<compile_context>
chip_gen: v5e
topology: v5e:2x2
jax: 0.10.0
libtpu: 0.0.40
codegen_flags: <defaults>
</compile_context>

<pallas_src>
import functools

import jax
import jax.numpy as jnp
import numpy as np
from jax.experimental import pallas as pl
from jax.experimental.pallas import tpu as pltpu


def _round_up(x, m):
    return (x + m - 1) // m * m


@functools.lru_cache(maxsize=None)
def _vmem_limit_bytes():
    """Generation-aware VMEM budget (~48 MiB on v7x, ~96 MiB on v5e/v6e)."""
    cap = 128 * 1024 * 1024
    try:
        info = pltpu.get_tpu_info()
        cap = int(getattr(info, "vmem_capacity_bytes", cap) or cap)
    except Exception:
        pass
    return int(cap * 3 // 4)


def _invariant_spec(shape, index_map):
    """BlockSpec for a grid-invariant operand: single-buffered when supported."""
    try:
        return pl.BlockSpec(shape, index_map, pipeline_mode=pl.Buffered(1))
    except Exception:  # Pallas without pipeline_mode / Buffered(1): default double buffer
        return pl.BlockSpec(shape, index_map)


def _pick_batch_block(B, T):
    """Batch elements per grid step: target >=256 matmul rows, keep >=2 steps if cheap."""
    blk = min(B, max(1, -(-256 // (T + 2))))
    while blk > 1 and B // blk < 2 and blk * (T + 2) > 512:
        blk = max(1, blk // 2)
    return blk


def _pick_freq_tile(Fo, Cout, lane_target=256):
    """Largest divisor of Fo whose N tile (Fo_t*Cout) stays <= lane_target lanes."""
    best = 1
    for d in range(1, Fo + 1):
        if Fo % d == 0 and d * Cout <= lane_target:
            best = d
    return best


# ----------------------------------------------------------------------------
# Pallas kernel: fused Conv2d(3x3, pad=1) + BatchNorm + ReLU (+ MaxPool(1, 2)).
#
# One grid step = one block of B_blk batch elements, stored channel-minor as a
# (R, (F+2)*Cin) slab whose borders (8 leading rows, 2 rows after each element,
# one frequency group on each side) are zero and realise the 'same' padding.
# The conv is n_g*3 banded matmuls per frequency tile (dy row shifts; dx taps and
# the folded BN scale live in the band); pooling = max over the n_g group accs.
# ----------------------------------------------------------------------------
def _conv_bn_relu_pool_kernel(x_ref, w_ref, b_ref, o_ref, *,
                              B_blk, T, n_g, Fo_t, n_tiles, Cin, Cout, Fo, m_chunk):
    S = T + 2
    M_out = B_blk * S - 2                  # conv centres live at rows [8, 8 + M_out)
    K_t = (n_g * Fo_t + 2) * Cin
    N_t = Fo_t * Cout
    stride_in = n_g * Fo_t * Cin
    bias_v = b_ref[...]                    # (1, N_t), folded conv bias + BN shift

    for j in range(n_tiles):                           # frequency tiles (static unroll)
        col_in = j * stride_in
        col_out = (1 + j * Fo_t) * Cout
        for m0 in range(0, M_out, m_chunk):            # row chunks bound f32 acc vregs
            mc = min(m_chunk, M_out - m0)
            acc = None
            for g in range(n_g):                       # pooling groups (even/odd freq)
                acc_g = None
                for dy in range(3):                    # kernel rows, static unroll
                    xv = x_ref[pl.ds(7 + dy + m0, mc), pl.ds(col_in, K_t)]
                    part = jnp.dot(xv, w_ref[g * 3 + dy],
                                   preferred_element_type=jnp.float32)
                    acc_g = part if acc_g is None else acc_g + part
                acc = acc_g if acc is None else jnp.maximum(acc, acc_g)  # MaxPool(1,2)
            y = jnp.maximum(acc + bias_v, 0.0)         # BN shift + ReLU
            o_ref[pl.ds(8 + m0, mc), pl.ds(col_out, N_t)] = y.astype(o_ref.dtype)

    # Re-zero the rows/columns that serve as the next conv's 'same' padding (and
    # overwrite the junk rows produced by the cross-element matmul windows).
    wout = o_ref.shape[1]
    rows = o_ref.shape[0]
    o_ref[pl.ds(0, 8), :] = jnp.zeros((8, wout), o_ref.dtype)
    for b in range(B_blk):
        o_ref[pl.ds(8 + b * S + T, 2), :] = jnp.zeros((2, wout), o_ref.dtype)
    zcol = jnp.zeros((rows, Cout), o_ref.dtype)
    o_ref[:, pl.ds(0, Cout)] = zcol
    o_ref[:, pl.ds((Fo + 1) * Cout, Cout)] = zcol


def conv_bn_relu_pool(x, layer, *, B_blk, T):
    """x: (NB, R, (F+2)*Cin) bf16 zero-bordered slab -> (NB, R, (Fo+2)*Cout) bf16."""
    NB, R, Win = x.shape
    m = layer["meta"]
    F, Cin, Cout = m["F"], m["Cin"], m["Cout"]
    n_g, Fo, Fo_t, n_tiles = m["n_g"], m["Fo"], m["Fo_t"], m["n_tiles"]
    assert Win == (F + 2) * Cin, (Win, F, Cin)
    Wout = (Fo + 2) * Cout
    N_t = Fo_t * Cout
    m_chunk = max(8, min(256, ((64 * 1024) // (4 * N_t)) // 8 * 8))

    kernel = functools.partial(
        _conv_bn_relu_pool_kernel,
        B_blk=B_blk, T=T, n_g=n_g, Fo_t=Fo_t, n_tiles=n_tiles,
        Cin=Cin, Cout=Cout, Fo=Fo, m_chunk=m_chunk)
    wstack, bias = layer["w"], layer["b"]
    return pl.pallas_call(
        kernel,
        out_shape=jax.ShapeDtypeStruct((NB, R, Wout), jnp.bfloat16),
        grid=(NB,),
        in_specs=[
            pl.BlockSpec((None, R, Win), lambda i: (i, 0, 0)),
            _invariant_spec(wstack.shape, lambda i: (0, 0, 0)),
            _invariant_spec(bias.shape, lambda i: (0, 0)),
        ],
        out_specs=pl.BlockSpec((None, R, Wout), lambda i: (i, 0, 0)),
        compiler_params=pltpu.CompilerParams(
            dimension_semantics=("parallel",),       # batch blocks shard across v7x's TCs
            vmem_limit_bytes=_vmem_limit_bytes()),
    )(x, wstack, bias)


# ----------------------------------------------------------------------------
# Pallas kernel: lane-padded fully-connected layer (y = x @ W + b), bf16 output.
# ----------------------------------------------------------------------------
def _fc_kernel(x_ref, w_ref, b_ref, o_ref):
    acc = jnp.dot(x_ref[...], w_ref[...], preferred_element_type=jnp.float32)
    o_ref[...] = (acc + b_ref[...]).astype(o_ref.dtype)


def linear(x2d, w_pad, b_pad):
    """x2d: (M, K) bf16; w_pad: (K, Npad) bf16; b_pad: (1, Npad) f32 -> (M_pad, Npad) bf16."""
    M, K = x2d.shape
    Npad = w_pad.shape[1]
    tm_floor = 256                       # never starve the MXU with 8-64 row tiles
    tm = _round_up(M, 8) if M <= tm_floor else tm_floor
    M_pad = _round_up(M, tm)
    if M_pad != M:
        x2d = jnp.pad(x2d, ((0, M_pad - M), (0, 0)))
    return pl.pallas_call(
        _fc_kernel,
        out_shape=jax.ShapeDtypeStruct((M_pad, Npad), jnp.bfloat16),
        grid=(M_pad // tm,),
        in_specs=[
            pl.BlockSpec((tm, K), lambda i: (i, 0)),
            _invariant_spec((K, Npad), lambda i: (0, 0)),
            _invariant_spec((1, Npad), lambda i: (0, 0)),
        ],
        out_specs=pl.BlockSpec((tm, Npad), lambda i: (i, 0)),
        compiler_params=pltpu.CompilerParams(
            dimension_semantics=("parallel",),
            vmem_limit_bytes=_vmem_limit_bytes()),
    )(x2d, w_pad, b_pad)


# ----------------------------------------------------------------------------
# Offline parameter preparation (BN folding, tiled banded conv weights, FC column
# permutation, lane padding, bf16 casts).  Runs once, outside the jitted path.
# ----------------------------------------------------------------------------
def _tiled_band_weight(w_scaled, Cin, Cout, n_g, Fo_t):
    """(n_g*3, (n_g*Fo_t+2)*Cin, Fo_t*Cout) banded weights shared by every freq tile.

    Column (fo, cout) of band [g, dy] has nonzeros at rows (q, cin) with
    q = n_g*fo + g + dx (relative padded input frequency), value w[cout, cin, dy, dx];
    out-of-range taps fall on the zero frequency borders of the activation layout.
    """
    K_t = (n_g * Fo_t + 2) * Cin
    N_t = Fo_t * Cout
    stack = np.zeros((n_g * 3, K_t, N_t), np.float32)
    for g in range(n_g):
        for dy in range(3):
            band = stack[g * 3 + dy]
            for fo in range(Fo_t):
                for dx in range(3):
                    q = n_g * fo + g + dx
                    band[q * Cin:(q + 1) * Cin, fo * Cout:(fo + 1) * Cout] = \
                        w_scaled[:, :, dy, dx].T
    return stack


def prepare_params(params, dim_in, eps=1e-5):
    prepared = {}
    F = dim_in
    for name, pool in (("layer1", False), ("layer2", True), ("layer3", True)):
        w, b, gamma, beta, mean, var = [np.asarray(t, np.float32) for t in params[name]]
        Cout, Cin, _, _ = w.shape
        scale = gamma / np.sqrt(var + eps)
        bias = beta + scale * (b - mean)              # folded conv bias + BN shift
        # TODO(synk): channels with tiny running variance can make scale large; folding
        # into bf16 weights loses a little precision there (fine for the tolerance used).
        w_scaled = w * scale[:, None, None, None]     # BN scale folded into the weights
        n_g = 2 if pool else 1
        Fo = F // n_g                                  # PyTorch MaxPool floor semantics
        Fo_t = _pick_freq_tile(Fo, Cout)
        n_tiles = Fo // Fo_t
        wstack = _tiled_band_weight(w_scaled, Cin, Cout, n_g, Fo_t)
        prepared[name] = {
            "w": jnp.asarray(wstack, jnp.bfloat16),                      # (n_g*3, K_t, N_t)
            "b": jnp.asarray(np.tile(bias, Fo_t)[None, :], jnp.float32),  # (1, N_t)
            "meta": dict(F=F, Cin=Cin, Cout=Cout, n_g=n_g, Fo=Fo, Fo_t=Fo_t,
                         n_tiles=n_tiles),
        }
        F = Fo

    w_fc, b_fc = [np.asarray(t, np.float32) for t in params["fc1"]]
    dim_out, feat = w_fc.shape
    C3 = prepared["layer3"]["meta"]["Cout"]
    F4 = F
    assert feat == C3 * F4, (feat, C3, F4)
    W3 = (F4 + 2) * C3
    Npad = _round_up(dim_out, 128)
    # PyTorch flattens (B,T,C3,F4) -> column c*F4 + f; our activations are channel-minor
    # with zero frequency borders (column (f+1)*C3 + c), so permute/pad the weight rows
    # offline instead of transposing / slicing the activation at runtime.
    w_perm = w_fc.reshape(dim_out, C3, F4).transpose(0, 2, 1).reshape(dim_out, F4 * C3)
    w_pad = np.zeros((W3, Npad), np.float32)
    w_pad[C3:(F4 + 1) * C3, :dim_out] = w_perm.T
    b_pad = np.zeros((1, Npad), np.float32)
    b_pad[0, :dim_out] = b_fc
    prepared["fc1"] = {
        "w": jnp.asarray(w_pad, jnp.bfloat16),
        "b": jnp.asarray(b_pad, jnp.float32),
        "dim_out": dim_out,
    }
    return prepared


# ----------------------------------------------------------------------------
# Forward pass
# ----------------------------------------------------------------------------
def acoustic_model_forward(in_feats_nchw, prepared):
    """in_feats: (B, C, T, F) as in PyTorch -> (B, T, dim_out) float32."""
    B, C, T, F = in_feats_nchw.shape
    meta1 = prepared["layer1"]["meta"]
    assert F == meta1["F"] and C == meta1["Cin"], (F, C, meta1)

    B_blk = _pick_batch_block(B, T)
    Bp = _round_up(B, B_blk)
    NB = Bp // B_blk
    S = T + 2
    R = 8 + B_blk * S

    # NCHW -> channel-minor bordered layout (NB, R, (F+2)*C) bf16: one zero frequency
    # group on each side, 2 zero rows after each element, 8 leading zero rows per block.
    x = jnp.transpose(in_feats_nchw, (0, 2, 3, 1))                 # (B, T, F, C)
    x = jnp.pad(x, ((0, Bp - B), (0, 2), (1, 1), (0, 0)))
    x = x.reshape(Bp, S, (F + 2) * C).reshape(NB, B_blk * S, (F + 2) * C)
    x = jnp.pad(x, ((0, 0), (8, 0), (0, 0))).astype(jnp.bfloat16)  # (NB, R, Win)

    for name in ("layer1", "layer2", "layer3"):      # Conv+BN+ReLU(+MaxPool); Dropout=id
        x = conv_bn_relu_pool(x, prepared[name], B_blk=B_blk, T=T)

    fc = prepared["fc1"]
    W3 = x.shape[-1]
    y = linear(x.reshape(NB * R, W3), fc["w"], fc["b"])            # (M_pad, Npad) bf16
    # Lazy slice of the padded slab back to (B, T, dim_out).
    y = y[:NB * R].reshape(NB, R, -1)[:, 8:, :]
    y = y.reshape(Bp, S, -1)[:B, :T, :fc["dim_out"]]
    return y.astype(jnp.float32)


# ----------------------------------------------------------------------------
# Raw (PyTorch-layout) parameters and a pure-JAX f32 reference for validation.
# ----------------------------------------------------------------------------
def init_params(key, dim_in, dim_out, in_channels=1, model_complexity=1):
    nf1 = 16 * model_complexity
    nf2 = nf1
    nf3 = 32 * model_complexity
    k1, k2, k3, k4 = jax.random.split(key, 4)

    def conv_layer(k, cin, cout):
        ks = jax.random.split(k, 6)
        w = 0.1 * jax.random.normal(ks[0], (cout, cin, 3, 3), jnp.float32)  # OIHW
        b = 0.1 * jax.random.normal(ks[1], (cout,), jnp.float32)
        gamma = 1.0 + 0.1 * jax.random.normal(ks[2], (cout,), jnp.float32)
        beta = 0.1 * jax.random.normal(ks[3], (cout,), jnp.float32)
        mean = 0.1 * jax.random.normal(ks[4], (cout,), jnp.float32)
        var = 1.0 + 0.1 * jnp.abs(jax.random.normal(ks[5], (cout,), jnp.float32))
        return (w, b, gamma, beta, mean, var)

    feat_map_size = nf3 * (dim_in // 4)
    kf1, kf2 = jax.random.split(k4)
    return {
        "layer1": conv_layer(k1, in_channels, nf1),
        "layer2": conv_layer(k2, nf1, nf2),
        "layer3": conv_layer(k3, nf2, nf3),
        "fc1": (0.05 * jax.random.normal(kf1, (dim_out, feat_map_size), jnp.float32),
                0.05 * jax.random.normal(kf2, (dim_out,), jnp.float32)),
    }


def _reference_forward(x_nchw, params, eps=1e-5):
    def conv_bn_relu(x, w, b, gamma, beta, mean, var):
        y = jax.lax.conv_general_dilated(
            x, w, window_strides=(1, 1), padding=((1, 1), (1, 1)),
            dimension_numbers=("NCHW", "OIHW", "NCHW"))
        y = y + b[None, :, None, None]
        y = (y - mean[None, :, None, None]) / jnp.sqrt(var + eps)[None, :, None, None]
        y = y * gamma[None, :, None, None] + beta[None, :, None, None]
        return jnp.maximum(y, 0.0)

    def pool_f(x):                                   # MaxPool2d((1, 2)): floor semantics
        b_, c_, t_, f_ = x.shape
        f2 = (f_ // 2) * 2
        return x[..., :f2].reshape(b_, c_, t_, f_ // 2, 2).max(axis=-1)

    x = conv_bn_relu(x_nchw, *params["layer1"])
    x = pool_f(conv_bn_relu(x, *params["layer2"]))
    x = pool_f(conv_bn_relu(x, *params["layer3"]))
    b_, c3, t_, f4 = x.shape
    x = jnp.transpose(x, (0, 2, 1, 3)).reshape(b_, t_, c3 * f4)
    w_fc, b_fc = params["fc1"]
    return x @ w_fc.T + b_fc


if __name__ == "__main__":
    B, C, T, F = 2, 1, 16, 32         # (batch, in_channels, frames, freq bins)
    dim_in, dim_out = F, 32
    key = jax.random.PRNGKey(0)
    kx, kp = jax.random.split(key)
    in_feats = jax.random.normal(kx, (B, C, T, F), jnp.float32)
    params = init_params(kp, dim_in, dim_out, in_channels=C, model_complexity=1)
    prepared = prepare_params(params, dim_in)        # one-time offline prep

    fwd = jax.jit(lambda x: acoustic_model_forward(x, prepared))
    out = jax.block_until_ready(fwd(in_feats))
    assert out.shape == (B, T, dim_out), out.shape
    assert bool(jnp.all(jnp.isfinite(out)))

    # Loose correctness check vs. a pure-JAX f32 reference (kernels run bf16 on the MXU).
    ref = jax.block_until_ready(jax.jit(lambda x: _reference_forward(x, params))(in_feats))
    err = float(jnp.max(jnp.abs(out - ref)))
    tol = 0.1 * float(jnp.max(jnp.abs(ref))) + 2e-2
    assert err <= tol, (err, tol)
    print("KERNEL_OK")
</pallas_src>

<mosaic_0001>
module attributes {stable_mosaic.version = 11 : i64} {
  func.func @_conv_bn_relu_pool_kernel(%arg0: i32, %arg1: memref<1x44x544xbf16, #tpu.memory_space<vmem>>, %arg2: memref<6x544x256xbf16, #tpu.memory_space<vmem>>, %arg3: memref<1x256xf32, #tpu.memory_space<vmem>>, %arg4: memref<1x44x288xbf16, #tpu.memory_space<vmem>>) attributes {dimension_semantics = [#tpu.dimension_semantics<parallel>], iteration_bounds = array<i64: 1>, scalar_prefetch = 0 : i64, scratch_operands = 0 : i64, tpu.core_type = #tpu.core_type<tc>, window_params = [{transform_indices = @transform_0, window_bounds = array<i64: 1, 44, 544>}, {pipeline_mode = #tpu.pipeline_mode<synchronous>, transform_indices = @transform_1, window_bounds = array<i64: 6, 544, 256>}, {pipeline_mode = #tpu.pipeline_mode<synchronous>, transform_indices = @transform_2, window_bounds = array<i64: 1, 256>}, {transform_indices = @transform_3, window_bounds = array<i64: 1, 44, 288>}]} {
    %c0 = arith.constant 0 : index
    %c0_0 = arith.constant 0 : index
    %0 = vector.load %arg3[%c0, %c0_0] : memref<1x256xf32, #tpu.memory_space<vmem>>, vector<1x256xf32>
    %c0_1 = arith.constant 0 : index
    %c7 = arith.constant 7 : index
    %c0_2 = arith.constant 0 : index
    %1 = vector.load %arg1[%c0_1, %c7, %c0_2] : memref<1x44x544xbf16, #tpu.memory_space<vmem>>, vector<1x34x544xbf16>
    %2 = vector.shape_cast %1 : vector<1x34x544xbf16> to vector<34x544xbf16>
    %c0_3 = arith.constant 0 : index
    %c0_4 = arith.constant 0 : index
    %c0_5 = arith.constant 0 : index
    %3 = vector.load %arg2[%c0_3, %c0_4, %c0_5] : memref<6x544x256xbf16, #tpu.memory_space<vmem>>, vector<1x544x256xbf16>
    %4 = vector.shape_cast %3 : vector<1x544x256xbf16> to vector<544x256xbf16>
    %cst = arith.constant dense<0.000000e+00> : vector<34x256xf32>
    %5 = tpu.matmul %2, %4, %cst {dimension_numbers = #tpu.dot_dimension_numbers<[1], [0], [0], [1], [0, 0, 1, 1], [], []>} : vector<34x544xbf16>, vector<544x256xbf16>, vector<34x256xf32> -> vector<34x256xf32>
    %c0_6 = arith.constant 0 : index
    %c8 = arith.constant 8 : index
    %c0_7 = arith.constant 0 : index
    %6 = vector.load %arg1[%c0_6, %c8, %c0_7] : memref<1x44x544xbf16, #tpu.memory_space<vmem>>, vector<1x34x544xbf16>
    %7 = vector.shape_cast %6 : vector<1x34x544xbf16> to vector<34x544xbf16>
    %c1 = arith.constant 1 : index
    %c0_8 = arith.constant 0 : index
    %c0_9 = arith.constant 0 : index
    %8 = vector.load %arg2[%c1, %c0_8, %c0_9] : memref<6x544x256xbf16, #tpu.memory_space<vmem>>, vector<1x544x256xbf16>
    %9 = vector.shape_cast %8 : vector<1x544x256xbf16> to vector<544x256xbf16>
    %cst_10 = arith.constant dense<0.000000e+00> : vector<34x256xf32>
    %10 = tpu.matmul %7, %9, %cst_10 {dimension_numbers = #tpu.dot_dimension_numbers<[1], [0], [0], [1], [0, 0, 1, 1], [], []>} : vector<34x544xbf16>, vector<544x256xbf16>, vector<34x256xf32> -> vector<34x256xf32>
    %11 = arith.addf %5, %10 : vector<34x256xf32>
    %c0_11 = arith.constant 0 : index
    %c9 = arith.constant 9 : index
    %c0_12 = arith.constant 0 : index
    %12 = vector.load %arg1[%c0_11, %c9, %c0_12] : memref<1x44x544xbf16, #tpu.memory_space<vmem>>, vector<1x34x544xbf16>
    %13 = vector.shape_cast %12 : vector<1x34x544xbf16> to vector<34x544xbf16>
    %c2 = arith.constant 2 : index
    %c0_13 = arith.constant 0 : index
    %c0_14 = arith.constant 0 : index
    %14 = vector.load %arg2[%c2, %c0_13, %c0_14] : memref<6x544x256xbf16, #tpu.memory_space<vmem>>, vector<1x544x256xbf16>
    %15 = vector.shape_cast %14 : vector<1x544x256xbf16> to vector<544x256xbf16>
    %cst_15 = arith.constant dense<0.000000e+00> : vector<34x256xf32>
    %16 = tpu.matmul %13, %15, %cst_15 {dimension_numbers = #tpu.dot_dimension_numbers<[1], [0], [0], [1], [0, 0, 1, 1], [], []>} : vector<34x544xbf16>, vector<544x256xbf16>, vector<34x256xf32> -> vector<34x256xf32>
    %17 = arith.addf %11, %16 : vector<34x256xf32>
    %c0_16 = arith.constant 0 : index
    %c7_17 = arith.constant 7 : index
    %c0_18 = arith.constant 0 : index
    %18 = vector.load %arg1[%c0_16, %c7_17, %c0_18] : memref<1x44x544xbf16, #tpu.memory_space<vmem>>, vector<1x34x544xbf16>
    %19 = vector.shape_cast %18 : vector<1x34x544xbf16> to vector<34x544xbf16>
    %c3 = arith.constant 3 : index
    %c0_19 = arith.constant 0 : index
    %c0_20 = arith.constant 0 : index
    %20 = vector.load %arg2[%c3, %c0_19, %c0_20] : memref<6x544x256xbf16, #tpu.memory_space<vmem>>, vector<1x544x256xbf16>
    %21 = vector.shape_cast %20 : vector<1x544x256xbf16> to vector<544x256xbf16>
    %cst_21 = arith.constant dense<0.000000e+00> : vector<34x256xf32>
    %22 = tpu.matmul %19, %21, %cst_21 {dimension_numbers = #tpu.dot_dimension_numbers<[1], [0], [0], [1], [0, 0, 1, 1], [], []>} : vector<34x544xbf16>, vector<544x256xbf16>, vector<34x256xf32> -> vector<34x256xf32>
    %c0_22 = arith.constant 0 : index
    %c8_23 = arith.constant 8 : index
    %c0_24 = arith.constant 0 : index
    %23 = vector.load %arg1[%c0_22, %c8_23, %c0_24] : memref<1x44x544xbf16, #tpu.memory_space<vmem>>, vector<1x34x544xbf16>
    %24 = vector.shape_cast %23 : vector<1x34x544xbf16> to vector<34x544xbf16>
    %c4 = arith.constant 4 : index
    %c0_25 = arith.constant 0 : index
    %c0_26 = arith.constant 0 : index
    %25 = vector.load %arg2[%c4, %c0_25, %c0_26] : memref<6x544x256xbf16, #tpu.memory_space<vmem>>, vector<1x544x256xbf16>
    %26 = vector.shape_cast %25 : vector<1x544x256xbf16> to vector<544x256xbf16>
    %cst_27 = arith.constant dense<0.000000e+00> : vector<34x256xf32>
    %27 = tpu.matmul %24, %26, %cst_27 {dimension_numbers = #tpu.dot_dimension_numbers<[1], [0], [0], [1], [0, 0, 1, 1], [], []>} : vector<34x544xbf16>, vector<544x256xbf16>, vector<34x256xf32> -> vector<34x256xf32>
    %28 = arith.addf %22, %27 : vector<34x256xf32>
    %c0_28 = arith.constant 0 : index
    %c9_29 = arith.constant 9 : index
    %c0_30 = arith.constant 0 : index
    %29 = vector.load %arg1[%c0_28, %c9_29, %c0_30] : memref<1x44x544xbf16, #tpu.memory_space<vmem>>, vector<1x34x544xbf16>
    %30 = vector.shape_cast %29 : vector<1x34x544xbf16> to vector<34x544xbf16>
    %c5 = arith.constant 5 : index
    %c0_31 = arith.constant 0 : index
    %c0_32 = arith.constant 0 : index
    %31 = vector.load %arg2[%c5, %c0_31, %c0_32] : memref<6x544x256xbf16, #tpu.memory_space<vmem>>, vector<1x544x256xbf16>
    %32 = vector.shape_cast %31 : vector<1x544x256xbf16> to vector<544x256xbf16>
    %cst_33 = arith.constant dense<0.000000e+00> : vector<34x256xf32>
    %33 = tpu.matmul %30, %32, %cst_33 {dimension_numbers = #tpu.dot_dimension_numbers<[1], [0], [0], [1], [0, 0, 1, 1], [], []>} : vector<34x544xbf16>, vector<544x256xbf16>, vector<34x256xf32> -> vector<34x256xf32>
    %34 = arith.addf %28, %33 : vector<34x256xf32>
    %35 = arith.maximumf %17, %34 : vector<34x256xf32>
    %36 = vector.broadcast %0 : vector<1x256xf32> to vector<34x256xf32>
    %37 = arith.addf %35, %36 : vector<34x256xf32>
    %cst_34 = arith.constant 0.000000e+00 : f32
    %38 = vector.broadcast %cst_34 : f32 to vector<34x256xf32>
    %39 = arith.maximumf %37, %38 : vector<34x256xf32>
    %40 = arith.truncf %39 : vector<34x256xf32> to vector<34x256xbf16>
    %c0_35 = arith.constant 0 : index
    %c8_36 = arith.constant 8 : index
    %c16 = arith.constant 16 : index
    %41 = vector.load %arg4[%c0_35, %c8_36, %c16] : memref<1x44x288xbf16, #tpu.memory_space<vmem>>, vector<1x34x256xbf16>
    %42 = vector.shape_cast %41 : vector<1x34x256xbf16> to vector<34x256xbf16>
    %43 = vector.shape_cast %40 : vector<34x256xbf16> to vector<1x34x256xbf16>
    tpu.vector_store %arg4[%c0_35, %c8_36, %c16], %43 {strides = array<i32>} : memref<1x44x288xbf16, #tpu.memory_space<vmem>>, vector<1x34x256xbf16>,
    %cst_37 = arith.constant 0.000000e+00 : bf16
    %44 = vector.broadcast %cst_37 : bf16 to vector<8x288xbf16>
    %c0_38 = arith.constant 0 : index
    %c0_39 = arith.constant 0 : index
    %c0_40 = arith.constant 0 : index
    %45 = vector.load %arg4[%c0_38, %c0_39, %c0_40] : memref<1x44x288xbf16, #tpu.memory_space<vmem>>, vector<1x8x288xbf16>
    %46 = vector.shape_cast %45 : vector<1x8x288xbf16> to vector<8x288xbf16>
    %47 = vector.shape_cast %44 : vector<8x288xbf16> to vector<1x8x288xbf16>
    tpu.vector_store %arg4[%c0_38, %c0_39, %c0_40], %47 {strides = array<i32>} : memref<1x44x288xbf16, #tpu.memory_space<vmem>>, vector<1x8x288xbf16>,
    %cst_41 = arith.constant 0.000000e+00 : bf16
    %48 = vector.broadcast %cst_41 : bf16 to vector<2x288xbf16>
    %c0_42 = arith.constant 0 : index
    %c24 = arith.constant 24 : index
    %c0_43 = arith.constant 0 : index
    %49 = vector.load %arg4[%c0_42, %c24, %c0_43] : memref<1x44x288xbf16, #tpu.memory_space<vmem>>, vector<1x2x288xbf16>
    %50 = vector.shape_cast %49 : vector<1x2x288xbf16> to vector<2x288xbf16>
    %51 = vector.shape_cast %48 : vector<2x288xbf16> to vector<1x2x288xbf16>
    tpu.vector_store %arg4[%c0_42, %c24, %c0_43], %51 {strides = array<i32>} : memref<1x44x288xbf16, #tpu.memory_space<vmem>>, vector<1x2x288xbf16>,
    %cst_44 = arith.constant 0.000000e+00 : bf16
    %52 = vector.broadcast %cst_44 : bf16 to vector<2x288xbf16>
    %c0_45 = arith.constant 0 : index
    %c42 = arith.constant 42 : index
    %c0_46 = arith.constant 0 : index
    %53 = vector.load %arg4[%c0_45, %c42, %c0_46] : memref<1x44x288xbf16, #tpu.memory_space<vmem>>, vector<1x2x288xbf16>
    %54 = vector.shape_cast %53 : vector<1x2x288xbf16> to vector<2x288xbf16>
    %55 = vector.shape_cast %52 : vector<2x288xbf16> to vector<1x2x288xbf16>
    tpu.vector_store %arg4[%c0_45, %c42, %c0_46], %55 {strides = array<i32>} : memref<1x44x288xbf16, #tpu.memory_space<vmem>>, vector<1x2x288xbf16>,
    %cst_47 = arith.constant 0.000000e+00 : bf16
    %56 = vector.broadcast %cst_47 : bf16 to vector<44x16xbf16>
    %c0_48 = arith.constant 0 : index
    %c0_49 = arith.constant 0 : index
    %c0_50 = arith.constant 0 : index
    %57 = vector.load %arg4[%c0_48, %c0_49, %c0_50] : memref<1x44x288xbf16, #tpu.memory_space<vmem>>, vector<1x44x16xbf16>
    %58 = vector.shape_cast %57 : vector<1x44x16xbf16> to vector<44x16xbf16>
    %59 = vector.shape_cast %56 : vector<44x16xbf16> to vector<1x44x16xbf16>
    tpu.vector_store %arg4[%c0_48, %c0_49, %c0_50], %59 {strides = array<i32>} : memref<1x44x288xbf16, #tpu.memory_space<vmem>>, vector<1x44x16xbf16>,
    %c0_51 = arith.constant 0 : index
    %c0_52 = arith.constant 0 : index
    %c272 = arith.constant 272 : index
    %60 = vector.load %arg4[%c0_51, %c0_52, %c272] : memref<1x44x288xbf16, #tpu.memory_space<vmem>>, vector<1x44x16xbf16>
    %61 = vector.shape_cast %60 : vector<1x44x16xbf16> to vector<44x16xbf16>
    %62 = vector.shape_cast %56 : vector<44x16xbf16> to vector<1x44x16xbf16>
    tpu.vector_store %arg4[%c0_51, %c0_52, %c272], %62 {strides = array<i32>} : memref<1x44x288xbf16, #tpu.memory_space<vmem>>, vector<1x44x16xbf16>,
    return
  }
  func.func @transform_0(%arg0: i32) -> (i32, i32, i32) {
    %c0_i32 = arith.constant 0 : i32
    %c0_i32_0 = arith.constant 0 : i32
    %c0_i32_1 = arith.constant 0 : i32
    return %arg0, %c0_i32, %c0_i32_0 : i32, i32, i32
  }
  func.func @transform_1(%arg0: i32) -> (i32, i32, i32) {
    %c0_i32 = arith.constant 0 : i32
    %c0_i32_0 = arith.constant 0 : i32
    %c0_i32_1 = arith.constant 0 : i32
    %c0_i32_2 = arith.constant 0 : i32
    return %c0_i32, %c0_i32_0, %c0_i32_1 : i32, i32, i32
  }
  func.func @transform_2(%arg0: i32) -> (i32, i32) {
    %c0_i32 = arith.constant 0 : i32
    %c0_i32_0 = arith.constant 0 : i32
    %c0_i32_1 = arith.constant 0 : i32
    return %c0_i32, %c0_i32_0 : i32, i32
  }
  func.func @transform_3(%arg0: i32) -> (i32, i32, i32) {
    %c0_i32 = arith.constant 0 : i32
    %c0_i32_0 = arith.constant 0 : i32
    %c0_i32_1 = arith.constant 0 : i32
    return %arg0, %c0_i32, %c0_i32_0 : i32, i32, i32
  }
}

module attributes {stable_mosaic.version = 11 : i64} {
  func.func @_conv_bn_relu_pool_kernel(%arg0: i32, %arg1: memref<1x44x288xbf16, #tpu.memory_space<vmem>>, %arg2: memref<6x288x256xbf16, #tpu.memory_space<vmem>>, %arg3: memref<1x256xf32, #tpu.memory_space<vmem>>, %arg4: memref<1x44x320xbf16, #tpu.memory_space<vmem>>) attributes {dimension_semantics = [#tpu.dimension_semantics<parallel>], iteration_bounds = array<i64: 1>, scalar_prefetch = 0 : i64, scratch_operands = 0 : i64, tpu.core_type = #tpu.core_type<tc>, window_params = [{transform_indices = @transform_0, window_bounds = array<i64: 1, 44, 288>}, {pipeline_mode = #tpu.pipeline_mode<synchronous>, transform_indices = @transform_1, window_bounds = array<i64: 6, 288, 256>}, {pipeline_mode = #tpu.pipeline_mode<synchronous>, transform_indices = @transform_2, window_bounds = array<i64: 1, 256>}, {transform_indices = @transform_3, window_bounds = array<i64: 1, 44, 320>}]} {
    %c0 = arith.constant 0 : index
    %c0_0 = arith.constant 0 : index
    %0 = vector.load %arg3[%c0, %c0_0] : memref<1x256xf32, #tpu.memory_space<vmem>>, vector<1x256xf32>
    %c0_1 = arith.constant 0 : index
    %c7 = arith.constant 7 : index
    %c0_2 = arith.constant 0 : index
    %1 = vector.load %arg1[%c0_1, %c7, %c0_2] : memref<1x44x288xbf16, #tpu.memory_space<vmem>>, vector<1x34x288xbf16>
    %2 = vector.shape_cast %1 : vector<1x34x288xbf16> to vector<34x288xbf16>
    %c0_3 = arith.constant 0 : index
    %c0_4 = arith.constant 0 : index
    %c0_5 = arith.constant 0 : index
    %3 = vector.load %arg2[%c0_3, %c0_4, %c0_5] : memref<6x288x256xbf16, #tpu.memory_space<vmem>>, vector<1x288x256xbf16>
    %4 = vector.shape_cast %3 : vector<1x288x256xbf16> to vector<288x256xbf16>
    %cst = arith.constant dense<0.000000e+00> : vector<34x256xf32>
    %5 = tpu.matmul %2, %4, %cst {dimension_numbers = #tpu.dot_dimension_numbers<[1], [0], [0], [1], [0, 0, 1, 1], [], []>} : vector<34x288xbf16>, vector<288x256xbf16>, vector<34x256xf32> -> vector<34x256xf32>
    %c0_6 = arith.constant 0 : index
    %c8 = arith.constant 8 : index
    %c0_7 = arith.constant 0 : index
    %6 = vector.load %arg1[%c0_6, %c8, %c0_7] : memref<1x44x288xbf16, #tpu.memory_space<vmem>>, vector<1x34x288xbf16>
    %7 = vector.shape_cast %6 : vector<1x34x288xbf16> to vector<34x288xbf16>
    %c1 = arith.constant 1 : index
    %c0_8 = arith.constant 0 : index
    %c0_9 = arith.constant 0 : index
    %8 = vector.load %arg2[%c1, %c0_8, %c0_9] : memref<6x288x256xbf16, #tpu.memory_space<vmem>>, vector<1x288x256xbf16>
    %9 = vector.shape_cast %8 : vector<1x288x256xbf16> to vector<288x256xbf16>
    %cst_10 = arith.constant dense<0.000000e+00> : vector<34x256xf32>
    %10 = tpu.matmul %7, %9, %cst_10 {dimension_numbers = #tpu.dot_dimension_numbers<[1], [0], [0], [1], [0, 0, 1, 1], [], []>} : vector<34x288xbf16>, vector<288x256xbf16>, vector<34x256xf32> -> vector<34x256xf32>
    %11 = arith.addf %5, %10 : vector<34x256xf32>
    %c0_11 = arith.constant 0 : index
    %c9 = arith.constant 9 : index
    %c0_12 = arith.constant 0 : index
    %12 = vector.load %arg1[%c0_11, %c9, %c0_12] : memref<1x44x288xbf16, #tpu.memory_space<vmem>>, vector<1x34x288xbf16>
    %13 = vector.shape_cast %12 : vector<1x34x288xbf16> to vector<34x288xbf16>
    %c2 = arith.constant 2 : index
    %c0_13 = arith.constant 0 : index
    %c0_14 = arith.constant 0 : index
    %14 = vector.load %arg2[%c2, %c0_13, %c0_14] : memref<6x288x256xbf16, #tpu.memory_space<vmem>>, vector<1x288x256xbf16>
    %15 = vector.shape_cast %14 : vector<1x288x256xbf16> to vector<288x256xbf16>
    %cst_15 = arith.constant dense<0.000000e+00> : vector<34x256xf32>
    %16 = tpu.matmul %13, %15, %cst_15 {dimension_numbers = #tpu.dot_dimension_numbers<[1], [0], [0], [1], [0, 0, 1, 1], [], []>} : vector<34x288xbf16>, vector<288x256xbf16>, vector<34x256xf32> -> vector<34x256xf32>
    %17 = arith.addf %11, %16 : vector<34x256xf32>
    %c0_16 = arith.constant 0 : index
    %c7_17 = arith.constant 7 : index
    %c0_18 = arith.constant 0 : index
    %18 = vector.load %arg1[%c0_16, %c7_17, %c0_18] : memref<1x44x288xbf16, #tpu.memory_space<vmem>>, vector<1x34x288xbf16>
    %19 = vector.shape_cast %18 : vector<1x34x288xbf16> to vector<34x288xbf16>
    %c3 = arith.constant 3 : index
    %c0_19 = arith.constant 0 : index
    %c0_20 = arith.constant 0 : index
    %20 = vector.load %arg2[%c3, %c0_19, %c0_20] : memref<6x288x256xbf16, #tpu.memory_space<vmem>>, vector<1x288x256xbf16>
    %21 = vector.shape_cast %20 : vector<1x288x256xbf16> to vector<288x256xbf16>
    %cst_21 = arith.constant dense<0.000000e+00> : vector<34x256xf32>
    %22 = tpu.matmul %19, %21, %cst_21 {dimension_numbers = #tpu.dot_dimension_numbers<[1], [0], [0], [1], [0, 0, 1, 1], [], []>} : vector<34x288xbf16>, vector<288x256xbf16>, vector<34x256xf32> -> vector<34x256xf32>
    %c0_22 = arith.constant 0 : index
    %c8_23 = arith.constant 8 : index
    %c0_24 = arith.constant 0 : index
    %23 = vector.load %arg1[%c0_22, %c8_23, %c0_24] : memref<1x44x288xbf16, #tpu.memory_space<vmem>>, vector<1x34x288xbf16>
    %24 = vector.shape_cast %23 : vector<1x34x288xbf16> to vector<34x288xbf16>
    %c4 = arith.constant 4 : index
    %c0_25 = arith.constant 0 : index
    %c0_26 = arith.constant 0 : index
    %25 = vector.load %arg2[%c4, %c0_25, %c0_26] : memref<6x288x256xbf16, #tpu.memory_space<vmem>>, vector<1x288x256xbf16>
    %26 = vector.shape_cast %25 : vector<1x288x256xbf16> to vector<288x256xbf16>
    %cst_27 = arith.constant dense<0.000000e+00> : vector<34x256xf32>
    %27 = tpu.matmul %24, %26, %cst_27 {dimension_numbers = #tpu.dot_dimension_numbers<[1], [0], [0], [1], [0, 0, 1, 1], [], []>} : vector<34x288xbf16>, vector<288x256xbf16>, vector<34x256xf32> -> vector<34x256xf32>
    %28 = arith.addf %22, %27 : vector<34x256xf32>
    %c0_28 = arith.constant 0 : index
    %c9_29 = arith.constant 9 : index
    %c0_30 = arith.constant 0 : index
    %29 = vector.load %arg1[%c0_28, %c9_29, %c0_30] : memref<1x44x288xbf16, #tpu.memory_space<vmem>>, vector<1x34x288xbf16>
    %30 = vector.shape_cast %29 : vector<1x34x288xbf16> to vector<34x288xbf16>
    %c5 = arith.constant 5 : index
    %c0_31 = arith.constant 0 : index
    %c0_32 = arith.constant 0 : index
    %31 = vector.load %arg2[%c5, %c0_31, %c0_32] : memref<6x288x256xbf16, #tpu.memory_space<vmem>>, vector<1x288x256xbf16>
    %32 = vector.shape_cast %31 : vector<1x288x256xbf16> to vector<288x256xbf16>
    %cst_33 = arith.constant dense<0.000000e+00> : vector<34x256xf32>
    %33 = tpu.matmul %30, %32, %cst_33 {dimension_numbers = #tpu.dot_dimension_numbers<[1], [0], [0], [1], [0, 0, 1, 1], [], []>} : vector<34x288xbf16>, vector<288x256xbf16>, vector<34x256xf32> -> vector<34x256xf32>
    %34 = arith.addf %28, %33 : vector<34x256xf32>
    %35 = arith.maximumf %17, %34 : vector<34x256xf32>
    %36 = vector.broadcast %0 : vector<1x256xf32> to vector<34x256xf32>
    %37 = arith.addf %35, %36 : vector<34x256xf32>
    %cst_34 = arith.constant 0.000000e+00 : f32
    %38 = vector.broadcast %cst_34 : f32 to vector<34x256xf32>
    %39 = arith.maximumf %37, %38 : vector<34x256xf32>
    %40 = arith.truncf %39 : vector<34x256xf32> to vector<34x256xbf16>
    %c0_35 = arith.constant 0 : index
    %c8_36 = arith.constant 8 : index
    %c32 = arith.constant 32 : index
    %41 = vector.load %arg4[%c0_35, %c8_36, %c32] : memref<1x44x320xbf16, #tpu.memory_space<vmem>>, vector<1x34x256xbf16>
    %42 = vector.shape_cast %41 : vector<1x34x256xbf16> to vector<34x256xbf16>
    %43 = vector.shape_cast %40 : vector<34x256xbf16> to vector<1x34x256xbf16>
    tpu.vector_store %arg4[%c0_35, %c8_36, %c32], %43 {strides = array<i32>} : memref<1x44x320xbf16, #tpu.memory_space<vmem>>, vector<1x34x256xbf16>,
    %cst_37 = arith.constant 0.000000e+00 : bf16
    %44 = vector.broadcast %cst_37 : bf16 to vector<8x320xbf16>
    %c0_38 = arith.constant 0 : index
    %c0_39 = arith.constant 0 : index
    %c0_40 = arith.constant 0 : index
    %45 = vector.load %arg4[%c0_38, %c0_39, %c0_40] : memref<1x44x320xbf16, #tpu.memory_space<vmem>>, vector<1x8x320xbf16>
    %46 = vector.shape_cast %45 : vector<1x8x320xbf16> to vector<8x320xbf16>
    %47 = vector.shape_cast %44 : vector<8x320xbf16> to vector<1x8x320xbf16>
    tpu.vector_store %arg4[%c0_38, %c0_39, %c0_40], %47 {strides = array<i32>} : memref<1x44x320xbf16, #tpu.memory_space<vmem>>, vector<1x8x320xbf16>,
    %cst_41 = arith.constant 0.000000e+00 : bf16
    %48 = vector.broadcast %cst_41 : bf16 to vector<2x320xbf16>
    %c0_42 = arith.constant 0 : index
    %c24 = arith.constant 24 : index
    %c0_43 = arith.constant 0 : index
    %49 = vector.load %arg4[%c0_42, %c24, %c0_43] : memref<1x44x320xbf16, #tpu.memory_space<vmem>>, vector<1x2x320xbf16>
    %50 = vector.shape_cast %49 : vector<1x2x320xbf16> to vector<2x320xbf16>
    %51 = vector.shape_cast %48 : vector<2x320xbf16> to vector<1x2x320xbf16>
    tpu.vector_store %arg4[%c0_42, %c24, %c0_43], %51 {strides = array<i32>} : memref<1x44x320xbf16, #tpu.memory_space<vmem>>, vector<1x2x320xbf16>,
    %cst_44 = arith.constant 0.000000e+00 : bf16
    %52 = vector.broadcast %cst_44 : bf16 to vector<2x320xbf16>
    %c0_45 = arith.constant 0 : index
    %c42 = arith.constant 42 : index
    %c0_46 = arith.constant 0 : index
    %53 = vector.load %arg4[%c0_45, %c42, %c0_46] : memref<1x44x320xbf16, #tpu.memory_space<vmem>>, vector<1x2x320xbf16>
    %54 = vector.shape_cast %53 : vector<1x2x320xbf16> to vector<2x320xbf16>
    %55 = vector.shape_cast %52 : vector<2x320xbf16> to vector<1x2x320xbf16>
    tpu.vector_store %arg4[%c0_45, %c42, %c0_46], %55 {strides = array<i32>} : memref<1x44x320xbf16, #tpu.memory_space<vmem>>, vector<1x2x320xbf16>,
    %cst_47 = arith.constant 0.000000e+00 : bf16
    %56 = vector.broadcast %cst_47 : bf16 to vector<44x32xbf16>
    %c0_48 = arith.constant 0 : index
    %c0_49 = arith.constant 0 : index
    %c0_50 = arith.constant 0 : index
    %57 = vector.load %arg4[%c0_48, %c0_49, %c0_50] : memref<1x44x320xbf16, #tpu.memory_space<vmem>>, vector<1x44x32xbf16>
    %58 = vector.shape_cast %57 : vector<1x44x32xbf16> to vector<44x32xbf16>
    %59 = vector.shape_cast %56 : vector<44x32xbf16> to vector<1x44x32xbf16>
    tpu.vector_store %arg4[%c0_48, %c0_49, %c0_50], %59 {strides = array<i32>} : memref<1x44x320xbf16, #tpu.memory_space<vmem>>, vector<1x44x32xbf16>,
    %c0_51 = arith.constant 0 : index
    %c0_52 = arith.constant 0 : index
    %c288 = arith.constant 288 : index
    %60 = vector.load %arg4[%c0_51, %c0_52, %c288] : memref<1x44x320xbf16, #tpu.memory_space<vmem>>, vector<1x44x32xbf16>
    %61 = vector.shape_cast %60 : vector<1x44x32xbf16> to vector<44x32xbf16>
    %62 = vector.shape_cast %56 : vector<44x32xbf16> to vector<1x44x32xbf16>
    tpu.vector_store %arg4[%c0_51, %c0_52, %c288], %62 {strides = array<i32>} : memref<1x44x320xbf16, #tpu.memory_space<vmem>>, vector<1x44x32xbf16>,
    return
  }
  func.func @transform_0(%arg0: i32) -> (i32, i32, i32) {
    %c0_i32 = arith.constant 0 : i32
    %c0_i32_0 = arith.constant 0 : i32
    %c0_i32_1 = arith.constant 0 : i32
    return %arg0, %c0_i32, %c0_i32_0 : i32, i32, i32
  }
  func.func @transform_1(%arg0: i32) -> (i32, i32, i32) {
    %c0_i32 = arith.constant 0 : i32
    %c0_i32_0 = arith.constant 0 : i32
    %c0_i32_1 = arith.constant 0 : i32
    %c0_i32_2 = arith.constant 0 : i32
    return %c0_i32, %c0_i32_0, %c0_i32_1 : i32, i32, i32
  }
  func.func @transform_2(%arg0: i32) -> (i32, i32) {
    %c0_i32 = arith.constant 0 : i32
    %c0_i32_0 = arith.constant 0 : i32
    %c0_i32_1 = arith.constant 0 : i32
    return %c0_i32, %c0_i32_0 : i32, i32
  }
  func.func @transform_3(%arg0: i32) -> (i32, i32, i32) {
    %c0_i32 = arith.constant 0 : i32
    %c0_i32_0 = arith.constant 0 : i32
    %c0_i32_1 = arith.constant 0 : i32
    return %arg0, %c0_i32, %c0_i32_0 : i32, i32, i32
  }
}

module attributes {stable_mosaic.version = 11 : i64} {
  func.func @_conv_bn_relu_pool_kernel(%arg0: i32, %arg1: memref<1x44x34xbf16, #tpu.memory_space<vmem>>, %arg2: memref<3x18x256xbf16, #tpu.memory_space<vmem>>, %arg3: memref<1x256xf32, #tpu.memory_space<vmem>>, %arg4: memref<1x44x544xbf16, #tpu.memory_space<vmem>>) attributes {dimension_semantics = [#tpu.dimension_semantics<parallel>], iteration_bounds = array<i64: 1>, scalar_prefetch = 0 : i64, scratch_operands = 0 : i64, tpu.core_type = #tpu.core_type<tc>, window_params = [{transform_indices = @transform_0, window_bounds = array<i64: 1, 44, 34>}, {pipeline_mode = #tpu.pipeline_mode<synchronous>, transform_indices = @transform_1, window_bounds = array<i64: 3, 18, 256>}, {pipeline_mode = #tpu.pipeline_mode<synchronous>, transform_indices = @transform_2, window_bounds = array<i64: 1, 256>}, {transform_indices = @transform_3, window_bounds = array<i64: 1, 44, 544>}]} {
    %c0 = arith.constant 0 : index
    %c0_0 = arith.constant 0 : index
    %0 = vector.load %arg3[%c0, %c0_0] : memref<1x256xf32, #tpu.memory_space<vmem>>, vector<1x256xf32>
    %c0_1 = arith.constant 0 : index
    %c7 = arith.constant 7 : index
    %c0_2 = arith.constant 0 : index
    %1 = vector.load %arg1[%c0_1, %c7, %c0_2] : memref<1x44x34xbf16, #tpu.memory_space<vmem>>, vector<1x34x18xbf16>
    %2 = vector.shape_cast %1 : vector<1x34x18xbf16> to vector<34x18xbf16>
    %c0_3 = arith.constant 0 : index
    %c0_4 = arith.constant 0 : index
    %c0_5 = arith.constant 0 : index
    %3 = vector.load %arg2[%c0_3, %c0_4, %c0_5] : memref<3x18x256xbf16, #tpu.memory_space<vmem>>, vector<1x18x256xbf16>
    %4 = vector.shape_cast %3 : vector<1x18x256xbf16> to vector<18x256xbf16>
    %cst = arith.constant dense<0.000000e+00> : vector<34x256xf32>
    %5 = tpu.matmul %2, %4, %cst {dimension_numbers = #tpu.dot_dimension_numbers<[1], [0], [0], [1], [0, 0, 1, 1], [], []>} : vector<34x18xbf16>, vector<18x256xbf16>, vector<34x256xf32> -> vector<34x256xf32>
    %c0_6 = arith.constant 0 : index
    %c8 = arith.constant 8 : index
    %c0_7 = arith.constant 0 : index
    %6 = vector.load %arg1[%c0_6, %c8, %c0_7] : memref<1x44x34xbf16, #tpu.memory_space<vmem>>, vector<1x34x18xbf16>
    %7 = vector.shape_cast %6 : vector<1x34x18xbf16> to vector<34x18xbf16>
    %c1 = arith.constant 1 : index
    %c0_8 = arith.constant 0 : index
    %c0_9 = arith.constant 0 : index
    %8 = vector.load %arg2[%c1, %c0_8, %c0_9] : memref<3x18x256xbf16, #tpu.memory_space<vmem>>, vector<1x18x256xbf16>
    %9 = vector.shape_cast %8 : vector<1x18x256xbf16> to vector<18x256xbf16>
    %cst_10 = arith.constant dense<0.000000e+00> : vector<34x256xf32>
    %10 = tpu.matmul %7, %9, %cst_10 {dimension_numbers = #tpu.dot_dimension_numbers<[1], [0], [0], [1], [0, 0, 1, 1], [], []>} : vector<34x18xbf16>, vector<18x256xbf16>, vector<34x256xf32> -> vector<34x256xf32>
    %11 = arith.addf %5, %10 : vector<34x256xf32>
    %c0_11 = arith.constant 0 : index
    %c9 = arith.constant 9 : index
    %c0_12 = arith.constant 0 : index
    %12 = vector.load %arg1[%c0_11, %c9, %c0_12] : memref<1x44x34xbf16, #tpu.memory_space<vmem>>, vector<1x34x18xbf16>
    %13 = vector.shape_cast %12 : vector<1x34x18xbf16> to vector<34x18xbf16>
    %c2 = arith.constant 2 : index
    %c0_13 = arith.constant 0 : index
    %c0_14 = arith.constant 0 : index
    %14 = vector.load %arg2[%c2, %c0_13, %c0_14] : memref<3x18x256xbf16, #tpu.memory_space<vmem>>, vector<1x18x256xbf16>
    %15 = vector.shape_cast %14 : vector<1x18x256xbf16> to vector<18x256xbf16>
    %cst_15 = arith.constant dense<0.000000e+00> : vector<34x256xf32>
    %16 = tpu.matmul %13, %15, %cst_15 {dimension_numbers = #tpu.dot_dimension_numbers<[1], [0], [0], [1], [0, 0, 1, 1], [], []>} : vector<34x18xbf16>, vector<18x256xbf16>, vector<34x256xf32> -> vector<34x256xf32>
    %17 = arith.addf %11, %16 : vector<34x256xf32>
    %18 = vector.broadcast %0 : vector<1x256xf32> to vector<34x256xf32>
    %19 = arith.addf %17, %18 : vector<34x256xf32>
    %cst_16 = arith.constant 0.000000e+00 : f32
    %20 = vector.broadcast %cst_16 : f32 to vector<34x256xf32>
    %21 = arith.maximumf %19, %20 : vector<34x256xf32>
    %22 = arith.truncf %21 : vector<34x256xf32> to vector<34x256xbf16>
    %c0_17 = arith.constant 0 : index
    %c8_18 = arith.constant 8 : index
    %c16 = arith.constant 16 : index
    %23 = vector.load %arg4[%c0_17, %c8_18, %c16] : memref<1x44x544xbf16, #tpu.memory_space<vmem>>, vector<1x34x256xbf16>
    %24 = vector.shape_cast %23 : vector<1x34x256xbf16> to vector<34x256xbf16>
    %25 = vector.shape_cast %22 : vector<34x256xbf16> to vector<1x34x256xbf16>
    tpu.vector_store %arg4[%c0_17, %c8_18, %c16], %25 {strides = array<i32>} : memref<1x44x544xbf16, #tpu.memory_space<vmem>>, vector<1x34x256xbf16>,
    %c0_19 = arith.constant 0 : index
    %c7_20 = arith.constant 7 : index
    %c16_21 = arith.constant 16 : index
    %26 = vector.load %arg1[%c0_19, %c7_20, %c16_21] : memref<1x44x34xbf16, #tpu.memory_space<vmem>>, vector<1x34x18xbf16>
    %27 = vector.shape_cast %26 : vector<1x34x18xbf16> to vector<34x18xbf16>
    %c0_22 = arith.constant 0 : index
    %c0_23 = arith.constant 0 : index
    %c0_24 = arith.constant 0 : index
    %28 = vector.load %arg2[%c0_22, %c0_23, %c0_24] : memref<3x18x256xbf16, #tpu.memory_space<vmem>>, vector<1x18x256xbf16>
    %29 = vector.shape_cast %28 : vector<1x18x256xbf16> to vector<18x256xbf16>
    %cst_25 = arith.constant dense<0.000000e+00> : vector<34x256xf32>
    %30 = tpu.matmul %27, %29, %cst_25 {dimension_numbers = #tpu.dot_dimension_numbers<[1], [0], [0], [1], [0, 0, 1, 1], [], []>} : vector<34x18xbf16>, vector<18x256xbf16>, vector<34x256xf32> -> vector<34x256xf32>
    %c0_26 = arith.constant 0 : index
    %c8_27 = arith.constant 8 : index
    %c16_28 = arith.constant 16 : index
    %31 = vector.load %arg1[%c0_26, %c8_27, %c16_28] : memref<1x44x34xbf16, #tpu.memory_space<vmem>>, vector<1x34x18xbf16>
    %32 = vector.shape_cast %31 : vector<1x34x18xbf16> to vector<34x18xbf16>
    %c1_29 = arith.constant 1 : index
    %c0_30 = arith.constant 0 : index
    %c0_31 = arith.constant 0 : index
    %33 = vector.load %arg2[%c1_29, %c0_30, %c0_31] : memref<3x18x256xbf16, #tpu.memory_space<vmem>>, vector<1x18x256xbf16>
    %34 = vector.shape_cast %33 : vector<1x18x256xbf16> to vector<18x256xbf16>
    %cst_32 = arith.constant dense<0.000000e+00> : vector<34x256xf32>
    %35 = tpu.matmul %32, %34, %cst_32 {dimension_numbers = #tpu.dot_dimension_numbers<[1], [0], [0], [1], [0, 0, 1, 1], [], []>} : vector<34x18xbf16>, vector<18x256xbf16>, vector<34x256xf32> -> vector<34x256xf32>
    %36 = arith.addf %30, %35 : vector<34x256xf32>
    %c0_33 = arith.constant 0 : index
    %c9_34 = arith.constant 9 : index
    %c16_35 = arith.constant 16 : index
    %37 = vector.load %arg1[%c0_33, %c9_34, %c16_35] : memref<1x44x34xbf16, #tpu.memory_space<vmem>>, vector<1x34x18xbf16>
    %38 = vector.shape_cast %37 : vector<1x34x18xbf16> to vector<34x18xbf16>
    %c2_36 = arith.constant 2 : index
    %c0_37 = arith.constant 0 : index
    %c0_38 = arith.constant 0 : index
    %39 = vector.load %arg2[%c2_36, %c0_37, %c0_38] : memref<3x18x256xbf16, #tpu.memory_space<vmem>>, vector<1x18x256xbf16>
    %40 = vector.shape_cast %39 : vector<1x18x256xbf16> to vector<18x256xbf16>
    %cst_39 = arith.constant dense<0.000000e+00> : vector<34x256xf32>
    %41 = tpu.matmul %38, %40, %cst_39 {dimension_numbers = #tpu.dot_dimension_numbers<[1], [0], [0], [1], [0, 0, 1, 1], [], []>} : vector<34x18xbf16>, vector<18x256xbf16>, vector<34x256xf32> -> vector<34x256xf32>
    %42 = arith.addf %36, %41 : vector<34x256xf32>
    %43 = vector.broadcast %0 : vector<1x256xf32> to vector<34x256xf32>
    %44 = arith.addf %42, %43 : vector<34x256xf32>
    %cst_40 = arith.constant 0.000000e+00 : f32
    %45 = vector.broadcast %cst_40 : f32 to vector<34x256xf32>
    %46 = arith.maximumf %44, %45 : vector<34x256xf32>
    %47 = arith.truncf %46 : vector<34x256xf32> to vector<34x256xbf16>
    %c0_41 = arith.constant 0 : index
    %c8_42 = arith.constant 8 : index
    %c272 = arith.constant 272 : index
    %48 = vector.load %arg4[%c0_41, %c8_42, %c272] : memref<1x44x544xbf16, #tpu.memory_space<vmem>>, vector<1x34x256xbf16>
    %49 = vector.shape_cast %48 : vector<1x34x256xbf16> to vector<34x256xbf16>
    %50 = vector.shape_cast %47 : vector<34x256xbf16> to vector<1x34x256xbf16>
    tpu.vector_store %arg4[%c0_41, %c8_42, %c272], %50 {strides = array<i32>} : memref<1x44x544xbf16, #tpu.memory_space<vmem>>, vector<1x34x256xbf16>,
    %cst_43 = arith.constant 0.000000e+00 : bf16
    %51 = vector.broadcast %cst_43 : bf16 to vector<8x544xbf16>
    %c0_44 = arith.constant 0 : index
    %c0_45 = arith.constant 0 : index
    %c0_46 = arith.constant 0 : index
    %52 = vector.load %arg4[%c0_44, %c0_45, %c0_46] : memref<1x44x544xbf16, #tpu.memory_space<vmem>>, vector<1x8x544xbf16>
    %53 = vector.shape_cast %52 : vector<1x8x544xbf16> to vector<8x544xbf16>
    %54 = vector.shape_cast %51 : vector<8x544xbf16> to vector<1x8x544xbf16>
    tpu.vector_store %arg4[%c0_44, %c0_45, %c0_46], %54 {strides = array<i32>} : memref<1x44x544xbf16, #tpu.memory_space<vmem>>, vector<1x8x544xbf16>,
    %cst_47 = arith.constant 0.000000e+00 : bf16
    %55 = vector.broadcast %cst_47 : bf16 to vector<2x544xbf16>
    %c0_48 = arith.constant 0 : index
    %c24 = arith.constant 24 : index
    %c0_49 = arith.constant 0 : index
    %56 = vector.load %arg4[%c0_48, %c24, %c0_49] : memref<1x44x544xbf16, #tpu.memory_space<vmem>>, vector<1x2x544xbf16>
    %57 = vector.shape_cast %56 : vector<1x2x544xbf16> to vector<2x544xbf16>
    %58 = vector.shape_cast %55 : vector<2x544xbf16> to vector<1x2x544xbf16>
    tpu.vector_store %arg4[%c0_48, %c24, %c0_49], %58 {strides = array<i32>} : memref<1x44x544xbf16, #tpu.memory_space<vmem>>, vector<1x2x544xbf16>,
    %cst_50 = arith.constant 0.000000e+00 : bf16
    %59 = vector.broadcast %cst_50 : bf16 to vector<2x544xbf16>
    %c0_51 = arith.constant 0 : index
    %c42 = arith.constant 42 : index
    %c0_52 = arith.constant 0 : index
    %60 = vector.load %arg4[%c0_51, %c42, %c0_52] : memref<1x44x544xbf16, #tpu.memory_space<vmem>>, vector<1x2x544xbf16>
    %61 = vector.shape_cast %60 : vector<1x2x544xbf16> to vector<2x544xbf16>
    %62 = vector.shape_cast %59 : vector<2x544xbf16> to vector<1x2x544xbf16>
    tpu.vector_store %arg4[%c0_51, %c42, %c0_52], %62 {strides = array<i32>} : memref<1x44x544xbf16, #tpu.memory_space<vmem>>, vector<1x2x544xbf16>,
    %cst_53 = arith.constant 0.000000e+00 : bf16
    %63 = vector.broadcast %cst_53 : bf16 to vector<44x16xbf16>
    %c0_54 = arith.constant 0 : index
    %c0_55 = arith.constant 0 : index
    %c0_56 = arith.constant 0 : index
    %64 = vector.load %arg4[%c0_54, %c0_55, %c0_56] : memref<1x44x544xbf16, #tpu.memory_space<vmem>>, vector<1x44x16xbf16>
    %65 = vector.shape_cast %64 : vector<1x44x16xbf16> to vector<44x16xbf16>
    %66 = vector.shape_cast %63 : vector<44x16xbf16> to vector<1x44x16xbf16>
    tpu.vector_store %arg4[%c0_54, %c0_55, %c0_56], %66 {strides = array<i32>} : memref<1x44x544xbf16, #tpu.memory_space<vmem>>, vector<1x44x16xbf16>,
    %c0_57 = arith.constant 0 : index
    %c0_58 = arith.constant 0 : index
    %c528 = arith.constant 528 : index
    %67 = vector.load %arg4[%c0_57, %c0_58, %c528] : memref<1x44x544xbf16, #tpu.memory_space<vmem>>, vector<1x44x16xbf16>
    %68 = vector.shape_cast %67 : vector<1x44x16xbf16> to vector<44x16xbf16>
    %69 = vector.shape_cast %63 : vector<44x16xbf16> to vector<1x44x16xbf16>
    tpu.vector_store %arg4[%c0_57, %c0_58, %c528], %69 {strides = array<i32>} : memref<1x44x544xbf16, #tpu.memory_space<vmem>>, vector<1x44x16xbf16>,
    return
  }
  func.func @transform_0(%arg0: i32) -> (i32, i32, i32) {
    %c0_i32 = arith.constant 0 : i32
    %c0_i32_0 = arith.constant 0 : i32
    %c0_i32_1 = arith.constant 0 : i32
    return %arg0, %c0_i32, %c0_i32_0 : i32, i32, i32
  }
  func.func @transform_1(%arg0: i32) -> (i32, i32, i32) {
    %c0_i32 = arith.constant 0 : i32
    %c0_i32_0 = arith.constant 0 : i32
    %c0_i32_1 = arith.constant 0 : i32
    %c0_i32_2 = arith.constant 0 : i32
    return %c0_i32, %c0_i32_0, %c0_i32_1 : i32, i32, i32
  }
  func.func @transform_2(%arg0: i32) -> (i32, i32) {
    %c0_i32 = arith.constant 0 : i32
    %c0_i32_0 = arith.constant 0 : i32
    %c0_i32_1 = arith.constant 0 : i32
    return %c0_i32, %c0_i32_0 : i32, i32
  }
  func.func @transform_3(%arg0: i32) -> (i32, i32, i32) {
    %c0_i32 = arith.constant 0 : i32
    %c0_i32_0 = arith.constant 0 : i32
    %c0_i32_1 = arith.constant 0 : i32
    return %arg0, %c0_i32, %c0_i32_0 : i32, i32, i32
  }
}

module attributes {stable_mosaic.version = 11 : i64} {
  func.func @_fc_kernel(%arg0: i32, %arg1: memref<48x320xbf16, #tpu.memory_space<vmem>>, %arg2: memref<320x128xbf16, #tpu.memory_space<vmem>>, %arg3: memref<1x128xf32, #tpu.memory_space<vmem>>, %arg4: memref<48x128xbf16, #tpu.memory_space<vmem>>) attributes {dimension_semantics = [#tpu.dimension_semantics<parallel>], iteration_bounds = array<i64: 1>, scalar_prefetch = 0 : i64, scratch_operands = 0 : i64, tpu.core_type = #tpu.core_type<tc>, window_params = [{transform_indices = @transform_0, window_bounds = array<i64: 48, 320>}, {pipeline_mode = #tpu.pipeline_mode<synchronous>, transform_indices = @transform_1, window_bounds = array<i64: 320, 128>}, {pipeline_mode = #tpu.pipeline_mode<synchronous>, transform_indices = @transform_2, window_bounds = array<i64: 1, 128>}, {transform_indices = @transform_3, window_bounds = array<i64: 48, 128>}]} {
    %c0 = arith.constant 0 : index
    %c0_0 = arith.constant 0 : index
    %0 = vector.load %arg1[%c0, %c0_0] : memref<48x320xbf16, #tpu.memory_space<vmem>>, vector<48x320xbf16>
    %c0_1 = arith.constant 0 : index
    %c0_2 = arith.constant 0 : index
    %1 = vector.load %arg2[%c0_1, %c0_2] : memref<320x128xbf16, #tpu.memory_space<vmem>>, vector<320x128xbf16>
    %cst = arith.constant dense<0.000000e+00> : vector<48x128xf32>
    %2 = tpu.matmul %0, %1, %cst {dimension_numbers = #tpu.dot_dimension_numbers<[1], [0], [0], [1], [0, 0, 1, 1], [], []>} : vector<48x320xbf16>, vector<320x128xbf16>, vector<48x128xf32> -> vector<48x128xf32>
    %c0_3 = arith.constant 0 : index
    %c0_4 = arith.constant 0 : index
    %3 = vector.load %arg3[%c0_3, %c0_4] : memref<1x128xf32, #tpu.memory_space<vmem>>, vector<1x128xf32>
    %4 = vector.broadcast %3 : vector<1x128xf32> to vector<48x128xf32>
    %5 = arith.addf %2, %4 : vector<48x128xf32>
    %6 = arith.truncf %5 : vector<48x128xf32> to vector<48x128xbf16>
    %c0_5 = arith.constant 0 : index
    %c0_6 = arith.constant 0 : index
    %7 = vector.load %arg4[%c0_5, %c0_6] : memref<48x128xbf16, #tpu.memory_space<vmem>>, vector<48x128xbf16>
    tpu.vector_store %arg4[%c0_5, %c0_6], %6 {strides = array<i32>} : memref<48x128xbf16, #tpu.memory_space<vmem>>, vector<48x128xbf16>,
    return
  }
  func.func @transform_0(%arg0: i32) -> (i32, i32) {
    %c0_i32 = arith.constant 0 : i32
    %c0_i32_0 = arith.constant 0 : i32
    return %arg0, %c0_i32 : i32, i32
  }
  func.func @transform_1(%arg0: i32) -> (i32, i32) {
    %c0_i32 = arith.constant 0 : i32
    %c0_i32_0 = arith.constant 0 : i32
    %c0_i32_1 = arith.constant 0 : i32
    return %c0_i32, %c0_i32_0 : i32, i32
  }
  func.func @transform_2(%arg0: i32) -> (i32, i32) {
    %c0_i32 = arith.constant 0 : i32
    %c0_i32_0 = arith.constant 0 : i32
    %c0_i32_1 = arith.constant 0 : i32
    return %c0_i32, %c0_i32_0 : i32, i32
  }
  func.func @transform_3(%arg0: i32) -> (i32, i32) {
    %c0_i32 = arith.constant 0 : i32
    %c0_i32_0 = arith.constant 0 : i32
    return %arg0, %c0_i32 : i32, i32
  }
}

</mosaic_0001>

<llo_original>
// kernel: _lambda_.7
$region0: #{_lambda_.7}
  #allocation0 [shape = 'u32[]', space=smem, size = 0x4, offset = 0x4, fixed_abs, tag = 'smem constant byte address 0x4 - core index']
  #allocation1 [shape = 'u32[72,128]{1,0:T(1,128)}', space=vmem, size = 0x9000, scoped, tag = 'internal scratch']
  %s0 = inlined_call_operand.vmem [shape: bf16[48,320], index: 0, kind: input, shape index: {}]
  %s1 = inlined_call_operand.hbm [shape: bf16[320,128], index: 1, kind: input, shape index: {}]
  %s2 = inlined_call_operand.hbm [shape: f32[1,128], index: 2, kind: input, shape index: {}]
  %s3 = inlined_call_operand.vmem [shape: bf16[48,128], index: 3, kind: output, shape index: {}]
  %s4 = sld [smem:[#allocation0]]
  $region30: #{_lambda_.7} parent=0
    _
  %s6 = ssub.s32 1, %s4
  %s7 = scalar_select 0, %s6, %s4
  $region1: #{_lambda_.7} parent=0
    #allocation2 [shape = 'u8[81920]{0}', space=vmem, size = 0x14000, scoped, tag = 'input window, operand 1, single buffered']
    #allocation3 [shape = 's32[1]{0}', space=sflag, size = 0x4, scoped, tag = 'scoped memory for _lambda_.7']
    #allocation4 [shape = 'u8[512]{0}', space=vmem, size = 0x400, scoped, tag = 'input window, operand 2, single buffered']
    #allocation5 [shape = 's32[1]{0}', space=sflag, size = 0x4, scoped, tag = 'scoped memory for _lambda_.7']
    %8 = vsyncpa [#allocation3], 0
    %9 = vsyncpa [#allocation5], 0
    // Predicated region
    $region2: #{_lambda_.7} parent=1 // pred_check
      _
    $region3: #{_lambda_.7} parent=1 // pred_check_branch
      %11 = sbr.rel (0) target = $region5
    $region4: #{_lambda_.7} parent=1 // pred_region
      _
    $region5: #{_lambda_.7} parent=1 // pred_fallthru
      _
    // Predicated region
    $region6: #{_lambda_.7} parent=1 // pred_check
      _
    $region7: #{_lambda_.7} parent=1 // pred_check_branch
      %13 = sbr.rel (0) target = $region9
    $region8: #{_lambda_.7} parent=1 // pred_region
      %15 = vsyncadd [#allocation3], 0
      %s16 = sshll.u32 %s1, 4
      %s17 = int_to_ptr.hbm [resolvable:$true] %s16
      %s18 = sshll.u32 [#allocation2], 4
      %s19 = int_to_ptr.vmem [resolvable:$true] %s18
      %24 = dma.hbm_to_vmem [thread:$0]  %s17, 2560, %s19, [#allocation3], 64, 64, 4
    $region9: #{_lambda_.7} parent=1 // pred_fallthru
      _
    // Predicated region
    $region10: #{_lambda_.7} parent=1 // pred_check
      _
    $region11: #{_lambda_.7} parent=1 // pred_check_branch
      %26 = sbr.rel (0) target = $region13
    $region12: #{_lambda_.7} parent=1 // pred_region
      %28 = vsyncadd [#allocation5], 0
      %s30 = sshll.u32 %s2, 4
      %s31 = int_to_ptr.hbm [resolvable:$true] %s30
      %s32 = sshll.u32 [#allocation4], 4
      %s33 = int_to_ptr.vmem [resolvable:$true] %s32
      %35 = dma.hbm_to_vmem [thread:$0]  %s31, 16, %s33, [#allocation5]
    $region13: #{_lambda_.7} parent=1 // pred_fallthru
      _
    // Predicated region
    $region14: #{_lambda_.7} parent=1 // pred_check
      _
    $region15: #{_lambda_.7} parent=1 // pred_check_branch
      %37 = sbr.rel (0) target = $region17
    $region16: #{_lambda_.7} parent=1 // pred_region
      %39 = dma.done [#allocation3], 2560
    $region17: #{_lambda_.7} parent=1 // pred_fallthru
      _
    // Predicated region
    $region18: #{_lambda_.7} parent=1 // pred_check
      _
    $region19: #{_lambda_.7} parent=1 // pred_check_branch
      %41 = sbr.rel (0) target = $region21
    $region20: #{_lambda_.7} parent=1 // pred_region
      %43 = dma.done [#allocation5], 16
    $region21: #{_lambda_.7} parent=1 // pred_fallthru
      _
    %v45 = vld [vmem:[%s0] sm:$0xff]
    %v46 = vld [vmem:[%s0 + $0x8] sm:$0xf]
    %v47 = vld [vmem:[%s0 + $0xc] sm:$0xff]
    %v48 = vld [vmem:[%s0 + $0x14] sm:$0xf]
    %v49 = vld [vmem:[%s0 + $0x18] sm:$0xff]
    %v50 = vld [vmem:[%s0 + $0x20] sm:$0xf]
    %v51 = vld [vmem:[%s0 + $0x24] sm:$0xff]
    %v52 = vld [vmem:[%s0 + $0x2c] sm:$0xf]
    %v53 = vld [vmem:[%s0 + $0x30] sm:$0xff]
    %v54 = vld [vmem:[%s0 + $0x38] sm:$0xf]
    %v55 = vld [vmem:[%s0 + $0x3c] sm:$0xff]
    %v56 = vld [vmem:[%s0 + $0x44] sm:$0xf]
    %v57 = vld [vmem:[#allocation2] sm:$0xf]
    %v58 = vld [vmem:[#allocation2 + $0x4] sm:$0xf]
    %v59 = vld [vmem:[#allocation2 + $0x8] sm:$0xf]
    %v60 = vld [vmem:[#allocation2 + $0xc] sm:$0xf]
    %v61 = vld [vmem:[#allocation2 + $0x10] sm:$0xf]
    %v62 = vld [vmem:[#allocation2 + $0x14] sm:$0xf]
    %v63 = vld [vmem:[#allocation2 + $0x18] sm:$0xf]
    %v64 = vld [vmem:[#allocation2 + $0x1c] sm:$0xf]
    %v65 = vld [vmem:[#allocation2 + $0x20] sm:$0xf]
    %v66 = vld [vmem:[#allocation2 + $0x24] sm:$0xf]
    %v67 = vld [vmem:[#allocation2 + $0x28] sm:$0xf]
    %v68 = vld [vmem:[#allocation2 + $0x2c] sm:$0xf]
    %v69 = vld [vmem:[#allocation2 + $0x30] sm:$0xf]
    %v70 = vld [vmem:[#allocation2 + $0x34] sm:$0xf]
    %v71 = vld [vmem:[#allocation2 + $0x38] sm:$0xf]
    %v72 = vld [vmem:[#allocation2 + $0x3c] sm:$0xf]
    %v73 = vld [vmem:[#allocation2 + $0x40] sm:$0xf]
    %v74 = vld [vmem:[#allocation2 + $0x44] sm:$0xf]
    %v75 = vld [vmem:[#allocation2 + $0x48] sm:$0xf]
    %v76 = vld [vmem:[#allocation2 + $0x4c] sm:$0xf]
    %v77 = vld [vmem:[#allocation2 + $0x50] sm:$0xf]
    %v78 = vld [vmem:[#allocation2 + $0x54] sm:$0xf]
    %v79 = vld [vmem:[#allocation2 + $0x58] sm:$0xf]
    %v80 = vld [vmem:[#allocation2 + $0x5c] sm:$0xf]
    %v81 = vld [vmem:[#allocation2 + $0x60] sm:$0xf]
    %v82 = vld [vmem:[#allocation2 + $0x64] sm:$0xf]
    %v83 = vld [vmem:[#allocation2 + $0x68] sm:$0xf]
    %v84 = vld [vmem:[#allocation2 + $0x6c] sm:$0xf]
    %v85 = vld [vmem:[#allocation2 + $0x70] sm:$0xf]
    %v86 = vld [vmem:[#allocation2 + $0x74] sm:$0xf]
    %v87 = vld [vmem:[#allocation2 + $0x78] sm:$0xf]
    %v88 = vld [vmem:[#allocation2 + $0x7c] sm:$0xf]
    %v89 = vld [vmem:[#allocation2 + $0x80] sm:$0xf]
    %v90 = vld [vmem:[#allocation2 + $0x84] sm:$0xf]
    %v91 = vld [vmem:[#allocation2 + $0x88] sm:$0xf]
    %v92 = vld [vmem:[#allocation2 + $0x8c] sm:$0xf]
    %v93 = vld [vmem:[#allocation2 + $0x90] sm:$0xf]
    %v94 = vld [vmem:[#allocation2 + $0x94] sm:$0xf]
    %v95 = vld [vmem:[#allocation2 + $0x98] sm:$0xf]
    %v96 = vld [vmem:[#allocation2 + $0x9c] sm:$0xf]
    %v97 = vld [vmem:[#allocation4] sm:$0x1]
    %v99 = vperm.slane %v97, 0
    %v113 = vunpack.c.l.b16 %v45
    %v114 = vunpack.c.h.b16 %v45
    %v115 = vunpack.c.l.b16 %v46
    %v116 = vunpack.c.l.b16 %v47
    %v117 = vunpack.c.h.b16 %v47
    %v118 = vunpack.c.l.b16 %v48
    %v119 = vunpack.c.l.b16 %v49
    %v120 = vunpack.c.h.b16 %v49
    %v121 = vunpack.c.l.b16 %v50
    %v122 = vunpack.c.l.b16 %v51
    %v123 = vunpack.c.h.b16 %v51
    %v124 = vunpack.c.l.b16 %v52
    %v125 = vunpack.c.l.b16 %v53
    %v126 = vunpack.c.h.b16 %v53
    %v127 = vunpack.c.l.b16 %v54
    %v128 = vunpack.c.l.b16 %v55
    %v129 = vunpack.c.h.b16 %v55
    %v130 = vunpack.c.l.b16 %v56
    %v131 = vpack.c.b16 %v116, %v113
    %v132 = vpack.c.b16 %v117, %v114
    %v133 = vpack.c.b16 %v118, %v115
    %v134 = vpack.c.b16 %v122, %v119
    %v135 = vpack.c.b16 %v123, %v120
    %v136 = vpack.c.b16 %v124, %v121
    %v137 = vpack.c.b16 %v128, %v125
    %v138 = vpack.c.b16 %v129, %v126
    %v139 = vpack.c.b16 %v130, %v127
    %v186 = vunpack.c.l.b16 %v57
    %v187 = vunpack.c.l.b16 %v58
    %v188 = vunpack.c.l.b16 %v59
    %v189 = vunpack.c.l.b16 %v60
    %v190 = vunpack.c.l.b16 %v61
    %v191 = vunpack.c.l.b16 %v62
    %v192 = vunpack.c.l.b16 %v63
    %v193 = vunpack.c.l.b16 %v64
    %v194 = vunpack.c.l.b16 %v65
    %v195 = vunpack.c.l.b16 %v66
    %v196 = vunpack.c.l.b16 %v67
    %v197 = vunpack.c.l.b16 %v68
    %v198 = vunpack.c.l.b16 %v69
    %v199 = vunpack.c.l.b16 %v70
    %v200 = vunpack.c.l.b16 %v71
    %v201 = vunpack.c.l.b16 %v72
    %v202 = vunpack.c.l.b16 %v73
    %v203 = vunpack.c.l.b16 %v74
    %v204 = vunpack.c.l.b16 %v75
    %v205 = vunpack.c.l.b16 %v76
    %v206 = vunpack.c.l.b16 %v77
    %v207 = vunpack.c.l.b16 %v78
    %v208 = vunpack.c.l.b16 %v79
    %v209 = vunpack.c.l.b16 %v80
    %v210 = vunpack.c.l.b16 %v81
    %v211 = vunpack.c.l.b16 %v82
    %v212 = vunpack.c.l.b16 %v83
    %v213 = vunpack.c.l.b16 %v84
    %v214 = vunpack.c.l.b16 %v85
    %v215 = vunpack.c.l.b16 %v86
    %v216 = vunpack.c.l.b16 %v87
    %v217 = vunpack.c.l.b16 %v88
    %v218 = vunpack.c.l.b16 %v89
    %v219 = vunpack.c.l.b16 %v90
    %v220 = vunpack.c.l.b16 %v91
    %v221 = vunpack.c.l.b16 %v92
    %v222 = vunpack.c.l.b16 %v93
    %v223 = vunpack.c.l.b16 %v94
    %v224 = vunpack.c.l.b16 %v95
    %v225 = vunpack.c.l.b16 %v96
    %v226 = vpack.c.b16 %v187, %v186
    %v227 = vpack.c.b16 %v189, %v188
    %v228 = vpack.c.b16 %v191, %v190
    %v229 = vpack.c.b16 %v193, %v192
    %v230 = vpack.c.b16 %v195, %v194
    %v231 = vpack.c.b16 %v197, %v196
    %v232 = vpack.c.b16 %v199, %v198
    %v233 = vpack.c.b16 %v201, %v200
    %v234 = vpack.c.b16 %v203, %v202
    %v235 = vpack.c.b16 %v205, %v204
    %v236 = vpack.c.b16 %v207, %v206
    %v237 = vpack.c.b16 %v209, %v208
    %v238 = vpack.c.b16 %v211, %v210
    %v239 = vpack.c.b16 %v213, %v212
    %v240 = vpack.c.b16 %v215, %v214
    %v241 = vpack.c.b16 %v217, %v216
    %v242 = vpack.c.b16 %v219, %v218
    %v243 = vpack.c.b16 %v221, %v220
    %v244 = vpack.c.b16 %v223, %v222
    %v245 = vpack.c.b16 %v225, %v224
    %vm266 = vcmask 523264
    %v268 = vsel %vm266, %v133, 0
    %v271 = vsel %vm266, %v136, 0
    %v274 = vsel %vm266, %v139, 0
    %276 = vmatpush.bf16.msra.mxu0 %v233
    %277 = vmatpush.bf16.msra.mxu0 %v232
    %278 = vmatpush.bf16.msra.mxu0 %v231
    %279 = vmatpush.bf16.msra.mxu0 %v230
    %280 = vmatpush.bf16.msra.mxu0 %v229
    %281 = vmatpush.bf16.msra.mxu0 %v228
    %282 = vmatpush.bf16.msra.mxu0 %v227
    %283 = vmatpush.bf16.msra.mxu0 %v226
    %284 = vmatmul.bf16.gmra.mxu0 %v131
    %v285 = vpop.f32.mrf.mxu0
    %v286 = vadd.f32 %v99, %v285
    %v287 = vpop.f32.mrf.mxu0
    %v288 = vadd.f32 %v99, %v287
    %289 = vmatmul.bf16.gmra.mxu0 %v134
    %v290 = vpop.f32.mrf.mxu0
    %v291 = vadd.f32 %v99, %v290
    %v292 = vpop.f32.mrf.mxu0
    %v293 = vadd.f32 %v99, %v292
    %294 = vmatmul.bf16.gmra.mxu0 %v137
    %v295 = vpop.f32.mrf.mxu0
    %v296 = vadd.f32 %v99, %v295
    %v297 = vpop.f32.mrf.mxu0
    %v298 = vadd.f32 %v99, %v297
    %299 = vdwg.mxu0
    %300 = vmatpush.bf16.msra.mxu0 %v241
    %301 = vmatpush.bf16.msra.mxu0 %v240
    %302 = vmatpush.bf16.msra.mxu0 %v239
    %303 = vmatpush.bf16.msra.mxu0 %v238
    %304 = vmatpush.bf16.msra.mxu0 %v237
    %305 = vmatpush.bf16.msra.mxu0 %v236
    %306 = vmatpush.bf16.msra.mxu0 %v235
    %307 = vmatpush.bf16.msra.mxu0 %v234
    %308 = vmatmul.bf16.gmra.mxu0 %v132
    %v309 = vpop.f32.mrf.mxu0
    %v310 = vadd.f32 %v286, %v309
    %v311 = vpop.f32.mrf.mxu0
    %v312 = vadd.f32 %v288, %v311
    %313 = vmatmul.bf16.gmra.mxu0 %v135
    %v314 = vpop.f32.mrf.mxu0
    %v315 = vadd.f32 %v291, %v314
    %v316 = vpop.f32.mrf.mxu0
    %v317 = vadd.f32 %v293, %v316
    %318 = vmatmul.bf16.gmra.mxu0 %v138
    %v319 = vpop.f32.mrf.mxu0
    %v320 = vadd.f32 %v296, %v319
    %v321 = vpop.f32.mrf.mxu0
    %v322 = vadd.f32 %v298, %v321
    %323 = vdwg.mxu0
    %324 = vmatpush.bf16.msra.mxu0 0
    %325 = vmatpush.bf16.msra.mxu0 0
    %326 = vmatpush.bf16.msra.mxu0 0
    %327 = vmatpush.bf16.msra.mxu0 0
    %328 = vmatpush.bf16.msra.mxu0 %v245
    %329 = vmatpush.bf16.msra.mxu0 %v244
    %330 = vmatpush.bf16.msra.mxu0 %v243
    %331 = vmatpush.bf16.msra.mxu0 %v242
    %332 = vmatmul.bf16.gmra.mxu0 %v268
    %v333 = vpop.f32.mrf.mxu0
    %v334 = vadd.f32 %v310, %v333
    %v335 = vpop.f32.mrf.mxu0
    %v336 = vadd.f32 %v312, %v335
    %337 = vmatmul.bf16.gmra.mxu0 %v271
    %v338 = vpop.f32.mrf.mxu0
    %v339 = vadd.f32 %v315, %v338
    %v340 = vpop.f32.mrf.mxu0
    %v341 = vadd.f32 %v317, %v340
    %342 = vmatmul.bf16.gmra.mxu0 %v274
    %v343 = vpop.f32.mrf.mxu0
    %v344 = vadd.f32 %v320, %v343
    %v345 = vpop.f32.mrf.mxu0
    %v346 = vadd.f32 %v322, %v345
    %347 = vdwg.mxu0
    %v348 = vpack.c.bf16 %v334, %v334
    %v349 = vpack.c.bf16 %v336, %v336
    %v350 = vpack.c.bf16 %v339, %v339
    %v351 = vpack.c.bf16 %v341, %v341
    %v352 = vpack.c.bf16 %v344, %v344
    %v353 = vpack.c.bf16 %v346, %v346
    %354 = vst [vmem:[%s3] sm:$0xf] %v348
    %355 = vst [vmem:[%s3 + $0x4] sm:$0xf] %v349
    %356 = vst [vmem:[%s3 + $0x8] sm:$0xf] %v350
    %357 = vst [vmem:[%s3 + $0xc] sm:$0xf] %v351
    %358 = vst [vmem:[%s3 + $0x10] sm:$0xf] %v352
    %359 = vst [vmem:[%s3 + $0x14] sm:$0xf] %v353
    // Predicated region
    $region22: #{_lambda_.7} parent=1 // pred_check
      _
    $region23: #{_lambda_.7} parent=1 // pred_check_branch
      %361 = sbr.rel (0) target = $region25
    $region24: #{_lambda_.7} parent=1 // pred_region
      _
    $region25: #{_lambda_.7} parent=1 // pred_fallthru
      _
    // Predicated region
    $region26: #{_lambda_.7} parent=1 // pred_check
      _
    $region27: #{_lambda_.7} parent=1 // pred_check_branch
      %363 = sbr.rel (0) target = $region29
    $region28: #{_lambda_.7} parent=1 // pred_region
      _
    $region29: #{_lambda_.7} parent=1 // pred_fallthru
      _
    %364 = vsyncpa [#allocation3], 1
    %365 = vsyncpa [#allocation5], 1

// kernel: _lambda_.4
$region0: #{_lambda_.4}
  #allocation0 [shape = 'u32[]', space=smem, size = 0x4, offset = 0x4, fixed_abs, tag = 'smem constant byte address 0x4 - core index']
  #allocation1 [shape = 'u32[72,128]{1,0:T(1,128)}', space=vmem, size = 0x9000, scoped, tag = 'internal scratch']
  %s0 = inlined_call_operand.vmem [shape: bf16[1,44,34], index: 0, kind: input, shape index: {}]
  %s1 = inlined_call_operand.hbm [shape: bf16[3,18,256], index: 1, kind: input, shape index: {}]
  %s2 = inlined_call_operand.hbm [shape: f32[1,256], index: 2, kind: input, shape index: {}]
  %s3 = inlined_call_operand.vmem [shape: bf16[1,44,544], index: 3, kind: output, shape index: {}]
  %s4 = sld [smem:[#allocation0]]
  $region30: #{_lambda_.4} parent=0
    _
  %s6 = ssub.s32 1, %s4
  %s7 = scalar_select 0, %s6, %s4
  $region1: #{_lambda_.4} parent=0
    #allocation2 [shape = 'u8[36864]{0}', space=vmem, size = 0x9000, scoped, tag = 'input window, operand 1, single buffered']
    #allocation3 [shape = 's32[1]{0}', space=sflag, size = 0x4, scoped, tag = 'scoped memory for _lambda_.4']
    #allocation4 [shape = 'u8[1024]{0}', space=vmem, size = 0x400, scoped, tag = 'input window, operand 2, single buffered']
    #allocation5 [shape = 's32[1]{0}', space=sflag, size = 0x4, scoped, tag = 'scoped memory for _lambda_.4']
    %8 = vsyncpa [#allocation3], 0
    %9 = vsyncpa [#allocation5], 0
    // Predicated region
    $region2: #{_lambda_.4} parent=1 // pred_check
      _
    $region3: #{_lambda_.4} parent=1 // pred_check_branch
      %11 = sbr.rel (0) target = $region5
    $region4: #{_lambda_.4} parent=1 // pred_region
      _
    $region5: #{_lambda_.4} parent=1 // pred_fallthru
      _
    // Predicated region
    $region6: #{_lambda_.4} parent=1 // pred_check
      _
    $region7: #{_lambda_.4} parent=1 // pred_check_branch
      %13 = sbr.rel (0) target = $region9
    $region8: #{_lambda_.4} parent=1 // pred_region
      %15 = vsyncadd [#allocation3], 0
      %s16 = sshll.u32 %s1, 4
      %s17 = int_to_ptr.hbm [resolvable:$true] %s16
      %s18 = sshll.u32 [#allocation2], 4
      %s19 = int_to_ptr.vmem [resolvable:$true] %s18
      %24 = dma.hbm_to_vmem [thread:$0]  %s17, 1152, %s19, [#allocation3], 128, 128, 8
    $region9: #{_lambda_.4} parent=1 // pred_fallthru
      _
    // Predicated region
    $region10: #{_lambda_.4} parent=1 // pred_check
      _
    $region11: #{_lambda_.4} parent=1 // pred_check_branch
      %26 = sbr.rel (0) target = $region13
    $region12: #{_lambda_.4} parent=1 // pred_region
      %28 = vsyncadd [#allocation5], 0
      %s30 = sshll.u32 %s2, 4
      %s31 = int_to_ptr.hbm [resolvable:$true] %s30
      %s32 = sshll.u32 [#allocation4], 4
      %s33 = int_to_ptr.vmem [resolvable:$true] %s32
      %35 = dma.hbm_to_vmem [thread:$0]  %s31, 32, %s33, [#allocation5]
    $region13: #{_lambda_.4} parent=1 // pred_fallthru
      _
    // Predicated region
    $region14: #{_lambda_.4} parent=1 // pred_check
      _
    $region15: #{_lambda_.4} parent=1 // pred_check_branch
      %37 = sbr.rel (0) target = $region17
    $region16: #{_lambda_.4} parent=1 // pred_region
      %39 = dma.done [#allocation3], 1152
    $region17: #{_lambda_.4} parent=1 // pred_fallthru
      _
    // Predicated region
    $region18: #{_lambda_.4} parent=1 // pred_check
      _
    $region19: #{_lambda_.4} parent=1 // pred_check_branch
      %41 = sbr.rel (0) target = $region21
    $region20: #{_lambda_.4} parent=1 // pred_region
      %43 = dma.done [#allocation5], 32
    $region21: #{_lambda_.4} parent=1 // pred_fallthru
      _
    %v45 = vld [vmem:[#allocation4] sm:$0x3]
    %v46 = vld [vmem:[%s0] sm:$0x8]
    %v47 = vld [vmem:[%s0 + $0x4] sm:$0xf]
    %v48 = vld [vmem:[%s0 + $0x8] sm:$0xf]
    %v49 = vld [vmem:[%s0 + $0xc] sm:$0xf]
    %v50 = vld [vmem:[%s0 + $0x10] sm:$0xf]
    %v51 = vld [vmem:[%s0 + $0x14] sm:$0x1]
    %v52 = vld [vmem:[#allocation2] sm:$0xff]
    %v53 = vld [vmem:[#allocation2 + $0x8] sm:$0xff]
    %v54 = vld [vmem:[#allocation2 + $0x10] sm:$0x11]
    %s55 = scalar_lea.vmem [#allocation2], 24
    %v56 = vld [vmem:[%s55] sm:$0xff]
    %v57 = vld [vmem:[%s55 + $0x8] sm:$0xff]
    %v58 = vld [vmem:[%s55 + $0x10] sm:$0x11]
    %v64 = vunpack.c.l.b16 %v47
    %v65 = vunpack.c.l.b16 %v48
    %v66 = vunpack.c.l.b16 %v49
    %v67 = vunpack.c.l.b16 %v50
    %v68 = vunpack.c.l.b16 %v51
    %v69 = vpack.c.b16 %v65, %v64
    %v70 = vpack.c.b16 %v67, %v66
    %v71 = vpack.c.b16 %v68, %v68
    %v75 = vunpack.c.l.b16 %v56
    %v76 = vunpack.c.h.b16 %v56
    %v77 = vunpack.c.l.b16 %v57
    %v78 = vunpack.c.h.b16 %v57
    %v79 = vunpack.c.l.b16 %v58
    %v80 = vunpack.c.h.b16 %v58
    %v81 = vpack.c.b16 %v77, %v75
    %v82 = vpack.c.b16 %v78, %v76
    %v83 = vpack.c.b16 %v79, %v79
    %v84 = vpack.c.b16 %v80, %v80
    %vm87 = vcmask 146432
    %v89 = vsel %vm87, %v69, 0
    %v92 = vsel %vm87, %v70, 0
    %v95 = vsel %vm87, %v71, 0
    %vm97 = vcmask 1040384
    %v99 = vsel %vm97, %v83, 0
    %v102 = vsel %vm97, %v84, 0
    %104 = vmatpush.bf16.msra.mxu0 0
    %105 = vmatpush.bf16.msra.mxu0 0
    %106 = vmatpush.bf16.msra.mxu0 0
    %107 = vmatpush.bf16.msra.mxu0 0
    %108 = vmatpush.bf16.msra.mxu0 0
    %109 = vmatpush.bf16.msra.mxu0 0
    %110 = vmatpush.bf16.msra.mxu0 %v99
    %111 = vmatpush.bf16.msra.mxu0 %v81
    %112 = vmatmul.bf16.gmra.mxu0 %v89
    %v113 = vpop.f32.mrf.mxu0
    %v114 = vadd.f32 0.0, %v113
    %v115 = vpop.f32.mrf.mxu0
    %v116 = vadd.f32 0.0, %v115
    %117 = vmatmul.bf16.gmra.mxu0 %v92
    %v118 = vpop.f32.mrf.mxu0
    %v119 = vadd.f32 0.0, %v118
    %v120 = vpop.f32.mrf.mxu0
    %v121 = vadd.f32 0.0, %v120
    %122 = vmatmul.bf16.gmra.mxu0 %v95
    %v123 = vpop.f32.mrf.mxu0
    %v124 = vadd.f32 0.0, %v123
    %v125 = vpop.f32.mrf.mxu0
    %126 = vdwg.mxu0
    %127 = vmatpush.bf16.msra.mxu0 0
    %128 = vmatpush.bf16.msra.mxu0 0
    %129 = vmatpush.bf16.msra.mxu0 0
    %130 = vmatpush.bf16.msra.mxu0 0
    %131 = vmatpush.bf16.msra.mxu0 0
    %132 = vmatpush.bf16.msra.mxu0 0
    %133 = vmatpush.bf16.msra.mxu0 %v102
    %134 = vmatpush.bf16.msra.mxu0 %v82
    %135 = vmatmul.bf16.gmra.mxu0 %v89
    %v136 = vpop.f32.mrf.mxu0
    %v137 = vadd.f32 0.0, %v136
    %v138 = vpop.f32.mrf.mxu0
    %v139 = vadd.f32 0.0, %v138
    %140 = vmatmul.bf16.gmra.mxu0 %v92
    %v141 = vpop.f32.mrf.mxu0
    %v142 = vadd.f32 0.0, %v141
    %v143 = vpop.f32.mrf.mxu0
    %v144 = vadd.f32 0.0, %v143
    %145 = vmatmul.bf16.gmra.mxu0 %v95
    %v146 = vpop.f32.mrf.mxu0
    %v147 = vadd.f32 0.0, %v146
    %v148 = vpop.f32.mrf.mxu0
    %149 = vdwg.mxu0
    %v151 = vunpack.c.l.b16 %v46
    %v152 = vpack.c.b16 %v64, %v151
    %v153 = vpack.c.b16 %v66, %v65
    %v154 = vpack.c.b16 %v68, %v67
    %vm155 = vsmask.f32 4352
    %v157 = vshrl.u32 %v152, 16
    %v159 = vrot.slane %v157, 3
    %v160 = vshll.u32 %v152, 16
    %v162 = vrot.slane %v160, 4
    %v163 = vor.u32 %v159, %v162
    %v165 = vshrl.u32 %v153, 16
    %v167 = vrot.slane %v165, 3
    %v168 = vshll.u32 %v153, 16
    %v170 = vrot.slane %v168, 4
    %v171 = vor.u32 %v167, %v170
    %v172 = vsel %vm155, %v163, %v171
    %v174 = vshrl.u32 %v154, 16
    %v176 = vrot.slane %v174, 3
    %v177 = vshll.u32 %v154, 16
    %v179 = vrot.slane %v177, 4
    %v180 = vor.u32 %v176, %v179
    %v181 = vsel %vm155, %v171, %v180
    %v185 = vunpack.c.l.b16 %v52
    %v186 = vunpack.c.h.b16 %v52
    %v187 = vunpack.c.l.b16 %v53
    %v188 = vunpack.c.h.b16 %v53
    %v189 = vunpack.c.l.b16 %v54
    %v190 = vunpack.c.h.b16 %v54
    %v191 = vpack.c.b16 %v187, %v185
    %v192 = vpack.c.b16 %v188, %v186
    %v193 = vpack.c.b16 %v189, %v189
    %v194 = vpack.c.b16 %v190, %v190
    %v198 = vsel %vm87, %v172, 0
    %v201 = vsel %vm87, %v181, 0
    %v204 = vsel %vm87, %v180, 0
    %v207 = vsel %vm97, %v193, 0
    %v210 = vsel %vm97, %v194, 0
    %212 = vmatpush.bf16.msra.mxu0 0
    %213 = vmatpush.bf16.msra.mxu0 0
    %214 = vmatpush.bf16.msra.mxu0 0
    %215 = vmatpush.bf16.msra.mxu0 0
    %216 = vmatpush.bf16.msra.mxu0 0
    %217 = vmatpush.bf16.msra.mxu0 0
    %218 = vmatpush.bf16.msra.mxu0 %v207
    %219 = vmatpush.bf16.msra.mxu0 %v191
    %220 = vmatmul.bf16.gmra.mxu0 %v198
    %v221 = vpop.f32.mrf.mxu0
    %v222 = vadd.f32 %v114, %v221
    %v223 = vpop.f32.mrf.mxu0
    %v224 = vadd.f32 %v116, %v223
    %225 = vmatmul.bf16.gmra.mxu0 %v201
    %v226 = vpop.f32.mrf.mxu0
    %v227 = vadd.f32 %v119, %v226
    %v228 = vpop.f32.mrf.mxu0
    %v229 = vadd.f32 %v121, %v228
    %230 = vmatmul.bf16.gmra.mxu0 %v204
    %v231 = vpop.f32.mrf.mxu0
    %v232 = vadd.f32 %v124, %v231
    %v233 = vpop.f32.mrf.mxu0
    %234 = vdwg.mxu0
    %235 = vmatpush.bf16.msra.mxu0 0
    %236 = vmatpush.bf16.msra.mxu0 0
    %237 = vmatpush.bf16.msra.mxu0 0
    %238 = vmatpush.bf16.msra.mxu0 0
    %239 = vmatpush.bf16.msra.mxu0 0
    %240 = vmatpush.bf16.msra.mxu0 0
    %241 = vmatpush.bf16.msra.mxu0 %v210
    %242 = vmatpush.bf16.msra.mxu0 %v192
    %243 = vmatmul.bf16.gmra.mxu0 %v198
    %v244 = vpop.f32.mrf.mxu0
    %v245 = vadd.f32 %v137, %v244
    %v246 = vpop.f32.mrf.mxu0
    %v247 = vadd.f32 %v139, %v246
    %248 = vmatmul.bf16.gmra.mxu0 %v201
    %v249 = vpop.f32.mrf.mxu0
    %v250 = vadd.f32 %v142, %v249
    %v251 = vpop.f32.mrf.mxu0
    %v252 = vadd.f32 %v144, %v251
    %253 = vmatmul.bf16.gmra.mxu0 %v204
    %v254 = vpop.f32.mrf.mxu0
    %v255 = vadd.f32 %v147, %v254
    %v256 = vpop.f32.mrf.mxu0
    %257 = vdwg.mxu0
    %v258 = vld [vmem:[%s0 + $0x14] sm:$0x3]
    %s259 = scalar_lea.vmem [#allocation2], 48
    %v260 = vld [vmem:[%s259] sm:$0xff]
    %v261 = vld [vmem:[%s259 + $0x8] sm:$0xff]
    %v262 = vld [vmem:[%s259 + $0x10] sm:$0x11]
    %v264 = vunpack.c.l.b16 %v258
    %v265 = vpack.c.b16 %v264, %v264
    %vm266 = vsmask.f32 7424
    %v267 = vshrl.u32 %v69, 16
    %v269 = vshll.u32 %v69, 16
    %v271 = vrot.slane %v269, 1
    %v272 = vor.u32 %v267, %v271
    %v273 = vshll.u32 %v70, 16
    %v275 = vrot.slane %v273, 1
    %v276 = vsel %vm266, %v272, %v275
    %v277 = vshrl.u32 %v70, 16
    %v279 = vor.u32 %v277, %v275
    %v281 = vshll.u32 %v265, 16
    %v283 = vrot.slane %v281, 1
    %v284 = vsel %vm266, %v279, %v283
    %v285 = vshrl.u32 %v265, 16
    %v287 = vor.u32 %v285, %v283
    %v291 = vunpack.c.l.b16 %v260
    %v292 = vunpack.c.h.b16 %v260
    %v293 = vunpack.c.l.b16 %v261
    %v294 = vunpack.c.h.b16 %v261
    %v295 = vunpack.c.l.b16 %v262
    %v296 = vunpack.c.h.b16 %v262
    %v297 = vpack.c.b16 %v293, %v291
    %v298 = vpack.c.b16 %v294, %v292
    %v299 = vpack.c.b16 %v295, %v295
    %v300 = vpack.c.b16 %v296, %v296
    %v304 = vsel %vm87, %v276, 0
    %v307 = vsel %vm87, %v284, 0
    %v310 = vsel %vm87, %v287, 0
    %v313 = vsel %vm97, %v299, 0
    %v316 = vsel %vm97, %v300, 0
    %318 = vmatpush.bf16.msra.mxu0 0
    %319 = vmatpush.bf16.msra.mxu0 0
    %320 = vmatpush.bf16.msra.mxu0 0
    %321 = vmatpush.bf16.msra.mxu0 0
    %322 = vmatpush.bf16.msra.mxu0 0
    %323 = vmatpush.bf16.msra.mxu0 0
    %324 = vmatpush.bf16.msra.mxu0 %v313
    %325 = vmatpush.bf16.msra.mxu0 %v297
    %326 = vmatmul.bf16.gmra.mxu0 %v304
    %v327 = vpop.f32.mrf.mxu0
    %v328 = vadd.f32 0.0, %v327
    %v329 = vpop.f32.mrf.mxu0
    %v330 = vadd.f32 0.0, %v329
    %331 = vmatmul.bf16.gmra.mxu0 %v307
    %v332 = vpop.f32.mrf.mxu0
    %v333 = vadd.f32 0.0, %v332
    %v334 = vpop.f32.mrf.mxu0
    %v335 = vadd.f32 0.0, %v334
    %336 = vmatmul.bf16.gmra.mxu0 %v310
    %v337 = vpop.f32.mrf.mxu0
    %v338 = vadd.f32 0.0, %v337
    %v339 = vpop.f32.mrf.mxu0
    %340 = vdwg.mxu0
    %341 = vmatpush.bf16.msra.mxu0 0
    %342 = vmatpush.bf16.msra.mxu0 0
    %343 = vmatpush.bf16.msra.mxu0 0
    %344 = vmatpush.bf16.msra.mxu0 0
    %345 = vmatpush.bf16.msra.mxu0 0
    %346 = vmatpush.bf16.msra.mxu0 0
    %347 = vmatpush.bf16.msra.mxu0 %v316
    %348 = vmatpush.bf16.msra.mxu0 %v298
    %349 = vmatmul.bf16.gmra.mxu0 %v304
    %v350 = vpop.f32.mrf.mxu0
    %v351 = vadd.f32 0.0, %v350
    %v352 = vpop.f32.mrf.mxu0
    %v353 = vadd.f32 0.0, %v352
    %354 = vmatmul.bf16.gmra.mxu0 %v307
    %v355 = vpop.f32.mrf.mxu0
    %v356 = vadd.f32 0.0, %v355
    %v357 = vpop.f32.mrf.mxu0
    %v358 = vadd.f32 0.0, %v357
    %359 = vmatmul.bf16.gmra.mxu0 %v310
    %v360 = vpop.f32.mrf.mxu0
    %v361 = vadd.f32 0.0, %v360
    %v362 = vpop.f32.mrf.mxu0
    %363 = vdwg.mxu0
    %v364 = vadd.f32 %v222, %v328
    %v365 = vadd.f32 %v245, %v351
    %v366 = vadd.f32 %v224, %v330
    %v367 = vadd.f32 %v247, %v353
    %v368 = vadd.f32 %v227, %v333
    %v369 = vadd.f32 %v250, %v356
    %v370 = vadd.f32 %v229, %v335
    %v371 = vadd.f32 %v252, %v358
    %v372 = vadd.f32 %v232, %v338
    %v373 = vadd.f32 %v255, %v361
    %v375 = vperm.slane %v45, 0
    %v376 = vperm.slane %v45, 1
    %v379 = vadd.f32 %v364, %v375
    %v380 = vadd.f32 %v365, %v376
    %v381 = vadd.f32 %v366, %v375
    %v382 = vadd.f32 %v367, %v376
    %v383 = vadd.f32 %v368, %v375
    %v384 = vadd.f32 %v369, %v376
    %v385 = vadd.f32 %v370, %v375
    %v386 = vadd.f32 %v371, %v376
    %v387 = vadd.f32 %v372, %v375
    %v388 = vadd.f32 %v373, %v376
    %v389 = vmax.f32 %v379, 0.0
    %v390 = vmax.f32 %v380, 0.0
    %v391 = vmax.f32 %v381, 0.0
    %v392 = vmax.f32 %v382, 0.0
    %v393 = vmax.f32 %v383, 0.0
    %v394 = vmax.f32 %v384, 0.0
    %v395 = vmax.f32 %v385, 0.0
    %v396 = vmax.f32 %v386, 0.0
    %v397 = vmax.f32 %v387, 0.0
    %v398 = vmax.f32 %v388, 0.0
    %v399 = vpack.c.bf16 %v390, %v389
    %v400 = vpack.c.bf16 %v392, %v391
    %v401 = vpack.c.bf16 %v394, %v393
    %v402 = vpack.c.bf16 %v396, %v395
    %v403 = vpack.c.bf16 %v398, %v397
    %409 = vrot.lane.b32.xlu0 %v399, 16
    %v410 = vpop.permute.xlu0 %409
    %411 = vrot.lane.b32.xlu0 %v400, 16
    %v412 = vpop.permute.xlu0 %411
    %413 = vrot.lane.b32.xlu0 %v401, 16
    %v414 = vpop.permute.xlu0 %413
    %415 = vrot.lane.b32.xlu0 %v402, 16
    %v416 = vpop.permute.xlu0 %415
    %417 = vrot.lane.b32.xlu0 %v403, 16
    %v418 = vpop.permute.xlu0 %417
    %v419 = vrot.slane %v410, 4
    %v420 = vrot.slane %v412, 4
    %v421 = vrot.slane %v414, 4
    %v422 = vrot.slane %v416, 4
    %v423 = vrot.slane %v418, 4
    %vm424 = vcmask 130048
    %v425 = vsel %vm424, %v419, %v410
    %v426 = vsel %vm424, %v420, %v412
    %v427 = vsel %vm424, %v421, %v414
    %v428 = vsel %vm424, %v422, %v416
    %v429 = vsel %vm424, %v423, %v418
    %vm440 = vcmask 1043584
    %vm441 = vcmask 1047556
    %vm442 = vmor %vm441, %vm440
    %443 = vst.msk [vmem:[%s3 + $0x14] sm:$0xff] %vm442, %v425
    %vm444 = vcmask 125952
    %445 = vst.msk [vmem:[%s3 + $0x1c] sm:$0xf] %vm444, %v419
    %446 = vst.msk [vmem:[%s3 + $0x28] sm:$0xff] %vm442, %v426
    %447 = vst.msk [vmem:[%s3 + $0x30] sm:$0xf] %vm444, %v420
    %448 = vst.msk [vmem:[%s3 + $0x3c] sm:$0xff] %vm442, %v427
    %449 = vst.msk [vmem:[%s3 + $0x44] sm:$0xf] %vm444, %v421
    %450 = vst.msk [vmem:[%s3 + $0x50] sm:$0xff] %vm442, %v428
    %451 = vst.msk [vmem:[%s3 + $0x58] sm:$0xf] %vm444, %v422
    %vm452 = vcmask 1040512
    %vm453 = vcmask 1044484
    %vm454 = vmor %vm453, %vm452
    %455 = vst.msk [vmem:[%s3 + $0x64] sm:$0x11] %vm454, %v429
    %vm456 = vcmask 122880
    %457 = vst.msk [vmem:[%s3 + $0x6c] sm:$0x1] %vm456, %v423
    %v458 = vld [vmem:[%s0] sm:$0x8]
    %v459 = vld [vmem:[%s0 + $0x4] sm:$0xf]
    %v460 = vld [vmem:[%s0 + $0x8] sm:$0xf]
    %v461 = vld [vmem:[%s0 + $0xc] sm:$0xf]
    %v462 = vld [vmem:[%s0 + $0x10] sm:$0xf]
    %v463 = vld [vmem:[%s0 + $0x14] sm:$0x1]
    %v464 = vld [vmem:[#allocation2] sm:$0xff]
    %v465 = vld [vmem:[#allocation2 + $0x8] sm:$0xff]
    %v466 = vld [vmem:[#allocation2 + $0x10] sm:$0x11]
    %v467 = vld [vmem:[%s55] sm:$0xff]
    %v468 = vld [vmem:[%s55 + $0x8] sm:$0xff]
    %v469 = vld [vmem:[%s55 + $0x10] sm:$0x11]
    %v475 = vunpack.c.l.b16 %v459
    %v476 = vunpack.c.l.b16 %v460
    %v477 = vunpack.c.l.b16 %v461
    %v478 = vunpack.c.l.b16 %v462
    %v479 = vunpack.c.l.b16 %v463
    %v480 = vpack.c.b16 %v476, %v475
    %v481 = vpack.c.b16 %v478, %v477
    %v482 = vpack.c.b16 %v479, %v479
    %483 = vrot.lane.b32.xlu0 %v480, 112
    %v484 = vpop.permute.xlu0 %483
    %485 = vrot.lane.b32.xlu0 %v481, 112
    %v486 = vpop.permute.xlu0 %485
    %487 = vrot.lane.b32.xlu0 %v482, 112
    %v488 = vpop.permute.xlu0 %487
    %v492 = vunpack.c.l.b16 %v467
    %v493 = vunpack.c.h.b16 %v467
    %v494 = vunpack.c.l.b16 %v468
    %v495 = vunpack.c.h.b16 %v468
    %v496 = vunpack.c.l.b16 %v469
    %v497 = vunpack.c.h.b16 %v469
    %v498 = vpack.c.b16 %v494, %v492
    %v499 = vpack.c.b16 %v495, %v493
    %v500 = vpack.c.b16 %v496, %v496
    %v501 = vpack.c.b16 %v497, %v497
    %v505 = vsel %vm87, %v484, 0
    %v508 = vsel %vm87, %v486, 0
    %v511 = vsel %vm87, %v488, 0
    %v514 = vsel %vm97, %v500, 0
    %v517 = vsel %vm97, %v501, 0
    %519 = vmatpush.bf16.msra.mxu0 0
    %520 = vmatpush.bf16.msra.mxu0 0
    %521 = vmatpush.bf16.msra.mxu0 0
    %522 = vmatpush.bf16.msra.mxu0 0
    %523 = vmatpush.bf16.msra.mxu0 0
    %524 = vmatpush.bf16.msra.mxu0 0
    %525 = vmatpush.bf16.msra.mxu0 %v514
    %526 = vmatpush.bf16.msra.mxu0 %v498
    %527 = vmatmul.bf16.gmra.mxu0 %v505
    %v528 = vpop.f32.mrf.mxu0
    %v529 = vadd.f32 0.0, %v528
    %v530 = vpop.f32.mrf.mxu0
    %v531 = vadd.f32 0.0, %v530
    %532 = vmatmul.bf16.gmra.mxu0 %v508
    %v533 = vpop.f32.mrf.mxu0
    %v534 = vadd.f32 0.0, %v533
    %v535 = vpop.f32.mrf.mxu0
    %v536 = vadd.f32 0.0, %v535
    %537 = vmatmul.bf16.gmra.mxu0 %v511
    %v538 = vpop.f32.mrf.mxu0
    %v539 = vadd.f32 0.0, %v538
    %v540 = vpop.f32.mrf.mxu0
    %541 = vdwg.mxu0
    %542 = vmatpush.bf16.msra.mxu0 0
    %543 = vmatpush.bf16.msra.mxu0 0
    %544 = vmatpush.bf16.msra.mxu0 0
    %545 = vmatpush.bf16.msra.mxu0 0
    %546 = vmatpush.bf16.msra.mxu0 0
    %547 = vmatpush.bf16.msra.mxu0 0
    %548 = vmatpush.bf16.msra.mxu0 %v517
    %549 = vmatpush.bf16.msra.mxu0 %v499
    %550 = vmatmul.bf16.gmra.mxu0 %v505
    %v551 = vpop.f32.mrf.mxu0
    %v552 = vadd.f32 0.0, %v551
    %v553 = vpop.f32.mrf.mxu0
    %v554 = vadd.f32 0.0, %v553
    %555 = vmatmul.bf16.gmra.mxu0 %v508
    %v556 = vpop.f32.mrf.mxu0
    %v557 = vadd.f32 0.0, %v556
    %v558 = vpop.f32.mrf.mxu0
    %v559 = vadd.f32 0.0, %v558
    %560 = vmatmul.bf16.gmra.mxu0 %v511
    %v561 = vpop.f32.mrf.mxu0
    %v562 = vadd.f32 0.0, %v561
    %v563 = vpop.f32.mrf.mxu0
    %564 = vdwg.mxu0
    %v566 = vunpack.c.l.b16 %v458
    %v567 = vpack.c.b16 %v475, %v566
    %v568 = vpack.c.b16 %v477, %v476
    %v569 = vpack.c.b16 %v479, %v478
    %v571 = vshrl.u32 %v567, 16
    %v573 = vrot.slane %v571, 3
    %v574 = vshll.u32 %v567, 16
    %v576 = vrot.slane %v574, 4
    %v577 = vor.u32 %v573, %v576
    %v579 = vshrl.u32 %v568, 16
    %v581 = vrot.slane %v579, 3
    %v582 = vshll.u32 %v568, 16
    %v584 = vrot.slane %v582, 4
    %v585 = vor.u32 %v581, %v584
    %v586 = vsel %vm155, %v577, %v585
    %v588 = vshrl.u32 %v569, 16
    %v590 = vrot.slane %v588, 3
    %v591 = vshll.u32 %v569, 16
    %v593 = vrot.slane %v591, 4
    %v594 = vor.u32 %v590, %v593
    %v595 = vsel %vm155, %v585, %v594
    %596 = vrot.lane.b32.xlu0 %v586, 112
    %v597 = vpop.permute.xlu0 %596
    %598 = vrot.lane.b32.xlu0 %v595, 112
    %v599 = vpop.permute.xlu0 %598
    %600 = vrot.lane.b32.xlu0 %v594, 112
    %v601 = vpop.permute.xlu0 %600
    %v605 = vunpack.c.l.b16 %v464
    %v606 = vunpack.c.h.b16 %v464
    %v607 = vunpack.c.l.b16 %v465
    %v608 = vunpack.c.h.b16 %v465
    %v609 = vunpack.c.l.b16 %v466
    %v610 = vunpack.c.h.b16 %v466
    %v611 = vpack.c.b16 %v607, %v605
    %v612 = vpack.c.b16 %v608, %v606
    %v613 = vpack.c.b16 %v609, %v609
    %v614 = vpack.c.b16 %v610, %v610
    %v618 = vsel %vm87, %v597, 0
    %v621 = vsel %vm87, %v599, 0
    %v624 = vsel %vm87, %v601, 0
    %v627 = vsel %vm97, %v613, 0
    %v630 = vsel %vm97, %v614, 0
    %632 = vmatpush.bf16.msra.mxu0 0
    %633 = vmatpush.bf16.msra.mxu0 0
    %634 = vmatpush.bf16.msra.mxu0 0
    %635 = vmatpush.bf16.msra.mxu0 0
    %636 = vmatpush.bf16.msra.mxu0 0
    %637 = vmatpush.bf16.msra.mxu0 0
    %638 = vmatpush.bf16.msra.mxu0 %v627
    %639 = vmatpush.bf16.msra.mxu0 %v611
    %640 = vmatmul.bf16.gmra.mxu0 %v618
    %v641 = vpop.f32.mrf.mxu0
    %v642 = vadd.f32 %v529, %v641
    %v643 = vpop.f32.mrf.mxu0
    %v644 = vadd.f32 %v531, %v643
    %645 = vmatmul.bf16.gmra.mxu0 %v621
    %v646 = vpop.f32.mrf.mxu0
    %v647 = vadd.f32 %v534, %v646
    %v648 = vpop.f32.mrf.mxu0
    %v649 = vadd.f32 %v536, %v648
    %650 = vmatmul.bf16.gmra.mxu0 %v624
    %v651 = vpop.f32.mrf.mxu0
    %v652 = vadd.f32 %v539, %v651
    %v653 = vpop.f32.mrf.mxu0
    %654 = vdwg.mxu0
    %655 = vmatpush.bf16.msra.mxu0 0
    %656 = vmatpush.bf16.msra.mxu0 0
    %657 = vmatpush.bf16.msra.mxu0 0
    %658 = vmatpush.bf16.msra.mxu0 0
    %659 = vmatpush.bf16.msra.mxu0 0
    %660 = vmatpush.bf16.msra.mxu0 0
    %661 = vmatpush.bf16.msra.mxu0 %v630
    %662 = vmatpush.bf16.msra.mxu0 %v612
    %663 = vmatmul.bf16.gmra.mxu0 %v618
    %v664 = vpop.f32.mrf.mxu0
    %v665 = vadd.f32 %v552, %v664
    %v666 = vpop.f32.mrf.mxu0
    %v667 = vadd.f32 %v554, %v666
    %668 = vmatmul.bf16.gmra.mxu0 %v621
    %v669 = vpop.f32.mrf.mxu0
    %v670 = vadd.f32 %v557, %v669
    %v671 = vpop.f32.mrf.mxu0
    %v672 = vadd.f32 %v559, %v671
    %673 = vmatmul.bf16.gmra.mxu0 %v624
    %v674 = vpop.f32.mrf.mxu0
    %v675 = vadd.f32 %v562, %v674
    %v676 = vpop.f32.mrf.mxu0
    %677 = vdwg.mxu0
    %v678 = vld [vmem:[%s0 + $0x14] sm:$0x3]
    %v679 = vld [vmem:[%s259] sm:$0xff]
    %v680 = vld [vmem:[%s259 + $0x8] sm:$0xff]
    %v681 = vld [vmem:[%s259 + $0x10] sm:$0x11]
    %v683 = vunpack.c.l.b16 %v678
    %v684 = vpack.c.b16 %v683, %v683
    %v686 = vshrl.u32 %v480, 16
    %v688 = vshll.u32 %v480, 16
    %v690 = vrot.slane %v688, 1
    %v691 = vor.u32 %v686, %v690
    %v693 = vshll.u32 %v481, 16
    %v695 = vrot.slane %v693, 1
    %v696 = vsel %vm266, %v691, %v695
    %v697 = vshrl.u32 %v481, 16
    %v699 = vor.u32 %v697, %v695
    %v701 = vshll.u32 %v684, 16
    %v703 = vrot.slane %v701, 1
    %v704 = vsel %vm266, %v699, %v703
    %v705 = vshrl.u32 %v684, 16
    %v707 = vor.u32 %v705, %v703
    %708 = vrot.lane.b32.xlu0 %v696, 112
    %v709 = vpop.permute.xlu0 %708
    %710 = vrot.lane.b32.xlu0 %v704, 112
    %v711 = vpop.permute.xlu0 %710
    %712 = vrot.lane.b32.xlu0 %v707, 112
    %v713 = vpop.permute.xlu0 %712
    %v717 = vunpack.c.l.b16 %v679
    %v718 = vunpack.c.h.b16 %v679
    %v719 = vunpack.c.l.b16 %v680
    %v720 = vunpack.c.h.b16 %v680
    %v721 = vunpack.c.l.b16 %v681
    %v722 = vunpack.c.h.b16 %v681
    %v723 = vpack.c.b16 %v719, %v717
    %v724 = vpack.c.b16 %v720, %v718
    %v725 = vpack.c.b16 %v721, %v721
    %v726 = vpack.c.b16 %v722, %v722
    %v730 = vsel %vm87, %v709, 0
    %v733 = vsel %vm87, %v711, 0
    %v736 = vsel %vm87, %v713, 0
    %v739 = vsel %vm97, %v725, 0
    %v742 = vsel %vm97, %v726, 0
    %744 = vmatpush.bf16.msra.mxu0 0
    %745 = vmatpush.bf16.msra.mxu0 0
    %746 = vmatpush.bf16.msra.mxu0 0
    %747 = vmatpush.bf16.msra.mxu0 0
    %748 = vmatpush.bf16.msra.mxu0 0
    %749 = vmatpush.bf16.msra.mxu0 0
    %750 = vmatpush.bf16.msra.mxu0 %v739
    %751 = vmatpush.bf16.msra.mxu0 %v723
    %752 = vmatmul.bf16.gmra.mxu0 %v730
    %v753 = vpop.f32.mrf.mxu0
    %v754 = vadd.f32 0.0, %v753
    %v755 = vpop.f32.mrf.mxu0
    %v756 = vadd.f32 0.0, %v755
    %757 = vmatmul.bf16.gmra.mxu0 %v733
    %v758 = vpop.f32.mrf.mxu0
    %v759 = vadd.f32 0.0, %v758
    %v760 = vpop.f32.mrf.mxu0
    %v761 = vadd.f32 0.0, %v760
    %762 = vmatmul.bf16.gmra.mxu0 %v736
    %v763 = vpop.f32.mrf.mxu0
    %v764 = vadd.f32 0.0, %v763
    %v765 = vpop.f32.mrf.mxu0
    %766 = vdwg.mxu0
    %767 = vmatpush.bf16.msra.mxu0 0
    %768 = vmatpush.bf16.msra.mxu0 0
    %769 = vmatpush.bf16.msra.mxu0 0
    %770 = vmatpush.bf16.msra.mxu0 0
    %771 = vmatpush.bf16.msra.mxu0 0
    %772 = vmatpush.bf16.msra.mxu0 0
    %773 = vmatpush.bf16.msra.mxu0 %v742
    %774 = vmatpush.bf16.msra.mxu0 %v724
    %775 = vmatmul.bf16.gmra.mxu0 %v730
    %v776 = vpop.f32.mrf.mxu0
    %v777 = vadd.f32 0.0, %v776
    %v778 = vpop.f32.mrf.mxu0
    %v779 = vadd.f32 0.0, %v778
    %780 = vmatmul.bf16.gmra.mxu0 %v733
    %v781 = vpop.f32.mrf.mxu0
    %v782 = vadd.f32 0.0, %v781
    %v783 = vpop.f32.mrf.mxu0
    %v784 = vadd.f32 0.0, %v783
    %785 = vmatmul.bf16.gmra.mxu0 %v736
    %v786 = vpop.f32.mrf.mxu0
    %v787 = vadd.f32 0.0, %v786
    %v788 = vpop.f32.mrf.mxu0
    %789 = vdwg.mxu0
    %v790 = vadd.f32 %v642, %v754
    %v791 = vadd.f32 %v665, %v777
    %v792 = vadd.f32 %v644, %v756
    %v793 = vadd.f32 %v667, %v779
    %v794 = vadd.f32 %v647, %v759
    %v795 = vadd.f32 %v670, %v782
    %v796 = vadd.f32 %v649, %v761
    %v797 = vadd.f32 %v672, %v784
    %v798 = vadd.f32 %v652, %v764
    %v799 = vadd.f32 %v675, %v787
    %v800 = vadd.f32 %v790, %v375
    %v801 = vadd.f32 %v791, %v376
    %v802 = vadd.f32 %v792, %v375
    %v803 = vadd.f32 %v793, %v376
    %v804 = vadd.f32 %v794, %v375
    %v805 = vadd.f32 %v795, %v376
    %v806 = vadd.f32 %v796, %v375
    %v807 = vadd.f32 %v797, %v376
    %v808 = vadd.f32 %v798, %v375
    %v809 = vadd.f32 %v799, %v376
    %v810 = vmax.f32 %v800, 0.0
    %v811 = vmax.f32 %v801, 0.0
    %v812 = vmax.f32 %v802, 0.0
    %v813 = vmax.f32 %v803, 0.0
    %v814 = vmax.f32 %v804, 0.0
    %v815 = vmax.f32 %v805, 0.0
    %v816 = vmax.f32 %v806, 0.0
    %v817 = vmax.f32 %v807, 0.0
    %v818 = vmax.f32 %v808, 0.0
    %v819 = vmax.f32 %v809, 0.0
    %v820 = vpack.c.bf16 %v811, %v810
    %v821 = vpack.c.bf16 %v813, %v812
    %v822 = vpack.c.bf16 %v815, %v814
    %v823 = vpack.c.bf16 %v817, %v816
    %v824 = vpack.c.bf16 %v819, %v818
    %830 = vrot.lane.b32.xlu0 %v820, 16
    %v831 = vpop.permute.xlu0 %830
    %832 = vrot.lane.b32.xlu0 %v821, 16
    %v833 = vpop.permute.xlu0 %832
    %834 = vrot.lane.b32.xlu0 %v822, 16
    %v835 = vpop.permute.xlu0 %834
    %836 = vrot.lane.b32.xlu0 %v823, 16
    %v837 = vpop.permute.xlu0 %836
    %838 = vrot.lane.b32.xlu0 %v824, 16
    %v839 = vpop.permute.xlu0 %838
    %v840 = vrot.slane %v831, 4
    %v841 = vrot.slane %v833, 4
    %v842 = vrot.slane %v835, 4
    %v843 = vrot.slane %v837, 4
    %v844 = vrot.slane %v839, 4
    %v845 = vsel %vm424, %v840, %v831
    %v846 = vsel %vm424, %v841, %v833
    %v847 = vsel %vm424, %v842, %v835
    %v848 = vsel %vm424, %v843, %v837
    %v849 = vsel %vm424, %v844, %v839
    %860 = vst.msk [vmem:[%s3 + $0x1c] sm:$0xff] %vm442, %v845
    %861 = vst.msk [vmem:[%s3 + $0x24] sm:$0xf] %vm444, %v840
    %862 = vst.msk [vmem:[%s3 + $0x30] sm:$0xff] %vm442, %v846
    %863 = vst.msk [vmem:[%s3 + $0x38] sm:$0xf] %vm444, %v841
    %864 = vst.msk [vmem:[%s3 + $0x44] sm:$0xff] %vm442, %v847
    %865 = vst.msk [vmem:[%s3 + $0x4c] sm:$0xf] %vm444, %v842
    %866 = vst.msk [vmem:[%s3 + $0x58] sm:$0xff] %vm442, %v848
    %867 = vst.msk [vmem:[%s3 + $0x60] sm:$0xf] %vm444, %v843
    %868 = vst.msk [vmem:[%s3 + $0x6c] sm:$0x11] %vm454, %v849
    %869 = vst.msk [vmem:[%s3 + $0x74] sm:$0x1] %vm456, %v844
    %870 = vst [vmem:[%s3] sm:$0xff] 0
    %871 = vst [vmem:[%s3 + $0x8] sm:$0xff] 0
    %vm872 = vcmask 257024
    %873 = vst.msk [vmem:[%s3 + $0x10] sm:$0xf] %vm872, 0
    %874 = vst [vmem:[%s3 + $0x3c] sm:$0x11] 0
    %875 = vst [vmem:[%s3 + $0x44] sm:$0x11] 0
    %vm876 = vcmask 253952
    %877 = vst.msk [vmem:[%s3 + $0x4c] sm:$0x1] %vm876, 0
    %878 = vst [vmem:[%s3 + $0x64] sm:$0x22] 0
    %879 = vst [vmem:[%s3 + $0x6c] sm:$0x22] 0
    %vm880 = vcmask 254977
    %881 = vst.msk [vmem:[%s3 + $0x74] sm:$0x2] %vm880, 0
    %882 = vst.msk [vmem:[%s3] sm:$0xf] %vm444, 0
    %883 = vst.msk [vmem:[%s3 + $0x14] sm:$0xf] %vm444, 0
    %884 = vst.msk [vmem:[%s3 + $0x28] sm:$0xf] %vm444, 0
    %885 = vst.msk [vmem:[%s3 + $0x3c] sm:$0xf] %vm444, 0
    %886 = vst.msk [vmem:[%s3 + $0x50] sm:$0xf] %vm444, 0
    %vm887 = vcmask 123904
    %888 = vst.msk [vmem:[%s3 + $0x64] sm:$0x3] %vm887, 0
    %vm889 = vcmask 257152
    %890 = vst.msk [vmem:[%s3 + $0x10] sm:$0xf] %vm889, 0
    %891 = vst.msk [vmem:[%s3 + $0x24] sm:$0xf] %vm889, 0
    %892 = vst.msk [vmem:[%s3 + $0x38] sm:$0xf] %vm889, 0
    %893 = vst.msk [vmem:[%s3 + $0x4c] sm:$0xf] %vm889, 0
    %894 = vst.msk [vmem:[%s3 + $0x60] sm:$0xf] %vm889, 0
    %vm895 = vcmask 255104
    %896 = vst.msk [vmem:[%s3 + $0x74] sm:$0x3] %vm895, 0
    // Predicated region
    $region22: #{_lambda_.4} parent=1 // pred_check
      _
    $region23: #{_lambda_.4} parent=1 // pred_check_branch
      %898 = sbr.rel (0) target = $region25
    $region24: #{_lambda_.4} parent=1 // pred_region
      _
    $region25: #{_lambda_.4} parent=1 // pred_fallthru
      _
    // Predicated region
    $region26: #{_lambda_.4} parent=1 // pred_check
      _
    $region27: #{_lambda_.4} parent=1 // pred_check_branch
      %900 = sbr.rel (0) target = $region29
    $region28: #{_lambda_.4} parent=1 // pred_region
      _
    $region29: #{_lambda_.4} parent=1 // pred_fallthru
      _
    %901 = vsyncpa [#allocation3], 1
    %902 = vsyncpa [#allocation5], 1

// kernel: _lambda_.6
$region0: #{_lambda_.6}
  #allocation0 [shape = 'u32[]', space=smem, size = 0x4, offset = 0x4, fixed_abs, tag = 'smem constant byte address 0x4 - core index']
  #allocation1 [shape = 'u32[72,128]{1,0:T(1,128)}', space=vmem, size = 0x9000, scoped, tag = 'internal scratch']
  %s0 = inlined_call_operand.vmem [shape: bf16[1,44,288], index: 0, kind: input, shape index: {}]
  %s1 = inlined_call_operand.hbm [shape: bf16[6,288,256], index: 1, kind: input, shape index: {}]
  %s2 = inlined_call_operand.hbm [shape: f32[1,256], index: 2, kind: input, shape index: {}]
  %s3 = inlined_call_operand.vmem [shape: bf16[1,44,320], index: 3, kind: output, shape index: {}]
  %s4 = sld [smem:[#allocation0]]
  $region30: #{_lambda_.6} parent=0
    _
  %s6 = ssub.s32 1, %s4
  %s7 = scalar_select 0, %s6, %s4
  $region1: #{_lambda_.6} parent=0
    #allocation2 [shape = 'u8[884736]{0}', space=vmem, size = 0xd8000, scoped, tag = 'input window, operand 1, single buffered']
    #allocation3 [shape = 's32[1]{0}', space=sflag, size = 0x4, scoped, tag = 'scoped memory for _lambda_.6']
    #allocation4 [shape = 'u8[1024]{0}', space=vmem, size = 0x400, scoped, tag = 'input window, operand 2, single buffered']
    #allocation5 [shape = 's32[1]{0}', space=sflag, size = 0x4, scoped, tag = 'scoped memory for _lambda_.6']
    %8 = vsyncpa [#allocation3], 0
    %9 = vsyncpa [#allocation5], 0
    // Predicated region
    $region2: #{_lambda_.6} parent=1 // pred_check
      _
    $region3: #{_lambda_.6} parent=1 // pred_check_branch
      %11 = sbr.rel (0) target = $region5
    $region4: #{_lambda_.6} parent=1 // pred_region
      _
    $region5: #{_lambda_.6} parent=1 // pred_fallthru
      _
    // Predicated region
    $region6: #{_lambda_.6} parent=1 // pred_check
      _
    $region7: #{_lambda_.6} parent=1 // pred_check_branch
      %13 = sbr.rel (0) target = $region9
    $region8: #{_lambda_.6} parent=1 // pred_region
      %15 = vsyncadd [#allocation3], 0
      %s16 = sshll.u32 %s1, 4
      %s17 = int_to_ptr.hbm [resolvable:$true] %s16
      %s18 = sshll.u32 [#allocation2], 4
      %s19 = int_to_ptr.vmem [resolvable:$true] %s18
      %24 = dma.hbm_to_vmem [thread:$0]  %s17, 27648, %s19, [#allocation3], 128, 128, 8
    $region9: #{_lambda_.6} parent=1 // pred_fallthru
      _
    // Predicated region
    $region10: #{_lambda_.6} parent=1 // pred_check
      _
    $region11: #{_lambda_.6} parent=1 // pred_check_branch
      %26 = sbr.rel (0) target = $region13
    $region12: #{_lambda_.6} parent=1 // pred_region
      %28 = vsyncadd [#allocation5], 0
      %s30 = sshll.u32 %s2, 4
      %s31 = int_to_ptr.hbm [resolvable:$true] %s30
      %s32 = sshll.u32 [#allocation4], 4
      %s33 = int_to_ptr.vmem [resolvable:$true] %s32
      %35 = dma.hbm_to_vmem [thread:$0]  %s31, 32, %s33, [#allocation5]
    $region13: #{_lambda_.6} parent=1 // pred_fallthru
      _
    // Predicated region
    $region14: #{_lambda_.6} parent=1 // pred_check
      _
    $region15: #{_lambda_.6} parent=1 // pred_check_branch
      %37 = sbr.rel (0) target = $region17
    $region16: #{_lambda_.6} parent=1 // pred_region
      %39 = dma.done [#allocation3], 27648
    $region17: #{_lambda_.6} parent=1 // pred_fallthru
      _
    // Predicated region
    $region18: #{_lambda_.6} parent=1 // pred_check
      _
    $region19: #{_lambda_.6} parent=1 // pred_check_branch
      %41 = sbr.rel (0) target = $region21
    $region20: #{_lambda_.6} parent=1 // pred_region
      %43 = dma.done [#allocation5], 32
    $region21: #{_lambda_.6} parent=1 // pred_fallthru
      _
    %v45 = vld [vmem:[#allocation4] sm:$0x3]
    %v46 = vld [vmem:[%s0] sm:$0x88]
    %v47 = vld [vmem:[%s0 + $0x8] sm:$0x8]
    %v48 = vld [vmem:[%s0 + $0xc] sm:$0xff]
    %v49 = vld [vmem:[%s0 + $0x14] sm:$0xf]
    %v50 = vld [vmem:[%s0 + $0x18] sm:$0xff]
    %v51 = vld [vmem:[%s0 + $0x20] sm:$0xf]
    %v52 = vld [vmem:[%s0 + $0x24] sm:$0xff]
    %v53 = vld [vmem:[%s0 + $0x2c] sm:$0xf]
    %v54 = vld [vmem:[%s0 + $0x30] sm:$0xff]
    %v55 = vld [vmem:[%s0 + $0x38] sm:$0xf]
    %v56 = vld [vmem:[%s0 + $0x3c] sm:$0x11]
    %v57 = vld [vmem:[%s0 + $0x44] sm:$0x1]
    %v58 = vld [vmem:[#allocation2] sm:$0xff]
    %v59 = vld [vmem:[#allocation2 + $0x8] sm:$0xff]
    %v60 = vld [vmem:[#allocation2 + $0x10] sm:$0xff]
    %v61 = vld [vmem:[#allocation2 + $0x18] sm:$0xff]
    %v62 = vld [vmem:[#allocation2 + $0x20] sm:$0xff]
    %v63 = vld [vmem:[#allocation2 + $0x28] sm:$0xff]
    %v64 = vld [vmem:[#allocation2 + $0x30] sm:$0xff]
    %v65 = vld [vmem:[#allocation2 + $0x38] sm:$0xff]
    %v66 = vld [vmem:[#allocation2 + $0x40] sm:$0xff]
    %v67 = vld [vmem:[#allocation2 + $0x48] sm:$0xff]
    %v68 = vld [vmem:[#allocation2 + $0x50] sm:$0xff]
    %v69 = vld [vmem:[#allocation2 + $0x58] sm:$0xff]
    %v70 = vld [vmem:[#allocation2 + $0x60] sm:$0xff]
    %v71 = vld [vmem:[#allocation2 + $0x68] sm:$0xff]
    %v72 = vld [vmem:[#allocation2 + $0x70] sm:$0xff]
    %v73 = vld [vmem:[#allocation2 + $0x78] sm:$0xff]
    %v74 = vld [vmem:[#allocation2 + $0x80] sm:$0xff]
    %v75 = vld [vmem:[#allocation2 + $0x88] sm:$0xff]
    %v76 = vld [vmem:[#allocation2 + $0x90] sm:$0xff]
    %v77 = vld [vmem:[#allocation2 + $0x98] sm:$0xff]
    %v78 = vld [vmem:[#allocation2 + $0xa0] sm:$0xff]
    %v79 = vld [vmem:[#allocation2 + $0xa8] sm:$0xff]
    %v80 = vld [vmem:[#allocation2 + $0xb0] sm:$0xff]
    %v81 = vld [vmem:[#allocation2 + $0xb8] sm:$0xff]
    %v82 = vld [vmem:[#allocation2 + $0xc0] sm:$0xff]
    %v83 = vld [vmem:[#allocation2 + $0xc8] sm:$0xff]
    %v84 = vld [vmem:[#allocation2 + $0xd0] sm:$0xff]
    %v85 = vld [vmem:[#allocation2 + $0xd8] sm:$0xff]
    %v86 = vld [vmem:[#allocation2 + $0xe0] sm:$0xff]
    %v87 = vld [vmem:[#allocation2 + $0xe8] sm:$0xff]
    %v88 = vld [vmem:[#allocation2 + $0xf0] sm:$0xff]
    %v89 = vld [vmem:[#allocation2 + $0xf8] sm:$0xff]
    %v90 = vld [vmem:[#allocation2 + $0x100] sm:$0xff]
    %v91 = vld [vmem:[#allocation2 + $0x108] sm:$0xff]
    %v92 = vld [vmem:[#allocation2 + $0x110] sm:$0xff]
    %v93 = vld [vmem:[#allocation2 + $0x118] sm:$0xff]
    %s94 = scalar_lea.vmem [#allocation2], 288
    %v95 = vld [vmem:[%s94] sm:$0xff]
    %v96 = vld [vmem:[%s94 + $0x8] sm:$0xff]
    %v97 = vld [vmem:[%s94 + $0x10] sm:$0xff]
    %v98 = vld [vmem:[%s94 + $0x18] sm:$0xff]
    %v99 = vld [vmem:[%s94 + $0x20] sm:$0xff]
    %v100 = vld [vmem:[%s94 + $0x28] sm:$0xff]
    %v101 = vld [vmem:[%s94 + $0x30] sm:$0xff]
    %v102 = vld [vmem:[%s94 + $0x38] sm:$0xff]
    %v103 = vld [vmem:[%s94 + $0x40] sm:$0xff]
    %v104 = vld [vmem:[%s94 + $0x48] sm:$0xff]
    %v105 = vld [vmem:[%s94 + $0x50] sm:$0xff]
    %v106 = vld [vmem:[%s94 + $0x58] sm:$0xff]
    %v107 = vld [vmem:[%s94 + $0x60] sm:$0xff]
    %v108 = vld [vmem:[%s94 + $0x68] sm:$0xff]
    %v109 = vld [vmem:[%s94 + $0x70] sm:$0xff]
    %v110 = vld [vmem:[%s94 + $0x78] sm:$0xff]
    %v111 = vld [vmem:[%s94 + $0x80] sm:$0xff]
    %v112 = vld [vmem:[%s94 + $0x88] sm:$0xff]
    %v113 = vld [vmem:[%s94 + $0x90] sm:$0xff]
    %v114 = vld [vmem:[%s94 + $0x98] sm:$0xff]
    %v115 = vld [vmem:[%s94 + $0xa0] sm:$0xff]
    %v116 = vld [vmem:[%s94 + $0xa8] sm:$0xff]
    %v117 = vld [vmem:[%s94 + $0xb0] sm:$0xff]
    %v118 = vld [vmem:[%s94 + $0xb8] sm:$0xff]
    %v119 = vld [vmem:[%s94 + $0xc0] sm:$0xff]
    %v120 = vld [vmem:[%s94 + $0xc8] sm:$0xff]
    %v121 = vld [vmem:[%s94 + $0xd0] sm:$0xff]
    %v122 = vld [vmem:[%s94 + $0xd8] sm:$0xff]
    %v123 = vld [vmem:[%s94 + $0xe0] sm:$0xff]
    %v124 = vld [vmem:[%s94 + $0xe8] sm:$0xff]
    %v125 = vld [vmem:[%s94 + $0xf0] sm:$0xff]
    %v126 = vld [vmem:[%s94 + $0xf8] sm:$0xff]
    %v127 = vld [vmem:[%s94 + $0x100] sm:$0xff]
    %v128 = vld [vmem:[%s94 + $0x108] sm:$0xff]
    %v129 = vld [vmem:[%s94 + $0x110] sm:$0xff]
    %v130 = vld [vmem:[%s94 + $0x118] sm:$0xff]
    %v141 = vunpack.c.l.b16 %v48
    %v142 = vunpack.c.h.b16 %v48
    %v143 = vunpack.c.l.b16 %v49
    %v144 = vunpack.c.l.b16 %v50
    %v145 = vunpack.c.h.b16 %v50
    %v146 = vunpack.c.l.b16 %v51
    %v147 = vunpack.c.l.b16 %v52
    %v148 = vunpack.c.h.b16 %v52
    %v149 = vunpack.c.l.b16 %v53
    %v150 = vunpack.c.l.b16 %v54
    %v151 = vunpack.c.h.b16 %v54
    %v152 = vunpack.c.l.b16 %v55
    %v153 = vunpack.c.l.b16 %v56
    %v154 = vunpack.c.h.b16 %v56
    %v155 = vunpack.c.l.b16 %v57
    %v156 = vpack.c.b16 %v144, %v141
    %v157 = vpack.c.b16 %v145, %v142
    %v158 = vpack.c.b16 %v146, %v143
    %v159 = vpack.c.b16 %v150, %v147
    %v160 = vpack.c.b16 %v151, %v148
    %v161 = vpack.c.b16 %v152, %v149
    %v162 = vpack.c.b16 %v153, %v153
    %v163 = vpack.c.b16 %v154, %v154
    %v164 = vpack.c.b16 %v155, %v155
    %v207 = vunpack.c.l.b16 %v95
    %v208 = vunpack.c.h.b16 %v95
    %v209 = vunpack.c.l.b16 %v96
    %v210 = vunpack.c.h.b16 %v96
    %v211 = vunpack.c.l.b16 %v97
    %v212 = vunpack.c.h.b16 %v97
    %v213 = vunpack.c.l.b16 %v98
    %v214 = vunpack.c.h.b16 %v98
    %v215 = vunpack.c.l.b16 %v99
    %v216 = vunpack.c.h.b16 %v99
    %v217 = vunpack.c.l.b16 %v100
    %v218 = vunpack.c.h.b16 %v100
    %v219 = vunpack.c.l.b16 %v101
    %v220 = vunpack.c.h.b16 %v101
    %v221 = vunpack.c.l.b16 %v102
    %v222 = vunpack.c.h.b16 %v102
    %v223 = vunpack.c.l.b16 %v103
    %v224 = vunpack.c.h.b16 %v103
    %v225 = vunpack.c.l.b16 %v104
    %v226 = vunpack.c.h.b16 %v104
    %v227 = vunpack.c.l.b16 %v105
    %v228 = vunpack.c.h.b16 %v105
    %v229 = vunpack.c.l.b16 %v106
    %v230 = vunpack.c.h.b16 %v106
    %v231 = vunpack.c.l.b16 %v107
    %v232 = vunpack.c.h.b16 %v107
    %v233 = vunpack.c.l.b16 %v108
    %v234 = vunpack.c.h.b16 %v108
    %v235 = vunpack.c.l.b16 %v109
    %v236 = vunpack.c.h.b16 %v109
    %v237 = vunpack.c.l.b16 %v110
    %v238 = vunpack.c.h.b16 %v110
    %v239 = vunpack.c.l.b16 %v111
    %v240 = vunpack.c.h.b16 %v111
    %v241 = vunpack.c.l.b16 %v112
    %v242 = vunpack.c.h.b16 %v112
    %v243 = vunpack.c.l.b16 %v113
    %v244 = vunpack.c.h.b16 %v113
    %v245 = vunpack.c.l.b16 %v114
    %v246 = vunpack.c.h.b16 %v114
    %v247 = vunpack.c.l.b16 %v115
    %v248 = vunpack.c.h.b16 %v115
    %v249 = vunpack.c.l.b16 %v116
    %v250 = vunpack.c.h.b16 %v116
    %v251 = vunpack.c.l.b16 %v117
    %v252 = vunpack.c.h.b16 %v117
    %v253 = vunpack.c.l.b16 %v118
    %v254 = vunpack.c.h.b16 %v118
    %v255 = vunpack.c.l.b16 %v119
    %v256 = vunpack.c.h.b16 %v119
    %v257 = vunpack.c.l.b16 %v120
    %v258 = vunpack.c.h.b16 %v120
    %v259 = vunpack.c.l.b16 %v121
    %v260 = vunpack.c.h.b16 %v121
    %v261 = vunpack.c.l.b16 %v122
    %v262 = vunpack.c.h.b16 %v122
    %v263 = vunpack.c.l.b16 %v123
    %v264 = vunpack.c.h.b16 %v123
    %v265 = vunpack.c.l.b16 %v124
    %v266 = vunpack.c.h.b16 %v124
    %v267 = vunpack.c.l.b16 %v125
    %v268 = vunpack.c.h.b16 %v125
    %v269 = vunpack.c.l.b16 %v126
    %v270 = vunpack.c.h.b16 %v126
    %v271 = vunpack.c.l.b16 %v127
    %v272 = vunpack.c.h.b16 %v127
    %v273 = vunpack.c.l.b16 %v128
    %v274 = vunpack.c.h.b16 %v128
    %v275 = vunpack.c.l.b16 %v129
    %v276 = vunpack.c.h.b16 %v129
    %v277 = vunpack.c.l.b16 %v130
    %v278 = vunpack.c.h.b16 %v130
    %v279 = vpack.c.b16 %v209, %v207
    %v280 = vpack.c.b16 %v210, %v208
    %v281 = vpack.c.b16 %v213, %v211
    %v282 = vpack.c.b16 %v214, %v212
    %v283 = vpack.c.b16 %v217, %v215
    %v284 = vpack.c.b16 %v218, %v216
    %v285 = vpack.c.b16 %v221, %v219
    %v286 = vpack.c.b16 %v222, %v220
    %v287 = vpack.c.b16 %v225, %v223
    %v288 = vpack.c.b16 %v226, %v224
    %v289 = vpack.c.b16 %v229, %v227
    %v290 = vpack.c.b16 %v230, %v228
    %v291 = vpack.c.b16 %v233, %v231
    %v292 = vpack.c.b16 %v234, %v232
    %v293 = vpack.c.b16 %v237, %v235
    %v294 = vpack.c.b16 %v238, %v236
    %v295 = vpack.c.b16 %v241, %v239
    %v296 = vpack.c.b16 %v242, %v240
    %v297 = vpack.c.b16 %v245, %v243
    %v298 = vpack.c.b16 %v246, %v244
    %v299 = vpack.c.b16 %v249, %v247
    %v300 = vpack.c.b16 %v250, %v248
    %v301 = vpack.c.b16 %v253, %v251
    %v302 = vpack.c.b16 %v254, %v252
    %v303 = vpack.c.b16 %v257, %v255
    %v304 = vpack.c.b16 %v258, %v256
    %v305 = vpack.c.b16 %v261, %v259
    %v306 = vpack.c.b16 %v262, %v260
    %v307 = vpack.c.b16 %v265, %v263
    %v308 = vpack.c.b16 %v266, %v264
    %v309 = vpack.c.b16 %v269, %v267
    %v310 = vpack.c.b16 %v270, %v268
    %v311 = vpack.c.b16 %v273, %v271
    %v312 = vpack.c.b16 %v274, %v272
    %v313 = vpack.c.b16 %v277, %v275
    %v314 = vpack.c.b16 %v278, %v276
    %vm351 = vcmask 261120
    %v353 = vsel %vm351, %v158, 0
    %v356 = vsel %vm351, %v161, 0
    %v359 = vsel %vm351, %v164, 0
    %361 = vmatpush.bf16.msra.mxu0 %v293
    %362 = vmatpush.bf16.msra.mxu0 %v291
    %363 = vmatpush.bf16.msra.mxu0 %v289
    %364 = vmatpush.bf16.msra.mxu0 %v287
    %365 = vmatpush.bf16.msra.mxu0 %v285
    %366 = vmatpush.bf16.msra.mxu0 %v283
    %367 = vmatpush.bf16.msra.mxu0 %v281
    %368 = vmatpush.bf16.msra.mxu0 %v279
    %369 = vmatmul.bf16.gmra.mxu0 %v156
    %v370 = vpop.f32.mrf.mxu0
    %v371 = vadd.f32 0.0, %v370
    %v372 = vpop.f32.mrf.mxu0
    %v373 = vadd.f32 0.0, %v372
    %374 = vmatmul.bf16.gmra.mxu0 %v159
    %v375 = vpop.f32.mrf.mxu0
    %v376 = vadd.f32 0.0, %v375
    %v377 = vpop.f32.mrf.mxu0
    %v378 = vadd.f32 0.0, %v377
    %379 = vmatmul.bf16.gmra.mxu0 %v162
    %v380 = vpop.f32.mrf.mxu0
    %v381 = vadd.f32 0.0, %v380
    %v382 = vpop.f32.mrf.mxu0
    %383 = vdwg.mxu0
    %384 = vmatpush.bf16.msra.mxu0 %v309
    %385 = vmatpush.bf16.msra.mxu0 %v307
    %386 = vmatpush.bf16.msra.mxu0 %v305
    %387 = vmatpush.bf16.msra.mxu0 %v303
    %388 = vmatpush.bf16.msra.mxu0 %v301
    %389 = vmatpush.bf16.msra.mxu0 %v299
    %390 = vmatpush.bf16.msra.mxu0 %v297
    %391 = vmatpush.bf16.msra.mxu0 %v295
    %392 = vmatmul.bf16.gmra.mxu0 %v157
    %v393 = vpop.f32.mrf.mxu0
    %v394 = vadd.f32 %v371, %v393
    %v395 = vpop.f32.mrf.mxu0
    %v396 = vadd.f32 %v373, %v395
    %397 = vmatmul.bf16.gmra.mxu0 %v160
    %v398 = vpop.f32.mrf.mxu0
    %v399 = vadd.f32 %v376, %v398
    %v400 = vpop.f32.mrf.mxu0
    %v401 = vadd.f32 %v378, %v400
    %402 = vmatmul.bf16.gmra.mxu0 %v163
    %v403 = vpop.f32.mrf.mxu0
    %v404 = vadd.f32 %v381, %v403
    %v405 = vpop.f32.mrf.mxu0
    %406 = vdwg.mxu0
    %407 = vmatpush.bf16.msra.mxu0 0
    %408 = vmatpush.bf16.msra.mxu0 0
    %409 = vmatpush.bf16.msra.mxu0 0
    %410 = vmatpush.bf16.msra.mxu0 0
    %411 = vmatpush.bf16.msra.mxu0 0
    %412 = vmatpush.bf16.msra.mxu0 0
    %413 = vmatpush.bf16.msra.mxu0 %v313
    %414 = vmatpush.bf16.msra.mxu0 %v311
    %415 = vmatmul.bf16.gmra.mxu0 %v353
    %v416 = vpop.f32.mrf.mxu0
    %v417 = vadd.f32 %v394, %v416
    %v418 = vpop.f32.mrf.mxu0
    %v419 = vadd.f32 %v396, %v418
    %420 = vmatmul.bf16.gmra.mxu0 %v356
    %v421 = vpop.f32.mrf.mxu0
    %v422 = vadd.f32 %v399, %v421
    %v423 = vpop.f32.mrf.mxu0
    %v424 = vadd.f32 %v401, %v423
    %425 = vmatmul.bf16.gmra.mxu0 %v359
    %v426 = vpop.f32.mrf.mxu0
    %v427 = vadd.f32 %v404, %v426
    %v428 = vpop.f32.mrf.mxu0
    %429 = vdwg.mxu0
    %430 = vmatpush.bf16.msra.mxu0 %v294
    %431 = vmatpush.bf16.msra.mxu0 %v292
    %432 = vmatpush.bf16.msra.mxu0 %v290
    %433 = vmatpush.bf16.msra.mxu0 %v288
    %434 = vmatpush.bf16.msra.mxu0 %v286
    %435 = vmatpush.bf16.msra.mxu0 %v284
    %436 = vmatpush.bf16.msra.mxu0 %v282
    %437 = vmatpush.bf16.msra.mxu0 %v280
    %438 = vmatmul.bf16.gmra.mxu0 %v156
    %v439 = vpop.f32.mrf.mxu0
    %v440 = vadd.f32 0.0, %v439
    %v441 = vpop.f32.mrf.mxu0
    %v442 = vadd.f32 0.0, %v441
    %443 = vmatmul.bf16.gmra.mxu0 %v159
    %v444 = vpop.f32.mrf.mxu0
    %v445 = vadd.f32 0.0, %v444
    %v446 = vpop.f32.mrf.mxu0
    %v447 = vadd.f32 0.0, %v446
    %448 = vmatmul.bf16.gmra.mxu0 %v162
    %v449 = vpop.f32.mrf.mxu0
    %v450 = vadd.f32 0.0, %v449
    %v451 = vpop.f32.mrf.mxu0
    %452 = vdwg.mxu0
    %453 = vmatpush.bf16.msra.mxu0 %v310
    %454 = vmatpush.bf16.msra.mxu0 %v308
    %455 = vmatpush.bf16.msra.mxu0 %v306
    %456 = vmatpush.bf16.msra.mxu0 %v304
    %457 = vmatpush.bf16.msra.mxu0 %v302
    %458 = vmatpush.bf16.msra.mxu0 %v300
    %459 = vmatpush.bf16.msra.mxu0 %v298
    %460 = vmatpush.bf16.msra.mxu0 %v296
    %461 = vmatmul.bf16.gmra.mxu0 %v157
    %v462 = vpop.f32.mrf.mxu0
    %v463 = vadd.f32 %v440, %v462
    %v464 = vpop.f32.mrf.mxu0
    %v465 = vadd.f32 %v442, %v464
    %466 = vmatmul.bf16.gmra.mxu0 %v160
    %v467 = vpop.f32.mrf.mxu0
    %v468 = vadd.f32 %v445, %v467
    %v469 = vpop.f32.mrf.mxu0
    %v470 = vadd.f32 %v447, %v469
    %471 = vmatmul.bf16.gmra.mxu0 %v163
    %v472 = vpop.f32.mrf.mxu0
    %v473 = vadd.f32 %v450, %v472
    %v474 = vpop.f32.mrf.mxu0
    %475 = vdwg.mxu0
    %476 = vmatpush.bf16.msra.mxu0 0
    %477 = vmatpush.bf16.msra.mxu0 0
    %478 = vmatpush.bf16.msra.mxu0 0
    %479 = vmatpush.bf16.msra.mxu0 0
    %480 = vmatpush.bf16.msra.mxu0 0
    %481 = vmatpush.bf16.msra.mxu0 0
    %482 = vmatpush.bf16.msra.mxu0 %v314
    %483 = vmatpush.bf16.msra.mxu0 %v312
    %484 = vmatmul.bf16.gmra.mxu0 %v353
    %v485 = vpop.f32.mrf.mxu0
    %v486 = vadd.f32 %v463, %v485
    %v487 = vpop.f32.mrf.mxu0
    %v488 = vadd.f32 %v465, %v487
    %489 = vmatmul.bf16.gmra.mxu0 %v356
    %v490 = vpop.f32.mrf.mxu0
    %v491 = vadd.f32 %v468, %v490
    %v492 = vpop.f32.mrf.mxu0
    %v493 = vadd.f32 %v470, %v492
    %494 = vmatmul.bf16.gmra.mxu0 %v359
    %v495 = vpop.f32.mrf.mxu0
    %v496 = vadd.f32 %v473, %v495
    %v497 = vpop.f32.mrf.mxu0
    %498 = vdwg.mxu0
    %v501 = vunpack.c.l.b16 %v46
    %v502 = vunpack.c.h.b16 %v46
    %v503 = vunpack.c.l.b16 %v47
    %v504 = vpack.c.b16 %v141, %v501
    %v505 = vpack.c.b16 %v142, %v502
    %v506 = vpack.c.b16 %v143, %v503
    %v507 = vpack.c.b16 %v147, %v144
    %v508 = vpack.c.b16 %v148, %v145
    %v509 = vpack.c.b16 %v149, %v146
    %v510 = vpack.c.b16 %v153, %v150
    %v511 = vpack.c.b16 %v154, %v151
    %v512 = vpack.c.b16 %v155, %v152
    %vm513 = vsmask.f32 4352
    %v515 = vshrl.u32 %v504, 16
    %v517 = vrot.slane %v515, 3
    %v518 = vshll.u32 %v504, 16
    %v520 = vrot.slane %v518, 4
    %v521 = vor.u32 %v517, %v520
    %v523 = vshrl.u32 %v507, 16
    %v525 = vrot.slane %v523, 3
    %v526 = vshll.u32 %v507, 16
    %v528 = vrot.slane %v526, 4
    %v529 = vor.u32 %v525, %v528
    %v530 = vsel %vm513, %v521, %v529
    %v532 = vshrl.u32 %v505, 16
    %v534 = vrot.slane %v532, 3
    %v535 = vshll.u32 %v505, 16
    %v537 = vrot.slane %v535, 4
    %v538 = vor.u32 %v534, %v537
    %v540 = vshrl.u32 %v508, 16
    %v542 = vrot.slane %v540, 3
    %v543 = vshll.u32 %v508, 16
    %v545 = vrot.slane %v543, 4
    %v546 = vor.u32 %v542, %v545
    %v547 = vsel %vm513, %v538, %v546
    %v549 = vshrl.u32 %v506, 16
    %v551 = vrot.slane %v549, 3
    %v552 = vshll.u32 %v506, 16
    %v554 = vrot.slane %v552, 4
    %v555 = vor.u32 %v551, %v554
    %v557 = vshrl.u32 %v509, 16
    %v559 = vrot.slane %v557, 3
    %v560 = vshll.u32 %v509, 16
    %v562 = vrot.slane %v560, 4
    %v563 = vor.u32 %v559, %v562
    %v564 = vsel %vm513, %v555, %v563
    %v566 = vshrl.u32 %v510, 16
    %v568 = vrot.slane %v566, 3
    %v569 = vshll.u32 %v510, 16
    %v571 = vrot.slane %v569, 4
    %v572 = vor.u32 %v568, %v571
    %v573 = vsel %vm513, %v529, %v572
    %v575 = vshrl.u32 %v511, 16
    %v577 = vrot.slane %v575, 3
    %v578 = vshll.u32 %v511, 16
    %v580 = vrot.slane %v578, 4
    %v581 = vor.u32 %v577, %v580
    %v582 = vsel %vm513, %v546, %v581
    %v584 = vshrl.u32 %v512, 16
    %v586 = vrot.slane %v584, 3
    %v587 = vshll.u32 %v512, 16
    %v589 = vrot.slane %v587, 4
    %v590 = vor.u32 %v586, %v589
    %v591 = vsel %vm513, %v563, %v590
    %v634 = vunpack.c.l.b16 %v58
    %v635 = vunpack.c.h.b16 %v58
    %v636 = vunpack.c.l.b16 %v59
    %v637 = vunpack.c.h.b16 %v59
    %v638 = vunpack.c.l.b16 %v60
    %v639 = vunpack.c.h.b16 %v60
    %v640 = vunpack.c.l.b16 %v61
    %v641 = vunpack.c.h.b16 %v61
    %v642 = vunpack.c.l.b16 %v62
    %v643 = vunpack.c.h.b16 %v62
    %v644 = vunpack.c.l.b16 %v63
    %v645 = vunpack.c.h.b16 %v63
    %v646 = vunpack.c.l.b16 %v64
    %v647 = vunpack.c.h.b16 %v64
    %v648 = vunpack.c.l.b16 %v65
    %v649 = vunpack.c.h.b16 %v65
    %v650 = vunpack.c.l.b16 %v66
    %v651 = vunpack.c.h.b16 %v66
    %v652 = vunpack.c.l.b16 %v67
    %v653 = vunpack.c.h.b16 %v67
    %v654 = vunpack.c.l.b16 %v68
    %v655 = vunpack.c.h.b16 %v68
    %v656 = vunpack.c.l.b16 %v69
    %v657 = vunpack.c.h.b16 %v69
    %v658 = vunpack.c.l.b16 %v70
    %v659 = vunpack.c.h.b16 %v70
    %v660 = vunpack.c.l.b16 %v71
    %v661 = vunpack.c.h.b16 %v71
    %v662 = vunpack.c.l.b16 %v72
    %v663 = vunpack.c.h.b16 %v72
    %v664 = vunpack.c.l.b16 %v73
    %v665 = vunpack.c.h.b16 %v73
    %v666 = vunpack.c.l.b16 %v74
    %v667 = vunpack.c.h.b16 %v74
    %v668 = vunpack.c.l.b16 %v75
    %v669 = vunpack.c.h.b16 %v75
    %v670 = vunpack.c.l.b16 %v76
    %v671 = vunpack.c.h.b16 %v76
    %v672 = vunpack.c.l.b16 %v77
    %v673 = vunpack.c.h.b16 %v77
    %v674 = vunpack.c.l.b16 %v78
    %v675 = vunpack.c.h.b16 %v78
    %v676 = vunpack.c.l.b16 %v79
    %v677 = vunpack.c.h.b16 %v79
    %v678 = vunpack.c.l.b16 %v80
    %v679 = vunpack.c.h.b16 %v80
    %v680 = vunpack.c.l.b16 %v81
    %v681 = vunpack.c.h.b16 %v81
    %v682 = vunpack.c.l.b16 %v82
    %v683 = vunpack.c.h.b16 %v82
    %v684 = vunpack.c.l.b16 %v83
    %v685 = vunpack.c.h.b16 %v83
    %v686 = vunpack.c.l.b16 %v84
    %v687 = vunpack.c.h.b16 %v84
    %v688 = vunpack.c.l.b16 %v85
    %v689 = vunpack.c.h.b16 %v85
    %v690 = vunpack.c.l.b16 %v86
    %v691 = vunpack.c.h.b16 %v86
    %v692 = vunpack.c.l.b16 %v87
    %v693 = vunpack.c.h.b16 %v87
    %v694 = vunpack.c.l.b16 %v88
    %v695 = vunpack.c.h.b16 %v88
    %v696 = vunpack.c.l.b16 %v89
    %v697 = vunpack.c.h.b16 %v89
    %v698 = vunpack.c.l.b16 %v90
    %v699 = vunpack.c.h.b16 %v90
    %v700 = vunpack.c.l.b16 %v91
    %v701 = vunpack.c.h.b16 %v91
    %v702 = vunpack.c.l.b16 %v92
    %v703 = vunpack.c.h.b16 %v92
    %v704 = vunpack.c.l.b16 %v93
    %v705 = vunpack.c.h.b16 %v93
    %v706 = vpack.c.b16 %v636, %v634
    %v707 = vpack.c.b16 %v637, %v635
    %v708 = vpack.c.b16 %v640, %v638
    %v709 = vpack.c.b16 %v641, %v639
    %v710 = vpack.c.b16 %v644, %v642
    %v711 = vpack.c.b16 %v645, %v643
    %v712 = vpack.c.b16 %v648, %v646
    %v713 = vpack.c.b16 %v649, %v647
    %v714 = vpack.c.b16 %v652, %v650
    %v715 = vpack.c.b16 %v653, %v651
    %v716 = vpack.c.b16 %v656, %v654
    %v717 = vpack.c.b16 %v657, %v655
    %v718 = vpack.c.b16 %v660, %v658
    %v719 = vpack.c.b16 %v661, %v659
    %v720 = vpack.c.b16 %v664, %v662
    %v721 = vpack.c.b16 %v665, %v663
    %v722 = vpack.c.b16 %v668, %v666
    %v723 = vpack.c.b16 %v669, %v667
    %v724 = vpack.c.b16 %v672, %v670
    %v725 = vpack.c.b16 %v673, %v671
    %v726 = vpack.c.b16 %v676, %v674
    %v727 = vpack.c.b16 %v677, %v675
    %v728 = vpack.c.b16 %v680, %v678
    %v729 = vpack.c.b16 %v681, %v679
    %v730 = vpack.c.b16 %v684, %v682
    %v731 = vpack.c.b16 %v685, %v683
    %v732 = vpack.c.b16 %v688, %v686
    %v733 = vpack.c.b16 %v689, %v687
    %v734 = vpack.c.b16 %v692, %v690
    %v735 = vpack.c.b16 %v693, %v691
    %v736 = vpack.c.b16 %v696, %v694
    %v737 = vpack.c.b16 %v697, %v695
    %v738 = vpack.c.b16 %v700, %v698
    %v739 = vpack.c.b16 %v701, %v699
    %v740 = vpack.c.b16 %v704, %v702
    %v741 = vpack.c.b16 %v705, %v703
    %v779 = vsel %vm351, %v564, 0
    %v782 = vsel %vm351, %v591, 0
    %v785 = vsel %vm351, %v590, 0
    %787 = vmatpush.bf16.msra.mxu0 %v720
    %788 = vmatpush.bf16.msra.mxu0 %v718
    %789 = vmatpush.bf16.msra.mxu0 %v716
    %790 = vmatpush.bf16.msra.mxu0 %v714
    %791 = vmatpush.bf16.msra.mxu0 %v712
    %792 = vmatpush.bf16.msra.mxu0 %v710
    %793 = vmatpush.bf16.msra.mxu0 %v708
    %794 = vmatpush.bf16.msra.mxu0 %v706
    %795 = vmatmul.bf16.gmra.mxu0 %v530
    %v796 = vpop.f32.mrf.mxu0
    %v797 = vadd.f32 %v417, %v796
    %v798 = vpop.f32.mrf.mxu0
    %v799 = vadd.f32 %v419, %v798
    %800 = vmatmul.bf16.gmra.mxu0 %v573
    %v801 = vpop.f32.mrf.mxu0
    %v802 = vadd.f32 %v422, %v801
    %v803 = vpop.f32.mrf.mxu0
    %v804 = vadd.f32 %v424, %v803
    %805 = vmatmul.bf16.gmra.mxu0 %v572
    %v806 = vpop.f32.mrf.mxu0
    %v807 = vadd.f32 %v427, %v806
    %v808 = vpop.f32.mrf.mxu0
    %809 = vdwg.mxu0
    %810 = vmatpush.bf16.msra.mxu0 %v736
    %811 = vmatpush.bf16.msra.mxu0 %v734
    %812 = vmatpush.bf16.msra.mxu0 %v732
    %813 = vmatpush.bf16.msra.mxu0 %v730
    %814 = vmatpush.bf16.msra.mxu0 %v728
    %815 = vmatpush.bf16.msra.mxu0 %v726
    %816 = vmatpush.bf16.msra.mxu0 %v724
    %817 = vmatpush.bf16.msra.mxu0 %v722
    %818 = vmatmul.bf16.gmra.mxu0 %v547
    %v819 = vpop.f32.mrf.mxu0
    %v820 = vadd.f32 %v797, %v819
    %v821 = vpop.f32.mrf.mxu0
    %v822 = vadd.f32 %v799, %v821
    %823 = vmatmul.bf16.gmra.mxu0 %v582
    %v824 = vpop.f32.mrf.mxu0
    %v825 = vadd.f32 %v802, %v824
    %v826 = vpop.f32.mrf.mxu0
    %v827 = vadd.f32 %v804, %v826
    %828 = vmatmul.bf16.gmra.mxu0 %v581
    %v829 = vpop.f32.mrf.mxu0
    %v830 = vadd.f32 %v807, %v829
    %v831 = vpop.f32.mrf.mxu0
    %832 = vdwg.mxu0
    %833 = vmatpush.bf16.msra.mxu0 0
    %834 = vmatpush.bf16.msra.mxu0 0
    %835 = vmatpush.bf16.msra.mxu0 0
    %836 = vmatpush.bf16.msra.mxu0 0
    %837 = vmatpush.bf16.msra.mxu0 0
    %838 = vmatpush.bf16.msra.mxu0 0
    %839 = vmatpush.bf16.msra.mxu0 %v740
    %840 = vmatpush.bf16.msra.mxu0 %v738
    %841 = vmatmul.bf16.gmra.mxu0 %v779
    %v842 = vpop.f32.mrf.mxu0
    %v843 = vadd.f32 %v820, %v842
    %v844 = vpop.f32.mrf.mxu0
    %v845 = vadd.f32 %v822, %v844
    %846 = vmatmul.bf16.gmra.mxu0 %v782
    %v847 = vpop.f32.mrf.mxu0
    %v848 = vadd.f32 %v825, %v847
    %v849 = vpop.f32.mrf.mxu0
    %v850 = vadd.f32 %v827, %v849
    %851 = vmatmul.bf16.gmra.mxu0 %v785
    %v852 = vpop.f32.mrf.mxu0
    %v853 = vadd.f32 %v830, %v852
    %v854 = vpop.f32.mrf.mxu0
    %855 = vdwg.mxu0
    %856 = vmatpush.bf16.msra.mxu0 %v721
    %857 = vmatpush.bf16.msra.mxu0 %v719
    %858 = vmatpush.bf16.msra.mxu0 %v717
    %859 = vmatpush.bf16.msra.mxu0 %v715
    %860 = vmatpush.bf16.msra.mxu0 %v713
    %861 = vmatpush.bf16.msra.mxu0 %v711
    %862 = vmatpush.bf16.msra.mxu0 %v709
    %863 = vmatpush.bf16.msra.mxu0 %v707
    %864 = vmatmul.bf16.gmra.mxu0 %v530
    %v865 = vpop.f32.mrf.mxu0
    %v866 = vadd.f32 %v486, %v865
    %v867 = vpop.f32.mrf.mxu0
    %v868 = vadd.f32 %v488, %v867
    %869 = vmatmul.bf16.gmra.mxu0 %v573
    %v870 = vpop.f32.mrf.mxu0
    %v871 = vadd.f32 %v491, %v870
    %v872 = vpop.f32.mrf.mxu0
    %v873 = vadd.f32 %v493, %v872
    %874 = vmatmul.bf16.gmra.mxu0 %v572
    %v875 = vpop.f32.mrf.mxu0
    %v876 = vadd.f32 %v496, %v875
    %v877 = vpop.f32.mrf.mxu0
    %878 = vdwg.mxu0
    %879 = vmatpush.bf16.msra.mxu0 %v737
    %880 = vmatpush.bf16.msra.mxu0 %v735
    %881 = vmatpush.bf16.msra.mxu0 %v733
    %882 = vmatpush.bf16.msra.mxu0 %v731
    %883 = vmatpush.bf16.msra.mxu0 %v729
    %884 = vmatpush.bf16.msra.mxu0 %v727
    %885 = vmatpush.bf16.msra.mxu0 %v725
    %886 = vmatpush.bf16.msra.mxu0 %v723
    %887 = vmatmul.bf16.gmra.mxu0 %v547
    %v888 = vpop.f32.mrf.mxu0
    %v889 = vadd.f32 %v866, %v888
    %v890 = vpop.f32.mrf.mxu0
    %v891 = vadd.f32 %v868, %v890
    %892 = vmatmul.bf16.gmra.mxu0 %v582
    %v893 = vpop.f32.mrf.mxu0
    %v894 = vadd.f32 %v871, %v893
    %v895 = vpop.f32.mrf.mxu0
    %v896 = vadd.f32 %v873, %v895
    %897 = vmatmul.bf16.gmra.mxu0 %v581
    %v898 = vpop.f32.mrf.mxu0
    %v899 = vadd.f32 %v876, %v898
    %v900 = vpop.f32.mrf.mxu0
    %901 = vdwg.mxu0
    %902 = vmatpush.bf16.msra.mxu0 0
    %903 = vmatpush.bf16.msra.mxu0 0
    %904 = vmatpush.bf16.msra.mxu0 0
    %905 = vmatpush.bf16.msra.mxu0 0
    %906 = vmatpush.bf16.msra.mxu0 0
    %907 = vmatpush.bf16.msra.mxu0 0
    %908 = vmatpush.bf16.msra.mxu0 %v741
    %909 = vmatpush.bf16.msra.mxu0 %v739
    %910 = vmatmul.bf16.gmra.mxu0 %v779
    %v911 = vpop.f32.mrf.mxu0
    %v912 = vadd.f32 %v889, %v911
    %v913 = vpop.f32.mrf.mxu0
    %v914 = vadd.f32 %v891, %v913
    %915 = vmatmul.bf16.gmra.mxu0 %v782
    %v916 = vpop.f32.mrf.mxu0
    %v917 = vadd.f32 %v894, %v916
    %v918 = vpop.f32.mrf.mxu0
    %v919 = vadd.f32 %v896, %v918
    %920 = vmatmul.bf16.gmra.mxu0 %v785
    %v921 = vpop.f32.mrf.mxu0
    %v922 = vadd.f32 %v899, %v921
    %v923 = vpop.f32.mrf.mxu0
    %924 = vdwg.mxu0
    %v925 = vld [vmem:[%s0 + $0x3c] sm:$0x33]
    %v926 = vld [vmem:[%s0 + $0x44] sm:$0x3]
    %s927 = scalar_lea.vmem [#allocation2], 576
    %v928 = vld [vmem:[%s927] sm:$0xff]
    %v929 = vld [vmem:[%s927 + $0x8] sm:$0xff]
    %v930 = vld [vmem:[%s927 + $0x10] sm:$0xff]
    %v931 = vld [vmem:[%s927 + $0x18] sm:$0xff]
    %v932 = vld [vmem:[%s927 + $0x20] sm:$0xff]
    %v933 = vld [vmem:[%s927 + $0x28] sm:$0xff]
    %v934 = vld [vmem:[%s927 + $0x30] sm:$0xff]
    %v935 = vld [vmem:[%s927 + $0x38] sm:$0xff]
    %v936 = vld [vmem:[%s927 + $0x40] sm:$0xff]
    %v937 = vld [vmem:[%s927 + $0x48] sm:$0xff]
    %v938 = vld [vmem:[%s927 + $0x50] sm:$0xff]
    %v939 = vld [vmem:[%s927 + $0x58] sm:$0xff]
    %v940 = vld [vmem:[%s927 + $0x60] sm:$0xff]
    %v941 = vld [vmem:[%s927 + $0x68] sm:$0xff]
    %v942 = vld [vmem:[%s927 + $0x70] sm:$0xff]
    %v943 = vld [vmem:[%s927 + $0x78] sm:$0xff]
    %v944 = vld [vmem:[%s927 + $0x80] sm:$0xff]
    %v945 = vld [vmem:[%s927 + $0x88] sm:$0xff]
    %v946 = vld [vmem:[%s927 + $0x90] sm:$0xff]
    %v947 = vld [vmem:[%s927 + $0x98] sm:$0xff]
    %v948 = vld [vmem:[%s927 + $0xa0] sm:$0xff]
    %v949 = vld [vmem:[%s927 + $0xa8] sm:$0xff]
    %v950 = vld [vmem:[%s927 + $0xb0] sm:$0xff]
    %v951 = vld [vmem:[%s927 + $0xb8] sm:$0xff]
    %v952 = vld [vmem:[%s927 + $0xc0] sm:$0xff]
    %v953 = vld [vmem:[%s927 + $0xc8] sm:$0xff]
    %v954 = vld [vmem:[%s927 + $0xd0] sm:$0xff]
    %v955 = vld [vmem:[%s927 + $0xd8] sm:$0xff]
    %v956 = vld [vmem:[%s927 + $0xe0] sm:$0xff]
    %v957 = vld [vmem:[%s927 + $0xe8] sm:$0xff]
    %v958 = vld [vmem:[%s927 + $0xf0] sm:$0xff]
    %v959 = vld [vmem:[%s927 + $0xf8] sm:$0xff]
    %v960 = vld [vmem:[%s927 + $0x100] sm:$0xff]
    %v961 = vld [vmem:[%s927 + $0x108] sm:$0xff]
    %v962 = vld [vmem:[%s927 + $0x110] sm:$0xff]
    %v963 = vld [vmem:[%s927 + $0x118] sm:$0xff]
    %v966 = vunpack.c.l.b16 %v925
    %v967 = vunpack.c.h.b16 %v925
    %v968 = vunpack.c.l.b16 %v926
    %v969 = vpack.c.b16 %v966, %v966
    %v970 = vpack.c.b16 %v967, %v967
    %v971 = vpack.c.b16 %v968, %v968
    %vm972 = vsmask.f32 7424
    %v974 = vshrl.u32 %v156, 16
    %v976 = vshll.u32 %v156, 16
    %v978 = vrot.slane %v976, 1
    %v979 = vor.u32 %v974, %v978
    %v981 = vshll.u32 %v159, 16
    %v983 = vrot.slane %v981, 1
    %v984 = vsel %vm972, %v979, %v983
    %v986 = vshrl.u32 %v157, 16
    %v988 = vshll.u32 %v157, 16
    %v990 = vrot.slane %v988, 1
    %v991 = vor.u32 %v986, %v990
    %v993 = vshll.u32 %v160, 16
    %v995 = vrot.slane %v993, 1
    %v996 = vsel %vm972, %v991, %v995
    %v997 = vshrl.u32 %v158, 16
    %v999 = vshll.u32 %v158, 16
    %v1001 = vrot.slane %v999, 1
    %v1002 = vor.u32 %v997, %v1001
    %v1003 = vshll.u32 %v161, 16
    %v1005 = vrot.slane %v1003, 1
    %v1006 = vsel %vm972, %v1002, %v1005
    %v1007 = vshrl.u32 %v159, 16
    %v1009 = vor.u32 %v1007, %v983
    %v1011 = vshll.u32 %v969, 16
    %v1013 = vrot.slane %v1011, 1
    %v1014 = vsel %vm972, %v1009, %v1013
    %v1015 = vshrl.u32 %v160, 16
    %v1017 = vor.u32 %v1015, %v995
    %v1019 = vshll.u32 %v970, 16
    %v1021 = vrot.slane %v1019, 1
    %v1022 = vsel %vm972, %v1017, %v1021
    %v1023 = vshrl.u32 %v161, 16
    %v1025 = vor.u32 %v1023, %v1005
    %v1027 = vshll.u32 %v971, 16
    %v1029 = vrot.slane %v1027, 1
    %v1030 = vsel %vm972, %v1025, %v1029
    %v1031 = vshrl.u32 %v969, 16
    %v1033 = vor.u32 %v1031, %v1013
    %v1034 = vshrl.u32 %v970, 16
    %v1036 = vor.u32 %v1034, %v1021
    %v1037 = vshrl.u32 %v971, 16
    %v1039 = vor.u32 %v1037, %v1029
    %v1082 = vunpack.c.l.b16 %v928
    %v1083 = vunpack.c.h.b16 %v928
    %v1084 = vunpack.c.l.b16 %v929
    %v1085 = vunpack.c.h.b16 %v929
    %v1086 = vunpack.c.l.b16 %v930
    %v1087 = vunpack.c.h.b16 %v930
    %v1088 = vunpack.c.l.b16 %v931
    %v1089 = vunpack.c.h.b16 %v931
    %v1090 = vunpack.c.l.b16 %v932
    %v1091 = vunpack.c.h.b16 %v932
    %v1092 = vunpack.c.l.b16 %v933
    %v1093 = vunpack.c.h.b16 %v933
    %v1094 = vunpack.c.l.b16 %v934
    %v1095 = vunpack.c.h.b16 %v934
    %v1096 = vunpack.c.l.b16 %v935
    %v1097 = vunpack.c.h.b16 %v935
    %v1098 = vunpack.c.l.b16 %v936
    %v1099 = vunpack.c.h.b16 %v936
    %v1100 = vunpack.c.l.b16 %v937
    %v1101 = vunpack.c.h.b16 %v937
    %v1102 = vunpack.c.l.b16 %v938
    %v1103 = vunpack.c.h.b16 %v938
    %v1104 = vunpack.c.l.b16 %v939
    %v1105 = vunpack.c.h.b16 %v939
    %v1106 = vunpack.c.l.b16 %v940
    %v1107 = vunpack.c.h.b16 %v940
    %v1108 = vunpack.c.l.b16 %v941
    %v1109 = vunpack.c.h.b16 %v941
    %v1110 = vunpack.c.l.b16 %v942
    %v1111 = vunpack.c.h.b16 %v942
    %v1112 = vunpack.c.l.b16 %v943
    %v1113 = vunpack.c.h.b16 %v943
    %v1114 = vunpack.c.l.b16 %v944
    %v1115 = vunpack.c.h.b16 %v944
    %v1116 = vunpack.c.l.b16 %v945
    %v1117 = vunpack.c.h.b16 %v945
    %v1118 = vunpack.c.l.b16 %v946
    %v1119 = vunpack.c.h.b16 %v946
    %v1120 = vunpack.c.l.b16 %v947
    %v1121 = vunpack.c.h.b16 %v947
    %v1122 = vunpack.c.l.b16 %v948
    %v1123 = vunpack.c.h.b16 %v948
    %v1124 = vunpack.c.l.b16 %v949
    %v1125 = vunpack.c.h.b16 %v949
    %v1126 = vunpack.c.l.b16 %v950
    %v1127 = vunpack.c.h.b16 %v950
    %v1128 = vunpack.c.l.b16 %v951
    %v1129 = vunpack.c.h.b16 %v951
    %v1130 = vunpack.c.l.b16 %v952
    %v1131 = vunpack.c.h.b16 %v952
    %v1132 = vunpack.c.l.b16 %v953
    %v1133 = vunpack.c.h.b16 %v953
    %v1134 = vunpack.c.l.b16 %v954
    %v1135 = vunpack.c.h.b16 %v954
    %v1136 = vunpack.c.l.b16 %v955
    %v1137 = vunpack.c.h.b16 %v955
    %v1138 = vunpack.c.l.b16 %v956
    %v1139 = vunpack.c.h.b16 %v956
    %v1140 = vunpack.c.l.b16 %v957
    %v1141 = vunpack.c.h.b16 %v957
    %v1142 = vunpack.c.l.b16 %v958
    %v1143 = vunpack.c.h.b16 %v958
    %v1144 = vunpack.c.l.b16 %v959
    %v1145 = vunpack.c.h.b16 %v959
    %v1146 = vunpack.c.l.b16 %v960
    %v1147 = vunpack.c.h.b16 %v960
    %v1148 = vunpack.c.l.b16 %v961
    %v1149 = vunpack.c.h.b16 %v961
    %v1150 = vunpack.c.l.b16 %v962
    %v1151 = vunpack.c.h.b16 %v962
    %v1152 = vunpack.c.l.b16 %v963
    %v1153 = vunpack.c.h.b16 %v963
    %v1154 = vpack.c.b16 %v1084, %v1082
    %v1155 = vpack.c.b16 %v1085, %v1083
    %v1156 = vpack.c.b16 %v1088, %v1086
    %v1157 = vpack.c.b16 %v1089, %v1087
    %v1158 = vpack.c.b16 %v1092, %v1090
    %v1159 = vpack.c.b16 %v1093, %v1091
    %v1160 = vpack.c.b16 %v1096, %v1094
    %v1161 = vpack.c.b16 %v1097, %v1095
    %v1162 = vpack.c.b16 %v1100, %v1098
    %v1163 = vpack.c.b16 %v1101, %v1099
    %v1164 = vpack.c.b16 %v1104, %v1102
    %v1165 = vpack.c.b16 %v1105, %v1103
    %v1166 = vpack.c.b16 %v1108, %v1106
    %v1167 = vpack.c.b16 %v1109, %v1107
    %v1168 = vpack.c.b16 %v1112, %v1110
    %v1169 = vpack.c.b16 %v1113, %v1111
    %v1170 = vpack.c.b16 %v1116, %v1114
    %v1171 = vpack.c.b16 %v1117, %v1115
    %v1172 = vpack.c.b16 %v1120, %v1118
    %v1173 = vpack.c.b16 %v1121, %v1119
    %v1174 = vpack.c.b16 %v1124, %v1122
    %v1175 = vpack.c.b16 %v1125, %v1123
    %v1176 = vpack.c.b16 %v1128, %v1126
    %v1177 = vpack.c.b16 %v1129, %v1127
    %v1178 = vpack.c.b16 %v1132, %v1130
    %v1179 = vpack.c.b16 %v1133, %v1131
    %v1180 = vpack.c.b16 %v1136, %v1134
    %v1181 = vpack.c.b16 %v1137, %v1135
    %v1182 = vpack.c.b16 %v1140, %v1138
    %v1183 = vpack.c.b16 %v1141, %v1139
    %v1184 = vpack.c.b16 %v1144, %v1142
    %v1185 = vpack.c.b16 %v1145, %v1143
    %v1186 = vpack.c.b16 %v1148, %v1146
    %v1187 = vpack.c.b16 %v1149, %v1147
    %v1188 = vpack.c.b16 %v1152, %v1150
    %v1189 = vpack.c.b16 %v1153, %v1151
    %v1227 = vsel %vm351, %v1006, 0
    %v1230 = vsel %vm351, %v1030, 0
    %v1233 = vsel %vm351, %v1039, 0
    %1235 = vmatpush.bf16.msra.mxu0 %v1168
    %1236 = vmatpush.bf16.msra.mxu0 %v1166
    %1237 = vmatpush.bf16.msra.mxu0 %v1164
    %1238 = vmatpush.bf16.msra.mxu0 %v1162
    %1239 = vmatpush.bf16.msra.mxu0 %v1160
    %1240 = vmatpush.bf16.msra.mxu0 %v1158
    %1241 = vmatpush.bf16.msra.mxu0 %v1156
    %1242 = vmatpush.bf16.msra.mxu0 %v1154
    %1243 = vmatmul.bf16.gmra.mxu0 %v984
    %v1244 = vpop.f32.mrf.mxu0
    %v1245 = vadd.f32 0.0, %v1244
    %v1246 = vpop.f32.mrf.mxu0
    %v1247 = vadd.f32 0.0, %v1246
    %1248 = vmatmul.bf16.gmra.mxu0 %v1014
    %v1249 = vpop.f32.mrf.mxu0
    %v1250 = vadd.f32 0.0, %v1249
    %v1251 = vpop.f32.mrf.mxu0
    %v1252 = vadd.f32 0.0, %v1251
    %1253 = vmatmul.bf16.gmra.mxu0 %v1033
    %v1254 = vpop.f32.mrf.mxu0
    %v1255 = vadd.f32 0.0, %v1254
    %v1256 = vpop.f32.mrf.mxu0
    %1257 = vdwg.mxu0
    %1258 = vmatpush.bf16.msra.mxu0 %v1184
    %1259 = vmatpush.bf16.msra.mxu0 %v1182
    %1260 = vmatpush.bf16.msra.mxu0 %v1180
    %1261 = vmatpush.bf16.msra.mxu0 %v1178
    %1262 = vmatpush.bf16.msra.mxu0 %v1176
    %1263 = vmatpush.bf16.msra.mxu0 %v1174
    %1264 = vmatpush.bf16.msra.mxu0 %v1172
    %1265 = vmatpush.bf16.msra.mxu0 %v1170
    %1266 = vmatmul.bf16.gmra.mxu0 %v996
    %v1267 = vpop.f32.mrf.mxu0
    %v1268 = vadd.f32 %v1245, %v1267
    %v1269 = vpop.f32.mrf.mxu0
    %v1270 = vadd.f32 %v1247, %v1269
    %1271 = vmatmul.bf16.gmra.mxu0 %v1022
    %v1272 = vpop.f32.mrf.mxu0
    %v1273 = vadd.f32 %v1250, %v1272
    %v1274 = vpop.f32.mrf.mxu0
    %v1275 = vadd.f32 %v1252, %v1274
    %1276 = vmatmul.bf16.gmra.mxu0 %v1036
    %v1277 = vpop.f32.mrf.mxu0
    %v1278 = vadd.f32 %v1255, %v1277
    %v1279 = vpop.f32.mrf.mxu0
    %1280 = vdwg.mxu0
    %1281 = vmatpush.bf16.msra.mxu0 0
    %1282 = vmatpush.bf16.msra.mxu0 0
    %1283 = vmatpush.bf16.msra.mxu0 0
    %1284 = vmatpush.bf16.msra.mxu0 0
    %1285 = vmatpush.bf16.msra.mxu0 0
    %1286 = vmatpush.bf16.msra.mxu0 0
    %1287 = vmatpush.bf16.msra.mxu0 %v1188
    %1288 = vmatpush.bf16.msra.mxu0 %v1186
    %1289 = vmatmul.bf16.gmra.mxu0 %v1227
    %v1290 = vpop.f32.mrf.mxu0
    %v1291 = vadd.f32 %v1268, %v1290
    %v1292 = vpop.f32.mrf.mxu0
    %v1293 = vadd.f32 %v1270, %v1292
    %1294 = vmatmul.bf16.gmra.mxu0 %v1230
    %v1295 = vpop.f32.mrf.mxu0
    %v1296 = vadd.f32 %v1273, %v1295
    %v1297 = vpop.f32.mrf.mxu0
    %v1298 = vadd.f32 %v1275, %v1297
    %1299 = vmatmul.bf16.gmra.mxu0 %v1233
    %v1300 = vpop.f32.mrf.mxu0
    %v1301 = vadd.f32 %v1278, %v1300
    %v1302 = vpop.f32.mrf.mxu0
    %1303 = vdwg.mxu0
    %1304 = vmatpush.bf16.msra.mxu0 %v1169
    %1305 = vmatpush.bf16.msra.mxu0 %v1167
    %1306 = vmatpush.bf16.msra.mxu0 %v1165
    %1307 = vmatpush.bf16.msra.mxu0 %v1163
    %1308 = vmatpush.bf16.msra.mxu0 %v1161
    %1309 = vmatpush.bf16.msra.mxu0 %v1159
    %1310 = vmatpush.bf16.msra.mxu0 %v1157
    %1311 = vmatpush.bf16.msra.mxu0 %v1155
    %1312 = vmatmul.bf16.gmra.mxu0 %v984
    %v1313 = vpop.f32.mrf.mxu0
    %v1314 = vadd.f32 0.0, %v1313
    %v1315 = vpop.f32.mrf.mxu0
    %v1316 = vadd.f32 0.0, %v1315
    %1317 = vmatmul.bf16.gmra.mxu0 %v1014
    %v1318 = vpop.f32.mrf.mxu0
    %v1319 = vadd.f32 0.0, %v1318
    %v1320 = vpop.f32.mrf.mxu0
    %v1321 = vadd.f32 0.0, %v1320
    %1322 = vmatmul.bf16.gmra.mxu0 %v1033
    %v1323 = vpop.f32.mrf.mxu0
    %v1324 = vadd.f32 0.0, %v1323
    %v1325 = vpop.f32.mrf.mxu0
    %1326 = vdwg.mxu0
    %1327 = vmatpush.bf16.msra.mxu0 %v1185
    %1328 = vmatpush.bf16.msra.mxu0 %v1183
    %1329 = vmatpush.bf16.msra.mxu0 %v1181
    %1330 = vmatpush.bf16.msra.mxu0 %v1179
    %1331 = vmatpush.bf16.msra.mxu0 %v1177
    %1332 = vmatpush.bf16.msra.mxu0 %v1175
    %1333 = vmatpush.bf16.msra.mxu0 %v1173
    %1334 = vmatpush.bf16.msra.mxu0 %v1171
    %1335 = vmatmul.bf16.gmra.mxu0 %v996
    %v1336 = vpop.f32.mrf.mxu0
    %v1337 = vadd.f32 %v1314, %v1336
    %v1338 = vpop.f32.mrf.mxu0
    %v1339 = vadd.f32 %v1316, %v1338
    %1340 = vmatmul.bf16.gmra.mxu0 %v1022
    %v1341 = vpop.f32.mrf.mxu0
    %v1342 = vadd.f32 %v1319, %v1341
    %v1343 = vpop.f32.mrf.mxu0
    %v1344 = vadd.f32 %v1321, %v1343
    %1345 = vmatmul.bf16.gmra.mxu0 %v1036
    %v1346 = vpop.f32.mrf.mxu0
    %v1347 = vadd.f32 %v1324, %v1346
    %v1348 = vpop.f32.mrf.mxu0
    %1349 = vdwg.mxu0
    %1350 = vmatpush.bf16.msra.mxu0 0
    %1351 = vmatpush.bf16.msra.mxu0 0
    %1352 = vmatpush.bf16.msra.mxu0 0
    %1353 = vmatpush.bf16.msra.mxu0 0
    %1354 = vmatpush.bf16.msra.mxu0 0
    %1355 = vmatpush.bf16.msra.mxu0 0
    %1356 = vmatpush.bf16.msra.mxu0 %v1189
    %1357 = vmatpush.bf16.msra.mxu0 %v1187
    %1358 = vmatmul.bf16.gmra.mxu0 %v1227
    %v1359 = vpop.f32.mrf.mxu0
    %v1360 = vadd.f32 %v1337, %v1359
    %v1361 = vpop.f32.mrf.mxu0
    %v1362 = vadd.f32 %v1339, %v1361
    %1363 = vmatmul.bf16.gmra.mxu0 %v1230
    %v1364 = vpop.f32.mrf.mxu0
    %v1365 = vadd.f32 %v1342, %v1364
    %v1366 = vpop.f32.mrf.mxu0
    %v1367 = vadd.f32 %v1344, %v1366
    %1368 = vmatmul.bf16.gmra.mxu0 %v1233
    %v1369 = vpop.f32.mrf.mxu0
    %v1370 = vadd.f32 %v1347, %v1369
    %v1371 = vpop.f32.mrf.mxu0
    %1372 = vdwg.mxu0
    %v1373 = vadd.f32 %v843, %v1291
    %v1374 = vadd.f32 %v912, %v1360
    %v1375 = vadd.f32 %v845, %v1293
    %v1376 = vadd.f32 %v914, %v1362
    %v1377 = vadd.f32 %v848, %v1296
    %v1378 = vadd.f32 %v917, %v1365
    %v1379 = vadd.f32 %v850, %v1298
    %v1380 = vadd.f32 %v919, %v1367
    %v1381 = vadd.f32 %v853, %v1301
    %v1382 = vadd.f32 %v922, %v1370
    %s1383 = scalar_lea.vmem [#allocation2], 864
    %v1384 = vld [vmem:[%s1383] sm:$0xff]
    %v1385 = vld [vmem:[%s1383 + $0x8] sm:$0xff]
    %v1386 = vld [vmem:[%s1383 + $0x10] sm:$0xff]
    %v1387 = vld [vmem:[%s1383 + $0x18] sm:$0xff]
    %v1388 = vld [vmem:[%s1383 + $0x20] sm:$0xff]
    %v1389 = vld [vmem:[%s1383 + $0x28] sm:$0xff]
    %v1390 = vld [vmem:[%s1383 + $0x30] sm:$0xff]
    %v1391 = vld [vmem:[%s1383 + $0x38] sm:$0xff]
    %v1392 = vld [vmem:[%s1383 + $0x40] sm:$0xff]
    %v1393 = vld [vmem:[%s1383 + $0x48] sm:$0xff]
    %v1394 = vld [vmem:[%s1383 + $0x50] sm:$0xff]
    %v1395 = vld [vmem:[%s1383 + $0x58] sm:$0xff]
    %v1396 = vld [vmem:[%s1383 + $0x60] sm:$0xff]
    %v1397 = vld [vmem:[%s1383 + $0x68] sm:$0xff]
    %v1398 = vld [vmem:[%s1383 + $0x70] sm:$0xff]
    %v1399 = vld [vmem:[%s1383 + $0x78] sm:$0xff]
    %v1400 = vld [vmem:[%s1383 + $0x80] sm:$0xff]
    %v1401 = vld [vmem:[%s1383 + $0x88] sm:$0xff]
    %v1402 = vld [vmem:[%s1383 + $0x90] sm:$0xff]
    %v1403 = vld [vmem:[%s1383 + $0x98] sm:$0xff]
    %v1404 = vld [vmem:[%s1383 + $0xa0] sm:$0xff]
    %v1405 = vld [vmem:[%s1383 + $0xa8] sm:$0xff]
    %v1406 = vld [vmem:[%s1383 + $0xb0] sm:$0xff]
    %v1407 = vld [vmem:[%s1383 + $0xb8] sm:$0xff]
    %v1408 = vld [vmem:[%s1383 + $0xc0] sm:$0xff]
    %v1409 = vld [vmem:[%s1383 + $0xc8] sm:$0xff]
    %v1410 = vld [vmem:[%s1383 + $0xd0] sm:$0xff]
    %v1411 = vld [vmem:[%s1383 + $0xd8] sm:$0xff]
    %v1412 = vld [vmem:[%s1383 + $0xe0] sm:$0xff]
    %v1413 = vld [vmem:[%s1383 + $0xe8] sm:$0xff]
    %v1414 = vld [vmem:[%s1383 + $0xf0] sm:$0xff]
    %v1415 = vld [vmem:[%s1383 + $0xf8] sm:$0xff]
    %v1416 = vld [vmem:[%s1383 + $0x100] sm:$0xff]
    %v1417 = vld [vmem:[%s1383 + $0x108] sm:$0xff]
    %v1418 = vld [vmem:[%s1383 + $0x110] sm:$0xff]
    %v1419 = vld [vmem:[%s1383 + $0x118] sm:$0xff]
    %s1420 = scalar_lea.vmem [#allocation2], 1152
    %v1421 = vld [vmem:[%s1420] sm:$0xff]
    %v1422 = vld [vmem:[%s1420 + $0x8] sm:$0xff]
    %v1423 = vld [vmem:[%s1420 + $0x10] sm:$0xff]
    %v1424 = vld [vmem:[%s1420 + $0x18] sm:$0xff]
    %v1425 = vld [vmem:[%s1420 + $0x20] sm:$0xff]
    %v1426 = vld [vmem:[%s1420 + $0x28] sm:$0xff]
    %v1427 = vld [vmem:[%s1420 + $0x30] sm:$0xff]
    %v1428 = vld [vmem:[%s1420 + $0x38] sm:$0xff]
    %v1429 = vld [vmem:[%s1420 + $0x40] sm:$0xff]
    %v1430 = vld [vmem:[%s1420 + $0x48] sm:$0xff]
    %v1431 = vld [vmem:[%s1420 + $0x50] sm:$0xff]
    %v1432 = vld [vmem:[%s1420 + $0x58] sm:$0xff]
    %v1433 = vld [vmem:[%s1420 + $0x60] sm:$0xff]
    %v1434 = vld [vmem:[%s1420 + $0x68] sm:$0xff]
    %v1435 = vld [vmem:[%s1420 + $0x70] sm:$0xff]
    %v1436 = vld [vmem:[%s1420 + $0x78] sm:$0xff]
    %v1437 = vld [vmem:[%s1420 + $0x80] sm:$0xff]
    %v1438 = vld [vmem:[%s1420 + $0x88] sm:$0xff]
    %v1439 = vld [vmem:[%s1420 + $0x90] sm:$0xff]
    %v1440 = vld [vmem:[%s1420 + $0x98] sm:$0xff]
    %v1441 = vld [vmem:[%s1420 + $0xa0] sm:$0xff]
    %v1442 = vld [vmem:[%s1420 + $0xa8] sm:$0xff]
    %v1443 = vld [vmem:[%s1420 + $0xb0] sm:$0xff]
    %v1444 = vld [vmem:[%s1420 + $0xb8] sm:$0xff]
    %v1445 = vld [vmem:[%s1420 + $0xc0] sm:$0xff]
    %v1446 = vld [vmem:[%s1420 + $0xc8] sm:$0xff]
    %v1447 = vld [vmem:[%s1420 + $0xd0] sm:$0xff]
    %v1448 = vld [vmem:[%s1420 + $0xd8] sm:$0xff]
    %v1449 = vld [vmem:[%s1420 + $0xe0] sm:$0xff]
    %v1450 = vld [vmem:[%s1420 + $0xe8] sm:$0xff]
    %v1451 = vld [vmem:[%s1420 + $0xf0] sm:$0xff]
    %v1452 = vld [vmem:[%s1420 + $0xf8] sm:$0xff]
    %v1453 = vld [vmem:[%s1420 + $0x100] sm:$0xff]
    %v1454 = vld [vmem:[%s1420 + $0x108] sm:$0xff]
    %v1455 = vld [vmem:[%s1420 + $0x110] sm:$0xff]
    %v1456 = vld [vmem:[%s1420 + $0x118] sm:$0xff]
    %v1493 = vunpack.c.l.b16 %v1421
    %v1494 = vunpack.c.h.b16 %v1421
    %v1495 = vunpack.c.l.b16 %v1422
    %v1496 = vunpack.c.h.b16 %v1422
    %v1497 = vunpack.c.l.b16 %v1423
    %v1498 = vunpack.c.h.b16 %v1423
    %v1499 = vunpack.c.l.b16 %v1424
    %v1500 = vunpack.c.h.b16 %v1424
    %v1501 = vunpack.c.l.b16 %v1425
    %v1502 = vunpack.c.h.b16 %v1425
    %v1503 = vunpack.c.l.b16 %v1426
    %v1504 = vunpack.c.h.b16 %v1426
    %v1505 = vunpack.c.l.b16 %v1427
    %v1506 = vunpack.c.h.b16 %v1427
    %v1507 = vunpack.c.l.b16 %v1428
    %v1508 = vunpack.c.h.b16 %v1428
    %v1509 = vunpack.c.l.b16 %v1429
    %v1510 = vunpack.c.h.b16 %v1429
    %v1511 = vunpack.c.l.b16 %v1430
    %v1512 = vunpack.c.h.b16 %v1430
    %v1513 = vunpack.c.l.b16 %v1431
    %v1514 = vunpack.c.h.b16 %v1431
    %v1515 = vunpack.c.l.b16 %v1432
    %v1516 = vunpack.c.h.b16 %v1432
    %v1517 = vunpack.c.l.b16 %v1433
    %v1518 = vunpack.c.h.b16 %v1433
    %v1519 = vunpack.c.l.b16 %v1434
    %v1520 = vunpack.c.h.b16 %v1434
    %v1521 = vunpack.c.l.b16 %v1435
    %v1522 = vunpack.c.h.b16 %v1435
    %v1523 = vunpack.c.l.b16 %v1436
    %v1524 = vunpack.c.h.b16 %v1436
    %v1525 = vunpack.c.l.b16 %v1437
    %v1526 = vunpack.c.h.b16 %v1437
    %v1527 = vunpack.c.l.b16 %v1438
    %v1528 = vunpack.c.h.b16 %v1438
    %v1529 = vunpack.c.l.b16 %v1439
    %v1530 = vunpack.c.h.b16 %v1439
    %v1531 = vunpack.c.l.b16 %v1440
    %v1532 = vunpack.c.h.b16 %v1440
    %v1533 = vunpack.c.l.b16 %v1441
    %v1534 = vunpack.c.h.b16 %v1441
    %v1535 = vunpack.c.l.b16 %v1442
    %v1536 = vunpack.c.h.b16 %v1442
    %v1537 = vunpack.c.l.b16 %v1443
    %v1538 = vunpack.c.h.b16 %v1443
    %v1539 = vunpack.c.l.b16 %v1444
    %v1540 = vunpack.c.h.b16 %v1444
    %v1541 = vunpack.c.l.b16 %v1445
    %v1542 = vunpack.c.h.b16 %v1445
    %v1543 = vunpack.c.l.b16 %v1446
    %v1544 = vunpack.c.h.b16 %v1446
    %v1545 = vunpack.c.l.b16 %v1447
    %v1546 = vunpack.c.h.b16 %v1447
    %v1547 = vunpack.c.l.b16 %v1448
    %v1548 = vunpack.c.h.b16 %v1448
    %v1549 = vunpack.c.l.b16 %v1449
    %v1550 = vunpack.c.h.b16 %v1449
    %v1551 = vunpack.c.l.b16 %v1450
    %v1552 = vunpack.c.h.b16 %v1450
    %v1553 = vunpack.c.l.b16 %v1451
    %v1554 = vunpack.c.h.b16 %v1451
    %v1555 = vunpack.c.l.b16 %v1452
    %v1556 = vunpack.c.h.b16 %v1452
    %v1557 = vunpack.c.l.b16 %v1453
    %v1558 = vunpack.c.h.b16 %v1453
    %v1559 = vunpack.c.l.b16 %v1454
    %v1560 = vunpack.c.h.b16 %v1454
    %v1561 = vunpack.c.l.b16 %v1455
    %v1562 = vunpack.c.h.b16 %v1455
    %v1563 = vunpack.c.l.b16 %v1456
    %v1564 = vunpack.c.h.b16 %v1456
    %v1565 = vpack.c.b16 %v1495, %v1493
    %v1566 = vpack.c.b16 %v1496, %v1494
    %v1567 = vpack.c.b16 %v1499, %v1497
    %v1568 = vpack.c.b16 %v1500, %v1498
    %v1569 = vpack.c.b16 %v1503, %v1501
    %v1570 = vpack.c.b16 %v1504, %v1502
    %v1571 = vpack.c.b16 %v1507, %v1505
    %v1572 = vpack.c.b16 %v1508, %v1506
    %v1573 = vpack.c.b16 %v1511, %v1509
    %v1574 = vpack.c.b16 %v1512, %v1510
    %v1575 = vpack.c.b16 %v1515, %v1513
    %v1576 = vpack.c.b16 %v1516, %v1514
    %v1577 = vpack.c.b16 %v1519, %v1517
    %v1578 = vpack.c.b16 %v1520, %v1518
    %v1579 = vpack.c.b16 %v1523, %v1521
    %v1580 = vpack.c.b16 %v1524, %v1522
    %v1581 = vpack.c.b16 %v1527, %v1525
    %v1582 = vpack.c.b16 %v1528, %v1526
    %v1583 = vpack.c.b16 %v1531, %v1529
    %v1584 = vpack.c.b16 %v1532, %v1530
    %v1585 = vpack.c.b16 %v1535, %v1533
    %v1586 = vpack.c.b16 %v1536, %v1534
    %v1587 = vpack.c.b16 %v1539, %v1537
    %v1588 = vpack.c.b16 %v1540, %v1538
    %v1589 = vpack.c.b16 %v1543, %v1541
    %v1590 = vpack.c.b16 %v1544, %v1542
    %v1591 = vpack.c.b16 %v1547, %v1545
    %v1592 = vpack.c.b16 %v1548, %v1546
    %v1593 = vpack.c.b16 %v1551, %v1549
    %v1594 = vpack.c.b16 %v1552, %v1550
    %v1595 = vpack.c.b16 %v1555, %v1553
    %v1596 = vpack.c.b16 %v1556, %v1554
    %v1597 = vpack.c.b16 %v1559, %v1557
    %v1598 = vpack.c.b16 %v1560, %v1558
    %v1599 = vpack.c.b16 %v1563, %v1561
    %v1600 = vpack.c.b16 %v1564, %v1562
    %1637 = vmatpush.bf16.msra.mxu0 %v1579
    %1638 = vmatpush.bf16.msra.mxu0 %v1577
    %1639 = vmatpush.bf16.msra.mxu0 %v1575
    %1640 = vmatpush.bf16.msra.mxu0 %v1573
    %1641 = vmatpush.bf16.msra.mxu0 %v1571
    %1642 = vmatpush.bf16.msra.mxu0 %v1569
    %1643 = vmatpush.bf16.msra.mxu0 %v1567
    %1644 = vmatpush.bf16.msra.mxu0 %v1565
    %1645 = vmatmul.bf16.gmra.mxu0 %v156
    %v1646 = vpop.f32.mrf.mxu0
    %v1647 = vadd.f32 0.0, %v1646
    %v1648 = vpop.f32.mrf.mxu0
    %v1649 = vadd.f32 0.0, %v1648
    %1650 = vmatmul.bf16.gmra.mxu0 %v159
    %v1651 = vpop.f32.mrf.mxu0
    %v1652 = vadd.f32 0.0, %v1651
    %v1653 = vpop.f32.mrf.mxu0
    %v1654 = vadd.f32 0.0, %v1653
    %1655 = vmatmul.bf16.gmra.mxu0 %v162
    %v1656 = vpop.f32.mrf.mxu0
    %v1657 = vadd.f32 0.0, %v1656
    %v1658 = vpop.f32.mrf.mxu0
    %1659 = vdwg.mxu0
    %1660 = vmatpush.bf16.msra.mxu0 %v1595
    %1661 = vmatpush.bf16.msra.mxu0 %v1593
    %1662 = vmatpush.bf16.msra.mxu0 %v1591
    %1663 = vmatpush.bf16.msra.mxu0 %v1589
    %1664 = vmatpush.bf16.msra.mxu0 %v1587
    %1665 = vmatpush.bf16.msra.mxu0 %v1585
    %1666 = vmatpush.bf16.msra.mxu0 %v1583
    %1667 = vmatpush.bf16.msra.mxu0 %v1581
    %1668 = vmatmul.bf16.gmra.mxu0 %v157
    %v1669 = vpop.f32.mrf.mxu0
    %v1670 = vadd.f32 %v1647, %v1669
    %v1671 = vpop.f32.mrf.mxu0
    %v1672 = vadd.f32 %v1649, %v1671
    %1673 = vmatmul.bf16.gmra.mxu0 %v160
    %v1674 = vpop.f32.mrf.mxu0
    %v1675 = vadd.f32 %v1652, %v1674
    %v1676 = vpop.f32.mrf.mxu0
    %v1677 = vadd.f32 %v1654, %v1676
    %1678 = vmatmul.bf16.gmra.mxu0 %v163
    %v1679 = vpop.f32.mrf.mxu0
    %v1680 = vadd.f32 %v1657, %v1679
    %v1681 = vpop.f32.mrf.mxu0
    %1682 = vdwg.mxu0
    %1683 = vmatpush.bf16.msra.mxu0 0
    %1684 = vmatpush.bf16.msra.mxu0 0
    %1685 = vmatpush.bf16.msra.mxu0 0
    %1686 = vmatpush.bf16.msra.mxu0 0
    %1687 = vmatpush.bf16.msra.mxu0 0
    %1688 = vmatpush.bf16.msra.mxu0 0
    %1689 = vmatpush.bf16.msra.mxu0 %v1599
    %1690 = vmatpush.bf16.msra.mxu0 %v1597
    %1691 = vmatmul.bf16.gmra.mxu0 %v353
    %v1692 = vpop.f32.mrf.mxu0
    %v1693 = vadd.f32 %v1670, %v1692
    %v1694 = vpop.f32.mrf.mxu0
    %v1695 = vadd.f32 %v1672, %v1694
    %1696 = vmatmul.bf16.gmra.mxu0 %v356
    %v1697 = vpop.f32.mrf.mxu0
    %v1698 = vadd.f32 %v1675, %v1697
    %v1699 = vpop.f32.mrf.mxu0
    %v1700 = vadd.f32 %v1677, %v1699
    %1701 = vmatmul.bf16.gmra.mxu0 %v359
    %v1702 = vpop.f32.mrf.mxu0
    %v1703 = vadd.f32 %v1680, %v1702
    %v1704 = vpop.f32.mrf.mxu0
    %1705 = vdwg.mxu0
    %1706 = vmatpush.bf16.msra.mxu0 %v1580
    %1707 = vmatpush.bf16.msra.mxu0 %v1578
    %1708 = vmatpush.bf16.msra.mxu0 %v1576
    %1709 = vmatpush.bf16.msra.mxu0 %v1574
    %1710 = vmatpush.bf16.msra.mxu0 %v1572
    %1711 = vmatpush.bf16.msra.mxu0 %v1570
    %1712 = vmatpush.bf16.msra.mxu0 %v1568
    %1713 = vmatpush.bf16.msra.mxu0 %v1566
    %1714 = vmatmul.bf16.gmra.mxu0 %v156
    %v1715 = vpop.f32.mrf.mxu0
    %v1716 = vadd.f32 0.0, %v1715
    %v1717 = vpop.f32.mrf.mxu0
    %v1718 = vadd.f32 0.0, %v1717
    %1719 = vmatmul.bf16.gmra.mxu0 %v159
    %v1720 = vpop.f32.mrf.mxu0
    %v1721 = vadd.f32 0.0, %v1720
    %v1722 = vpop.f32.mrf.mxu0
    %v1723 = vadd.f32 0.0, %v1722
    %1724 = vmatmul.bf16.gmra.mxu0 %v162
    %v1725 = vpop.f32.mrf.mxu0
    %v1726 = vadd.f32 0.0, %v1725
    %v1727 = vpop.f32.mrf.mxu0
    %1728 = vdwg.mxu0
    %1729 = vmatpush.bf16.msra.mxu0 %v1596
    %1730 = vmatpush.bf16.msra.mxu0 %v1594
    %1731 = vmatpush.bf16.msra.mxu0 %v1592
    %1732 = vmatpush.bf16.msra.mxu0 %v1590
    %1733 = vmatpush.bf16.msra.mxu0 %v1588
    %1734 = vmatpush.bf16.msra.mxu0 %v1586
    %1735 = vmatpush.bf16.msra.mxu0 %v1584
    %1736 = vmatpush.bf16.msra.mxu0 %v1582
    %1737 = vmatmul.bf16.gmra.mxu0 %v157
    %v1738 = vpop.f32.mrf.mxu0
    %v1739 = vadd.f32 %v1716, %v1738
    %v1740 = vpop.f32.mrf.mxu0
    %v1741 = vadd.f32 %v1718, %v1740
    %1742 = vmatmul.bf16.gmra.mxu0 %v160
    %v1743 = vpop.f32.mrf.mxu0
    %v1744 = vadd.f32 %v1721, %v1743
    %v1745 = vpop.f32.mrf.mxu0
    %v1746 = vadd.f32 %v1723, %v1745
    %1747 = vmatmul.bf16.gmra.mxu0 %v163
    %v1748 = vpop.f32.mrf.mxu0
    %v1749 = vadd.f32 %v1726, %v1748
    %v1750 = vpop.f32.mrf.mxu0
    %1751 = vdwg.mxu0
    %1752 = vmatpush.bf16.msra.mxu0 0
    %1753 = vmatpush.bf16.msra.mxu0 0
    %1754 = vmatpush.bf16.msra.mxu0 0
    %1755 = vmatpush.bf16.msra.mxu0 0
    %1756 = vmatpush.bf16.msra.mxu0 0
    %1757 = vmatpush.bf16.msra.mxu0 0
    %1758 = vmatpush.bf16.msra.mxu0 %v1600
    %1759 = vmatpush.bf16.msra.mxu0 %v1598
    %1760 = vmatmul.bf16.gmra.mxu0 %v353
    %v1761 = vpop.f32.mrf.mxu0
    %v1762 = vadd.f32 %v1739, %v1761
    %v1763 = vpop.f32.mrf.mxu0
    %v1764 = vadd.f32 %v1741, %v1763
    %1765 = vmatmul.bf16.gmra.mxu0 %v356
    %v1766 = vpop.f32.mrf.mxu0
    %v1767 = vadd.f32 %v1744, %v1766
    %v1768 = vpop.f32.mrf.mxu0
    %v1769 = vadd.f32 %v1746, %v1768
    %1770 = vmatmul.bf16.gmra.mxu0 %v359
    %v1771 = vpop.f32.mrf.mxu0
    %v1772 = vadd.f32 %v1749, %v1771
    %v1773 = vpop.f32.mrf.mxu0
    %1774 = vdwg.mxu0
    %v1811 = vunpack.c.l.b16 %v1384
    %v1812 = vunpack.c.h.b16 %v1384
    %v1813 = vunpack.c.l.b16 %v1385
    %v1814 = vunpack.c.h.b16 %v1385
    %v1815 = vunpack.c.l.b16 %v1386
    %v1816 = vunpack.c.h.b16 %v1386
    %v1817 = vunpack.c.l.b16 %v1387
    %v1818 = vunpack.c.h.b16 %v1387
    %v1819 = vunpack.c.l.b16 %v1388
    %v1820 = vunpack.c.h.b16 %v1388
    %v1821 = vunpack.c.l.b16 %v1389
    %v1822 = vunpack.c.h.b16 %v1389
    %v1823 = vunpack.c.l.b16 %v1390
    %v1824 = vunpack.c.h.b16 %v1390
    %v1825 = vunpack.c.l.b16 %v1391
    %v1826 = vunpack.c.h.b16 %v1391
    %v1827 = vunpack.c.l.b16 %v1392
    %v1828 = vunpack.c.h.b16 %v1392
    %v1829 = vunpack.c.l.b16 %v1393
    %v1830 = vunpack.c.h.b16 %v1393
    %v1831 = vunpack.c.l.b16 %v1394
    %v1832 = vunpack.c.h.b16 %v1394
    %v1833 = vunpack.c.l.b16 %v1395
    %v1834 = vunpack.c.h.b16 %v1395
    %v1835 = vunpack.c.l.b16 %v1396
    %v1836 = vunpack.c.h.b16 %v1396
    %v1837 = vunpack.c.l.b16 %v1397
    %v1838 = vunpack.c.h.b16 %v1397
    %v1839 = vunpack.c.l.b16 %v1398
    %v1840 = vunpack.c.h.b16 %v1398
    %v1841 = vunpack.c.l.b16 %v1399
    %v1842 = vunpack.c.h.b16 %v1399
    %v1843 = vunpack.c.l.b16 %v1400
    %v1844 = vunpack.c.h.b16 %v1400
    %v1845 = vunpack.c.l.b16 %v1401
    %v1846 = vunpack.c.h.b16 %v1401
    %v1847 = vunpack.c.l.b16 %v1402
    %v1848 = vunpack.c.h.b16 %v1402
    %v1849 = vunpack.c.l.b16 %v1403
    %v1850 = vunpack.c.h.b16 %v1403
    %v1851 = vunpack.c.l.b16 %v1404
    %v1852 = vunpack.c.h.b16 %v1404
    %v1853 = vunpack.c.l.b16 %v1405
    %v1854 = vunpack.c.h.b16 %v1405
    %v1855 = vunpack.c.l.b16 %v1406
    %v1856 = vunpack.c.h.b16 %v1406
    %v1857 = vunpack.c.l.b16 %v1407
    %v1858 = vunpack.c.h.b16 %v1407
    %v1859 = vunpack.c.l.b16 %v1408
    %v1860 = vunpack.c.h.b16 %v1408
    %v1861 = vunpack.c.l.b16 %v1409
    %v1862 = vunpack.c.h.b16 %v1409
    %v1863 = vunpack.c.l.b16 %v1410
    %v1864 = vunpack.c.h.b16 %v1410
    %v1865 = vunpack.c.l.b16 %v1411
    %v1866 = vunpack.c.h.b16 %v1411
    %v1867 = vunpack.c.l.b16 %v1412
    %v1868 = vunpack.c.h.b16 %v1412
    %v1869 = vunpack.c.l.b16 %v1413
    %v1870 = vunpack.c.h.b16 %v1413
    %v1871 = vunpack.c.l.b16 %v1414
    %v1872 = vunpack.c.h.b16 %v1414
    %v1873 = vunpack.c.l.b16 %v1415
    %v1874 = vunpack.c.h.b16 %v1415
    %v1875 = vunpack.c.l.b16 %v1416
    %v1876 = vunpack.c.h.b16 %v1416
    %v1877 = vunpack.c.l.b16 %v1417
    %v1878 = vunpack.c.h.b16 %v1417
    %v1879 = vunpack.c.l.b16 %v1418
    %v1880 = vunpack.c.h.b16 %v1418
    %v1881 = vunpack.c.l.b16 %v1419
    %v1882 = vunpack.c.h.b16 %v1419
    %v1883 = vpack.c.b16 %v1813, %v1811
    %v1884 = vpack.c.b16 %v1814, %v1812
    %v1885 = vpack.c.b16 %v1817, %v1815
    %v1886 = vpack.c.b16 %v1818, %v1816
    %v1887 = vpack.c.b16 %v1821, %v1819
    %v1888 = vpack.c.b16 %v1822, %v1820
    %v1889 = vpack.c.b16 %v1825, %v1823
    %v1890 = vpack.c.b16 %v1826, %v1824
    %v1891 = vpack.c.b16 %v1829, %v1827
    %v1892 = vpack.c.b16 %v1830, %v1828
    %v1893 = vpack.c.b16 %v1833, %v1831
    %v1894 = vpack.c.b16 %v1834, %v1832
    %v1895 = vpack.c.b16 %v1837, %v1835
    %v1896 = vpack.c.b16 %v1838, %v1836
    %v1897 = vpack.c.b16 %v1841, %v1839
    %v1898 = vpack.c.b16 %v1842, %v1840
    %v1899 = vpack.c.b16 %v1845, %v1843
    %v1900 = vpack.c.b16 %v1846, %v1844
    %v1901 = vpack.c.b16 %v1849, %v1847
    %v1902 = vpack.c.b16 %v1850, %v1848
    %v1903 = vpack.c.b16 %v1853, %v1851
    %v1904 = vpack.c.b16 %v1854, %v1852
    %v1905 = vpack.c.b16 %v1857, %v1855
    %v1906 = vpack.c.b16 %v1858, %v1856
    %v1907 = vpack.c.b16 %v1861, %v1859
    %v1908 = vpack.c.b16 %v1862, %v1860
    %v1909 = vpack.c.b16 %v1865, %v1863
    %v1910 = vpack.c.b16 %v1866, %v1864
    %v1911 = vpack.c.b16 %v1869, %v1867
    %v1912 = vpack.c.b16 %v1870, %v1868
    %v1913 = vpack.c.b16 %v1873, %v1871
    %v1914 = vpack.c.b16 %v1874, %v1872
    %v1915 = vpack.c.b16 %v1877, %v1875
    %v1916 = vpack.c.b16 %v1878, %v1876
    %v1917 = vpack.c.b16 %v1881, %v1879
    %v1918 = vpack.c.b16 %v1882, %v1880
    %1955 = vmatpush.bf16.msra.mxu0 %v1897
    %1956 = vmatpush.bf16.msra.mxu0 %v1895
    %1957 = vmatpush.bf16.msra.mxu0 %v1893
    %1958 = vmatpush.bf16.msra.mxu0 %v1891
    %1959 = vmatpush.bf16.msra.mxu0 %v1889
    %1960 = vmatpush.bf16.msra.mxu0 %v1887
    %1961 = vmatpush.bf16.msra.mxu0 %v1885
    %1962 = vmatpush.bf16.msra.mxu0 %v1883
    %1963 = vmatmul.bf16.gmra.mxu0 %v530
    %v1964 = vpop.f32.mrf.mxu0
    %v1965 = vadd.f32 %v1693, %v1964
    %v1966 = vpop.f32.mrf.mxu0
    %v1967 = vadd.f32 %v1695, %v1966
    %1968 = vmatmul.bf16.gmra.mxu0 %v573
    %v1969 = vpop.f32.mrf.mxu0
    %v1970 = vadd.f32 %v1698, %v1969
    %v1971 = vpop.f32.mrf.mxu0
    %v1972 = vadd.f32 %v1700, %v1971
    %1973 = vmatmul.bf16.gmra.mxu0 %v572
    %v1974 = vpop.f32.mrf.mxu0
    %v1975 = vadd.f32 %v1703, %v1974
    %v1976 = vpop.f32.mrf.mxu0
    %1977 = vdwg.mxu0
    %1978 = vmatpush.bf16.msra.mxu0 %v1913
    %1979 = vmatpush.bf16.msra.mxu0 %v1911
    %1980 = vmatpush.bf16.msra.mxu0 %v1909
    %1981 = vmatpush.bf16.msra.mxu0 %v1907
    %1982 = vmatpush.bf16.msra.mxu0 %v1905
    %1983 = vmatpush.bf16.msra.mxu0 %v1903
    %1984 = vmatpush.bf16.msra.mxu0 %v1901
    %1985 = vmatpush.bf16.msra.mxu0 %v1899
    %1986 = vmatmul.bf16.gmra.mxu0 %v547
    %v1987 = vpop.f32.mrf.mxu0
    %v1988 = vadd.f32 %v1965, %v1987
    %v1989 = vpop.f32.mrf.mxu0
    %v1990 = vadd.f32 %v1967, %v1989
    %1991 = vmatmul.bf16.gmra.mxu0 %v582
    %v1992 = vpop.f32.mrf.mxu0
    %v1993 = vadd.f32 %v1970, %v1992
    %v1994 = vpop.f32.mrf.mxu0
    %v1995 = vadd.f32 %v1972, %v1994
    %1996 = vmatmul.bf16.gmra.mxu0 %v581
    %v1997 = vpop.f32.mrf.mxu0
    %v1998 = vadd.f32 %v1975, %v1997
    %v1999 = vpop.f32.mrf.mxu0
    %2000 = vdwg.mxu0
    %2001 = vmatpush.bf16.msra.mxu0 0
    %2002 = vmatpush.bf16.msra.mxu0 0
    %2003 = vmatpush.bf16.msra.mxu0 0
    %2004 = vmatpush.bf16.msra.mxu0 0
    %2005 = vmatpush.bf16.msra.mxu0 0
    %2006 = vmatpush.bf16.msra.mxu0 0
    %2007 = vmatpush.bf16.msra.mxu0 %v1917
    %2008 = vmatpush.bf16.msra.mxu0 %v1915
    %2009 = vmatmul.bf16.gmra.mxu0 %v779
    %v2010 = vpop.f32.mrf.mxu0
    %v2011 = vadd.f32 %v1988, %v2010
    %v2012 = vpop.f32.mrf.mxu0
    %v2013 = vadd.f32 %v1990, %v2012
    %2014 = vmatmul.bf16.gmra.mxu0 %v782
    %v2015 = vpop.f32.mrf.mxu0
    %v2016 = vadd.f32 %v1993, %v2015
    %v2017 = vpop.f32.mrf.mxu0
    %v2018 = vadd.f32 %v1995, %v2017
    %2019 = vmatmul.bf16.gmra.mxu0 %v785
    %v2020 = vpop.f32.mrf.mxu0
    %v2021 = vadd.f32 %v1998, %v2020
    %v2022 = vpop.f32.mrf.mxu0
    %2023 = vdwg.mxu0
    %2024 = vmatpush.bf16.msra.mxu0 %v1898
    %2025 = vmatpush.bf16.msra.mxu0 %v1896
    %2026 = vmatpush.bf16.msra.mxu0 %v1894
    %2027 = vmatpush.bf16.msra.mxu0 %v1892
    %2028 = vmatpush.bf16.msra.mxu0 %v1890
    %2029 = vmatpush.bf16.msra.mxu0 %v1888
    %2030 = vmatpush.bf16.msra.mxu0 %v1886
    %2031 = vmatpush.bf16.msra.mxu0 %v1884
    %2032 = vmatmul.bf16.gmra.mxu0 %v530
    %v2033 = vpop.f32.mrf.mxu0
    %v2034 = vadd.f32 %v1762, %v2033
    %v2035 = vpop.f32.mrf.mxu0
    %v2036 = vadd.f32 %v1764, %v2035
    %2037 = vmatmul.bf16.gmra.mxu0 %v573
    %v2038 = vpop.f32.mrf.mxu0
    %v2039 = vadd.f32 %v1767, %v2038
    %v2040 = vpop.f32.mrf.mxu0
    %v2041 = vadd.f32 %v1769, %v2040
    %2042 = vmatmul.bf16.gmra.mxu0 %v572
    %v2043 = vpop.f32.mrf.mxu0
    %v2044 = vadd.f32 %v1772, %v2043
    %v2045 = vpop.f32.mrf.mxu0
    %2046 = vdwg.mxu0
    %2047 = vmatpush.bf16.msra.mxu0 %v1914
    %2048 = vmatpush.bf16.msra.mxu0 %v1912
    %2049 = vmatpush.bf16.msra.mxu0 %v1910
    %2050 = vmatpush.bf16.msra.mxu0 %v1908
    %2051 = vmatpush.bf16.msra.mxu0 %v1906
    %2052 = vmatpush.bf16.msra.mxu0 %v1904
    %2053 = vmatpush.bf16.msra.mxu0 %v1902
    %2054 = vmatpush.bf16.msra.mxu0 %v1900
    %2055 = vmatmul.bf16.gmra.mxu0 %v547
    %v2056 = vpop.f32.mrf.mxu0
    %v2057 = vadd.f32 %v2034, %v2056
    %v2058 = vpop.f32.mrf.mxu0
    %v2059 = vadd.f32 %v2036, %v2058
    %2060 = vmatmul.bf16.gmra.mxu0 %v582
    %v2061 = vpop.f32.mrf.mxu0
    %v2062 = vadd.f32 %v2039, %v2061
    %v2063 = vpop.f32.mrf.mxu0
    %v2064 = vadd.f32 %v2041, %v2063
    %2065 = vmatmul.bf16.gmra.mxu0 %v581
    %v2066 = vpop.f32.mrf.mxu0
    %v2067 = vadd.f32 %v2044, %v2066
    %v2068 = vpop.f32.mrf.mxu0
    %2069 = vdwg.mxu0
    %2070 = vmatpush.bf16.msra.mxu0 0
    %2071 = vmatpush.bf16.msra.mxu0 0
    %2072 = vmatpush.bf16.msra.mxu0 0
    %2073 = vmatpush.bf16.msra.mxu0 0
    %2074 = vmatpush.bf16.msra.mxu0 0
    %2075 = vmatpush.bf16.msra.mxu0 0
    %2076 = vmatpush.bf16.msra.mxu0 %v1918
    %2077 = vmatpush.bf16.msra.mxu0 %v1916
    %2078 = vmatmul.bf16.gmra.mxu0 %v779
    %v2079 = vpop.f32.mrf.mxu0
    %v2080 = vadd.f32 %v2057, %v2079
    %v2081 = vpop.f32.mrf.mxu0
    %v2082 = vadd.f32 %v2059, %v2081
    %2083 = vmatmul.bf16.gmra.mxu0 %v782
    %v2084 = vpop.f32.mrf.mxu0
    %v2085 = vadd.f32 %v2062, %v2084
    %v2086 = vpop.f32.mrf.mxu0
    %v2087 = vadd.f32 %v2064, %v2086
    %2088 = vmatmul.bf16.gmra.mxu0 %v785
    %v2089 = vpop.f32.mrf.mxu0
    %v2090 = vadd.f32 %v2067, %v2089
    %v2091 = vpop.f32.mrf.mxu0
    %2092 = vdwg.mxu0
    %s2093 = scalar_lea.vmem [#allocation2], 1440
    %v2094 = vld [vmem:[%s2093] sm:$0xff]
    %v2095 = vld [vmem:[%s2093 + $0x8] sm:$0xff]
    %v2096 = vld [vmem:[%s2093 + $0x10] sm:$0xff]
    %v2097 = vld [vmem:[%s2093 + $0x18] sm:$0xff]
    %v2098 = vld [vmem:[%s2093 + $0x20] sm:$0xff]
    %v2099 = vld [vmem:[%s2093 + $0x28] sm:$0xff]
    %v2100 = vld [vmem:[%s2093 + $0x30] sm:$0xff]
    %v2101 = vld [vmem:[%s2093 + $0x38] sm:$0xff]
    %v2102 = vld [vmem:[%s2093 + $0x40] sm:$0xff]
    %v2103 = vld [vmem:[%s2093 + $0x48] sm:$0xff]
    %v2104 = vld [vmem:[%s2093 + $0x50] sm:$0xff]
    %v2105 = vld [vmem:[%s2093 + $0x58] sm:$0xff]
    %v2106 = vld [vmem:[%s2093 + $0x60] sm:$0xff]
    %v2107 = vld [vmem:[%s2093 + $0x68] sm:$0xff]
    %v2108 = vld [vmem:[%s2093 + $0x70] sm:$0xff]
    %v2109 = vld [vmem:[%s2093 + $0x78] sm:$0xff]
    %v2110 = vld [vmem:[%s2093 + $0x80] sm:$0xff]
    %v2111 = vld [vmem:[%s2093 + $0x88] sm:$0xff]
    %v2112 = vld [vmem:[%s2093 + $0x90] sm:$0xff]
    %v2113 = vld [vmem:[%s2093 + $0x98] sm:$0xff]
    %v2114 = vld [vmem:[%s2093 + $0xa0] sm:$0xff]
    %v2115 = vld [vmem:[%s2093 + $0xa8] sm:$0xff]
    %v2116 = vld [vmem:[%s2093 + $0xb0] sm:$0xff]
    %v2117 = vld [vmem:[%s2093 + $0xb8] sm:$0xff]
    %v2118 = vld [vmem:[%s2093 + $0xc0] sm:$0xff]
    %v2119 = vld [vmem:[%s2093 + $0xc8] sm:$0xff]
    %v2120 = vld [vmem:[%s2093 + $0xd0] sm:$0xff]
    %v2121 = vld [vmem:[%s2093 + $0xd8] sm:$0xff]
    %v2122 = vld [vmem:[%s2093 + $0xe0] sm:$0xff]
    %v2123 = vld [vmem:[%s2093 + $0xe8] sm:$0xff]
    %v2124 = vld [vmem:[%s2093 + $0xf0] sm:$0xff]
    %v2125 = vld [vmem:[%s2093 + $0xf8] sm:$0xff]
    %v2126 = vld [vmem:[%s2093 + $0x100] sm:$0xff]
    %v2127 = vld [vmem:[%s2093 + $0x108] sm:$0xff]
    %v2128 = vld [vmem:[%s2093 + $0x110] sm:$0xff]
    %v2129 = vld [vmem:[%s2093 + $0x118] sm:$0xff]
    %v2166 = vunpack.c.l.b16 %v2094
    %v2167 = vunpack.c.h.b16 %v2094
    %v2168 = vunpack.c.l.b16 %v2095
    %v2169 = vunpack.c.h.b16 %v2095
    %v2170 = vunpack.c.l.b16 %v2096
    %v2171 = vunpack.c.h.b16 %v2096
    %v2172 = vunpack.c.l.b16 %v2097
    %v2173 = vunpack.c.h.b16 %v2097
    %v2174 = vunpack.c.l.b16 %v2098
    %v2175 = vunpack.c.h.b16 %v2098
    %v2176 = vunpack.c.l.b16 %v2099
    %v2177 = vunpack.c.h.b16 %v2099
    %v2178 = vunpack.c.l.b16 %v2100
    %v2179 = vunpack.c.h.b16 %v2100
    %v2180 = vunpack.c.l.b16 %v2101
    %v2181 = vunpack.c.h.b16 %v2101
    %v2182 = vunpack.c.l.b16 %v2102
    %v2183 = vunpack.c.h.b16 %v2102
    %v2184 = vunpack.c.l.b16 %v2103
    %v2185 = vunpack.c.h.b16 %v2103
    %v2186 = vunpack.c.l.b16 %v2104
    %v2187 = vunpack.c.h.b16 %v2104
    %v2188 = vunpack.c.l.b16 %v2105
    %v2189 = vunpack.c.h.b16 %v2105
    %v2190 = vunpack.c.l.b16 %v2106
    %v2191 = vunpack.c.h.b16 %v2106
    %v2192 = vunpack.c.l.b16 %v2107
    %v2193 = vunpack.c.h.b16 %v2107
    %v2194 = vunpack.c.l.b16 %v2108
    %v2195 = vunpack.c.h.b16 %v2108
    %v2196 = vunpack.c.l.b16 %v2109
    %v2197 = vunpack.c.h.b16 %v2109
    %v2198 = vunpack.c.l.b16 %v2110
    %v2199 = vunpack.c.h.b16 %v2110
    %v2200 = vunpack.c.l.b16 %v2111
    %v2201 = vunpack.c.h.b16 %v2111
    %v2202 = vunpack.c.l.b16 %v2112
    %v2203 = vunpack.c.h.b16 %v2112
    %v2204 = vunpack.c.l.b16 %v2113
    %v2205 = vunpack.c.h.b16 %v2113
    %v2206 = vunpack.c.l.b16 %v2114
    %v2207 = vunpack.c.h.b16 %v2114
    %v2208 = vunpack.c.l.b16 %v2115
    %v2209 = vunpack.c.h.b16 %v2115
    %v2210 = vunpack.c.l.b16 %v2116
    %v2211 = vunpack.c.h.b16 %v2116
    %v2212 = vunpack.c.l.b16 %v2117
    %v2213 = vunpack.c.h.b16 %v2117
    %v2214 = vunpack.c.l.b16 %v2118
    %v2215 = vunpack.c.h.b16 %v2118
    %v2216 = vunpack.c.l.b16 %v2119
    %v2217 = vunpack.c.h.b16 %v2119
    %v2218 = vunpack.c.l.b16 %v2120
    %v2219 = vunpack.c.h.b16 %v2120
    %v2220 = vunpack.c.l.b16 %v2121
    %v2221 = vunpack.c.h.b16 %v2121
    %v2222 = vunpack.c.l.b16 %v2122
    %v2223 = vunpack.c.h.b16 %v2122
    %v2224 = vunpack.c.l.b16 %v2123
    %v2225 = vunpack.c.h.b16 %v2123
    %v2226 = vunpack.c.l.b16 %v2124
    %v2227 = vunpack.c.h.b16 %v2124
    %v2228 = vunpack.c.l.b16 %v2125
    %v2229 = vunpack.c.h.b16 %v2125
    %v2230 = vunpack.c.l.b16 %v2126
    %v2231 = vunpack.c.h.b16 %v2126
    %v2232 = vunpack.c.l.b16 %v2127
    %v2233 = vunpack.c.h.b16 %v2127
    %v2234 = vunpack.c.l.b16 %v2128
    %v2235 = vunpack.c.h.b16 %v2128
    %v2236 = vunpack.c.l.b16 %v2129
    %v2237 = vunpack.c.h.b16 %v2129
    %v2238 = vpack.c.b16 %v2168, %v2166
    %v2239 = vpack.c.b16 %v2169, %v2167
    %v2240 = vpack.c.b16 %v2172, %v2170
    %v2241 = vpack.c.b16 %v2173, %v2171
    %v2242 = vpack.c.b16 %v2176, %v2174
    %v2243 = vpack.c.b16 %v2177, %v2175
    %v2244 = vpack.c.b16 %v2180, %v2178
    %v2245 = vpack.c.b16 %v2181, %v2179
    %v2246 = vpack.c.b16 %v2184, %v2182
    %v2247 = vpack.c.b16 %v2185, %v2183
    %v2248 = vpack.c.b16 %v2188, %v2186
    %v2249 = vpack.c.b16 %v2189, %v2187
    %v2250 = vpack.c.b16 %v2192, %v2190
    %v2251 = vpack.c.b16 %v2193, %v2191
    %v2252 = vpack.c.b16 %v2196, %v2194
    %v2253 = vpack.c.b16 %v2197, %v2195
    %v2254 = vpack.c.b16 %v2200, %v2198
    %v2255 = vpack.c.b16 %v2201, %v2199
    %v2256 = vpack.c.b16 %v2204, %v2202
    %v2257 = vpack.c.b16 %v2205, %v2203
    %v2258 = vpack.c.b16 %v2208, %v2206
    %v2259 = vpack.c.b16 %v2209, %v2207
    %v2260 = vpack.c.b16 %v2212, %v2210
    %v2261 = vpack.c.b16 %v2213, %v2211
    %v2262 = vpack.c.b16 %v2216, %v2214
    %v2263 = vpack.c.b16 %v2217, %v2215
    %v2264 = vpack.c.b16 %v2220, %v2218
    %v2265 = vpack.c.b16 %v2221, %v2219
    %v2266 = vpack.c.b16 %v2224, %v2222
    %v2267 = vpack.c.b16 %v2225, %v2223
    %v2268 = vpack.c.b16 %v2228, %v2226
    %v2269 = vpack.c.b16 %v2229, %v2227
    %v2270 = vpack.c.b16 %v2232, %v2230
    %v2271 = vpack.c.b16 %v2233, %v2231
    %v2272 = vpack.c.b16 %v2236, %v2234
    %v2273 = vpack.c.b16 %v2237, %v2235
    %2310 = vmatpush.bf16.msra.mxu0 %v2252
    %2311 = vmatpush.bf16.msra.mxu0 %v2250
    %2312 = vmatpush.bf16.msra.mxu0 %v2248
    %2313 = vmatpush.bf16.msra.mxu0 %v2246
    %2314 = vmatpush.bf16.msra.mxu0 %v2244
    %2315 = vmatpush.bf16.msra.mxu0 %v2242
    %2316 = vmatpush.bf16.msra.mxu0 %v2240
    %2317 = vmatpush.bf16.msra.mxu0 %v2238
    %2318 = vmatmul.bf16.gmra.mxu0 %v984
    %v2319 = vpop.f32.mrf.mxu0
    %v2320 = vadd.f32 0.0, %v2319
    %v2321 = vpop.f32.mrf.mxu0
    %v2322 = vadd.f32 0.0, %v2321
    %2323 = vmatmul.bf16.gmra.mxu0 %v1014
    %v2324 = vpop.f32.mrf.mxu0
    %v2325 = vadd.f32 0.0, %v2324
    %v2326 = vpop.f32.mrf.mxu0
    %v2327 = vadd.f32 0.0, %v2326
    %2328 = vmatmul.bf16.gmra.mxu0 %v1033
    %v2329 = vpop.f32.mrf.mxu0
    %v2330 = vadd.f32 0.0, %v2329
    %v2331 = vpop.f32.mrf.mxu0
    %2332 = vdwg.mxu0
    %2333 = vmatpush.bf16.msra.mxu0 %v2268
    %2334 = vmatpush.bf16.msra.mxu0 %v2266
    %2335 = vmatpush.bf16.msra.mxu0 %v2264
    %2336 = vmatpush.bf16.msra.mxu0 %v2262
    %2337 = vmatpush.bf16.msra.mxu0 %v2260
    %2338 = vmatpush.bf16.msra.mxu0 %v2258
    %2339 = vmatpush.bf16.msra.mxu0 %v2256
    %2340 = vmatpush.bf16.msra.mxu0 %v2254
    %2341 = vmatmul.bf16.gmra.mxu0 %v996
    %v2342 = vpop.f32.mrf.mxu0
    %v2343 = vadd.f32 %v2320, %v2342
    %v2344 = vpop.f32.mrf.mxu0
    %v2345 = vadd.f32 %v2322, %v2344
    %2346 = vmatmul.bf16.gmra.mxu0 %v1022
    %v2347 = vpop.f32.mrf.mxu0
    %v2348 = vadd.f32 %v2325, %v2347
    %v2349 = vpop.f32.mrf.mxu0
    %v2350 = vadd.f32 %v2327, %v2349
    %2351 = vmatmul.bf16.gmra.mxu0 %v1036
    %v2352 = vpop.f32.mrf.mxu0
    %v2353 = vadd.f32 %v2330, %v2352
    %v2354 = vpop.f32.mrf.mxu0
    %2355 = vdwg.mxu0
    %2356 = vmatpush.bf16.msra.mxu0 0
    %2357 = vmatpush.bf16.msra.mxu0 0
    %2358 = vmatpush.bf16.msra.mxu0 0
    %2359 = vmatpush.bf16.msra.mxu0 0
    %2360 = vmatpush.bf16.msra.mxu0 0
    %2361 = vmatpush.bf16.msra.mxu0 0
    %2362 = vmatpush.bf16.msra.mxu0 %v2272
    %2363 = vmatpush.bf16.msra.mxu0 %v2270
    %2364 = vmatmul.bf16.gmra.mxu0 %v1227
    %v2365 = vpop.f32.mrf.mxu0
    %v2366 = vadd.f32 %v2343, %v2365
    %v2367 = vpop.f32.mrf.mxu0
    %v2368 = vadd.f32 %v2345, %v2367
    %2369 = vmatmul.bf16.gmra.mxu0 %v1230
    %v2370 = vpop.f32.mrf.mxu0
    %v2371 = vadd.f32 %v2348, %v2370
    %v2372 = vpop.f32.mrf.mxu0
    %v2373 = vadd.f32 %v2350, %v2372
    %2374 = vmatmul.bf16.gmra.mxu0 %v1233
    %v2375 = vpop.f32.mrf.mxu0
    %v2376 = vadd.f32 %v2353, %v2375
    %v2377 = vpop.f32.mrf.mxu0
    %2378 = vdwg.mxu0
    %2379 = vmatpush.bf16.msra.mxu0 %v2253
    %2380 = vmatpush.bf16.msra.mxu0 %v2251
    %2381 = vmatpush.bf16.msra.mxu0 %v2249
    %2382 = vmatpush.bf16.msra.mxu0 %v2247
    %2383 = vmatpush.bf16.msra.mxu0 %v2245
    %2384 = vmatpush.bf16.msra.mxu0 %v2243
    %2385 = vmatpush.bf16.msra.mxu0 %v2241
    %2386 = vmatpush.bf16.msra.mxu0 %v2239
    %2387 = vmatmul.bf16.gmra.mxu0 %v984
    %v2388 = vpop.f32.mrf.mxu0
    %v2389 = vadd.f32 0.0, %v2388
    %v2390 = vpop.f32.mrf.mxu0
    %v2391 = vadd.f32 0.0, %v2390
    %2392 = vmatmul.bf16.gmra.mxu0 %v1014
    %v2393 = vpop.f32.mrf.mxu0
    %v2394 = vadd.f32 0.0, %v2393
    %v2395 = vpop.f32.mrf.mxu0
    %v2396 = vadd.f32 0.0, %v2395
    %2397 = vmatmul.bf16.gmra.mxu0 %v1033
    %v2398 = vpop.f32.mrf.mxu0
    %v2399 = vadd.f32 0.0, %v2398
    %v2400 = vpop.f32.mrf.mxu0
    %2401 = vdwg.mxu0
    %2402 = vmatpush.bf16.msra.mxu0 %v2269
    %2403 = vmatpush.bf16.msra.mxu0 %v2267
    %2404 = vmatpush.bf16.msra.mxu0 %v2265
    %2405 = vmatpush.bf16.msra.mxu0 %v2263
    %2406 = vmatpush.bf16.msra.mxu0 %v2261
    %2407 = vmatpush.bf16.msra.mxu0 %v2259
    %2408 = vmatpush.bf16.msra.mxu0 %v2257
    %2409 = vmatpush.bf16.msra.mxu0 %v2255
    %2410 = vmatmul.bf16.gmra.mxu0 %v996
    %v2411 = vpop.f32.mrf.mxu0
    %v2412 = vadd.f32 %v2389, %v2411
    %v2413 = vpop.f32.mrf.mxu0
    %v2414 = vadd.f32 %v2391, %v2413
    %2415 = vmatmul.bf16.gmra.mxu0 %v1022
    %v2416 = vpop.f32.mrf.mxu0
    %v2417 = vadd.f32 %v2394, %v2416
    %v2418 = vpop.f32.mrf.mxu0
    %v2419 = vadd.f32 %v2396, %v2418
    %2420 = vmatmul.bf16.gmra.mxu0 %v1036
    %v2421 = vpop.f32.mrf.mxu0
    %v2422 = vadd.f32 %v2399, %v2421
    %v2423 = vpop.f32.mrf.mxu0
    %2424 = vdwg.mxu0
    %2425 = vmatpush.bf16.msra.mxu0 0
    %2426 = vmatpush.bf16.msra.mxu0 0
    %2427 = vmatpush.bf16.msra.mxu0 0
    %2428 = vmatpush.bf16.msra.mxu0 0
    %2429 = vmatpush.bf16.msra.mxu0 0
    %2430 = vmatpush.bf16.msra.mxu0 0
    %2431 = vmatpush.bf16.msra.mxu0 %v2273
    %2432 = vmatpush.bf16.msra.mxu0 %v2271
    %2433 = vmatmul.bf16.gmra.mxu0 %v1227
    %v2434 = vpop.f32.mrf.mxu0
    %v2435 = vadd.f32 %v2412, %v2434
    %v2436 = vpop.f32.mrf.mxu0
    %v2437 = vadd.f32 %v2414, %v2436
    %2438 = vmatmul.bf16.gmra.mxu0 %v1230
    %v2439 = vpop.f32.mrf.mxu0
    %v2440 = vadd.f32 %v2417, %v2439
    %v2441 = vpop.f32.mrf.mxu0
    %v2442 = vadd.f32 %v2419, %v2441
    %2443 = vmatmul.bf16.gmra.mxu0 %v1233
    %v2444 = vpop.f32.mrf.mxu0
    %v2445 = vadd.f32 %v2422, %v2444
    %v2446 = vpop.f32.mrf.mxu0
    %2447 = vdwg.mxu0
    %v2448 = vadd.f32 %v2011, %v2366
    %v2449 = vadd.f32 %v2080, %v2435
    %v2450 = vadd.f32 %v2013, %v2368
    %v2451 = vadd.f32 %v2082, %v2437
    %v2452 = vadd.f32 %v2016, %v2371
    %v2453 = vadd.f32 %v2085, %v2440
    %v2454 = vadd.f32 %v2018, %v2373
    %v2455 = vadd.f32 %v2087, %v2442
    %v2456 = vadd.f32 %v2021, %v2376
    %v2457 = vadd.f32 %v2090, %v2445
    %v2458 = vmax.f32 %v1373, %v2448
    %v2459 = vmax.f32 %v1374, %v2449
    %v2460 = vmax.f32 %v1375, %v2450
    %v2461 = vmax.f32 %v1376, %v2451
    %v2462 = vmax.f32 %v1377, %v2452
    %v2463 = vmax.f32 %v1378, %v2453
    %v2464 = vmax.f32 %v1379, %v2454
    %v2465 = vmax.f32 %v1380, %v2455
    %v2466 = vmax.f32 %v1381, %v2456
    %v2467 = vmax.f32 %v1382, %v2457
    %v2469 = vperm.slane %v45, 0
    %v2470 = vperm.slane %v45, 1
    %v2473 = vadd.f32 %v2458, %v2469
    %v2474 = vadd.f32 %v2459, %v2470
    %v2475 = vadd.f32 %v2460, %v2469
    %v2476 = vadd.f32 %v2461, %v2470
    %v2477 = vadd.f32 %v2462, %v2469
    %v2478 = vadd.f32 %v2463, %v2470
    %v2479 = vadd.f32 %v2464, %v2469
    %v2480 = vadd.f32 %v2465, %v2470
    %v2481 = vadd.f32 %v2466, %v2469
    %v2482 = vadd.f32 %v2467, %v2470
    %v2483 = vmax.f32 %v2473, 0.0
    %v2484 = vmax.f32 %v2474, 0.0
    %v2485 = vmax.f32 %v2475, 0.0
    %v2486 = vmax.f32 %v2476, 0.0
    %v2487 = vmax.f32 %v2477, 0.0
    %v2488 = vmax.f32 %v2478, 0.0
    %v2489 = vmax.f32 %v2479, 0.0
    %v2490 = vmax.f32 %v2480, 0.0
    %v2491 = vmax.f32 %v2481, 0.0
    %v2492 = vmax.f32 %v2482, 0.0
    %v2493 = vpack.c.bf16 %v2484, %v2483
    %v2494 = vpack.c.bf16 %v2486, %v2485
    %v2495 = vpack.c.bf16 %v2488, %v2487
    %v2496 = vpack.c.bf16 %v2490, %v2489
    %v2497 = vpack.c.bf16 %v2492, %v2491
    %2503 = vrot.lane.b32.xlu0 %v2493, 32
    %v2504 = vpop.permute.xlu0 %2503
    %2505 = vrot.lane.b32.xlu0 %v2494, 32
    %v2506 = vpop.permute.xlu0 %2505
    %2507 = vrot.lane.b32.xlu0 %v2495, 32
    %v2508 = vpop.permute.xlu0 %2507
    %2509 = vrot.lane.b32.xlu0 %v2496, 32
    %v2510 = vpop.permute.xlu0 %2509
    %2511 = vrot.lane.b32.xlu0 %v2497, 32
    %v2512 = vpop.permute.xlu0 %2511
    %v2513 = vrot.slane %v2504, 4
    %v2514 = vrot.slane %v2506, 4
    %v2515 = vrot.slane %v2508, 4
    %v2516 = vrot.slane %v2510, 4
    %v2517 = vrot.slane %v2512, 4
    %vm2518 = vcmask 261120
    %v2519 = vsel %vm2518, %v2513, %v2504
    %v2520 = vsel %vm2518, %v2514, %v2506
    %v2521 = vsel %vm2518, %v2515, %v2508
    %v2522 = vsel %vm2518, %v2516, %v2510
    %v2523 = vsel %vm2518, %v2517, %v2512
    %vm2534 = vcmask 1043712
    %vm2535 = vcmask 1047556
    %vm2536 = vmor %vm2535, %vm2534
    %2537 = vst.msk [vmem:[%s3 + $0xc] sm:$0xff] %vm2536, %v2519
    %vm2538 = vcmask 257024
    %2539 = vst.msk [vmem:[%s3 + $0x14] sm:$0xf] %vm2538, %v2513
    %2540 = vst.msk [vmem:[%s3 + $0x18] sm:$0xff] %vm2536, %v2520
    %2541 = vst.msk [vmem:[%s3 + $0x20] sm:$0xf] %vm2538, %v2514
    %2542 = vst.msk [vmem:[%s3 + $0x24] sm:$0xff] %vm2536, %v2521
    %2543 = vst.msk [vmem:[%s3 + $0x2c] sm:$0xf] %vm2538, %v2515
    %2544 = vst.msk [vmem:[%s3 + $0x30] sm:$0xff] %vm2536, %v2522
    %2545 = vst.msk [vmem:[%s3 + $0x38] sm:$0xf] %vm2538, %v2516
    %vm2546 = vcmask 1040640
    %vm2547 = vcmask 1044484
    %vm2548 = vmor %vm2547, %vm2546
    %2549 = vst.msk [vmem:[%s3 + $0x3c] sm:$0x11] %vm2548, %v2523
    %vm2550 = vcmask 253952
    %2551 = vst.msk [vmem:[%s3 + $0x44] sm:$0x1] %vm2550, %v2517
    %2552 = vst [vmem:[%s3] sm:$0xff] 0
    %vm2553 = vcmask 519168
    %2554 = vst.msk [vmem:[%s3 + $0x8] sm:$0xf] %vm2553, 0
    %2555 = vst [vmem:[%s3 + $0x24] sm:$0x11] 0
    %vm2556 = vcmask 516096
    %2557 = vst.msk [vmem:[%s3 + $0x2c] sm:$0x1] %vm2556, 0
    %2558 = vst [vmem:[%s3 + $0x3c] sm:$0x22] 0
    %vm2559 = vcmask 517121
    %2560 = vst.msk [vmem:[%s3 + $0x44] sm:$0x2] %vm2559, 0
    %2561 = vst.msk [vmem:[%s3] sm:$0xf] %vm2538, 0
    %2562 = vst.msk [vmem:[%s3 + $0xc] sm:$0xf] %vm2538, 0
    %2563 = vst.msk [vmem:[%s3 + $0x18] sm:$0xf] %vm2538, 0
    %2564 = vst.msk [vmem:[%s3 + $0x24] sm:$0xf] %vm2538, 0
    %2565 = vst.msk [vmem:[%s3 + $0x30] sm:$0xf] %vm2538, 0
    %vm2566 = vcmask 254976
    %2567 = vst.msk [vmem:[%s3 + $0x3c] sm:$0x3] %vm2566, 0
    %vm2568 = vcmask 519424
    %2569 = vst.msk [vmem:[%s3 + $0x8] sm:$0xf] %vm2568, 0
    %2570 = vst.msk [vmem:[%s3 + $0x14] sm:$0xf] %vm2568, 0
    %2571 = vst.msk [vmem:[%s3 + $0x20] sm:$0xf] %vm2568, 0
    %2572 = vst.msk [vmem:[%s3 + $0x2c] sm:$0xf] %vm2568, 0
    %2573 = vst.msk [vmem:[%s3 + $0x38] sm:$0xf] %vm2568, 0
    %vm2574 = vcmask 517376
    %2575 = vst.msk [vmem:[%s3 + $0x44] sm:$0x3] %vm2574, 0
    // Predicated region
    $region22: #{_lambda_.6} parent=1 // pred_check
      _
    $region23: #{_lambda_.6} parent=1 // pred_check_branch
      %2577 = sbr.rel (0) target = $region25
    $region24: #{_lambda_.6} parent=1 // pred_region
      _
    $region25: #{_lambda_.6} parent=1 // pred_fallthru
      _
    // Predicated region
    $region26: #{_lambda_.6} parent=1 // pred_check
      _
    $region27: #{_lambda_.6} parent=1 // pred_check_branch
      %2579 = sbr.rel (0) target = $region29
    $region28: #{_lambda_.6} parent=1 // pred_region
      _
    $region29: #{_lambda_.6} parent=1 // pred_fallthru
      _
    %2580 = vsyncpa [#allocation3], 1
    %2581 = vsyncpa [#allocation5], 1

// kernel: _lambda_.5
$region0: #{_lambda_.5}
  #allocation0 [shape = 'u32[]', space=smem, size = 0x4, offset = 0x4, fixed_abs, tag = 'smem constant byte address 0x4 - core index']
  #allocation1 [shape = 'u32[72,128]{1,0:T(1,128)}', space=vmem, size = 0x9000, scoped, tag = 'internal scratch']
  %s0 = inlined_call_operand.vmem [shape: bf16[1,44,544], index: 0, kind: input, shape index: {}]
  %s1 = inlined_call_operand.hbm [shape: bf16[6,544,256], index: 1, kind: input, shape index: {}]
  %s2 = inlined_call_operand.hbm [shape: f32[1,256], index: 2, kind: input, shape index: {}]
  %s3 = inlined_call_operand.vmem [shape: bf16[1,44,288], index: 3, kind: output, shape index: {}]
  %s4 = sld [smem:[#allocation0]]
  $region30: #{_lambda_.5} parent=0
    _
  %s6 = ssub.s32 1, %s4
  %s7 = scalar_select 0, %s6, %s4
  $region1: #{_lambda_.5} parent=0
    #allocation2 [shape = 'u8[1671168]{0}', space=vmem, size = 0x198000, scoped, tag = 'input window, operand 1, single buffered']
    #allocation3 [shape = 's32[1]{0}', space=sflag, size = 0x4, scoped, tag = 'scoped memory for _lambda_.5']
    #allocation4 [shape = 'u8[1024]{0}', space=vmem, size = 0x400, scoped, tag = 'input window, operand 2, single buffered']
    #allocation5 [shape = 's32[1]{0}', space=sflag, size = 0x4, scoped, tag = 'scoped memory for _lambda_.5']
    %8 = vsyncpa [#allocation3], 0
    %9 = vsyncpa [#allocation5], 0
    // Predicated region
    $region2: #{_lambda_.5} parent=1 // pred_check
      _
    $region3: #{_lambda_.5} parent=1 // pred_check_branch
      %11 = sbr.rel (0) target = $region5
    $region4: #{_lambda_.5} parent=1 // pred_region
      _
    $region5: #{_lambda_.5} parent=1 // pred_fallthru
      _
    // Predicated region
    $region6: #{_lambda_.5} parent=1 // pred_check
      _
    $region7: #{_lambda_.5} parent=1 // pred_check_branch
      %13 = sbr.rel (0) target = $region9
    $region8: #{_lambda_.5} parent=1 // pred_region
      %15 = vsyncadd [#allocation3], 0
      %s16 = sshll.u32 %s1, 4
      %s17 = int_to_ptr.hbm [resolvable:$true] %s16
      %s18 = sshll.u32 [#allocation2], 4
      %s19 = int_to_ptr.vmem [resolvable:$true] %s18
      %24 = dma.hbm_to_vmem [thread:$0]  %s17, 52224, %s19, [#allocation3], 128, 128, 8
    $region9: #{_lambda_.5} parent=1 // pred_fallthru
      _
    // Predicated region
    $region10: #{_lambda_.5} parent=1 // pred_check
      _
    $region11: #{_lambda_.5} parent=1 // pred_check_branch
      %26 = sbr.rel (0) target = $region13
    $region12: #{_lambda_.5} parent=1 // pred_region
      %28 = vsyncadd [#allocation5], 0
      %s30 = sshll.u32 %s2, 4
      %s31 = int_to_ptr.hbm [resolvable:$true] %s30
      %s32 = sshll.u32 [#allocation4], 4
      %s33 = int_to_ptr.vmem [resolvable:$true] %s32
      %35 = dma.hbm_to_vmem [thread:$0]  %s31, 32, %s33, [#allocation5]
    $region13: #{_lambda_.5} parent=1 // pred_fallthru
      _
    // Predicated region
    $region14: #{_lambda_.5} parent=1 // pred_check
      _
    $region15: #{_lambda_.5} parent=1 // pred_check_branch
      %37 = sbr.rel (0) target = $region17
    $region16: #{_lambda_.5} parent=1 // pred_region
      %39 = dma.done [#allocation3], 52224
    $region17: #{_lambda_.5} parent=1 // pred_fallthru
      _
    // Predicated region
    $region18: #{_lambda_.5} parent=1 // pred_check
      _
    $region19: #{_lambda_.5} parent=1 // pred_check_branch
      %41 = sbr.rel (0) target = $region21
    $region20: #{_lambda_.5} parent=1 // pred_region
      %43 = dma.done [#allocation5], 32
    $region21: #{_lambda_.5} parent=1 // pred_fallthru
      _
    %v45 = vld [vmem:[#allocation4] sm:$0x3]
    %v46 = vld [vmem:[%s0] sm:$0x88]
    %v47 = vld [vmem:[%s0 + $0x8] sm:$0x88]
    %v48 = vld [vmem:[%s0 + $0x10] sm:$0x8]
    %v49 = vld [vmem:[%s0 + $0x14] sm:$0xff]
    %v50 = vld [vmem:[%s0 + $0x1c] sm:$0xff]
    %v51 = vld [vmem:[%s0 + $0x24] sm:$0xf]
    %v52 = vld [vmem:[%s0 + $0x28] sm:$0xff]
    %v53 = vld [vmem:[%s0 + $0x30] sm:$0xff]
    %v54 = vld [vmem:[%s0 + $0x38] sm:$0xf]
    %v55 = vld [vmem:[%s0 + $0x3c] sm:$0xff]
    %v56 = vld [vmem:[%s0 + $0x44] sm:$0xff]
    %v57 = vld [vmem:[%s0 + $0x4c] sm:$0xf]
    %v58 = vld [vmem:[%s0 + $0x50] sm:$0xff]
    %v59 = vld [vmem:[%s0 + $0x58] sm:$0xff]
    %v60 = vld [vmem:[%s0 + $0x60] sm:$0xf]
    %v61 = vld [vmem:[%s0 + $0x64] sm:$0x11]
    %v62 = vld [vmem:[%s0 + $0x6c] sm:$0x11]
    %v63 = vld [vmem:[%s0 + $0x74] sm:$0x1]
    %v64 = vld [vmem:[#allocation2] sm:$0xff]
    %v65 = vld [vmem:[#allocation2 + $0x8] sm:$0xff]
    %v66 = vld [vmem:[#allocation2 + $0x10] sm:$0xff]
    %v67 = vld [vmem:[#allocation2 + $0x18] sm:$0xff]
    %v68 = vld [vmem:[#allocation2 + $0x20] sm:$0xff]
    %v69 = vld [vmem:[#allocation2 + $0x28] sm:$0xff]
    %v70 = vld [vmem:[#allocation2 + $0x30] sm:$0xff]
    %v71 = vld [vmem:[#allocation2 + $0x38] sm:$0xff]
    %v72 = vld [vmem:[#allocation2 + $0x40] sm:$0xff]
    %v73 = vld [vmem:[#allocation2 + $0x48] sm:$0xff]
    %v74 = vld [vmem:[#allocation2 + $0x50] sm:$0xff]
    %v75 = vld [vmem:[#allocation2 + $0x58] sm:$0xff]
    %v76 = vld [vmem:[#allocation2 + $0x60] sm:$0xff]
    %v77 = vld [vmem:[#allocation2 + $0x68] sm:$0xff]
    %v78 = vld [vmem:[#allocation2 + $0x70] sm:$0xff]
    %v79 = vld [vmem:[#allocation2 + $0x78] sm:$0xff]
    %v80 = vld [vmem:[#allocation2 + $0x80] sm:$0xff]
    %v81 = vld [vmem:[#allocation2 + $0x88] sm:$0xff]
    %v82 = vld [vmem:[#allocation2 + $0x90] sm:$0xff]
    %v83 = vld [vmem:[#allocation2 + $0x98] sm:$0xff]
    %v84 = vld [vmem:[#allocation2 + $0xa0] sm:$0xff]
    %v85 = vld [vmem:[#allocation2 + $0xa8] sm:$0xff]
    %v86 = vld [vmem:[#allocation2 + $0xb0] sm:$0xff]
    %v87 = vld [vmem:[#allocation2 + $0xb8] sm:$0xff]
    %v88 = vld [vmem:[#allocation2 + $0xc0] sm:$0xff]
    %v89 = vld [vmem:[#allocation2 + $0xc8] sm:$0xff]
    %v90 = vld [vmem:[#allocation2 + $0xd0] sm:$0xff]
    %v91 = vld [vmem:[#allocation2 + $0xd8] sm:$0xff]
    %v92 = vld [vmem:[#allocation2 + $0xe0] sm:$0xff]
    %v93 = vld [vmem:[#allocation2 + $0xe8] sm:$0xff]
    %v94 = vld [vmem:[#allocation2 + $0xf0] sm:$0xff]
    %v95 = vld [vmem:[#allocation2 + $0xf8] sm:$0xff]
    %v96 = vld [vmem:[#allocation2 + $0x100] sm:$0xff]
    %v97 = vld [vmem:[#allocation2 + $0x108] sm:$0xff]
    %v98 = vld [vmem:[#allocation2 + $0x110] sm:$0xff]
    %v99 = vld [vmem:[#allocation2 + $0x118] sm:$0xff]
    %v100 = vld [vmem:[#allocation2 + $0x120] sm:$0xff]
    %v101 = vld [vmem:[#allocation2 + $0x128] sm:$0xff]
    %v102 = vld [vmem:[#allocation2 + $0x130] sm:$0xff]
    %v103 = vld [vmem:[#allocation2 + $0x138] sm:$0xff]
    %v104 = vld [vmem:[#allocation2 + $0x140] sm:$0xff]
    %v105 = vld [vmem:[#allocation2 + $0x148] sm:$0xff]
    %v106 = vld [vmem:[#allocation2 + $0x150] sm:$0xff]
    %v107 = vld [vmem:[#allocation2 + $0x158] sm:$0xff]
    %v108 = vld [vmem:[#allocation2 + $0x160] sm:$0xff]
    %v109 = vld [vmem:[#allocation2 + $0x168] sm:$0xff]
    %v110 = vld [vmem:[#allocation2 + $0x170] sm:$0xff]
    %v111 = vld [vmem:[#allocation2 + $0x178] sm:$0xff]
    %v112 = vld [vmem:[#allocation2 + $0x180] sm:$0xff]
    %v113 = vld [vmem:[#allocation2 + $0x188] sm:$0xff]
    %v114 = vld [vmem:[#allocation2 + $0x190] sm:$0xff]
    %v115 = vld [vmem:[#allocation2 + $0x198] sm:$0xff]
    %v116 = vld [vmem:[#allocation2 + $0x1a0] sm:$0xff]
    %v117 = vld [vmem:[#allocation2 + $0x1a8] sm:$0xff]
    %v118 = vld [vmem:[#allocation2 + $0x1b0] sm:$0xff]
    %v119 = vld [vmem:[#allocation2 + $0x1b8] sm:$0xff]
    %v120 = vld [vmem:[#allocation2 + $0x1c0] sm:$0xff]
    %v121 = vld [vmem:[#allocation2 + $0x1c8] sm:$0xff]
    %v122 = vld [vmem:[#allocation2 + $0x1d0] sm:$0xff]
    %v123 = vld [vmem:[#allocation2 + $0x1d8] sm:$0xff]
    %v124 = vld [vmem:[#allocation2 + $0x1e0] sm:$0xff]
    %v125 = vld [vmem:[#allocation2 + $0x1e8] sm:$0xff]
    %v126 = vld [vmem:[#allocation2 + $0x1f0] sm:$0xff]
    %v127 = vld [vmem:[#allocation2 + $0x1f8] sm:$0xff]
    %v128 = vld [vmem:[#allocation2 + $0x200] sm:$0xff]
    %v129 = vld [vmem:[#allocation2 + $0x208] sm:$0xff]
    %v130 = vld [vmem:[#allocation2 + $0x210] sm:$0xff]
    %v131 = vld [vmem:[#allocation2 + $0x218] sm:$0xff]
    %s132 = scalar_lea.vmem [#allocation2], 544
    %v133 = vld [vmem:[%s132] sm:$0xff]
    %v134 = vld [vmem:[%s132 + $0x8] sm:$0xff]
    %v135 = vld [vmem:[%s132 + $0x10] sm:$0xff]
    %v136 = vld [vmem:[%s132 + $0x18] sm:$0xff]
    %v137 = vld [vmem:[%s132 + $0x20] sm:$0xff]
    %v138 = vld [vmem:[%s132 + $0x28] sm:$0xff]
    %v139 = vld [vmem:[%s132 + $0x30] sm:$0xff]
    %v140 = vld [vmem:[%s132 + $0x38] sm:$0xff]
    %v141 = vld [vmem:[%s132 + $0x40] sm:$0xff]
    %v142 = vld [vmem:[%s132 + $0x48] sm:$0xff]
    %v143 = vld [vmem:[%s132 + $0x50] sm:$0xff]
    %v144 = vld [vmem:[%s132 + $0x58] sm:$0xff]
    %v145 = vld [vmem:[%s132 + $0x60] sm:$0xff]
    %v146 = vld [vmem:[%s132 + $0x68] sm:$0xff]
    %v147 = vld [vmem:[%s132 + $0x70] sm:$0xff]
    %v148 = vld [vmem:[%s132 + $0x78] sm:$0xff]
    %v149 = vld [vmem:[%s132 + $0x80] sm:$0xff]
    %v150 = vld [vmem:[%s132 + $0x88] sm:$0xff]
    %v151 = vld [vmem:[%s132 + $0x90] sm:$0xff]
    %v152 = vld [vmem:[%s132 + $0x98] sm:$0xff]
    %v153 = vld [vmem:[%s132 + $0xa0] sm:$0xff]
    %v154 = vld [vmem:[%s132 + $0xa8] sm:$0xff]
    %v155 = vld [vmem:[%s132 + $0xb0] sm:$0xff]
    %v156 = vld [vmem:[%s132 + $0xb8] sm:$0xff]
    %v157 = vld [vmem:[%s132 + $0xc0] sm:$0xff]
    %v158 = vld [vmem:[%s132 + $0xc8] sm:$0xff]
    %v159 = vld [vmem:[%s132 + $0xd0] sm:$0xff]
    %v160 = vld [vmem:[%s132 + $0xd8] sm:$0xff]
    %v161 = vld [vmem:[%s132 + $0xe0] sm:$0xff]
    %v162 = vld [vmem:[%s132 + $0xe8] sm:$0xff]
    %v163 = vld [vmem:[%s132 + $0xf0] sm:$0xff]
    %v164 = vld [vmem:[%s132 + $0xf8] sm:$0xff]
    %v165 = vld [vmem:[%s132 + $0x100] sm:$0xff]
    %v166 = vld [vmem:[%s132 + $0x108] sm:$0xff]
    %v167 = vld [vmem:[%s132 + $0x110] sm:$0xff]
    %v168 = vld [vmem:[%s132 + $0x118] sm:$0xff]
    %v169 = vld [vmem:[%s132 + $0x120] sm:$0xff]
    %v170 = vld [vmem:[%s132 + $0x128] sm:$0xff]
    %v171 = vld [vmem:[%s132 + $0x130] sm:$0xff]
    %v172 = vld [vmem:[%s132 + $0x138] sm:$0xff]
    %v173 = vld [vmem:[%s132 + $0x140] sm:$0xff]
    %v174 = vld [vmem:[%s132 + $0x148] sm:$0xff]
    %v175 = vld [vmem:[%s132 + $0x150] sm:$0xff]
    %v176 = vld [vmem:[%s132 + $0x158] sm:$0xff]
    %v177 = vld [vmem:[%s132 + $0x160] sm:$0xff]
    %v178 = vld [vmem:[%s132 + $0x168] sm:$0xff]
    %v179 = vld [vmem:[%s132 + $0x170] sm:$0xff]
    %v180 = vld [vmem:[%s132 + $0x178] sm:$0xff]
    %v181 = vld [vmem:[%s132 + $0x180] sm:$0xff]
    %v182 = vld [vmem:[%s132 + $0x188] sm:$0xff]
    %v183 = vld [vmem:[%s132 + $0x190] sm:$0xff]
    %v184 = vld [vmem:[%s132 + $0x198] sm:$0xff]
    %v185 = vld [vmem:[%s132 + $0x1a0] sm:$0xff]
    %v186 = vld [vmem:[%s132 + $0x1a8] sm:$0xff]
    %v187 = vld [vmem:[%s132 + $0x1b0] sm:$0xff]
    %v188 = vld [vmem:[%s132 + $0x1b8] sm:$0xff]
    %v189 = vld [vmem:[%s132 + $0x1c0] sm:$0xff]
    %v190 = vld [vmem:[%s132 + $0x1c8] sm:$0xff]
    %v191 = vld [vmem:[%s132 + $0x1d0] sm:$0xff]
    %v192 = vld [vmem:[%s132 + $0x1d8] sm:$0xff]
    %v193 = vld [vmem:[%s132 + $0x1e0] sm:$0xff]
    %v194 = vld [vmem:[%s132 + $0x1e8] sm:$0xff]
    %v195 = vld [vmem:[%s132 + $0x1f0] sm:$0xff]
    %v196 = vld [vmem:[%s132 + $0x1f8] sm:$0xff]
    %v197 = vld [vmem:[%s132 + $0x200] sm:$0xff]
    %v198 = vld [vmem:[%s132 + $0x208] sm:$0xff]
    %v199 = vld [vmem:[%s132 + $0x210] sm:$0xff]
    %v200 = vld [vmem:[%s132 + $0x218] sm:$0xff]
    %v216 = vunpack.c.l.b16 %v49
    %v217 = vunpack.c.h.b16 %v49
    %v218 = vunpack.c.l.b16 %v50
    %v219 = vunpack.c.h.b16 %v50
    %v220 = vunpack.c.l.b16 %v51
    %v221 = vunpack.c.l.b16 %v52
    %v222 = vunpack.c.h.b16 %v52
    %v223 = vunpack.c.l.b16 %v53
    %v224 = vunpack.c.h.b16 %v53
    %v225 = vunpack.c.l.b16 %v54
    %v226 = vunpack.c.l.b16 %v55
    %v227 = vunpack.c.h.b16 %v55
    %v228 = vunpack.c.l.b16 %v56
    %v229 = vunpack.c.h.b16 %v56
    %v230 = vunpack.c.l.b16 %v57
    %v231 = vunpack.c.l.b16 %v58
    %v232 = vunpack.c.h.b16 %v58
    %v233 = vunpack.c.l.b16 %v59
    %v234 = vunpack.c.h.b16 %v59
    %v235 = vunpack.c.l.b16 %v60
    %v236 = vunpack.c.l.b16 %v61
    %v237 = vunpack.c.h.b16 %v61
    %v238 = vunpack.c.l.b16 %v62
    %v239 = vunpack.c.h.b16 %v62
    %v240 = vunpack.c.l.b16 %v63
    %v241 = vpack.c.b16 %v221, %v216
    %v242 = vpack.c.b16 %v222, %v217
    %v243 = vpack.c.b16 %v223, %v218
    %v244 = vpack.c.b16 %v224, %v219
    %v245 = vpack.c.b16 %v225, %v220
    %v246 = vpack.c.b16 %v231, %v226
    %v247 = vpack.c.b16 %v232, %v227
    %v248 = vpack.c.b16 %v233, %v228
    %v249 = vpack.c.b16 %v234, %v229
    %v250 = vpack.c.b16 %v235, %v230
    %v251 = vpack.c.b16 %v236, %v236
    %v252 = vpack.c.b16 %v237, %v237
    %v253 = vpack.c.b16 %v238, %v238
    %v254 = vpack.c.b16 %v239, %v239
    %v255 = vpack.c.b16 %v240, %v240
    %v336 = vunpack.c.l.b16 %v133
    %v337 = vunpack.c.h.b16 %v133
    %v338 = vunpack.c.l.b16 %v134
    %v339 = vunpack.c.h.b16 %v134
    %v340 = vunpack.c.l.b16 %v135
    %v341 = vunpack.c.h.b16 %v135
    %v342 = vunpack.c.l.b16 %v136
    %v343 = vunpack.c.h.b16 %v136
    %v344 = vunpack.c.l.b16 %v137
    %v345 = vunpack.c.h.b16 %v137
    %v346 = vunpack.c.l.b16 %v138
    %v347 = vunpack.c.h.b16 %v138
    %v348 = vunpack.c.l.b16 %v139
    %v349 = vunpack.c.h.b16 %v139
    %v350 = vunpack.c.l.b16 %v140
    %v351 = vunpack.c.h.b16 %v140
    %v352 = vunpack.c.l.b16 %v141
    %v353 = vunpack.c.h.b16 %v141
    %v354 = vunpack.c.l.b16 %v142
    %v355 = vunpack.c.h.b16 %v142
    %v356 = vunpack.c.l.b16 %v143
    %v357 = vunpack.c.h.b16 %v143
    %v358 = vunpack.c.l.b16 %v144
    %v359 = vunpack.c.h.b16 %v144
    %v360 = vunpack.c.l.b16 %v145
    %v361 = vunpack.c.h.b16 %v145
    %v362 = vunpack.c.l.b16 %v146
    %v363 = vunpack.c.h.b16 %v146
    %v364 = vunpack.c.l.b16 %v147
    %v365 = vunpack.c.h.b16 %v147
    %v366 = vunpack.c.l.b16 %v148
    %v367 = vunpack.c.h.b16 %v148
    %v368 = vunpack.c.l.b16 %v149
    %v369 = vunpack.c.h.b16 %v149
    %v370 = vunpack.c.l.b16 %v150
    %v371 = vunpack.c.h.b16 %v150
    %v372 = vunpack.c.l.b16 %v151
    %v373 = vunpack.c.h.b16 %v151
    %v374 = vunpack.c.l.b16 %v152
    %v375 = vunpack.c.h.b16 %v152
    %v376 = vunpack.c.l.b16 %v153
    %v377 = vunpack.c.h.b16 %v153
    %v378 = vunpack.c.l.b16 %v154
    %v379 = vunpack.c.h.b16 %v154
    %v380 = vunpack.c.l.b16 %v155
    %v381 = vunpack.c.h.b16 %v155
    %v382 = vunpack.c.l.b16 %v156
    %v383 = vunpack.c.h.b16 %v156
    %v384 = vunpack.c.l.b16 %v157
    %v385 = vunpack.c.h.b16 %v157
    %v386 = vunpack.c.l.b16 %v158
    %v387 = vunpack.c.h.b16 %v158
    %v388 = vunpack.c.l.b16 %v159
    %v389 = vunpack.c.h.b16 %v159
    %v390 = vunpack.c.l.b16 %v160
    %v391 = vunpack.c.h.b16 %v160
    %v392 = vunpack.c.l.b16 %v161
    %v393 = vunpack.c.h.b16 %v161
    %v394 = vunpack.c.l.b16 %v162
    %v395 = vunpack.c.h.b16 %v162
    %v396 = vunpack.c.l.b16 %v163
    %v397 = vunpack.c.h.b16 %v163
    %v398 = vunpack.c.l.b16 %v164
    %v399 = vunpack.c.h.b16 %v164
    %v400 = vunpack.c.l.b16 %v165
    %v401 = vunpack.c.h.b16 %v165
    %v402 = vunpack.c.l.b16 %v166
    %v403 = vunpack.c.h.b16 %v166
    %v404 = vunpack.c.l.b16 %v167
    %v405 = vunpack.c.h.b16 %v167
    %v406 = vunpack.c.l.b16 %v168
    %v407 = vunpack.c.h.b16 %v168
    %v408 = vunpack.c.l.b16 %v169
    %v409 = vunpack.c.h.b16 %v169
    %v410 = vunpack.c.l.b16 %v170
    %v411 = vunpack.c.h.b16 %v170
    %v412 = vunpack.c.l.b16 %v171
    %v413 = vunpack.c.h.b16 %v171
    %v414 = vunpack.c.l.b16 %v172
    %v415 = vunpack.c.h.b16 %v172
    %v416 = vunpack.c.l.b16 %v173
    %v417 = vunpack.c.h.b16 %v173
    %v418 = vunpack.c.l.b16 %v174
    %v419 = vunpack.c.h.b16 %v174
    %v420 = vunpack.c.l.b16 %v175
    %v421 = vunpack.c.h.b16 %v175
    %v422 = vunpack.c.l.b16 %v176
    %v423 = vunpack.c.h.b16 %v176
    %v424 = vunpack.c.l.b16 %v177
    %v425 = vunpack.c.h.b16 %v177
    %v426 = vunpack.c.l.b16 %v178
    %v427 = vunpack.c.h.b16 %v178
    %v428 = vunpack.c.l.b16 %v179
    %v429 = vunpack.c.h.b16 %v179
    %v430 = vunpack.c.l.b16 %v180
    %v431 = vunpack.c.h.b16 %v180
    %v432 = vunpack.c.l.b16 %v181
    %v433 = vunpack.c.h.b16 %v181
    %v434 = vunpack.c.l.b16 %v182
    %v435 = vunpack.c.h.b16 %v182
    %v436 = vunpack.c.l.b16 %v183
    %v437 = vunpack.c.h.b16 %v183
    %v438 = vunpack.c.l.b16 %v184
    %v439 = vunpack.c.h.b16 %v184
    %v440 = vunpack.c.l.b16 %v185
    %v441 = vunpack.c.h.b16 %v185
    %v442 = vunpack.c.l.b16 %v186
    %v443 = vunpack.c.h.b16 %v186
    %v444 = vunpack.c.l.b16 %v187
    %v445 = vunpack.c.h.b16 %v187
    %v446 = vunpack.c.l.b16 %v188
    %v447 = vunpack.c.h.b16 %v188
    %v448 = vunpack.c.l.b16 %v189
    %v449 = vunpack.c.h.b16 %v189
    %v450 = vunpack.c.l.b16 %v190
    %v451 = vunpack.c.h.b16 %v190
    %v452 = vunpack.c.l.b16 %v191
    %v453 = vunpack.c.h.b16 %v191
    %v454 = vunpack.c.l.b16 %v192
    %v455 = vunpack.c.h.b16 %v192
    %v456 = vunpack.c.l.b16 %v193
    %v457 = vunpack.c.h.b16 %v193
    %v458 = vunpack.c.l.b16 %v194
    %v459 = vunpack.c.h.b16 %v194
    %v460 = vunpack.c.l.b16 %v195
    %v461 = vunpack.c.h.b16 %v195
    %v462 = vunpack.c.l.b16 %v196
    %v463 = vunpack.c.h.b16 %v196
    %v464 = vunpack.c.l.b16 %v197
    %v465 = vunpack.c.h.b16 %v197
    %v466 = vunpack.c.l.b16 %v198
    %v467 = vunpack.c.h.b16 %v198
    %v468 = vunpack.c.l.b16 %v199
    %v469 = vunpack.c.h.b16 %v199
    %v470 = vunpack.c.l.b16 %v200
    %v471 = vunpack.c.h.b16 %v200
    %v472 = vpack.c.b16 %v338, %v336
    %v473 = vpack.c.b16 %v339, %v337
    %v474 = vpack.c.b16 %v342, %v340
    %v475 = vpack.c.b16 %v343, %v341
    %v476 = vpack.c.b16 %v346, %v344
    %v477 = vpack.c.b16 %v347, %v345
    %v478 = vpack.c.b16 %v350, %v348
    %v479 = vpack.c.b16 %v351, %v349
    %v480 = vpack.c.b16 %v354, %v352
    %v481 = vpack.c.b16 %v355, %v353
    %v482 = vpack.c.b16 %v358, %v356
    %v483 = vpack.c.b16 %v359, %v357
    %v484 = vpack.c.b16 %v362, %v360
    %v485 = vpack.c.b16 %v363, %v361
    %v486 = vpack.c.b16 %v366, %v364
    %v487 = vpack.c.b16 %v367, %v365
    %v488 = vpack.c.b16 %v370, %v368
    %v489 = vpack.c.b16 %v371, %v369
    %v490 = vpack.c.b16 %v374, %v372
    %v491 = vpack.c.b16 %v375, %v373
    %v492 = vpack.c.b16 %v378, %v376
    %v493 = vpack.c.b16 %v379, %v377
    %v494 = vpack.c.b16 %v382, %v380
    %v495 = vpack.c.b16 %v383, %v381
    %v496 = vpack.c.b16 %v386, %v384
    %v497 = vpack.c.b16 %v387, %v385
    %v498 = vpack.c.b16 %v390, %v388
    %v499 = vpack.c.b16 %v391, %v389
    %v500 = vpack.c.b16 %v394, %v392
    %v501 = vpack.c.b16 %v395, %v393
    %v502 = vpack.c.b16 %v398, %v396
    %v503 = vpack.c.b16 %v399, %v397
    %v504 = vpack.c.b16 %v402, %v400
    %v505 = vpack.c.b16 %v403, %v401
    %v506 = vpack.c.b16 %v406, %v404
    %v507 = vpack.c.b16 %v407, %v405
    %v508 = vpack.c.b16 %v410, %v408
    %v509 = vpack.c.b16 %v411, %v409
    %v510 = vpack.c.b16 %v414, %v412
    %v511 = vpack.c.b16 %v415, %v413
    %v512 = vpack.c.b16 %v418, %v416
    %v513 = vpack.c.b16 %v419, %v417
    %v514 = vpack.c.b16 %v422, %v420
    %v515 = vpack.c.b16 %v423, %v421
    %v516 = vpack.c.b16 %v426, %v424
    %v517 = vpack.c.b16 %v427, %v425
    %v518 = vpack.c.b16 %v430, %v428
    %v519 = vpack.c.b16 %v431, %v429
    %v520 = vpack.c.b16 %v434, %v432
    %v521 = vpack.c.b16 %v435, %v433
    %v522 = vpack.c.b16 %v438, %v436
    %v523 = vpack.c.b16 %v439, %v437
    %v524 = vpack.c.b16 %v442, %v440
    %v525 = vpack.c.b16 %v443, %v441
    %v526 = vpack.c.b16 %v446, %v444
    %v527 = vpack.c.b16 %v447, %v445
    %v528 = vpack.c.b16 %v450, %v448
    %v529 = vpack.c.b16 %v451, %v449
    %v530 = vpack.c.b16 %v454, %v452
    %v531 = vpack.c.b16 %v455, %v453
    %v532 = vpack.c.b16 %v458, %v456
    %v533 = vpack.c.b16 %v459, %v457
    %v534 = vpack.c.b16 %v462, %v460
    %v535 = vpack.c.b16 %v463, %v461
    %v536 = vpack.c.b16 %v466, %v464
    %v537 = vpack.c.b16 %v467, %v465
    %v538 = vpack.c.b16 %v470, %v468
    %v539 = vpack.c.b16 %v471, %v469
    %vm608 = vcmask 261120
    %v610 = vsel %vm608, %v245, 0
    %v613 = vsel %vm608, %v250, 0
    %v616 = vsel %vm608, %v255, 0
    %618 = vmatpush.bf16.msra.mxu0 %v486
    %619 = vmatpush.bf16.msra.mxu0 %v484
    %620 = vmatpush.bf16.msra.mxu0 %v482
    %621 = vmatpush.bf16.msra.mxu0 %v480
    %622 = vmatpush.bf16.msra.mxu0 %v478
    %623 = vmatpush.bf16.msra.mxu0 %v476
    %624 = vmatpush.bf16.msra.mxu0 %v474
    %625 = vmatpush.bf16.msra.mxu0 %v472
    %626 = vmatmul.bf16.gmra.mxu0 %v241
    %v627 = vpop.f32.mrf.mxu0
    %v628 = vadd.f32 0.0, %v627
    %v629 = vpop.f32.mrf.mxu0
    %v630 = vadd.f32 0.0, %v629
    %631 = vmatmul.bf16.gmra.mxu0 %v246
    %v632 = vpop.f32.mrf.mxu0
    %v633 = vadd.f32 0.0, %v632
    %v634 = vpop.f32.mrf.mxu0
    %v635 = vadd.f32 0.0, %v634
    %636 = vmatmul.bf16.gmra.mxu0 %v251
    %v637 = vpop.f32.mrf.mxu0
    %v638 = vadd.f32 0.0, %v637
    %v639 = vpop.f32.mrf.mxu0
    %640 = vdwg.mxu0
    %641 = vmatpush.bf16.msra.mxu0 %v502
    %642 = vmatpush.bf16.msra.mxu0 %v500
    %643 = vmatpush.bf16.msra.mxu0 %v498
    %644 = vmatpush.bf16.msra.mxu0 %v496
    %645 = vmatpush.bf16.msra.mxu0 %v494
    %646 = vmatpush.bf16.msra.mxu0 %v492
    %647 = vmatpush.bf16.msra.mxu0 %v490
    %648 = vmatpush.bf16.msra.mxu0 %v488
    %649 = vmatmul.bf16.gmra.mxu0 %v242
    %v650 = vpop.f32.mrf.mxu0
    %v651 = vadd.f32 %v628, %v650
    %v652 = vpop.f32.mrf.mxu0
    %v653 = vadd.f32 %v630, %v652
    %654 = vmatmul.bf16.gmra.mxu0 %v247
    %v655 = vpop.f32.mrf.mxu0
    %v656 = vadd.f32 %v633, %v655
    %v657 = vpop.f32.mrf.mxu0
    %v658 = vadd.f32 %v635, %v657
    %659 = vmatmul.bf16.gmra.mxu0 %v252
    %v660 = vpop.f32.mrf.mxu0
    %v661 = vadd.f32 %v638, %v660
    %v662 = vpop.f32.mrf.mxu0
    %663 = vdwg.mxu0
    %664 = vmatpush.bf16.msra.mxu0 %v518
    %665 = vmatpush.bf16.msra.mxu0 %v516
    %666 = vmatpush.bf16.msra.mxu0 %v514
    %667 = vmatpush.bf16.msra.mxu0 %v512
    %668 = vmatpush.bf16.msra.mxu0 %v510
    %669 = vmatpush.bf16.msra.mxu0 %v508
    %670 = vmatpush.bf16.msra.mxu0 %v506
    %671 = vmatpush.bf16.msra.mxu0 %v504
    %672 = vmatmul.bf16.gmra.mxu0 %v243
    %v673 = vpop.f32.mrf.mxu0
    %v674 = vadd.f32 %v651, %v673
    %v675 = vpop.f32.mrf.mxu0
    %v676 = vadd.f32 %v653, %v675
    %677 = vmatmul.bf16.gmra.mxu0 %v248
    %v678 = vpop.f32.mrf.mxu0
    %v679 = vadd.f32 %v656, %v678
    %v680 = vpop.f32.mrf.mxu0
    %v681 = vadd.f32 %v658, %v680
    %682 = vmatmul.bf16.gmra.mxu0 %v253
    %v683 = vpop.f32.mrf.mxu0
    %v684 = vadd.f32 %v661, %v683
    %v685 = vpop.f32.mrf.mxu0
    %686 = vdwg.mxu0
    %687 = vmatpush.bf16.msra.mxu0 %v534
    %688 = vmatpush.bf16.msra.mxu0 %v532
    %689 = vmatpush.bf16.msra.mxu0 %v530
    %690 = vmatpush.bf16.msra.mxu0 %v528
    %691 = vmatpush.bf16.msra.mxu0 %v526
    %692 = vmatpush.bf16.msra.mxu0 %v524
    %693 = vmatpush.bf16.msra.mxu0 %v522
    %694 = vmatpush.bf16.msra.mxu0 %v520
    %695 = vmatmul.bf16.gmra.mxu0 %v244
    %v696 = vpop.f32.mrf.mxu0
    %v697 = vadd.f32 %v674, %v696
    %v698 = vpop.f32.mrf.mxu0
    %v699 = vadd.f32 %v676, %v698
    %700 = vmatmul.bf16.gmra.mxu0 %v249
    %v701 = vpop.f32.mrf.mxu0
    %v702 = vadd.f32 %v679, %v701
    %v703 = vpop.f32.mrf.mxu0
    %v704 = vadd.f32 %v681, %v703
    %705 = vmatmul.bf16.gmra.mxu0 %v254
    %v706 = vpop.f32.mrf.mxu0
    %v707 = vadd.f32 %v684, %v706
    %v708 = vpop.f32.mrf.mxu0
    %709 = vdwg.mxu0
    %710 = vmatpush.bf16.msra.mxu0 0
    %711 = vmatpush.bf16.msra.mxu0 0
    %712 = vmatpush.bf16.msra.mxu0 0
    %713 = vmatpush.bf16.msra.mxu0 0
    %714 = vmatpush.bf16.msra.mxu0 0
    %715 = vmatpush.bf16.msra.mxu0 0
    %716 = vmatpush.bf16.msra.mxu0 %v538
    %717 = vmatpush.bf16.msra.mxu0 %v536
    %718 = vmatmul.bf16.gmra.mxu0 %v610
    %v719 = vpop.f32.mrf.mxu0
    %v720 = vadd.f32 %v697, %v719
    %v721 = vpop.f32.mrf.mxu0
    %v722 = vadd.f32 %v699, %v721
    %723 = vmatmul.bf16.gmra.mxu0 %v613
    %v724 = vpop.f32.mrf.mxu0
    %v725 = vadd.f32 %v702, %v724
    %v726 = vpop.f32.mrf.mxu0
    %v727 = vadd.f32 %v704, %v726
    %728 = vmatmul.bf16.gmra.mxu0 %v616
    %v729 = vpop.f32.mrf.mxu0
    %v730 = vadd.f32 %v707, %v729
    %v731 = vpop.f32.mrf.mxu0
    %732 = vdwg.mxu0
    %733 = vmatpush.bf16.msra.mxu0 %v487
    %734 = vmatpush.bf16.msra.mxu0 %v485
    %735 = vmatpush.bf16.msra.mxu0 %v483
    %736 = vmatpush.bf16.msra.mxu0 %v481
    %737 = vmatpush.bf16.msra.mxu0 %v479
    %738 = vmatpush.bf16.msra.mxu0 %v477
    %739 = vmatpush.bf16.msra.mxu0 %v475
    %740 = vmatpush.bf16.msra.mxu0 %v473
    %741 = vmatmul.bf16.gmra.mxu0 %v241
    %v742 = vpop.f32.mrf.mxu0
    %v743 = vadd.f32 0.0, %v742
    %v744 = vpop.f32.mrf.mxu0
    %v745 = vadd.f32 0.0, %v744
    %746 = vmatmul.bf16.gmra.mxu0 %v246
    %v747 = vpop.f32.mrf.mxu0
    %v748 = vadd.f32 0.0, %v747
    %v749 = vpop.f32.mrf.mxu0
    %v750 = vadd.f32 0.0, %v749
    %751 = vmatmul.bf16.gmra.mxu0 %v251
    %v752 = vpop.f32.mrf.mxu0
    %v753 = vadd.f32 0.0, %v752
    %v754 = vpop.f32.mrf.mxu0
    %755 = vdwg.mxu0
    %756 = vmatpush.bf16.msra.mxu0 %v503
    %757 = vmatpush.bf16.msra.mxu0 %v501
    %758 = vmatpush.bf16.msra.mxu0 %v499
    %759 = vmatpush.bf16.msra.mxu0 %v497
    %760 = vmatpush.bf16.msra.mxu0 %v495
    %761 = vmatpush.bf16.msra.mxu0 %v493
    %762 = vmatpush.bf16.msra.mxu0 %v491
    %763 = vmatpush.bf16.msra.mxu0 %v489
    %764 = vmatmul.bf16.gmra.mxu0 %v242
    %v765 = vpop.f32.mrf.mxu0
    %v766 = vadd.f32 %v743, %v765
    %v767 = vpop.f32.mrf.mxu0
    %v768 = vadd.f32 %v745, %v767
    %769 = vmatmul.bf16.gmra.mxu0 %v247
    %v770 = vpop.f32.mrf.mxu0
    %v771 = vadd.f32 %v748, %v770
    %v772 = vpop.f32.mrf.mxu0
    %v773 = vadd.f32 %v750, %v772
    %774 = vmatmul.bf16.gmra.mxu0 %v252
    %v775 = vpop.f32.mrf.mxu0
    %v776 = vadd.f32 %v753, %v775
    %v777 = vpop.f32.mrf.mxu0
    %778 = vdwg.mxu0
    %779 = vmatpush.bf16.msra.mxu0 %v519
    %780 = vmatpush.bf16.msra.mxu0 %v517
    %781 = vmatpush.bf16.msra.mxu0 %v515
    %782 = vmatpush.bf16.msra.mxu0 %v513
    %783 = vmatpush.bf16.msra.mxu0 %v511
    %784 = vmatpush.bf16.msra.mxu0 %v509
    %785 = vmatpush.bf16.msra.mxu0 %v507
    %786 = vmatpush.bf16.msra.mxu0 %v505
    %787 = vmatmul.bf16.gmra.mxu0 %v243
    %v788 = vpop.f32.mrf.mxu0
    %v789 = vadd.f32 %v766, %v788
    %v790 = vpop.f32.mrf.mxu0
    %v791 = vadd.f32 %v768, %v790
    %792 = vmatmul.bf16.gmra.mxu0 %v248
    %v793 = vpop.f32.mrf.mxu0
    %v794 = vadd.f32 %v771, %v793
    %v795 = vpop.f32.mrf.mxu0
    %v796 = vadd.f32 %v773, %v795
    %797 = vmatmul.bf16.gmra.mxu0 %v253
    %v798 = vpop.f32.mrf.mxu0
    %v799 = vadd.f32 %v776, %v798
    %v800 = vpop.f32.mrf.mxu0
    %801 = vdwg.mxu0
    %802 = vmatpush.bf16.msra.mxu0 %v535
    %803 = vmatpush.bf16.msra.mxu0 %v533
    %804 = vmatpush.bf16.msra.mxu0 %v531
    %805 = vmatpush.bf16.msra.mxu0 %v529
    %806 = vmatpush.bf16.msra.mxu0 %v527
    %807 = vmatpush.bf16.msra.mxu0 %v525
    %808 = vmatpush.bf16.msra.mxu0 %v523
    %809 = vmatpush.bf16.msra.mxu0 %v521
    %810 = vmatmul.bf16.gmra.mxu0 %v244
    %v811 = vpop.f32.mrf.mxu0
    %v812 = vadd.f32 %v789, %v811
    %v813 = vpop.f32.mrf.mxu0
    %v814 = vadd.f32 %v791, %v813
    %815 = vmatmul.bf16.gmra.mxu0 %v249
    %v816 = vpop.f32.mrf.mxu0
    %v817 = vadd.f32 %v794, %v816
    %v818 = vpop.f32.mrf.mxu0
    %v819 = vadd.f32 %v796, %v818
    %820 = vmatmul.bf16.gmra.mxu0 %v254
    %v821 = vpop.f32.mrf.mxu0
    %v822 = vadd.f32 %v799, %v821
    %v823 = vpop.f32.mrf.mxu0
    %824 = vdwg.mxu0
    %825 = vmatpush.bf16.msra.mxu0 0
    %826 = vmatpush.bf16.msra.mxu0 0
    %827 = vmatpush.bf16.msra.mxu0 0
    %828 = vmatpush.bf16.msra.mxu0 0
    %829 = vmatpush.bf16.msra.mxu0 0
    %830 = vmatpush.bf16.msra.mxu0 0
    %831 = vmatpush.bf16.msra.mxu0 %v539
    %832 = vmatpush.bf16.msra.mxu0 %v537
    %833 = vmatmul.bf16.gmra.mxu0 %v610
    %v834 = vpop.f32.mrf.mxu0
    %v835 = vadd.f32 %v812, %v834
    %v836 = vpop.f32.mrf.mxu0
    %v837 = vadd.f32 %v814, %v836
    %838 = vmatmul.bf16.gmra.mxu0 %v613
    %v839 = vpop.f32.mrf.mxu0
    %v840 = vadd.f32 %v817, %v839
    %v841 = vpop.f32.mrf.mxu0
    %v842 = vadd.f32 %v819, %v841
    %843 = vmatmul.bf16.gmra.mxu0 %v616
    %v844 = vpop.f32.mrf.mxu0
    %v845 = vadd.f32 %v822, %v844
    %v846 = vpop.f32.mrf.mxu0
    %847 = vdwg.mxu0
    %v851 = vunpack.c.l.b16 %v46
    %v852 = vunpack.c.h.b16 %v46
    %v853 = vunpack.c.l.b16 %v47
    %v854 = vunpack.c.h.b16 %v47
    %v855 = vunpack.c.l.b16 %v48
    %v856 = vpack.c.b16 %v216, %v851
    %v857 = vpack.c.b16 %v217, %v852
    %v858 = vpack.c.b16 %v218, %v853
    %v859 = vpack.c.b16 %v219, %v854
    %v860 = vpack.c.b16 %v220, %v855
    %v861 = vpack.c.b16 %v226, %v221
    %v862 = vpack.c.b16 %v227, %v222
    %v863 = vpack.c.b16 %v228, %v223
    %v864 = vpack.c.b16 %v229, %v224
    %v865 = vpack.c.b16 %v230, %v225
    %v866 = vpack.c.b16 %v236, %v231
    %v867 = vpack.c.b16 %v237, %v232
    %v868 = vpack.c.b16 %v238, %v233
    %v869 = vpack.c.b16 %v239, %v234
    %v870 = vpack.c.b16 %v240, %v235
    %vm871 = vsmask.f32 4352
    %v873 = vshrl.u32 %v856, 16
    %v875 = vrot.slane %v873, 3
    %v876 = vshll.u32 %v856, 16
    %v878 = vrot.slane %v876, 4
    %v879 = vor.u32 %v875, %v878
    %v881 = vshrl.u32 %v861, 16
    %v883 = vrot.slane %v881, 3
    %v884 = vshll.u32 %v861, 16
    %v886 = vrot.slane %v884, 4
    %v887 = vor.u32 %v883, %v886
    %v888 = vsel %vm871, %v879, %v887
    %v890 = vshrl.u32 %v857, 16
    %v892 = vrot.slane %v890, 3
    %v893 = vshll.u32 %v857, 16
    %v895 = vrot.slane %v893, 4
    %v896 = vor.u32 %v892, %v895
    %v898 = vshrl.u32 %v862, 16
    %v900 = vrot.slane %v898, 3
    %v901 = vshll.u32 %v862, 16
    %v903 = vrot.slane %v901, 4
    %v904 = vor.u32 %v900, %v903
    %v905 = vsel %vm871, %v896, %v904
    %v907 = vshrl.u32 %v858, 16
    %v909 = vrot.slane %v907, 3
    %v910 = vshll.u32 %v858, 16
    %v912 = vrot.slane %v910, 4
    %v913 = vor.u32 %v909, %v912
    %v915 = vshrl.u32 %v863, 16
    %v917 = vrot.slane %v915, 3
    %v918 = vshll.u32 %v863, 16
    %v920 = vrot.slane %v918, 4
    %v921 = vor.u32 %v917, %v920
    %v922 = vsel %vm871, %v913, %v921
    %v924 = vshrl.u32 %v859, 16
    %v926 = vrot.slane %v924, 3
    %v927 = vshll.u32 %v859, 16
    %v929 = vrot.slane %v927, 4
    %v930 = vor.u32 %v926, %v929
    %v932 = vshrl.u32 %v864, 16
    %v934 = vrot.slane %v932, 3
    %v935 = vshll.u32 %v864, 16
    %v937 = vrot.slane %v935, 4
    %v938 = vor.u32 %v934, %v937
    %v939 = vsel %vm871, %v930, %v938
    %v941 = vshrl.u32 %v860, 16
    %v943 = vrot.slane %v941, 3
    %v944 = vshll.u32 %v860, 16
    %v946 = vrot.slane %v944, 4
    %v947 = vor.u32 %v943, %v946
    %v949 = vshrl.u32 %v865, 16
    %v951 = vrot.slane %v949, 3
    %v952 = vshll.u32 %v865, 16
    %v954 = vrot.slane %v952, 4
    %v955 = vor.u32 %v951, %v954
    %v956 = vsel %vm871, %v947, %v955
    %v958 = vshrl.u32 %v866, 16
    %v960 = vrot.slane %v958, 3
    %v961 = vshll.u32 %v866, 16
    %v963 = vrot.slane %v961, 4
    %v964 = vor.u32 %v960, %v963
    %v965 = vsel %vm871, %v887, %v964
    %v967 = vshrl.u32 %v867, 16
    %v969 = vrot.slane %v967, 3
    %v970 = vshll.u32 %v867, 16
    %v972 = vrot.slane %v970, 4
    %v973 = vor.u32 %v969, %v972
    %v974 = vsel %vm871, %v904, %v973
    %v976 = vshrl.u32 %v868, 16
    %v978 = vrot.slane %v976, 3
    %v979 = vshll.u32 %v868, 16
    %v981 = vrot.slane %v979, 4
    %v982 = vor.u32 %v978, %v981
    %v983 = vsel %vm871, %v921, %v982
    %v985 = vshrl.u32 %v869, 16
    %v987 = vrot.slane %v985, 3
    %v988 = vshll.u32 %v869, 16
    %v990 = vrot.slane %v988, 4
    %v991 = vor.u32 %v987, %v990
    %v992 = vsel %vm871, %v938, %v991
    %v994 = vshrl.u32 %v870, 16
    %v996 = vrot.slane %v994, 3
    %v997 = vshll.u32 %v870, 16
    %v999 = vrot.slane %v997, 4
    %v1000 = vor.u32 %v996, %v999
    %v1001 = vsel %vm871, %v955, %v1000
    %v1082 = vunpack.c.l.b16 %v64
    %v1083 = vunpack.c.h.b16 %v64
    %v1084 = vunpack.c.l.b16 %v65
    %v1085 = vunpack.c.h.b16 %v65
    %v1086 = vunpack.c.l.b16 %v66
    %v1087 = vunpack.c.h.b16 %v66
    %v1088 = vunpack.c.l.b16 %v67
    %v1089 = vunpack.c.h.b16 %v67
    %v1090 = vunpack.c.l.b16 %v68
    %v1091 = vunpack.c.h.b16 %v68
    %v1092 = vunpack.c.l.b16 %v69
    %v1093 = vunpack.c.h.b16 %v69
    %v1094 = vunpack.c.l.b16 %v70
    %v1095 = vunpack.c.h.b16 %v70
    %v1096 = vunpack.c.l.b16 %v71
    %v1097 = vunpack.c.h.b16 %v71
    %v1098 = vunpack.c.l.b16 %v72
    %v1099 = vunpack.c.h.b16 %v72
    %v1100 = vunpack.c.l.b16 %v73
    %v1101 = vunpack.c.h.b16 %v73
    %v1102 = vunpack.c.l.b16 %v74
    %v1103 = vunpack.c.h.b16 %v74
    %v1104 = vunpack.c.l.b16 %v75
    %v1105 = vunpack.c.h.b16 %v75
    %v1106 = vunpack.c.l.b16 %v76
    %v1107 = vunpack.c.h.b16 %v76
    %v1108 = vunpack.c.l.b16 %v77
    %v1109 = vunpack.c.h.b16 %v77
    %v1110 = vunpack.c.l.b16 %v78
    %v1111 = vunpack.c.h.b16 %v78
    %v1112 = vunpack.c.l.b16 %v79
    %v1113 = vunpack.c.h.b16 %v79
    %v1114 = vunpack.c.l.b16 %v80
    %v1115 = vunpack.c.h.b16 %v80
    %v1116 = vunpack.c.l.b16 %v81
    %v1117 = vunpack.c.h.b16 %v81
    %v1118 = vunpack.c.l.b16 %v82
    %v1119 = vunpack.c.h.b16 %v82
    %v1120 = vunpack.c.l.b16 %v83
    %v1121 = vunpack.c.h.b16 %v83
    %v1122 = vunpack.c.l.b16 %v84
    %v1123 = vunpack.c.h.b16 %v84
    %v1124 = vunpack.c.l.b16 %v85
    %v1125 = vunpack.c.h.b16 %v85
    %v1126 = vunpack.c.l.b16 %v86
    %v1127 = vunpack.c.h.b16 %v86
    %v1128 = vunpack.c.l.b16 %v87
    %v1129 = vunpack.c.h.b16 %v87
    %v1130 = vunpack.c.l.b16 %v88
    %v1131 = vunpack.c.h.b16 %v88
    %v1132 = vunpack.c.l.b16 %v89
    %v1133 = vunpack.c.h.b16 %v89
    %v1134 = vunpack.c.l.b16 %v90
    %v1135 = vunpack.c.h.b16 %v90
    %v1136 = vunpack.c.l.b16 %v91
    %v1137 = vunpack.c.h.b16 %v91
    %v1138 = vunpack.c.l.b16 %v92
    %v1139 = vunpack.c.h.b16 %v92
    %v1140 = vunpack.c.l.b16 %v93
    %v1141 = vunpack.c.h.b16 %v93
    %v1142 = vunpack.c.l.b16 %v94
    %v1143 = vunpack.c.h.b16 %v94
    %v1144 = vunpack.c.l.b16 %v95
    %v1145 = vunpack.c.h.b16 %v95
    %v1146 = vunpack.c.l.b16 %v96
    %v1147 = vunpack.c.h.b16 %v96
    %v1148 = vunpack.c.l.b16 %v97
    %v1149 = vunpack.c.h.b16 %v97
    %v1150 = vunpack.c.l.b16 %v98
    %v1151 = vunpack.c.h.b16 %v98
    %v1152 = vunpack.c.l.b16 %v99
    %v1153 = vunpack.c.h.b16 %v99
    %v1154 = vunpack.c.l.b16 %v100
    %v1155 = vunpack.c.h.b16 %v100
    %v1156 = vunpack.c.l.b16 %v101
    %v1157 = vunpack.c.h.b16 %v101
    %v1158 = vunpack.c.l.b16 %v102
    %v1159 = vunpack.c.h.b16 %v102
    %v1160 = vunpack.c.l.b16 %v103
    %v1161 = vunpack.c.h.b16 %v103
    %v1162 = vunpack.c.l.b16 %v104
    %v1163 = vunpack.c.h.b16 %v104
    %v1164 = vunpack.c.l.b16 %v105
    %v1165 = vunpack.c.h.b16 %v105
    %v1166 = vunpack.c.l.b16 %v106
    %v1167 = vunpack.c.h.b16 %v106
    %v1168 = vunpack.c.l.b16 %v107
    %v1169 = vunpack.c.h.b16 %v107
    %v1170 = vunpack.c.l.b16 %v108
    %v1171 = vunpack.c.h.b16 %v108
    %v1172 = vunpack.c.l.b16 %v109
    %v1173 = vunpack.c.h.b16 %v109
    %v1174 = vunpack.c.l.b16 %v110
    %v1175 = vunpack.c.h.b16 %v110
    %v1176 = vunpack.c.l.b16 %v111
    %v1177 = vunpack.c.h.b16 %v111
    %v1178 = vunpack.c.l.b16 %v112
    %v1179 = vunpack.c.h.b16 %v112
    %v1180 = vunpack.c.l.b16 %v113
    %v1181 = vunpack.c.h.b16 %v113
    %v1182 = vunpack.c.l.b16 %v114
    %v1183 = vunpack.c.h.b16 %v114
    %v1184 = vunpack.c.l.b16 %v115
    %v1185 = vunpack.c.h.b16 %v115
    %v1186 = vunpack.c.l.b16 %v116
    %v1187 = vunpack.c.h.b16 %v116
    %v1188 = vunpack.c.l.b16 %v117
    %v1189 = vunpack.c.h.b16 %v117
    %v1190 = vunpack.c.l.b16 %v118
    %v1191 = vunpack.c.h.b16 %v118
    %v1192 = vunpack.c.l.b16 %v119
    %v1193 = vunpack.c.h.b16 %v119
    %v1194 = vunpack.c.l.b16 %v120
    %v1195 = vunpack.c.h.b16 %v120
    %v1196 = vunpack.c.l.b16 %v121
    %v1197 = vunpack.c.h.b16 %v121
    %v1198 = vunpack.c.l.b16 %v122
    %v1199 = vunpack.c.h.b16 %v122
    %v1200 = vunpack.c.l.b16 %v123
    %v1201 = vunpack.c.h.b16 %v123
    %v1202 = vunpack.c.l.b16 %v124
    %v1203 = vunpack.c.h.b16 %v124
    %v1204 = vunpack.c.l.b16 %v125
    %v1205 = vunpack.c.h.b16 %v125
    %v1206 = vunpack.c.l.b16 %v126
    %v1207 = vunpack.c.h.b16 %v126
    %v1208 = vunpack.c.l.b16 %v127
    %v1209 = vunpack.c.h.b16 %v127
    %v1210 = vunpack.c.l.b16 %v128
    %v1211 = vunpack.c.h.b16 %v128
    %v1212 = vunpack.c.l.b16 %v129
    %v1213 = vunpack.c.h.b16 %v129
    %v1214 = vunpack.c.l.b16 %v130
    %v1215 = vunpack.c.h.b16 %v130
    %v1216 = vunpack.c.l.b16 %v131
    %v1217 = vunpack.c.h.b16 %v131
    %v1218 = vpack.c.b16 %v1084, %v1082
    %v1219 = vpack.c.b16 %v1085, %v1083
    %v1220 = vpack.c.b16 %v1088, %v1086
    %v1221 = vpack.c.b16 %v1089, %v1087
    %v1222 = vpack.c.b16 %v1092, %v1090
    %v1223 = vpack.c.b16 %v1093, %v1091
    %v1224 = vpack.c.b16 %v1096, %v1094
    %v1225 = vpack.c.b16 %v1097, %v1095
    %v1226 = vpack.c.b16 %v1100, %v1098
    %v1227 = vpack.c.b16 %v1101, %v1099
    %v1228 = vpack.c.b16 %v1104, %v1102
    %v1229 = vpack.c.b16 %v1105, %v1103
    %v1230 = vpack.c.b16 %v1108, %v1106
    %v1231 = vpack.c.b16 %v1109, %v1107
    %v1232 = vpack.c.b16 %v1112, %v1110
    %v1233 = vpack.c.b16 %v1113, %v1111
    %v1234 = vpack.c.b16 %v1116, %v1114
    %v1235 = vpack.c.b16 %v1117, %v1115
    %v1236 = vpack.c.b16 %v1120, %v1118
    %v1237 = vpack.c.b16 %v1121, %v1119
    %v1238 = vpack.c.b16 %v1124, %v1122
    %v1239 = vpack.c.b16 %v1125, %v1123
    %v1240 = vpack.c.b16 %v1128, %v1126
    %v1241 = vpack.c.b16 %v1129, %v1127
    %v1242 = vpack.c.b16 %v1132, %v1130
    %v1243 = vpack.c.b16 %v1133, %v1131
    %v1244 = vpack.c.b16 %v1136, %v1134
    %v1245 = vpack.c.b16 %v1137, %v1135
    %v1246 = vpack.c.b16 %v1140, %v1138
    %v1247 = vpack.c.b16 %v1141, %v1139
    %v1248 = vpack.c.b16 %v1144, %v1142
    %v1249 = vpack.c.b16 %v1145, %v1143
    %v1250 = vpack.c.b16 %v1148, %v1146
    %v1251 = vpack.c.b16 %v1149, %v1147
    %v1252 = vpack.c.b16 %v1152, %v1150
    %v1253 = vpack.c.b16 %v1153, %v1151
    %v1254 = vpack.c.b16 %v1156, %v1154
    %v1255 = vpack.c.b16 %v1157, %v1155
    %v1256 = vpack.c.b16 %v1160, %v1158
    %v1257 = vpack.c.b16 %v1161, %v1159
    %v1258 = vpack.c.b16 %v1164, %v1162
    %v1259 = vpack.c.b16 %v1165, %v1163
    %v1260 = vpack.c.b16 %v1168, %v1166
    %v1261 = vpack.c.b16 %v1169, %v1167
    %v1262 = vpack.c.b16 %v1172, %v1170
    %v1263 = vpack.c.b16 %v1173, %v1171
    %v1264 = vpack.c.b16 %v1176, %v1174
    %v1265 = vpack.c.b16 %v1177, %v1175
    %v1266 = vpack.c.b16 %v1180, %v1178
    %v1267 = vpack.c.b16 %v1181, %v1179
    %v1268 = vpack.c.b16 %v1184, %v1182
    %v1269 = vpack.c.b16 %v1185, %v1183
    %v1270 = vpack.c.b16 %v1188, %v1186
    %v1271 = vpack.c.b16 %v1189, %v1187
    %v1272 = vpack.c.b16 %v1192, %v1190
    %v1273 = vpack.c.b16 %v1193, %v1191
    %v1274 = vpack.c.b16 %v1196, %v1194
    %v1275 = vpack.c.b16 %v1197, %v1195
    %v1276 = vpack.c.b16 %v1200, %v1198
    %v1277 = vpack.c.b16 %v1201, %v1199
    %v1278 = vpack.c.b16 %v1204, %v1202
    %v1279 = vpack.c.b16 %v1205, %v1203
    %v1280 = vpack.c.b16 %v1208, %v1206
    %v1281 = vpack.c.b16 %v1209, %v1207
    %v1282 = vpack.c.b16 %v1212, %v1210
    %v1283 = vpack.c.b16 %v1213, %v1211
    %v1284 = vpack.c.b16 %v1216, %v1214
    %v1285 = vpack.c.b16 %v1217, %v1215
    %v1355 = vsel %vm608, %v956, 0
    %v1358 = vsel %vm608, %v1001, 0
    %v1361 = vsel %vm608, %v1000, 0
    %1363 = vmatpush.bf16.msra.mxu0 %v1232
    %1364 = vmatpush.bf16.msra.mxu0 %v1230
    %1365 = vmatpush.bf16.msra.mxu0 %v1228
    %1366 = vmatpush.bf16.msra.mxu0 %v1226
    %1367 = vmatpush.bf16.msra.mxu0 %v1224
    %1368 = vmatpush.bf16.msra.mxu0 %v1222
    %1369 = vmatpush.bf16.msra.mxu0 %v1220
    %1370 = vmatpush.bf16.msra.mxu0 %v1218
    %1371 = vmatmul.bf16.gmra.mxu0 %v888
    %v1372 = vpop.f32.mrf.mxu0
    %v1373 = vadd.f32 %v720, %v1372
    %v1374 = vpop.f32.mrf.mxu0
    %v1375 = vadd.f32 %v722, %v1374
    %1376 = vmatmul.bf16.gmra.mxu0 %v965
    %v1377 = vpop.f32.mrf.mxu0
    %v1378 = vadd.f32 %v725, %v1377
    %v1379 = vpop.f32.mrf.mxu0
    %v1380 = vadd.f32 %v727, %v1379
    %1381 = vmatmul.bf16.gmra.mxu0 %v964
    %v1382 = vpop.f32.mrf.mxu0
    %v1383 = vadd.f32 %v730, %v1382
    %v1384 = vpop.f32.mrf.mxu0
    %1385 = vdwg.mxu0
    %1386 = vmatpush.bf16.msra.mxu0 %v1248
    %1387 = vmatpush.bf16.msra.mxu0 %v1246
    %1388 = vmatpush.bf16.msra.mxu0 %v1244
    %1389 = vmatpush.bf16.msra.mxu0 %v1242
    %1390 = vmatpush.bf16.msra.mxu0 %v1240
    %1391 = vmatpush.bf16.msra.mxu0 %v1238
    %1392 = vmatpush.bf16.msra.mxu0 %v1236
    %1393 = vmatpush.bf16.msra.mxu0 %v1234
    %1394 = vmatmul.bf16.gmra.mxu0 %v905
    %v1395 = vpop.f32.mrf.mxu0
    %v1396 = vadd.f32 %v1373, %v1395
    %v1397 = vpop.f32.mrf.mxu0
    %v1398 = vadd.f32 %v1375, %v1397
    %1399 = vmatmul.bf16.gmra.mxu0 %v974
    %v1400 = vpop.f32.mrf.mxu0
    %v1401 = vadd.f32 %v1378, %v1400
    %v1402 = vpop.f32.mrf.mxu0
    %v1403 = vadd.f32 %v1380, %v1402
    %1404 = vmatmul.bf16.gmra.mxu0 %v973
    %v1405 = vpop.f32.mrf.mxu0
    %v1406 = vadd.f32 %v1383, %v1405
    %v1407 = vpop.f32.mrf.mxu0
    %1408 = vdwg.mxu0
    %1409 = vmatpush.bf16.msra.mxu0 %v1264
    %1410 = vmatpush.bf16.msra.mxu0 %v1262
    %1411 = vmatpush.bf16.msra.mxu0 %v1260
    %1412 = vmatpush.bf16.msra.mxu0 %v1258
    %1413 = vmatpush.bf16.msra.mxu0 %v1256
    %1414 = vmatpush.bf16.msra.mxu0 %v1254
    %1415 = vmatpush.bf16.msra.mxu0 %v1252
    %1416 = vmatpush.bf16.msra.mxu0 %v1250
    %1417 = vmatmul.bf16.gmra.mxu0 %v922
    %v1418 = vpop.f32.mrf.mxu0
    %v1419 = vadd.f32 %v1396, %v1418
    %v1420 = vpop.f32.mrf.mxu0
    %v1421 = vadd.f32 %v1398, %v1420
    %1422 = vmatmul.bf16.gmra.mxu0 %v983
    %v1423 = vpop.f32.mrf.mxu0
    %v1424 = vadd.f32 %v1401, %v1423
    %v1425 = vpop.f32.mrf.mxu0
    %v1426 = vadd.f32 %v1403, %v1425
    %1427 = vmatmul.bf16.gmra.mxu0 %v982
    %v1428 = vpop.f32.mrf.mxu0
    %v1429 = vadd.f32 %v1406, %v1428
    %v1430 = vpop.f32.mrf.mxu0
    %1431 = vdwg.mxu0
    %1432 = vmatpush.bf16.msra.mxu0 %v1280
    %1433 = vmatpush.bf16.msra.mxu0 %v1278
    %1434 = vmatpush.bf16.msra.mxu0 %v1276
    %1435 = vmatpush.bf16.msra.mxu0 %v1274
    %1436 = vmatpush.bf16.msra.mxu0 %v1272
    %1437 = vmatpush.bf16.msra.mxu0 %v1270
    %1438 = vmatpush.bf16.msra.mxu0 %v1268
    %1439 = vmatpush.bf16.msra.mxu0 %v1266
    %1440 = vmatmul.bf16.gmra.mxu0 %v939
    %v1441 = vpop.f32.mrf.mxu0
    %v1442 = vadd.f32 %v1419, %v1441
    %v1443 = vpop.f32.mrf.mxu0
    %v1444 = vadd.f32 %v1421, %v1443
    %1445 = vmatmul.bf16.gmra.mxu0 %v992
    %v1446 = vpop.f32.mrf.mxu0
    %v1447 = vadd.f32 %v1424, %v1446
    %v1448 = vpop.f32.mrf.mxu0
    %v1449 = vadd.f32 %v1426, %v1448
    %1450 = vmatmul.bf16.gmra.mxu0 %v991
    %v1451 = vpop.f32.mrf.mxu0
    %v1452 = vadd.f32 %v1429, %v1451
    %v1453 = vpop.f32.mrf.mxu0
    %1454 = vdwg.mxu0
    %1455 = vmatpush.bf16.msra.mxu0 0
    %1456 = vmatpush.bf16.msra.mxu0 0
    %1457 = vmatpush.bf16.msra.mxu0 0
    %1458 = vmatpush.bf16.msra.mxu0 0
    %1459 = vmatpush.bf16.msra.mxu0 0
    %1460 = vmatpush.bf16.msra.mxu0 0
    %1461 = vmatpush.bf16.msra.mxu0 %v1284
    %1462 = vmatpush.bf16.msra.mxu0 %v1282
    %1463 = vmatmul.bf16.gmra.mxu0 %v1355
    %v1464 = vpop.f32.mrf.mxu0
    %v1465 = vadd.f32 %v1442, %v1464
    %v1466 = vpop.f32.mrf.mxu0
    %v1467 = vadd.f32 %v1444, %v1466
    %1468 = vmatmul.bf16.gmra.mxu0 %v1358
    %v1469 = vpop.f32.mrf.mxu0
    %v1470 = vadd.f32 %v1447, %v1469
    %v1471 = vpop.f32.mrf.mxu0
    %v1472 = vadd.f32 %v1449, %v1471
    %1473 = vmatmul.bf16.gmra.mxu0 %v1361
    %v1474 = vpop.f32.mrf.mxu0
    %v1475 = vadd.f32 %v1452, %v1474
    %v1476 = vpop.f32.mrf.mxu0
    %1477 = vdwg.mxu0
    %1478 = vmatpush.bf16.msra.mxu0 %v1233
    %1479 = vmatpush.bf16.msra.mxu0 %v1231
    %1480 = vmatpush.bf16.msra.mxu0 %v1229
    %1481 = vmatpush.bf16.msra.mxu0 %v1227
    %1482 = vmatpush.bf16.msra.mxu0 %v1225
    %1483 = vmatpush.bf16.msra.mxu0 %v1223
    %1484 = vmatpush.bf16.msra.mxu0 %v1221
    %1485 = vmatpush.bf16.msra.mxu0 %v1219
    %1486 = vmatmul.bf16.gmra.mxu0 %v888
    %v1487 = vpop.f32.mrf.mxu0
    %v1488 = vadd.f32 %v835, %v1487
    %v1489 = vpop.f32.mrf.mxu0
    %v1490 = vadd.f32 %v837, %v1489
    %1491 = vmatmul.bf16.gmra.mxu0 %v965
    %v1492 = vpop.f32.mrf.mxu0
    %v1493 = vadd.f32 %v840, %v1492
    %v1494 = vpop.f32.mrf.mxu0
    %v1495 = vadd.f32 %v842, %v1494
    %1496 = vmatmul.bf16.gmra.mxu0 %v964
    %v1497 = vpop.f32.mrf.mxu0
    %v1498 = vadd.f32 %v845, %v1497
    %v1499 = vpop.f32.mrf.mxu0
    %1500 = vdwg.mxu0
    %1501 = vmatpush.bf16.msra.mxu0 %v1249
    %1502 = vmatpush.bf16.msra.mxu0 %v1247
    %1503 = vmatpush.bf16.msra.mxu0 %v1245
    %1504 = vmatpush.bf16.msra.mxu0 %v1243
    %1505 = vmatpush.bf16.msra.mxu0 %v1241
    %1506 = vmatpush.bf16.msra.mxu0 %v1239
    %1507 = vmatpush.bf16.msra.mxu0 %v1237
    %1508 = vmatpush.bf16.msra.mxu0 %v1235
    %1509 = vmatmul.bf16.gmra.mxu0 %v905
    %v1510 = vpop.f32.mrf.mxu0
    %v1511 = vadd.f32 %v1488, %v1510
    %v1512 = vpop.f32.mrf.mxu0
    %v1513 = vadd.f32 %v1490, %v1512
    %1514 = vmatmul.bf16.gmra.mxu0 %v974
    %v1515 = vpop.f32.mrf.mxu0
    %v1516 = vadd.f32 %v1493, %v1515
    %v1517 = vpop.f32.mrf.mxu0
    %v1518 = vadd.f32 %v1495, %v1517
    %1519 = vmatmul.bf16.gmra.mxu0 %v973
    %v1520 = vpop.f32.mrf.mxu0
    %v1521 = vadd.f32 %v1498, %v1520
    %v1522 = vpop.f32.mrf.mxu0
    %1523 = vdwg.mxu0
    %1524 = vmatpush.bf16.msra.mxu0 %v1265
    %1525 = vmatpush.bf16.msra.mxu0 %v1263
    %1526 = vmatpush.bf16.msra.mxu0 %v1261
    %1527 = vmatpush.bf16.msra.mxu0 %v1259
    %1528 = vmatpush.bf16.msra.mxu0 %v1257
    %1529 = vmatpush.bf16.msra.mxu0 %v1255
    %1530 = vmatpush.bf16.msra.mxu0 %v1253
    %1531 = vmatpush.bf16.msra.mxu0 %v1251
    %1532 = vmatmul.bf16.gmra.mxu0 %v922
    %v1533 = vpop.f32.mrf.mxu0
    %v1534 = vadd.f32 %v1511, %v1533
    %v1535 = vpop.f32.mrf.mxu0
    %v1536 = vadd.f32 %v1513, %v1535
    %1537 = vmatmul.bf16.gmra.mxu0 %v983
    %v1538 = vpop.f32.mrf.mxu0
    %v1539 = vadd.f32 %v1516, %v1538
    %v1540 = vpop.f32.mrf.mxu0
    %v1541 = vadd.f32 %v1518, %v1540
    %1542 = vmatmul.bf16.gmra.mxu0 %v982
    %v1543 = vpop.f32.mrf.mxu0
    %v1544 = vadd.f32 %v1521, %v1543
    %v1545 = vpop.f32.mrf.mxu0
    %1546 = vdwg.mxu0
    %1547 = vmatpush.bf16.msra.mxu0 %v1281
    %1548 = vmatpush.bf16.msra.mxu0 %v1279
    %1549 = vmatpush.bf16.msra.mxu0 %v1277
    %1550 = vmatpush.bf16.msra.mxu0 %v1275
    %1551 = vmatpush.bf16.msra.mxu0 %v1273
    %1552 = vmatpush.bf16.msra.mxu0 %v1271
    %1553 = vmatpush.bf16.msra.mxu0 %v1269
    %1554 = vmatpush.bf16.msra.mxu0 %v1267
    %1555 = vmatmul.bf16.gmra.mxu0 %v939
    %v1556 = vpop.f32.mrf.mxu0
    %v1557 = vadd.f32 %v1534, %v1556
    %v1558 = vpop.f32.mrf.mxu0
    %v1559 = vadd.f32 %v1536, %v1558
    %1560 = vmatmul.bf16.gmra.mxu0 %v992
    %v1561 = vpop.f32.mrf.mxu0
    %v1562 = vadd.f32 %v1539, %v1561
    %v1563 = vpop.f32.mrf.mxu0
    %v1564 = vadd.f32 %v1541, %v1563
    %1565 = vmatmul.bf16.gmra.mxu0 %v991
    %v1566 = vpop.f32.mrf.mxu0
    %v1567 = vadd.f32 %v1544, %v1566
    %v1568 = vpop.f32.mrf.mxu0
    %1569 = vdwg.mxu0
    %1570 = vmatpush.bf16.msra.mxu0 0
    %1571 = vmatpush.bf16.msra.mxu0 0
    %1572 = vmatpush.bf16.msra.mxu0 0
    %1573 = vmatpush.bf16.msra.mxu0 0
    %1574 = vmatpush.bf16.msra.mxu0 0
    %1575 = vmatpush.bf16.msra.mxu0 0
    %1576 = vmatpush.bf16.msra.mxu0 %v1285
    %1577 = vmatpush.bf16.msra.mxu0 %v1283
    %1578 = vmatmul.bf16.gmra.mxu0 %v1355
    %v1579 = vpop.f32.mrf.mxu0
    %v1580 = vadd.f32 %v1557, %v1579
    %v1581 = vpop.f32.mrf.mxu0
    %v1582 = vadd.f32 %v1559, %v1581
    %1583 = vmatmul.bf16.gmra.mxu0 %v1358
    %v1584 = vpop.f32.mrf.mxu0
    %v1585 = vadd.f32 %v1562, %v1584
    %v1586 = vpop.f32.mrf.mxu0
    %v1587 = vadd.f32 %v1564, %v1586
    %1588 = vmatmul.bf16.gmra.mxu0 %v1361
    %v1589 = vpop.f32.mrf.mxu0
    %v1590 = vadd.f32 %v1567, %v1589
    %v1591 = vpop.f32.mrf.mxu0
    %1592 = vdwg.mxu0
    %v1593 = vld [vmem:[%s0 + $0x64] sm:$0x33]
    %v1594 = vld [vmem:[%s0 + $0x6c] sm:$0x33]
    %v1595 = vld [vmem:[%s0 + $0x74] sm:$0x3]
    %s1596 = scalar_lea.vmem [#allocation2], 1088
    %v1597 = vld [vmem:[%s1596] sm:$0xff]
    %v1598 = vld [vmem:[%s1596 + $0x8] sm:$0xff]
    %v1599 = vld [vmem:[%s1596 + $0x10] sm:$0xff]
    %v1600 = vld [vmem:[%s1596 + $0x18] sm:$0xff]
    %v1601 = vld [vmem:[%s1596 + $0x20] sm:$0xff]
    %v1602 = vld [vmem:[%s1596 + $0x28] sm:$0xff]
    %v1603 = vld [vmem:[%s1596 + $0x30] sm:$0xff]
    %v1604 = vld [vmem:[%s1596 + $0x38] sm:$0xff]
    %v1605 = vld [vmem:[%s1596 + $0x40] sm:$0xff]
    %v1606 = vld [vmem:[%s1596 + $0x48] sm:$0xff]
    %v1607 = vld [vmem:[%s1596 + $0x50] sm:$0xff]
    %v1608 = vld [vmem:[%s1596 + $0x58] sm:$0xff]
    %v1609 = vld [vmem:[%s1596 + $0x60] sm:$0xff]
    %v1610 = vld [vmem:[%s1596 + $0x68] sm:$0xff]
    %v1611 = vld [vmem:[%s1596 + $0x70] sm:$0xff]
    %v1612 = vld [vmem:[%s1596 + $0x78] sm:$0xff]
    %v1613 = vld [vmem:[%s1596 + $0x80] sm:$0xff]
    %v1614 = vld [vmem:[%s1596 + $0x88] sm:$0xff]
    %v1615 = vld [vmem:[%s1596 + $0x90] sm:$0xff]
    %v1616 = vld [vmem:[%s1596 + $0x98] sm:$0xff]
    %v1617 = vld [vmem:[%s1596 + $0xa0] sm:$0xff]
    %v1618 = vld [vmem:[%s1596 + $0xa8] sm:$0xff]
    %v1619 = vld [vmem:[%s1596 + $0xb0] sm:$0xff]
    %v1620 = vld [vmem:[%s1596 + $0xb8] sm:$0xff]
    %v1621 = vld [vmem:[%s1596 + $0xc0] sm:$0xff]
    %v1622 = vld [vmem:[%s1596 + $0xc8] sm:$0xff]
    %v1623 = vld [vmem:[%s1596 + $0xd0] sm:$0xff]
    %v1624 = vld [vmem:[%s1596 + $0xd8] sm:$0xff]
    %v1625 = vld [vmem:[%s1596 + $0xe0] sm:$0xff]
    %v1626 = vld [vmem:[%s1596 + $0xe8] sm:$0xff]
    %v1627 = vld [vmem:[%s1596 + $0xf0] sm:$0xff]
    %v1628 = vld [vmem:[%s1596 + $0xf8] sm:$0xff]
    %v1629 = vld [vmem:[%s1596 + $0x100] sm:$0xff]
    %v1630 = vld [vmem:[%s1596 + $0x108] sm:$0xff]
    %v1631 = vld [vmem:[%s1596 + $0x110] sm:$0xff]
    %v1632 = vld [vmem:[%s1596 + $0x118] sm:$0xff]
    %v1633 = vld [vmem:[%s1596 + $0x120] sm:$0xff]
    %v1634 = vld [vmem:[%s1596 + $0x128] sm:$0xff]
    %v1635 = vld [vmem:[%s1596 + $0x130] sm:$0xff]
    %v1636 = vld [vmem:[%s1596 + $0x138] sm:$0xff]
    %v1637 = vld [vmem:[%s1596 + $0x140] sm:$0xff]
    %v1638 = vld [vmem:[%s1596 + $0x148] sm:$0xff]
    %v1639 = vld [vmem:[%s1596 + $0x150] sm:$0xff]
    %v1640 = vld [vmem:[%s1596 + $0x158] sm:$0xff]
    %v1641 = vld [vmem:[%s1596 + $0x160] sm:$0xff]
    %v1642 = vld [vmem:[%s1596 + $0x168] sm:$0xff]
    %v1643 = vld [vmem:[%s1596 + $0x170] sm:$0xff]
    %v1644 = vld [vmem:[%s1596 + $0x178] sm:$0xff]
    %v1645 = vld [vmem:[%s1596 + $0x180] sm:$0xff]
    %v1646 = vld [vmem:[%s1596 + $0x188] sm:$0xff]
    %v1647 = vld [vmem:[%s1596 + $0x190] sm:$0xff]
    %v1648 = vld [vmem:[%s1596 + $0x198] sm:$0xff]
    %v1649 = vld [vmem:[%s1596 + $0x1a0] sm:$0xff]
    %v1650 = vld [vmem:[%s1596 + $0x1a8] sm:$0xff]
    %v1651 = vld [vmem:[%s1596 + $0x1b0] sm:$0xff]
    %v1652 = vld [vmem:[%s1596 + $0x1b8] sm:$0xff]
    %v1653 = vld [vmem:[%s1596 + $0x1c0] sm:$0xff]
    %v1654 = vld [vmem:[%s1596 + $0x1c8] sm:$0xff]
    %v1655 = vld [vmem:[%s1596 + $0x1d0] sm:$0xff]
    %v1656 = vld [vmem:[%s1596 + $0x1d8] sm:$0xff]
    %v1657 = vld [vmem:[%s1596 + $0x1e0] sm:$0xff]
    %v1658 = vld [vmem:[%s1596 + $0x1e8] sm:$0xff]
    %v1659 = vld [vmem:[%s1596 + $0x1f0] sm:$0xff]
    %v1660 = vld [vmem:[%s1596 + $0x1f8] sm:$0xff]
    %v1661 = vld [vmem:[%s1596 + $0x200] sm:$0xff]
    %v1662 = vld [vmem:[%s1596 + $0x208] sm:$0xff]
    %v1663 = vld [vmem:[%s1596 + $0x210] sm:$0xff]
    %v1664 = vld [vmem:[%s1596 + $0x218] sm:$0xff]
    %v1668 = vunpack.c.l.b16 %v1593
    %v1669 = vunpack.c.h.b16 %v1593
    %v1670 = vunpack.c.l.b16 %v1594
    %v1671 = vunpack.c.h.b16 %v1594
    %v1672 = vunpack.c.l.b16 %v1595
    %v1673 = vpack.c.b16 %v1668, %v1668
    %v1674 = vpack.c.b16 %v1669, %v1669
    %v1675 = vpack.c.b16 %v1670, %v1670
    %v1676 = vpack.c.b16 %v1671, %v1671
    %v1677 = vpack.c.b16 %v1672, %v1672
    %vm1678 = vsmask.f32 7424
    %v1680 = vshrl.u32 %v241, 16
    %v1682 = vshll.u32 %v241, 16
    %v1684 = vrot.slane %v1682, 1
    %v1685 = vor.u32 %v1680, %v1684
    %v1687 = vshll.u32 %v246, 16
    %v1689 = vrot.slane %v1687, 1
    %v1690 = vsel %vm1678, %v1685, %v1689
    %v1692 = vshrl.u32 %v242, 16
    %v1694 = vshll.u32 %v242, 16
    %v1696 = vrot.slane %v1694, 1
    %v1697 = vor.u32 %v1692, %v1696
    %v1699 = vshll.u32 %v247, 16
    %v1701 = vrot.slane %v1699, 1
    %v1702 = vsel %vm1678, %v1697, %v1701
    %v1704 = vshrl.u32 %v243, 16
    %v1706 = vshll.u32 %v243, 16
    %v1708 = vrot.slane %v1706, 1
    %v1709 = vor.u32 %v1704, %v1708
    %v1711 = vshll.u32 %v248, 16
    %v1713 = vrot.slane %v1711, 1
    %v1714 = vsel %vm1678, %v1709, %v1713
    %v1716 = vshrl.u32 %v244, 16
    %v1718 = vshll.u32 %v244, 16
    %v1720 = vrot.slane %v1718, 1
    %v1721 = vor.u32 %v1716, %v1720
    %v1723 = vshll.u32 %v249, 16
    %v1725 = vrot.slane %v1723, 1
    %v1726 = vsel %vm1678, %v1721, %v1725
    %v1727 = vshrl.u32 %v245, 16
    %v1729 = vshll.u32 %v245, 16
    %v1731 = vrot.slane %v1729, 1
    %v1732 = vor.u32 %v1727, %v1731
    %v1733 = vshll.u32 %v250, 16
    %v1735 = vrot.slane %v1733, 1
    %v1736 = vsel %vm1678, %v1732, %v1735
    %v1737 = vshrl.u32 %v246, 16
    %v1739 = vor.u32 %v1737, %v1689
    %v1741 = vshll.u32 %v1673, 16
    %v1743 = vrot.slane %v1741, 1
    %v1744 = vsel %vm1678, %v1739, %v1743
    %v1745 = vshrl.u32 %v247, 16
    %v1747 = vor.u32 %v1745, %v1701
    %v1749 = vshll.u32 %v1674, 16
    %v1751 = vrot.slane %v1749, 1
    %v1752 = vsel %vm1678, %v1747, %v1751
    %v1753 = vshrl.u32 %v248, 16
    %v1755 = vor.u32 %v1753, %v1713
    %v1757 = vshll.u32 %v1675, 16
    %v1759 = vrot.slane %v1757, 1
    %v1760 = vsel %vm1678, %v1755, %v1759
    %v1761 = vshrl.u32 %v249, 16
    %v1763 = vor.u32 %v1761, %v1725
    %v1765 = vshll.u32 %v1676, 16
    %v1767 = vrot.slane %v1765, 1
    %v1768 = vsel %vm1678, %v1763, %v1767
    %v1769 = vshrl.u32 %v250, 16
    %v1771 = vor.u32 %v1769, %v1735
    %v1773 = vshll.u32 %v1677, 16
    %v1775 = vrot.slane %v1773, 1
    %v1776 = vsel %vm1678, %v1771, %v1775
    %v1777 = vshrl.u32 %v1673, 16
    %v1779 = vor.u32 %v1777, %v1743
    %v1780 = vshrl.u32 %v1674, 16
    %v1782 = vor.u32 %v1780, %v1751
    %v1783 = vshrl.u32 %v1675, 16
    %v1785 = vor.u32 %v1783, %v1759
    %v1786 = vshrl.u32 %v1676, 16
    %v1788 = vor.u32 %v1786, %v1767
    %v1789 = vshrl.u32 %v1677, 16
    %v1791 = vor.u32 %v1789, %v1775
    %v1872 = vunpack.c.l.b16 %v1597
    %v1873 = vunpack.c.h.b16 %v1597
    %v1874 = vunpack.c.l.b16 %v1598
    %v1875 = vunpack.c.h.b16 %v1598
    %v1876 = vunpack.c.l.b16 %v1599
    %v1877 = vunpack.c.h.b16 %v1599
    %v1878 = vunpack.c.l.b16 %v1600
    %v1879 = vunpack.c.h.b16 %v1600
    %v1880 = vunpack.c.l.b16 %v1601
    %v1881 = vunpack.c.h.b16 %v1601
    %v1882 = vunpack.c.l.b16 %v1602
    %v1883 = vunpack.c.h.b16 %v1602
    %v1884 = vunpack.c.l.b16 %v1603
    %v1885 = vunpack.c.h.b16 %v1603
    %v1886 = vunpack.c.l.b16 %v1604
    %v1887 = vunpack.c.h.b16 %v1604
    %v1888 = vunpack.c.l.b16 %v1605
    %v1889 = vunpack.c.h.b16 %v1605
    %v1890 = vunpack.c.l.b16 %v1606
    %v1891 = vunpack.c.h.b16 %v1606
    %v1892 = vunpack.c.l.b16 %v1607
    %v1893 = vunpack.c.h.b16 %v1607
    %v1894 = vunpack.c.l.b16 %v1608
    %v1895 = vunpack.c.h.b16 %v1608
    %v1896 = vunpack.c.l.b16 %v1609
    %v1897 = vunpack.c.h.b16 %v1609
    %v1898 = vunpack.c.l.b16 %v1610
    %v1899 = vunpack.c.h.b16 %v1610
    %v1900 = vunpack.c.l.b16 %v1611
    %v1901 = vunpack.c.h.b16 %v1611
    %v1902 = vunpack.c.l.b16 %v1612
    %v1903 = vunpack.c.h.b16 %v1612
    %v1904 = vunpack.c.l.b16 %v1613
    %v1905 = vunpack.c.h.b16 %v1613
    %v1906 = vunpack.c.l.b16 %v1614
    %v1907 = vunpack.c.h.b16 %v1614
    %v1908 = vunpack.c.l.b16 %v1615
    %v1909 = vunpack.c.h.b16 %v1615
    %v1910 = vunpack.c.l.b16 %v1616
    %v1911 = vunpack.c.h.b16 %v1616
    %v1912 = vunpack.c.l.b16 %v1617
    %v1913 = vunpack.c.h.b16 %v1617
    %v1914 = vunpack.c.l.b16 %v1618
    %v1915 = vunpack.c.h.b16 %v1618
    %v1916 = vunpack.c.l.b16 %v1619
    %v1917 = vunpack.c.h.b16 %v1619
    %v1918 = vunpack.c.l.b16 %v1620
    %v1919 = vunpack.c.h.b16 %v1620
    %v1920 = vunpack.c.l.b16 %v1621
    %v1921 = vunpack.c.h.b16 %v1621
    %v1922 = vunpack.c.l.b16 %v1622
    %v1923 = vunpack.c.h.b16 %v1622
    %v1924 = vunpack.c.l.b16 %v1623
    %v1925 = vunpack.c.h.b16 %v1623
    %v1926 = vunpack.c.l.b16 %v1624
    %v1927 = vunpack.c.h.b16 %v1624
    %v1928 = vunpack.c.l.b16 %v1625
    %v1929 = vunpack.c.h.b16 %v1625
    %v1930 = vunpack.c.l.b16 %v1626
    %v1931 = vunpack.c.h.b16 %v1626
    %v1932 = vunpack.c.l.b16 %v1627
    %v1933 = vunpack.c.h.b16 %v1627
    %v1934 = vunpack.c.l.b16 %v1628
    %v1935 = vunpack.c.h.b16 %v1628
    %v1936 = vunpack.c.l.b16 %v1629
    %v1937 = vunpack.c.h.b16 %v1629
    %v1938 = vunpack.c.l.b16 %v1630
    %v1939 = vunpack.c.h.b16 %v1630
    %v1940 = vunpack.c.l.b16 %v1631
    %v1941 = vunpack.c.h.b16 %v1631
    %v1942 = vunpack.c.l.b16 %v1632
    %v1943 = vunpack.c.h.b16 %v1632
    %v1944 = vunpack.c.l.b16 %v1633
    %v1945 = vunpack.c.h.b16 %v1633
    %v1946 = vunpack.c.l.b16 %v1634
    %v1947 = vunpack.c.h.b16 %v1634
    %v1948 = vunpack.c.l.b16 %v1635
    %v1949 = vunpack.c.h.b16 %v1635
    %v1950 = vunpack.c.l.b16 %v1636
    %v1951 = vunpack.c.h.b16 %v1636
    %v1952 = vunpack.c.l.b16 %v1637
    %v1953 = vunpack.c.h.b16 %v1637
    %v1954 = vunpack.c.l.b16 %v1638
    %v1955 = vunpack.c.h.b16 %v1638
    %v1956 = vunpack.c.l.b16 %v1639
    %v1957 = vunpack.c.h.b16 %v1639
    %v1958 = vunpack.c.l.b16 %v1640
    %v1959 = vunpack.c.h.b16 %v1640
    %v1960 = vunpack.c.l.b16 %v1641
    %v1961 = vunpack.c.h.b16 %v1641
    %v1962 = vunpack.c.l.b16 %v1642
    %v1963 = vunpack.c.h.b16 %v1642
    %v1964 = vunpack.c.l.b16 %v1643
    %v1965 = vunpack.c.h.b16 %v1643
    %v1966 = vunpack.c.l.b16 %v1644
    %v1967 = vunpack.c.h.b16 %v1644
    %v1968 = vunpack.c.l.b16 %v1645
    %v1969 = vunpack.c.h.b16 %v1645
    %v1970 = vunpack.c.l.b16 %v1646
    %v1971 = vunpack.c.h.b16 %v1646
    %v1972 = vunpack.c.l.b16 %v1647
    %v1973 = vunpack.c.h.b16 %v1647
    %v1974 = vunpack.c.l.b16 %v1648
    %v1975 = vunpack.c.h.b16 %v1648
    %v1976 = vunpack.c.l.b16 %v1649
    %v1977 = vunpack.c.h.b16 %v1649
    %v1978 = vunpack.c.l.b16 %v1650
    %v1979 = vunpack.c.h.b16 %v1650
    %v1980 = vunpack.c.l.b16 %v1651
    %v1981 = vunpack.c.h.b16 %v1651
    %v1982 = vunpack.c.l.b16 %v1652
    %v1983 = vunpack.c.h.b16 %v1652
    %v1984 = vunpack.c.l.b16 %v1653
    %v1985 = vunpack.c.h.b16 %v1653
    %v1986 = vunpack.c.l.b16 %v1654
    %v1987 = vunpack.c.h.b16 %v1654
    %v1988 = vunpack.c.l.b16 %v1655
    %v1989 = vunpack.c.h.b16 %v1655
    %v1990 = vunpack.c.l.b16 %v1656
    %v1991 = vunpack.c.h.b16 %v1656
    %v1992 = vunpack.c.l.b16 %v1657
    %v1993 = vunpack.c.h.b16 %v1657
    %v1994 = vunpack.c.l.b16 %v1658
    %v1995 = vunpack.c.h.b16 %v1658
    %v1996 = vunpack.c.l.b16 %v1659
    %v1997 = vunpack.c.h.b16 %v1659
    %v1998 = vunpack.c.l.b16 %v1660
    %v1999 = vunpack.c.h.b16 %v1660
    %v2000 = vunpack.c.l.b16 %v1661
    %v2001 = vunpack.c.h.b16 %v1661
    %v2002 = vunpack.c.l.b16 %v1662
    %v2003 = vunpack.c.h.b16 %v1662
    %v2004 = vunpack.c.l.b16 %v1663
    %v2005 = vunpack.c.h.b16 %v1663
    %v2006 = vunpack.c.l.b16 %v1664
    %v2007 = vunpack.c.h.b16 %v1664
    %v2008 = vpack.c.b16 %v1874, %v1872
    %v2009 = vpack.c.b16 %v1875, %v1873
    %v2010 = vpack.c.b16 %v1878, %v1876
    %v2011 = vpack.c.b16 %v1879, %v1877
    %v2012 = vpack.c.b16 %v1882, %v1880
    %v2013 = vpack.c.b16 %v1883, %v1881
    %v2014 = vpack.c.b16 %v1886, %v1884
    %v2015 = vpack.c.b16 %v1887, %v1885
    %v2016 = vpack.c.b16 %v1890, %v1888
    %v2017 = vpack.c.b16 %v1891, %v1889
    %v2018 = vpack.c.b16 %v1894, %v1892
    %v2019 = vpack.c.b16 %v1895, %v1893
    %v2020 = vpack.c.b16 %v1898, %v1896
    %v2021 = vpack.c.b16 %v1899, %v1897
    %v2022 = vpack.c.b16 %v1902, %v1900
    %v2023 = vpack.c.b16 %v1903, %v1901
    %v2024 = vpack.c.b16 %v1906, %v1904
    %v2025 = vpack.c.b16 %v1907, %v1905
    %v2026 = vpack.c.b16 %v1910, %v1908
    %v2027 = vpack.c.b16 %v1911, %v1909
    %v2028 = vpack.c.b16 %v1914, %v1912
    %v2029 = vpack.c.b16 %v1915, %v1913
    %v2030 = vpack.c.b16 %v1918, %v1916
    %v2031 = vpack.c.b16 %v1919, %v1917
    %v2032 = vpack.c.b16 %v1922, %v1920
    %v2033 = vpack.c.b16 %v1923, %v1921
    %v2034 = vpack.c.b16 %v1926, %v1924
    %v2035 = vpack.c.b16 %v1927, %v1925
    %v2036 = vpack.c.b16 %v1930, %v1928
    %v2037 = vpack.c.b16 %v1931, %v1929
    %v2038 = vpack.c.b16 %v1934, %v1932
    %v2039 = vpack.c.b16 %v1935, %v1933
    %v2040 = vpack.c.b16 %v1938, %v1936
    %v2041 = vpack.c.b16 %v1939, %v1937
    %v2042 = vpack.c.b16 %v1942, %v1940
    %v2043 = vpack.c.b16 %v1943, %v1941
    %v2044 = vpack.c.b16 %v1946, %v1944
    %v2045 = vpack.c.b16 %v1947, %v1945
    %v2046 = vpack.c.b16 %v1950, %v1948
    %v2047 = vpack.c.b16 %v1951, %v1949
    %v2048 = vpack.c.b16 %v1954, %v1952
    %v2049 = vpack.c.b16 %v1955, %v1953
    %v2050 = vpack.c.b16 %v1958, %v1956
    %v2051 = vpack.c.b16 %v1959, %v1957
    %v2052 = vpack.c.b16 %v1962, %v1960
    %v2053 = vpack.c.b16 %v1963, %v1961
    %v2054 = vpack.c.b16 %v1966, %v1964
    %v2055 = vpack.c.b16 %v1967, %v1965
    %v2056 = vpack.c.b16 %v1970, %v1968
    %v2057 = vpack.c.b16 %v1971, %v1969
    %v2058 = vpack.c.b16 %v1974, %v1972
    %v2059 = vpack.c.b16 %v1975, %v1973
    %v2060 = vpack.c.b16 %v1978, %v1976
    %v2061 = vpack.c.b16 %v1979, %v1977
    %v2062 = vpack.c.b16 %v1982, %v1980
    %v2063 = vpack.c.b16 %v1983, %v1981
    %v2064 = vpack.c.b16 %v1986, %v1984
    %v2065 = vpack.c.b16 %v1987, %v1985
    %v2066 = vpack.c.b16 %v1990, %v1988
    %v2067 = vpack.c.b16 %v1991, %v1989
    %v2068 = vpack.c.b16 %v1994, %v1992
    %v2069 = vpack.c.b16 %v1995, %v1993
    %v2070 = vpack.c.b16 %v1998, %v1996
    %v2071 = vpack.c.b16 %v1999, %v1997
    %v2072 = vpack.c.b16 %v2002, %v2000
    %v2073 = vpack.c.b16 %v2003, %v2001
    %v2074 = vpack.c.b16 %v2006, %v2004
    %v2075 = vpack.c.b16 %v2007, %v2005
    %v2145 = vsel %vm608, %v1736, 0
    %v2148 = vsel %vm608, %v1776, 0
    %v2151 = vsel %vm608, %v1791, 0
    %2153 = vmatpush.bf16.msra.mxu0 %v2022
    %2154 = vmatpush.bf16.msra.mxu0 %v2020
    %2155 = vmatpush.bf16.msra.mxu0 %v2018
    %2156 = vmatpush.bf16.msra.mxu0 %v2016
    %2157 = vmatpush.bf16.msra.mxu0 %v2014
    %2158 = vmatpush.bf16.msra.mxu0 %v2012
    %2159 = vmatpush.bf16.msra.mxu0 %v2010
    %2160 = vmatpush.bf16.msra.mxu0 %v2008
    %2161 = vmatmul.bf16.gmra.mxu0 %v1690
    %v2162 = vpop.f32.mrf.mxu0
    %v2163 = vadd.f32 0.0, %v2162
    %v2164 = vpop.f32.mrf.mxu0
    %v2165 = vadd.f32 0.0, %v2164
    %2166 = vmatmul.bf16.gmra.mxu0 %v1744
    %v2167 = vpop.f32.mrf.mxu0
    %v2168 = vadd.f32 0.0, %v2167
    %v2169 = vpop.f32.mrf.mxu0
    %v2170 = vadd.f32 0.0, %v2169
    %2171 = vmatmul.bf16.gmra.mxu0 %v1779
    %v2172 = vpop.f32.mrf.mxu0
    %v2173 = vadd.f32 0.0, %v2172
    %v2174 = vpop.f32.mrf.mxu0
    %2175 = vdwg.mxu0
    %2176 = vmatpush.bf16.msra.mxu0 %v2038
    %2177 = vmatpush.bf16.msra.mxu0 %v2036
    %2178 = vmatpush.bf16.msra.mxu0 %v2034
    %2179 = vmatpush.bf16.msra.mxu0 %v2032
    %2180 = vmatpush.bf16.msra.mxu0 %v2030
    %2181 = vmatpush.bf16.msra.mxu0 %v2028
    %2182 = vmatpush.bf16.msra.mxu0 %v2026
    %2183 = vmatpush.bf16.msra.mxu0 %v2024
    %2184 = vmatmul.bf16.gmra.mxu0 %v1702
    %v2185 = vpop.f32.mrf.mxu0
    %v2186 = vadd.f32 %v2163, %v2185
    %v2187 = vpop.f32.mrf.mxu0
    %v2188 = vadd.f32 %v2165, %v2187
    %2189 = vmatmul.bf16.gmra.mxu0 %v1752
    %v2190 = vpop.f32.mrf.mxu0
    %v2191 = vadd.f32 %v2168, %v2190
    %v2192 = vpop.f32.mrf.mxu0
    %v2193 = vadd.f32 %v2170, %v2192
    %2194 = vmatmul.bf16.gmra.mxu0 %v1782
    %v2195 = vpop.f32.mrf.mxu0
    %v2196 = vadd.f32 %v2173, %v2195
    %v2197 = vpop.f32.mrf.mxu0
    %2198 = vdwg.mxu0
    %2199 = vmatpush.bf16.msra.mxu0 %v2054
    %2200 = vmatpush.bf16.msra.mxu0 %v2052
    %2201 = vmatpush.bf16.msra.mxu0 %v2050
    %2202 = vmatpush.bf16.msra.mxu0 %v2048
    %2203 = vmatpush.bf16.msra.mxu0 %v2046
    %2204 = vmatpush.bf16.msra.mxu0 %v2044
    %2205 = vmatpush.bf16.msra.mxu0 %v2042
    %2206 = vmatpush.bf16.msra.mxu0 %v2040
    %2207 = vmatmul.bf16.gmra.mxu0 %v1714
    %v2208 = vpop.f32.mrf.mxu0
    %v2209 = vadd.f32 %v2186, %v2208
    %v2210 = vpop.f32.mrf.mxu0
    %v2211 = vadd.f32 %v2188, %v2210
    %2212 = vmatmul.bf16.gmra.mxu0 %v1760
    %v2213 = vpop.f32.mrf.mxu0
    %v2214 = vadd.f32 %v2191, %v2213
    %v2215 = vpop.f32.mrf.mxu0
    %v2216 = vadd.f32 %v2193, %v2215
    %2217 = vmatmul.bf16.gmra.mxu0 %v1785
    %v2218 = vpop.f32.mrf.mxu0
    %v2219 = vadd.f32 %v2196, %v2218
    %v2220 = vpop.f32.mrf.mxu0
    %2221 = vdwg.mxu0
    %2222 = vmatpush.bf16.msra.mxu0 %v2070
    %2223 = vmatpush.bf16.msra.mxu0 %v2068
    %2224 = vmatpush.bf16.msra.mxu0 %v2066
    %2225 = vmatpush.bf16.msra.mxu0 %v2064
    %2226 = vmatpush.bf16.msra.mxu0 %v2062
    %2227 = vmatpush.bf16.msra.mxu0 %v2060
    %2228 = vmatpush.bf16.msra.mxu0 %v2058
    %2229 = vmatpush.bf16.msra.mxu0 %v2056
    %2230 = vmatmul.bf16.gmra.mxu0 %v1726
    %v2231 = vpop.f32.mrf.mxu0
    %v2232 = vadd.f32 %v2209, %v2231
    %v2233 = vpop.f32.mrf.mxu0
    %v2234 = vadd.f32 %v2211, %v2233
    %2235 = vmatmul.bf16.gmra.mxu0 %v1768
    %v2236 = vpop.f32.mrf.mxu0
    %v2237 = vadd.f32 %v2214, %v2236
    %v2238 = vpop.f32.mrf.mxu0
    %v2239 = vadd.f32 %v2216, %v2238
    %2240 = vmatmul.bf16.gmra.mxu0 %v1788
    %v2241 = vpop.f32.mrf.mxu0
    %v2242 = vadd.f32 %v2219, %v2241
    %v2243 = vpop.f32.mrf.mxu0
    %2244 = vdwg.mxu0
    %2245 = vmatpush.bf16.msra.mxu0 0
    %2246 = vmatpush.bf16.msra.mxu0 0
    %2247 = vmatpush.bf16.msra.mxu0 0
    %2248 = vmatpush.bf16.msra.mxu0 0
    %2249 = vmatpush.bf16.msra.mxu0 0
    %2250 = vmatpush.bf16.msra.mxu0 0
    %2251 = vmatpush.bf16.msra.mxu0 %v2074
    %2252 = vmatpush.bf16.msra.mxu0 %v2072
    %2253 = vmatmul.bf16.gmra.mxu0 %v2145
    %v2254 = vpop.f32.mrf.mxu0
    %v2255 = vadd.f32 %v2232, %v2254
    %v2256 = vpop.f32.mrf.mxu0
    %v2257 = vadd.f32 %v2234, %v2256
    %2258 = vmatmul.bf16.gmra.mxu0 %v2148
    %v2259 = vpop.f32.mrf.mxu0
    %v2260 = vadd.f32 %v2237, %v2259
    %v2261 = vpop.f32.mrf.mxu0
    %v2262 = vadd.f32 %v2239, %v2261
    %2263 = vmatmul.bf16.gmra.mxu0 %v2151
    %v2264 = vpop.f32.mrf.mxu0
    %v2265 = vadd.f32 %v2242, %v2264
    %v2266 = vpop.f32.mrf.mxu0
    %2267 = vdwg.mxu0
    %2268 = vmatpush.bf16.msra.mxu0 %v2023
    %2269 = vmatpush.bf16.msra.mxu0 %v2021
    %2270 = vmatpush.bf16.msra.mxu0 %v2019
    %2271 = vmatpush.bf16.msra.mxu0 %v2017
    %2272 = vmatpush.bf16.msra.mxu0 %v2015
    %2273 = vmatpush.bf16.msra.mxu0 %v2013
    %2274 = vmatpush.bf16.msra.mxu0 %v2011
    %2275 = vmatpush.bf16.msra.mxu0 %v2009
    %2276 = vmatmul.bf16.gmra.mxu0 %v1690
    %v2277 = vpop.f32.mrf.mxu0
    %v2278 = vadd.f32 0.0, %v2277
    %v2279 = vpop.f32.mrf.mxu0
    %v2280 = vadd.f32 0.0, %v2279
    %2281 = vmatmul.bf16.gmra.mxu0 %v1744
    %v2282 = vpop.f32.mrf.mxu0
    %v2283 = vadd.f32 0.0, %v2282
    %v2284 = vpop.f32.mrf.mxu0
    %v2285 = vadd.f32 0.0, %v2284
    %2286 = vmatmul.bf16.gmra.mxu0 %v1779
    %v2287 = vpop.f32.mrf.mxu0
    %v2288 = vadd.f32 0.0, %v2287
    %v2289 = vpop.f32.mrf.mxu0
    %2290 = vdwg.mxu0
    %2291 = vmatpush.bf16.msra.mxu0 %v2039
    %2292 = vmatpush.bf16.msra.mxu0 %v2037
    %2293 = vmatpush.bf16.msra.mxu0 %v2035
    %2294 = vmatpush.bf16.msra.mxu0 %v2033
    %2295 = vmatpush.bf16.msra.mxu0 %v2031
    %2296 = vmatpush.bf16.msra.mxu0 %v2029
    %2297 = vmatpush.bf16.msra.mxu0 %v2027
    %2298 = vmatpush.bf16.msra.mxu0 %v2025
    %2299 = vmatmul.bf16.gmra.mxu0 %v1702
    %v2300 = vpop.f32.mrf.mxu0
    %v2301 = vadd.f32 %v2278, %v2300
    %v2302 = vpop.f32.mrf.mxu0
    %v2303 = vadd.f32 %v2280, %v2302
    %2304 = vmatmul.bf16.gmra.mxu0 %v1752
    %v2305 = vpop.f32.mrf.mxu0
    %v2306 = vadd.f32 %v2283, %v2305
    %v2307 = vpop.f32.mrf.mxu0
    %v2308 = vadd.f32 %v2285, %v2307
    %2309 = vmatmul.bf16.gmra.mxu0 %v1782
    %v2310 = vpop.f32.mrf.mxu0
    %v2311 = vadd.f32 %v2288, %v2310
    %v2312 = vpop.f32.mrf.mxu0
    %2313 = vdwg.mxu0
    %2314 = vmatpush.bf16.msra.mxu0 %v2055
    %2315 = vmatpush.bf16.msra.mxu0 %v2053
    %2316 = vmatpush.bf16.msra.mxu0 %v2051
    %2317 = vmatpush.bf16.msra.mxu0 %v2049
    %2318 = vmatpush.bf16.msra.mxu0 %v2047
    %2319 = vmatpush.bf16.msra.mxu0 %v2045
    %2320 = vmatpush.bf16.msra.mxu0 %v2043
    %2321 = vmatpush.bf16.msra.mxu0 %v2041
    %2322 = vmatmul.bf16.gmra.mxu0 %v1714
    %v2323 = vpop.f32.mrf.mxu0
    %v2324 = vadd.f32 %v2301, %v2323
    %v2325 = vpop.f32.mrf.mxu0
    %v2326 = vadd.f32 %v2303, %v2325
    %2327 = vmatmul.bf16.gmra.mxu0 %v1760
    %v2328 = vpop.f32.mrf.mxu0
    %v2329 = vadd.f32 %v2306, %v2328
    %v2330 = vpop.f32.mrf.mxu0
    %v2331 = vadd.f32 %v2308, %v2330
    %2332 = vmatmul.bf16.gmra.mxu0 %v1785
    %v2333 = vpop.f32.mrf.mxu0
    %v2334 = vadd.f32 %v2311, %v2333
    %v2335 = vpop.f32.mrf.mxu0
    %2336 = vdwg.mxu0
    %2337 = vmatpush.bf16.msra.mxu0 %v2071
    %2338 = vmatpush.bf16.msra.mxu0 %v2069
    %2339 = vmatpush.bf16.msra.mxu0 %v2067
    %2340 = vmatpush.bf16.msra.mxu0 %v2065
    %2341 = vmatpush.bf16.msra.mxu0 %v2063
    %2342 = vmatpush.bf16.msra.mxu0 %v2061
    %2343 = vmatpush.bf16.msra.mxu0 %v2059
    %2344 = vmatpush.bf16.msra.mxu0 %v2057
    %2345 = vmatmul.bf16.gmra.mxu0 %v1726
    %v2346 = vpop.f32.mrf.mxu0
    %v2347 = vadd.f32 %v2324, %v2346
    %v2348 = vpop.f32.mrf.mxu0
    %v2349 = vadd.f32 %v2326, %v2348
    %2350 = vmatmul.bf16.gmra.mxu0 %v1768
    %v2351 = vpop.f32.mrf.mxu0
    %v2352 = vadd.f32 %v2329, %v2351
    %v2353 = vpop.f32.mrf.mxu0
    %v2354 = vadd.f32 %v2331, %v2353
    %2355 = vmatmul.bf16.gmra.mxu0 %v1788
    %v2356 = vpop.f32.mrf.mxu0
    %v2357 = vadd.f32 %v2334, %v2356
    %v2358 = vpop.f32.mrf.mxu0
    %2359 = vdwg.mxu0
    %2360 = vmatpush.bf16.msra.mxu0 0
    %2361 = vmatpush.bf16.msra.mxu0 0
    %2362 = vmatpush.bf16.msra.mxu0 0
    %2363 = vmatpush.bf16.msra.mxu0 0
    %2364 = vmatpush.bf16.msra.mxu0 0
    %2365 = vmatpush.bf16.msra.mxu0 0
    %2366 = vmatpush.bf16.msra.mxu0 %v2075
    %2367 = vmatpush.bf16.msra.mxu0 %v2073
    %2368 = vmatmul.bf16.gmra.mxu0 %v2145
    %v2369 = vpop.f32.mrf.mxu0
    %v2370 = vadd.f32 %v2347, %v2369
    %v2371 = vpop.f32.mrf.mxu0
    %v2372 = vadd.f32 %v2349, %v2371
    %2373 = vmatmul.bf16.gmra.mxu0 %v2148
    %v2374 = vpop.f32.mrf.mxu0
    %v2375 = vadd.f32 %v2352, %v2374
    %v2376 = vpop.f32.mrf.mxu0
    %v2377 = vadd.f32 %v2354, %v2376
    %2378 = vmatmul.bf16.gmra.mxu0 %v2151
    %v2379 = vpop.f32.mrf.mxu0
    %v2380 = vadd.f32 %v2357, %v2379
    %v2381 = vpop.f32.mrf.mxu0
    %2382 = vdwg.mxu0
    %v2383 = vadd.f32 %v1465, %v2255
    %v2384 = vadd.f32 %v1580, %v2370
    %v2385 = vadd.f32 %v1467, %v2257
    %v2386 = vadd.f32 %v1582, %v2372
    %v2387 = vadd.f32 %v1470, %v2260
    %v2388 = vadd.f32 %v1585, %v2375
    %v2389 = vadd.f32 %v1472, %v2262
    %v2390 = vadd.f32 %v1587, %v2377
    %v2391 = vadd.f32 %v1475, %v2265
    %v2392 = vadd.f32 %v1590, %v2380
    %s2393 = scalar_lea.vmem [#allocation2], 1632
    %v2394 = vld [vmem:[%s2393] sm:$0xff]
    %v2395 = vld [vmem:[%s2393 + $0x8] sm:$0xff]
    %v2396 = vld [vmem:[%s2393 + $0x10] sm:$0xff]
    %v2397 = vld [vmem:[%s2393 + $0x18] sm:$0xff]
    %v2398 = vld [vmem:[%s2393 + $0x20] sm:$0xff]
    %v2399 = vld [vmem:[%s2393 + $0x28] sm:$0xff]
    %v2400 = vld [vmem:[%s2393 + $0x30] sm:$0xff]
    %v2401 = vld [vmem:[%s2393 + $0x38] sm:$0xff]
    %v2402 = vld [vmem:[%s2393 + $0x40] sm:$0xff]
    %v2403 = vld [vmem:[%s2393 + $0x48] sm:$0xff]
    %v2404 = vld [vmem:[%s2393 + $0x50] sm:$0xff]
    %v2405 = vld [vmem:[%s2393 + $0x58] sm:$0xff]
    %v2406 = vld [vmem:[%s2393 + $0x60] sm:$0xff]
    %v2407 = vld [vmem:[%s2393 + $0x68] sm:$0xff]
    %v2408 = vld [vmem:[%s2393 + $0x70] sm:$0xff]
    %v2409 = vld [vmem:[%s2393 + $0x78] sm:$0xff]
    %v2410 = vld [vmem:[%s2393 + $0x80] sm:$0xff]
    %v2411 = vld [vmem:[%s2393 + $0x88] sm:$0xff]
    %v2412 = vld [vmem:[%s2393 + $0x90] sm:$0xff]
    %v2413 = vld [vmem:[%s2393 + $0x98] sm:$0xff]
    %v2414 = vld [vmem:[%s2393 + $0xa0] sm:$0xff]
    %v2415 = vld [vmem:[%s2393 + $0xa8] sm:$0xff]
    %v2416 = vld [vmem:[%s2393 + $0xb0] sm:$0xff]
    %v2417 = vld [vmem:[%s2393 + $0xb8] sm:$0xff]
    %v2418 = vld [vmem:[%s2393 + $0xc0] sm:$0xff]
    %v2419 = vld [vmem:[%s2393 + $0xc8] sm:$0xff]
    %v2420 = vld [vmem:[%s2393 + $0xd0] sm:$0xff]
    %v2421 = vld [vmem:[%s2393 + $0xd8] sm:$0xff]
    %v2422 = vld [vmem:[%s2393 + $0xe0] sm:$0xff]
    %v2423 = vld [vmem:[%s2393 + $0xe8] sm:$0xff]
    %v2424 = vld [vmem:[%s2393 + $0xf0] sm:$0xff]
    %v2425 = vld [vmem:[%s2393 + $0xf8] sm:$0xff]
    %v2426 = vld [vmem:[%s2393 + $0x100] sm:$0xff]
    %v2427 = vld [vmem:[%s2393 + $0x108] sm:$0xff]
    %v2428 = vld [vmem:[%s2393 + $0x110] sm:$0xff]
    %v2429 = vld [vmem:[%s2393 + $0x118] sm:$0xff]
    %v2430 = vld [vmem:[%s2393 + $0x120] sm:$0xff]
    %v2431 = vld [vmem:[%s2393 + $0x128] sm:$0xff]
    %v2432 = vld [vmem:[%s2393 + $0x130] sm:$0xff]
    %v2433 = vld [vmem:[%s2393 + $0x138] sm:$0xff]
    %v2434 = vld [vmem:[%s2393 + $0x140] sm:$0xff]
    %v2435 = vld [vmem:[%s2393 + $0x148] sm:$0xff]
    %v2436 = vld [vmem:[%s2393 + $0x150] sm:$0xff]
    %v2437 = vld [vmem:[%s2393 + $0x158] sm:$0xff]
    %v2438 = vld [vmem:[%s2393 + $0x160] sm:$0xff]
    %v2439 = vld [vmem:[%s2393 + $0x168] sm:$0xff]
    %v2440 = vld [vmem:[%s2393 + $0x170] sm:$0xff]
    %v2441 = vld [vmem:[%s2393 + $0x178] sm:$0xff]
    %v2442 = vld [vmem:[%s2393 + $0x180] sm:$0xff]
    %v2443 = vld [vmem:[%s2393 + $0x188] sm:$0xff]
    %v2444 = vld [vmem:[%s2393 + $0x190] sm:$0xff]
    %v2445 = vld [vmem:[%s2393 + $0x198] sm:$0xff]
    %v2446 = vld [vmem:[%s2393 + $0x1a0] sm:$0xff]
    %v2447 = vld [vmem:[%s2393 + $0x1a8] sm:$0xff]
    %v2448 = vld [vmem:[%s2393 + $0x1b0] sm:$0xff]
    %v2449 = vld [vmem:[%s2393 + $0x1b8] sm:$0xff]
    %v2450 = vld [vmem:[%s2393 + $0x1c0] sm:$0xff]
    %v2451 = vld [vmem:[%s2393 + $0x1c8] sm:$0xff]
    %v2452 = vld [vmem:[%s2393 + $0x1d0] sm:$0xff]
    %v2453 = vld [vmem:[%s2393 + $0x1d8] sm:$0xff]
    %v2454 = vld [vmem:[%s2393 + $0x1e0] sm:$0xff]
    %v2455 = vld [vmem:[%s2393 + $0x1e8] sm:$0xff]
    %v2456 = vld [vmem:[%s2393 + $0x1f0] sm:$0xff]
    %v2457 = vld [vmem:[%s2393 + $0x1f8] sm:$0xff]
    %v2458 = vld [vmem:[%s2393 + $0x200] sm:$0xff]
    %v2459 = vld [vmem:[%s2393 + $0x208] sm:$0xff]
    %v2460 = vld [vmem:[%s2393 + $0x210] sm:$0xff]
    %v2461 = vld [vmem:[%s2393 + $0x218] sm:$0xff]
    %s2462 = scalar_lea.vmem [#allocation2], 2176
    %v2463 = vld [vmem:[%s2462] sm:$0xff]
    %v2464 = vld [vmem:[%s2462 + $0x8] sm:$0xff]
    %v2465 = vld [vmem:[%s2462 + $0x10] sm:$0xff]
    %v2466 = vld [vmem:[%s2462 + $0x18] sm:$0xff]
    %v2467 = vld [vmem:[%s2462 + $0x20] sm:$0xff]
    %v2468 = vld [vmem:[%s2462 + $0x28] sm:$0xff]
    %v2469 = vld [vmem:[%s2462 + $0x30] sm:$0xff]
    %v2470 = vld [vmem:[%s2462 + $0x38] sm:$0xff]
    %v2471 = vld [vmem:[%s2462 + $0x40] sm:$0xff]
    %v2472 = vld [vmem:[%s2462 + $0x48] sm:$0xff]
    %v2473 = vld [vmem:[%s2462 + $0x50] sm:$0xff]
    %v2474 = vld [vmem:[%s2462 + $0x58] sm:$0xff]
    %v2475 = vld [vmem:[%s2462 + $0x60] sm:$0xff]
    %v2476 = vld [vmem:[%s2462 + $0x68] sm:$0xff]
    %v2477 = vld [vmem:[%s2462 + $0x70] sm:$0xff]
    %v2478 = vld [vmem:[%s2462 + $0x78] sm:$0xff]
    %v2479 = vld [vmem:[%s2462 + $0x80] sm:$0xff]
    %v2480 = vld [vmem:[%s2462 + $0x88] sm:$0xff]
    %v2481 = vld [vmem:[%s2462 + $0x90] sm:$0xff]
    %v2482 = vld [vmem:[%s2462 + $0x98] sm:$0xff]
    %v2483 = vld [vmem:[%s2462 + $0xa0] sm:$0xff]
    %v2484 = vld [vmem:[%s2462 + $0xa8] sm:$0xff]
    %v2485 = vld [vmem:[%s2462 + $0xb0] sm:$0xff]
    %v2486 = vld [vmem:[%s2462 + $0xb8] sm:$0xff]
    %v2487 = vld [vmem:[%s2462 + $0xc0] sm:$0xff]
    %v2488 = vld [vmem:[%s2462 + $0xc8] sm:$0xff]
    %v2489 = vld [vmem:[%s2462 + $0xd0] sm:$0xff]
    %v2490 = vld [vmem:[%s2462 + $0xd8] sm:$0xff]
    %v2491 = vld [vmem:[%s2462 + $0xe0] sm:$0xff]
    %v2492 = vld [vmem:[%s2462 + $0xe8] sm:$0xff]
    %v2493 = vld [vmem:[%s2462 + $0xf0] sm:$0xff]
    %v2494 = vld [vmem:[%s2462 + $0xf8] sm:$0xff]
    %v2495 = vld [vmem:[%s2462 + $0x100] sm:$0xff]
    %v2496 = vld [vmem:[%s2462 + $0x108] sm:$0xff]
    %v2497 = vld [vmem:[%s2462 + $0x110] sm:$0xff]
    %v2498 = vld [vmem:[%s2462 + $0x118] sm:$0xff]
    %v2499 = vld [vmem:[%s2462 + $0x120] sm:$0xff]
    %v2500 = vld [vmem:[%s2462 + $0x128] sm:$0xff]
    %v2501 = vld [vmem:[%s2462 + $0x130] sm:$0xff]
    %v2502 = vld [vmem:[%s2462 + $0x138] sm:$0xff]
    %v2503 = vld [vmem:[%s2462 + $0x140] sm:$0xff]
    %v2504 = vld [vmem:[%s2462 + $0x148] sm:$0xff]
    %v2505 = vld [vmem:[%s2462 + $0x150] sm:$0xff]
    %v2506 = vld [vmem:[%s2462 + $0x158] sm:$0xff]
    %v2507 = vld [vmem:[%s2462 + $0x160] sm:$0xff]
    %v2508 = vld [vmem:[%s2462 + $0x168] sm:$0xff]
    %v2509 = vld [vmem:[%s2462 + $0x170] sm:$0xff]
    %v2510 = vld [vmem:[%s2462 + $0x178] sm:$0xff]
    %v2511 = vld [vmem:[%s2462 + $0x180] sm:$0xff]
    %v2512 = vld [vmem:[%s2462 + $0x188] sm:$0xff]
    %v2513 = vld [vmem:[%s2462 + $0x190] sm:$0xff]
    %v2514 = vld [vmem:[%s2462 + $0x198] sm:$0xff]
    %v2515 = vld [vmem:[%s2462 + $0x1a0] sm:$0xff]
    %v2516 = vld [vmem:[%s2462 + $0x1a8] sm:$0xff]
    %v2517 = vld [vmem:[%s2462 + $0x1b0] sm:$0xff]
    %v2518 = vld [vmem:[%s2462 + $0x1b8] sm:$0xff]
    %v2519 = vld [vmem:[%s2462 + $0x1c0] sm:$0xff]
    %v2520 = vld [vmem:[%s2462 + $0x1c8] sm:$0xff]
    %v2521 = vld [vmem:[%s2462 + $0x1d0] sm:$0xff]
    %v2522 = vld [vmem:[%s2462 + $0x1d8] sm:$0xff]
    %v2523 = vld [vmem:[%s2462 + $0x1e0] sm:$0xff]
    %v2524 = vld [vmem:[%s2462 + $0x1e8] sm:$0xff]
    %v2525 = vld [vmem:[%s2462 + $0x1f0] sm:$0xff]
    %v2526 = vld [vmem:[%s2462 + $0x1f8] sm:$0xff]
    %v2527 = vld [vmem:[%s2462 + $0x200] sm:$0xff]
    %v2528 = vld [vmem:[%s2462 + $0x208] sm:$0xff]
    %v2529 = vld [vmem:[%s2462 + $0x210] sm:$0xff]
    %v2530 = vld [vmem:[%s2462 + $0x218] sm:$0xff]
    %v2599 = vunpack.c.l.b16 %v2463
    %v2600 = vunpack.c.h.b16 %v2463
    %v2601 = vunpack.c.l.b16 %v2464
    %v2602 = vunpack.c.h.b16 %v2464
    %v2603 = vunpack.c.l.b16 %v2465
    %v2604 = vunpack.c.h.b16 %v2465
    %v2605 = vunpack.c.l.b16 %v2466
    %v2606 = vunpack.c.h.b16 %v2466
    %v2607 = vunpack.c.l.b16 %v2467
    %v2608 = vunpack.c.h.b16 %v2467
    %v2609 = vunpack.c.l.b16 %v2468
    %v2610 = vunpack.c.h.b16 %v2468
    %v2611 = vunpack.c.l.b16 %v2469
    %v2612 = vunpack.c.h.b16 %v2469
    %v2613 = vunpack.c.l.b16 %v2470
    %v2614 = vunpack.c.h.b16 %v2470
    %v2615 = vunpack.c.l.b16 %v2471
    %v2616 = vunpack.c.h.b16 %v2471
    %v2617 = vunpack.c.l.b16 %v2472
    %v2618 = vunpack.c.h.b16 %v2472
    %v2619 = vunpack.c.l.b16 %v2473
    %v2620 = vunpack.c.h.b16 %v2473
    %v2621 = vunpack.c.l.b16 %v2474
    %v2622 = vunpack.c.h.b16 %v2474
    %v2623 = vunpack.c.l.b16 %v2475
    %v2624 = vunpack.c.h.b16 %v2475
    %v2625 = vunpack.c.l.b16 %v2476
    %v2626 = vunpack.c.h.b16 %v2476
    %v2627 = vunpack.c.l.b16 %v2477
    %v2628 = vunpack.c.h.b16 %v2477
    %v2629 = vunpack.c.l.b16 %v2478
    %v2630 = vunpack.c.h.b16 %v2478
    %v2631 = vunpack.c.l.b16 %v2479
    %v2632 = vunpack.c.h.b16 %v2479
    %v2633 = vunpack.c.l.b16 %v2480
    %v2634 = vunpack.c.h.b16 %v2480
    %v2635 = vunpack.c.l.b16 %v2481
    %v2636 = vunpack.c.h.b16 %v2481
    %v2637 = vunpack.c.l.b16 %v2482
    %v2638 = vunpack.c.h.b16 %v2482
    %v2639 = vunpack.c.l.b16 %v2483
    %v2640 = vunpack.c.h.b16 %v2483
    %v2641 = vunpack.c.l.b16 %v2484
    %v2642 = vunpack.c.h.b16 %v2484
    %v2643 = vunpack.c.l.b16 %v2485
    %v2644 = vunpack.c.h.b16 %v2485
    %v2645 = vunpack.c.l.b16 %v2486
    %v2646 = vunpack.c.h.b16 %v2486
    %v2647 = vunpack.c.l.b16 %v2487
    %v2648 = vunpack.c.h.b16 %v2487
    %v2649 = vunpack.c.l.b16 %v2488
    %v2650 = vunpack.c.h.b16 %v2488
    %v2651 = vunpack.c.l.b16 %v2489
    %v2652 = vunpack.c.h.b16 %v2489
    %v2653 = vunpack.c.l.b16 %v2490
    %v2654 = vunpack.c.h.b16 %v2490
    %v2655 = vunpack.c.l.b16 %v2491
    %v2656 = vunpack.c.h.b16 %v2491
    %v2657 = vunpack.c.l.b16 %v2492
    %v2658 = vunpack.c.h.b16 %v2492
    %v2659 = vunpack.c.l.b16 %v2493
    %v2660 = vunpack.c.h.b16 %v2493
    %v2661 = vunpack.c.l.b16 %v2494
    %v2662 = vunpack.c.h.b16 %v2494
    %v2663 = vunpack.c.l.b16 %v2495
    %v2664 = vunpack.c.h.b16 %v2495
    %v2665 = vunpack.c.l.b16 %v2496
    %v2666 = vunpack.c.h.b16 %v2496
    %v2667 = vunpack.c.l.b16 %v2497
    %v2668 = vunpack.c.h.b16 %v2497
    %v2669 = vunpack.c.l.b16 %v2498
    %v2670 = vunpack.c.h.b16 %v2498
    %v2671 = vunpack.c.l.b16 %v2499
    %v2672 = vunpack.c.h.b16 %v2499
    %v2673 = vunpack.c.l.b16 %v2500
    %v2674 = vunpack.c.h.b16 %v2500
    %v2675 = vunpack.c.l.b16 %v2501
    %v2676 = vunpack.c.h.b16 %v2501
    %v2677 = vunpack.c.l.b16 %v2502
    %v2678 = vunpack.c.h.b16 %v2502
    %v2679 = vunpack.c.l.b16 %v2503
    %v2680 = vunpack.c.h.b16 %v2503
    %v2681 = vunpack.c.l.b16 %v2504
    %v2682 = vunpack.c.h.b16 %v2504
    %v2683 = vunpack.c.l.b16 %v2505
    %v2684 = vunpack.c.h.b16 %v2505
    %v2685 = vunpack.c.l.b16 %v2506
    %v2686 = vunpack.c.h.b16 %v2506
    %v2687 = vunpack.c.l.b16 %v2507
    %v2688 = vunpack.c.h.b16 %v2507
    %v2689 = vunpack.c.l.b16 %v2508
    %v2690 = vunpack.c.h.b16 %v2508
    %v2691 = vunpack.c.l.b16 %v2509
    %v2692 = vunpack.c.h.b16 %v2509
    %v2693 = vunpack.c.l.b16 %v2510
    %v2694 = vunpack.c.h.b16 %v2510
    %v2695 = vunpack.c.l.b16 %v2511
    %v2696 = vunpack.c.h.b16 %v2511
    %v2697 = vunpack.c.l.b16 %v2512
    %v2698 = vunpack.c.h.b16 %v2512
    %v2699 = vunpack.c.l.b16 %v2513
    %v2700 = vunpack.c.h.b16 %v2513
    %v2701 = vunpack.c.l.b16 %v2514
    %v2702 = vunpack.c.h.b16 %v2514
    %v2703 = vunpack.c.l.b16 %v2515
    %v2704 = vunpack.c.h.b16 %v2515
    %v2705 = vunpack.c.l.b16 %v2516
    %v2706 = vunpack.c.h.b16 %v2516
    %v2707 = vunpack.c.l.b16 %v2517
    %v2708 = vunpack.c.h.b16 %v2517
    %v2709 = vunpack.c.l.b16 %v2518
    %v2710 = vunpack.c.h.b16 %v2518
    %v2711 = vunpack.c.l.b16 %v2519
    %v2712 = vunpack.c.h.b16 %v2519
    %v2713 = vunpack.c.l.b16 %v2520
    %v2714 = vunpack.c.h.b16 %v2520
    %v2715 = vunpack.c.l.b16 %v2521
    %v2716 = vunpack.c.h.b16 %v2521
    %v2717 = vunpack.c.l.b16 %v2522
    %v2718 = vunpack.c.h.b16 %v2522
    %v2719 = vunpack.c.l.b16 %v2523
    %v2720 = vunpack.c.h.b16 %v2523
    %v2721 = vunpack.c.l.b16 %v2524
    %v2722 = vunpack.c.h.b16 %v2524
    %v2723 = vunpack.c.l.b16 %v2525
    %v2724 = vunpack.c.h.b16 %v2525
    %v2725 = vunpack.c.l.b16 %v2526
    %v2726 = vunpack.c.h.b16 %v2526
    %v2727 = vunpack.c.l.b16 %v2527
    %v2728 = vunpack.c.h.b16 %v2527
    %v2729 = vunpack.c.l.b16 %v2528
    %v2730 = vunpack.c.h.b16 %v2528
    %v2731 = vunpack.c.l.b16 %v2529
    %v2732 = vunpack.c.h.b16 %v2529
    %v2733 = vunpack.c.l.b16 %v2530
    %v2734 = vunpack.c.h.b16 %v2530
    %v2735 = vpack.c.b16 %v2601, %v2599
    %v2736 = vpack.c.b16 %v2602, %v2600
    %v2737 = vpack.c.b16 %v2605, %v2603
    %v2738 = vpack.c.b16 %v2606, %v2604
    %v2739 = vpack.c.b16 %v2609, %v2607
    %v2740 = vpack.c.b16 %v2610, %v2608
    %v2741 = vpack.c.b16 %v2613, %v2611
    %v2742 = vpack.c.b16 %v2614, %v2612
    %v2743 = vpack.c.b16 %v2617, %v2615
    %v2744 = vpack.c.b16 %v2618, %v2616
    %v2745 = vpack.c.b16 %v2621, %v2619
    %v2746 = vpack.c.b16 %v2622, %v2620
    %v2747 = vpack.c.b16 %v2625, %v2623
    %v2748 = vpack.c.b16 %v2626, %v2624
    %v2749 = vpack.c.b16 %v2629, %v2627
    %v2750 = vpack.c.b16 %v2630, %v2628
    %v2751 = vpack.c.b16 %v2633, %v2631
    %v2752 = vpack.c.b16 %v2634, %v2632
    %v2753 = vpack.c.b16 %v2637, %v2635
    %v2754 = vpack.c.b16 %v2638, %v2636
    %v2755 = vpack.c.b16 %v2641, %v2639
    %v2756 = vpack.c.b16 %v2642, %v2640
    %v2757 = vpack.c.b16 %v2645, %v2643
    %v2758 = vpack.c.b16 %v2646, %v2644
    %v2759 = vpack.c.b16 %v2649, %v2647
    %v2760 = vpack.c.b16 %v2650, %v2648
    %v2761 = vpack.c.b16 %v2653, %v2651
    %v2762 = vpack.c.b16 %v2654, %v2652
    %v2763 = vpack.c.b16 %v2657, %v2655
    %v2764 = vpack.c.b16 %v2658, %v2656
    %v2765 = vpack.c.b16 %v2661, %v2659
    %v2766 = vpack.c.b16 %v2662, %v2660
    %v2767 = vpack.c.b16 %v2665, %v2663
    %v2768 = vpack.c.b16 %v2666, %v2664
    %v2769 = vpack.c.b16 %v2669, %v2667
    %v2770 = vpack.c.b16 %v2670, %v2668
    %v2771 = vpack.c.b16 %v2673, %v2671
    %v2772 = vpack.c.b16 %v2674, %v2672
    %v2773 = vpack.c.b16 %v2677, %v2675
    %v2774 = vpack.c.b16 %v2678, %v2676
    %v2775 = vpack.c.b16 %v2681, %v2679
    %v2776 = vpack.c.b16 %v2682, %v2680
    %v2777 = vpack.c.b16 %v2685, %v2683
    %v2778 = vpack.c.b16 %v2686, %v2684
    %v2779 = vpack.c.b16 %v2689, %v2687
    %v2780 = vpack.c.b16 %v2690, %v2688
    %v2781 = vpack.c.b16 %v2693, %v2691
    %v2782 = vpack.c.b16 %v2694, %v2692
    %v2783 = vpack.c.b16 %v2697, %v2695
    %v2784 = vpack.c.b16 %v2698, %v2696
    %v2785 = vpack.c.b16 %v2701, %v2699
    %v2786 = vpack.c.b16 %v2702, %v2700
    %v2787 = vpack.c.b16 %v2705, %v2703
    %v2788 = vpack.c.b16 %v2706, %v2704
    %v2789 = vpack.c.b16 %v2709, %v2707
    %v2790 = vpack.c.b16 %v2710, %v2708
    %v2791 = vpack.c.b16 %v2713, %v2711
    %v2792 = vpack.c.b16 %v2714, %v2712
    %v2793 = vpack.c.b16 %v2717, %v2715
    %v2794 = vpack.c.b16 %v2718, %v2716
    %v2795 = vpack.c.b16 %v2721, %v2719
    %v2796 = vpack.c.b16 %v2722, %v2720
    %v2797 = vpack.c.b16 %v2725, %v2723
    %v2798 = vpack.c.b16 %v2726, %v2724
    %v2799 = vpack.c.b16 %v2729, %v2727
    %v2800 = vpack.c.b16 %v2730, %v2728
    %v2801 = vpack.c.b16 %v2733, %v2731
    %v2802 = vpack.c.b16 %v2734, %v2732
    %2871 = vmatpush.bf16.msra.mxu0 %v2749
    %2872 = vmatpush.bf16.msra.mxu0 %v2747
    %2873 = vmatpush.bf16.msra.mxu0 %v2745
    %2874 = vmatpush.bf16.msra.mxu0 %v2743
    %2875 = vmatpush.bf16.msra.mxu0 %v2741
    %2876 = vmatpush.bf16.msra.mxu0 %v2739
    %2877 = vmatpush.bf16.msra.mxu0 %v2737
    %2878 = vmatpush.bf16.msra.mxu0 %v2735
    %2879 = vmatmul.bf16.gmra.mxu0 %v241
    %v2880 = vpop.f32.mrf.mxu0
    %v2881 = vadd.f32 0.0, %v2880
    %v2882 = vpop.f32.mrf.mxu0
    %v2883 = vadd.f32 0.0, %v2882
    %2884 = vmatmul.bf16.gmra.mxu0 %v246
    %v2885 = vpop.f32.mrf.mxu0
    %v2886 = vadd.f32 0.0, %v2885
    %v2887 = vpop.f32.mrf.mxu0
    %v2888 = vadd.f32 0.0, %v2887
    %2889 = vmatmul.bf16.gmra.mxu0 %v251
    %v2890 = vpop.f32.mrf.mxu0
    %v2891 = vadd.f32 0.0, %v2890
    %v2892 = vpop.f32.mrf.mxu0
    %2893 = vdwg.mxu0
    %2894 = vmatpush.bf16.msra.mxu0 %v2765
    %2895 = vmatpush.bf16.msra.mxu0 %v2763
    %2896 = vmatpush.bf16.msra.mxu0 %v2761
    %2897 = vmatpush.bf16.msra.mxu0 %v2759
    %2898 = vmatpush.bf16.msra.mxu0 %v2757
    %2899 = vmatpush.bf16.msra.mxu0 %v2755
    %2900 = vmatpush.bf16.msra.mxu0 %v2753
    %2901 = vmatpush.bf16.msra.mxu0 %v2751
    %2902 = vmatmul.bf16.gmra.mxu0 %v242
    %v2903 = vpop.f32.mrf.mxu0
    %v2904 = vadd.f32 %v2881, %v2903
    %v2905 = vpop.f32.mrf.mxu0
    %v2906 = vadd.f32 %v2883, %v2905
    %2907 = vmatmul.bf16.gmra.mxu0 %v247
    %v2908 = vpop.f32.mrf.mxu0
    %v2909 = vadd.f32 %v2886, %v2908
    %v2910 = vpop.f32.mrf.mxu0
    %v2911 = vadd.f32 %v2888, %v2910
    %2912 = vmatmul.bf16.gmra.mxu0 %v252
    %v2913 = vpop.f32.mrf.mxu0
    %v2914 = vadd.f32 %v2891, %v2913
    %v2915 = vpop.f32.mrf.mxu0
    %2916 = vdwg.mxu0
    %2917 = vmatpush.bf16.msra.mxu0 %v2781
    %2918 = vmatpush.bf16.msra.mxu0 %v2779
    %2919 = vmatpush.bf16.msra.mxu0 %v2777
    %2920 = vmatpush.bf16.msra.mxu0 %v2775
    %2921 = vmatpush.bf16.msra.mxu0 %v2773
    %2922 = vmatpush.bf16.msra.mxu0 %v2771
    %2923 = vmatpush.bf16.msra.mxu0 %v2769
    %2924 = vmatpush.bf16.msra.mxu0 %v2767
    %2925 = vmatmul.bf16.gmra.mxu0 %v243
    %v2926 = vpop.f32.mrf.mxu0
    %v2927 = vadd.f32 %v2904, %v2926
    %v2928 = vpop.f32.mrf.mxu0
    %v2929 = vadd.f32 %v2906, %v2928
    %2930 = vmatmul.bf16.gmra.mxu0 %v248
    %v2931 = vpop.f32.mrf.mxu0
    %v2932 = vadd.f32 %v2909, %v2931
    %v2933 = vpop.f32.mrf.mxu0
    %v2934 = vadd.f32 %v2911, %v2933
    %2935 = vmatmul.bf16.gmra.mxu0 %v253
    %v2936 = vpop.f32.mrf.mxu0
    %v2937 = vadd.f32 %v2914, %v2936
    %v2938 = vpop.f32.mrf.mxu0
    %2939 = vdwg.mxu0
    %2940 = vmatpush.bf16.msra.mxu0 %v2797
    %2941 = vmatpush.bf16.msra.mxu0 %v2795
    %2942 = vmatpush.bf16.msra.mxu0 %v2793
    %2943 = vmatpush.bf16.msra.mxu0 %v2791
    %2944 = vmatpush.bf16.msra.mxu0 %v2789
    %2945 = vmatpush.bf16.msra.mxu0 %v2787
    %2946 = vmatpush.bf16.msra.mxu0 %v2785
    %2947 = vmatpush.bf16.msra.mxu0 %v2783
    %2948 = vmatmul.bf16.gmra.mxu0 %v244
    %v2949 = vpop.f32.mrf.mxu0
    %v2950 = vadd.f32 %v2927, %v2949
    %v2951 = vpop.f32.mrf.mxu0
    %v2952 = vadd.f32 %v2929, %v2951
    %2953 = vmatmul.bf16.gmra.mxu0 %v249
    %v2954 = vpop.f32.mrf.mxu0
    %v2955 = vadd.f32 %v2932, %v2954
    %v2956 = vpop.f32.mrf.mxu0
    %v2957 = vadd.f32 %v2934, %v2956
    %2958 = vmatmul.bf16.gmra.mxu0 %v254
    %v2959 = vpop.f32.mrf.mxu0
    %v2960 = vadd.f32 %v2937, %v2959
    %v2961 = vpop.f32.mrf.mxu0
    %2962 = vdwg.mxu0
    %2963 = vmatpush.bf16.msra.mxu0 0
    %2964 = vmatpush.bf16.msra.mxu0 0
    %2965 = vmatpush.bf16.msra.mxu0 0
    %2966 = vmatpush.bf16.msra.mxu0 0
    %2967 = vmatpush.bf16.msra.mxu0 0
    %2968 = vmatpush.bf16.msra.mxu0 0
    %2969 = vmatpush.bf16.msra.mxu0 %v2801
    %2970 = vmatpush.bf16.msra.mxu0 %v2799
    %2971 = vmatmul.bf16.gmra.mxu0 %v610
    %v2972 = vpop.f32.mrf.mxu0
    %v2973 = vadd.f32 %v2950, %v2972
    %v2974 = vpop.f32.mrf.mxu0
    %v2975 = vadd.f32 %v2952, %v2974
    %2976 = vmatmul.bf16.gmra.mxu0 %v613
    %v2977 = vpop.f32.mrf.mxu0
    %v2978 = vadd.f32 %v2955, %v2977
    %v2979 = vpop.f32.mrf.mxu0
    %v2980 = vadd.f32 %v2957, %v2979
    %2981 = vmatmul.bf16.gmra.mxu0 %v616
    %v2982 = vpop.f32.mrf.mxu0
    %v2983 = vadd.f32 %v2960, %v2982
    %v2984 = vpop.f32.mrf.mxu0
    %2985 = vdwg.mxu0
    %2986 = vmatpush.bf16.msra.mxu0 %v2750
    %2987 = vmatpush.bf16.msra.mxu0 %v2748
    %2988 = vmatpush.bf16.msra.mxu0 %v2746
    %2989 = vmatpush.bf16.msra.mxu0 %v2744
    %2990 = vmatpush.bf16.msra.mxu0 %v2742
    %2991 = vmatpush.bf16.msra.mxu0 %v2740
    %2992 = vmatpush.bf16.msra.mxu0 %v2738
    %2993 = vmatpush.bf16.msra.mxu0 %v2736
    %2994 = vmatmul.bf16.gmra.mxu0 %v241
    %v2995 = vpop.f32.mrf.mxu0
    %v2996 = vadd.f32 0.0, %v2995
    %v2997 = vpop.f32.mrf.mxu0
    %v2998 = vadd.f32 0.0, %v2997
    %2999 = vmatmul.bf16.gmra.mxu0 %v246
    %v3000 = vpop.f32.mrf.mxu0
    %v3001 = vadd.f32 0.0, %v3000
    %v3002 = vpop.f32.mrf.mxu0
    %v3003 = vadd.f32 0.0, %v3002
    %3004 = vmatmul.bf16.gmra.mxu0 %v251
    %v3005 = vpop.f32.mrf.mxu0
    %v3006 = vadd.f32 0.0, %v3005
    %v3007 = vpop.f32.mrf.mxu0
    %3008 = vdwg.mxu0
    %3009 = vmatpush.bf16.msra.mxu0 %v2766
    %3010 = vmatpush.bf16.msra.mxu0 %v2764
    %3011 = vmatpush.bf16.msra.mxu0 %v2762
    %3012 = vmatpush.bf16.msra.mxu0 %v2760
    %3013 = vmatpush.bf16.msra.mxu0 %v2758
    %3014 = vmatpush.bf16.msra.mxu0 %v2756
    %3015 = vmatpush.bf16.msra.mxu0 %v2754
    %3016 = vmatpush.bf16.msra.mxu0 %v2752
    %3017 = vmatmul.bf16.gmra.mxu0 %v242
    %v3018 = vpop.f32.mrf.mxu0
    %v3019 = vadd.f32 %v2996, %v3018
    %v3020 = vpop.f32.mrf.mxu0
    %v3021 = vadd.f32 %v2998, %v3020
    %3022 = vmatmul.bf16.gmra.mxu0 %v247
    %v3023 = vpop.f32.mrf.mxu0
    %v3024 = vadd.f32 %v3001, %v3023
    %v3025 = vpop.f32.mrf.mxu0
    %v3026 = vadd.f32 %v3003, %v3025
    %3027 = vmatmul.bf16.gmra.mxu0 %v252
    %v3028 = vpop.f32.mrf.mxu0
    %v3029 = vadd.f32 %v3006, %v3028
    %v3030 = vpop.f32.mrf.mxu0
    %3031 = vdwg.mxu0
    %3032 = vmatpush.bf16.msra.mxu0 %v2782
    %3033 = vmatpush.bf16.msra.mxu0 %v2780
    %3034 = vmatpush.bf16.msra.mxu0 %v2778
    %3035 = vmatpush.bf16.msra.mxu0 %v2776
    %3036 = vmatpush.bf16.msra.mxu0 %v2774
    %3037 = vmatpush.bf16.msra.mxu0 %v2772
    %3038 = vmatpush.bf16.msra.mxu0 %v2770
    %3039 = vmatpush.bf16.msra.mxu0 %v2768
    %3040 = vmatmul.bf16.gmra.mxu0 %v243
    %v3041 = vpop.f32.mrf.mxu0
    %v3042 = vadd.f32 %v3019, %v3041
    %v3043 = vpop.f32.mrf.mxu0
    %v3044 = vadd.f32 %v3021, %v3043
    %3045 = vmatmul.bf16.gmra.mxu0 %v248
    %v3046 = vpop.f32.mrf.mxu0
    %v3047 = vadd.f32 %v3024, %v3046
    %v3048 = vpop.f32.mrf.mxu0
    %v3049 = vadd.f32 %v3026, %v3048
    %3050 = vmatmul.bf16.gmra.mxu0 %v253
    %v3051 = vpop.f32.mrf.mxu0
    %v3052 = vadd.f32 %v3029, %v3051
    %v3053 = vpop.f32.mrf.mxu0
    %3054 = vdwg.mxu0
    %3055 = vmatpush.bf16.msra.mxu0 %v2798
    %3056 = vmatpush.bf16.msra.mxu0 %v2796
    %3057 = vmatpush.bf16.msra.mxu0 %v2794
    %3058 = vmatpush.bf16.msra.mxu0 %v2792
    %3059 = vmatpush.bf16.msra.mxu0 %v2790
    %3060 = vmatpush.bf16.msra.mxu0 %v2788
    %3061 = vmatpush.bf16.msra.mxu0 %v2786
    %3062 = vmatpush.bf16.msra.mxu0 %v2784
    %3063 = vmatmul.bf16.gmra.mxu0 %v244
    %v3064 = vpop.f32.mrf.mxu0
    %v3065 = vadd.f32 %v3042, %v3064
    %v3066 = vpop.f32.mrf.mxu0
    %v3067 = vadd.f32 %v3044, %v3066
    %3068 = vmatmul.bf16.gmra.mxu0 %v249
    %v3069 = vpop.f32.mrf.mxu0
    %v3070 = vadd.f32 %v3047, %v3069
    %v3071 = vpop.f32.mrf.mxu0
    %v3072 = vadd.f32 %v3049, %v3071
    %3073 = vmatmul.bf16.gmra.mxu0 %v254
    %v3074 = vpop.f32.mrf.mxu0
    %v3075 = vadd.f32 %v3052, %v3074
    %v3076 = vpop.f32.mrf.mxu0
    %3077 = vdwg.mxu0
    %3078 = vmatpush.bf16.msra.mxu0 0
    %3079 = vmatpush.bf16.msra.mxu0 0
    %3080 = vmatpush.bf16.msra.mxu0 0
    %3081 = vmatpush.bf16.msra.mxu0 0
    %3082 = vmatpush.bf16.msra.mxu0 0
    %3083 = vmatpush.bf16.msra.mxu0 0
    %3084 = vmatpush.bf16.msra.mxu0 %v2802
    %3085 = vmatpush.bf16.msra.mxu0 %v2800
    %3086 = vmatmul.bf16.gmra.mxu0 %v610
    %v3087 = vpop.f32.mrf.mxu0
    %v3088 = vadd.f32 %v3065, %v3087
    %v3089 = vpop.f32.mrf.mxu0
    %v3090 = vadd.f32 %v3067, %v3089
    %3091 = vmatmul.bf16.gmra.mxu0 %v613
    %v3092 = vpop.f32.mrf.mxu0
    %v3093 = vadd.f32 %v3070, %v3092
    %v3094 = vpop.f32.mrf.mxu0
    %v3095 = vadd.f32 %v3072, %v3094
    %3096 = vmatmul.bf16.gmra.mxu0 %v616
    %v3097 = vpop.f32.mrf.mxu0
    %v3098 = vadd.f32 %v3075, %v3097
    %v3099 = vpop.f32.mrf.mxu0
    %3100 = vdwg.mxu0
    %v3169 = vunpack.c.l.b16 %v2394
    %v3170 = vunpack.c.h.b16 %v2394
    %v3171 = vunpack.c.l.b16 %v2395
    %v3172 = vunpack.c.h.b16 %v2395
    %v3173 = vunpack.c.l.b16 %v2396
    %v3174 = vunpack.c.h.b16 %v2396
    %v3175 = vunpack.c.l.b16 %v2397
    %v3176 = vunpack.c.h.b16 %v2397
    %v3177 = vunpack.c.l.b16 %v2398
    %v3178 = vunpack.c.h.b16 %v2398
    %v3179 = vunpack.c.l.b16 %v2399
    %v3180 = vunpack.c.h.b16 %v2399
    %v3181 = vunpack.c.l.b16 %v2400
    %v3182 = vunpack.c.h.b16 %v2400
    %v3183 = vunpack.c.l.b16 %v2401
    %v3184 = vunpack.c.h.b16 %v2401
    %v3185 = vunpack.c.l.b16 %v2402
    %v3186 = vunpack.c.h.b16 %v2402
    %v3187 = vunpack.c.l.b16 %v2403
    %v3188 = vunpack.c.h.b16 %v2403
    %v3189 = vunpack.c.l.b16 %v2404
    %v3190 = vunpack.c.h.b16 %v2404
    %v3191 = vunpack.c.l.b16 %v2405
    %v3192 = vunpack.c.h.b16 %v2405
    %v3193 = vunpack.c.l.b16 %v2406
    %v3194 = vunpack.c.h.b16 %v2406
    %v3195 = vunpack.c.l.b16 %v2407
    %v3196 = vunpack.c.h.b16 %v2407
    %v3197 = vunpack.c.l.b16 %v2408
    %v3198 = vunpack.c.h.b16 %v2408
    %v3199 = vunpack.c.l.b16 %v2409
    %v3200 = vunpack.c.h.b16 %v2409
    %v3201 = vunpack.c.l.b16 %v2410
    %v3202 = vunpack.c.h.b16 %v2410
    %v3203 = vunpack.c.l.b16 %v2411
    %v3204 = vunpack.c.h.b16 %v2411
    %v3205 = vunpack.c.l.b16 %v2412
    %v3206 = vunpack.c.h.b16 %v2412
    %v3207 = vunpack.c.l.b16 %v2413
    %v3208 = vunpack.c.h.b16 %v2413
    %v3209 = vunpack.c.l.b16 %v2414
    %v3210 = vunpack.c.h.b16 %v2414
    %v3211 = vunpack.c.l.b16 %v2415
    %v3212 = vunpack.c.h.b16 %v2415
    %v3213 = vunpack.c.l.b16 %v2416
    %v3214 = vunpack.c.h.b16 %v2416
    %v3215 = vunpack.c.l.b16 %v2417
    %v3216 = vunpack.c.h.b16 %v2417
    %v3217 = vunpack.c.l.b16 %v2418
    %v3218 = vunpack.c.h.b16 %v2418
    %v3219 = vunpack.c.l.b16 %v2419
    %v3220 = vunpack.c.h.b16 %v2419
    %v3221 = vunpack.c.l.b16 %v2420
    %v3222 = vunpack.c.h.b16 %v2420
    %v3223 = vunpack.c.l.b16 %v2421
    %v3224 = vunpack.c.h.b16 %v2421
    %v3225 = vunpack.c.l.b16 %v2422
    %v3226 = vunpack.c.h.b16 %v2422
    %v3227 = vunpack.c.l.b16 %v2423
    %v3228 = vunpack.c.h.b16 %v2423
    %v3229 = vunpack.c.l.b16 %v2424
    %v3230 = vunpack.c.h.b16 %v2424
    %v3231 = vunpack.c.l.b16 %v2425
    %v3232 = vunpack.c.h.b16 %v2425
    %v3233 = vunpack.c.l.b16 %v2426
    %v3234 = vunpack.c.h.b16 %v2426
    %v3235 = vunpack.c.l.b16 %v2427
    %v3236 = vunpack.c.h.b16 %v2427
    %v3237 = vunpack.c.l.b16 %v2428
    %v3238 = vunpack.c.h.b16 %v2428
    %v3239 = vunpack.c.l.b16 %v2429
    %v3240 = vunpack.c.h.b16 %v2429
    %v3241 = vunpack.c.l.b16 %v2430
    %v3242 = vunpack.c.h.b16 %v2430
    %v3243 = vunpack.c.l.b16 %v2431
    %v3244 = vunpack.c.h.b16 %v2431
    %v3245 = vunpack.c.l.b16 %v2432
    %v3246 = vunpack.c.h.b16 %v2432
    %v3247 = vunpack.c.l.b16 %v2433
    %v3248 = vunpack.c.h.b16 %v2433
    %v3249 = vunpack.c.l.b16 %v2434
    %v3250 = vunpack.c.h.b16 %v2434
    %v3251 = vunpack.c.l.b16 %v2435
    %v3252 = vunpack.c.h.b16 %v2435
    %v3253 = vunpack.c.l.b16 %v2436
    %v3254 = vunpack.c.h.b16 %v2436
    %v3255 = vunpack.c.l.b16 %v2437
    %v3256 = vunpack.c.h.b16 %v2437
    %v3257 = vunpack.c.l.b16 %v2438
    %v3258 = vunpack.c.h.b16 %v2438
    %v3259 = vunpack.c.l.b16 %v2439
    %v3260 = vunpack.c.h.b16 %v2439
    %v3261 = vunpack.c.l.b16 %v2440
    %v3262 = vunpack.c.h.b16 %v2440
    %v3263 = vunpack.c.l.b16 %v2441
    %v3264 = vunpack.c.h.b16 %v2441
    %v3265 = vunpack.c.l.b16 %v2442
    %v3266 = vunpack.c.h.b16 %v2442
    %v3267 = vunpack.c.l.b16 %v2443
    %v3268 = vunpack.c.h.b16 %v2443
    %v3269 = vunpack.c.l.b16 %v2444
    %v3270 = vunpack.c.h.b16 %v2444
    %v3271 = vunpack.c.l.b16 %v2445
    %v3272 = vunpack.c.h.b16 %v2445
    %v3273 = vunpack.c.l.b16 %v2446
    %v3274 = vunpack.c.h.b16 %v2446
    %v3275 = vunpack.c.l.b16 %v2447
    %v3276 = vunpack.c.h.b16 %v2447
    %v3277 = vunpack.c.l.b16 %v2448
    %v3278 = vunpack.c.h.b16 %v2448
    %v3279 = vunpack.c.l.b16 %v2449
    %v3280 = vunpack.c.h.b16 %v2449
    %v3281 = vunpack.c.l.b16 %v2450
    %v3282 = vunpack.c.h.b16 %v2450
    %v3283 = vunpack.c.l.b16 %v2451
    %v3284 = vunpack.c.h.b16 %v2451
    %v3285 = vunpack.c.l.b16 %v2452
    %v3286 = vunpack.c.h.b16 %v2452
    %v3287 = vunpack.c.l.b16 %v2453
    %v3288 = vunpack.c.h.b16 %v2453
    %v3289 = vunpack.c.l.b16 %v2454
    %v3290 = vunpack.c.h.b16 %v2454
    %v3291 = vunpack.c.l.b16 %v2455
    %v3292 = vunpack.c.h.b16 %v2455
    %v3293 = vunpack.c.l.b16 %v2456
    %v3294 = vunpack.c.h.b16 %v2456
    %v3295 = vunpack.c.l.b16 %v2457
    %v3296 = vunpack.c.h.b16 %v2457
    %v3297 = vunpack.c.l.b16 %v2458
    %v3298 = vunpack.c.h.b16 %v2458
    %v3299 = vunpack.c.l.b16 %v2459
    %v3300 = vunpack.c.h.b16 %v2459
    %v3301 = vunpack.c.l.b16 %v2460
    %v3302 = vunpack.c.h.b16 %v2460
    %v3303 = vunpack.c.l.b16 %v2461
    %v3304 = vunpack.c.h.b16 %v2461
    %v3305 = vpack.c.b16 %v3171, %v3169
    %v3306 = vpack.c.b16 %v3172, %v3170
    %v3307 = vpack.c.b16 %v3175, %v3173
    %v3308 = vpack.c.b16 %v3176, %v3174
    %v3309 = vpack.c.b16 %v3179, %v3177
    %v3310 = vpack.c.b16 %v3180, %v3178
    %v3311 = vpack.c.b16 %v3183, %v3181
    %v3312 = vpack.c.b16 %v3184, %v3182
    %v3313 = vpack.c.b16 %v3187, %v3185
    %v3314 = vpack.c.b16 %v3188, %v3186
    %v3315 = vpack.c.b16 %v3191, %v3189
    %v3316 = vpack.c.b16 %v3192, %v3190
    %v3317 = vpack.c.b16 %v3195, %v3193
    %v3318 = vpack.c.b16 %v3196, %v3194
    %v3319 = vpack.c.b16 %v3199, %v3197
    %v3320 = vpack.c.b16 %v3200, %v3198
    %v3321 = vpack.c.b16 %v3203, %v3201
    %v3322 = vpack.c.b16 %v3204, %v3202
    %v3323 = vpack.c.b16 %v3207, %v3205
    %v3324 = vpack.c.b16 %v3208, %v3206
    %v3325 = vpack.c.b16 %v3211, %v3209
    %v3326 = vpack.c.b16 %v3212, %v3210
    %v3327 = vpack.c.b16 %v3215, %v3213
    %v3328 = vpack.c.b16 %v3216, %v3214
    %v3329 = vpack.c.b16 %v3219, %v3217
    %v3330 = vpack.c.b16 %v3220, %v3218
    %v3331 = vpack.c.b16 %v3223, %v3221
    %v3332 = vpack.c.b16 %v3224, %v3222
    %v3333 = vpack.c.b16 %v3227, %v3225
    %v3334 = vpack.c.b16 %v3228, %v3226
    %v3335 = vpack.c.b16 %v3231, %v3229
    %v3336 = vpack.c.b16 %v3232, %v3230
    %v3337 = vpack.c.b16 %v3235, %v3233
    %v3338 = vpack.c.b16 %v3236, %v3234
    %v3339 = vpack.c.b16 %v3239, %v3237
    %v3340 = vpack.c.b16 %v3240, %v3238
    %v3341 = vpack.c.b16 %v3243, %v3241
    %v3342 = vpack.c.b16 %v3244, %v3242
    %v3343 = vpack.c.b16 %v3247, %v3245
    %v3344 = vpack.c.b16 %v3248, %v3246
    %v3345 = vpack.c.b16 %v3251, %v3249
    %v3346 = vpack.c.b16 %v3252, %v3250
    %v3347 = vpack.c.b16 %v3255, %v3253
    %v3348 = vpack.c.b16 %v3256, %v3254
    %v3349 = vpack.c.b16 %v3259, %v3257
    %v3350 = vpack.c.b16 %v3260, %v3258
    %v3351 = vpack.c.b16 %v3263, %v3261
    %v3352 = vpack.c.b16 %v3264, %v3262
    %v3353 = vpack.c.b16 %v3267, %v3265
    %v3354 = vpack.c.b16 %v3268, %v3266
    %v3355 = vpack.c.b16 %v3271, %v3269
    %v3356 = vpack.c.b16 %v3272, %v3270
    %v3357 = vpack.c.b16 %v3275, %v3273
    %v3358 = vpack.c.b16 %v3276, %v3274
    %v3359 = vpack.c.b16 %v3279, %v3277
    %v3360 = vpack.c.b16 %v3280, %v3278
    %v3361 = vpack.c.b16 %v3283, %v3281
    %v3362 = vpack.c.b16 %v3284, %v3282
    %v3363 = vpack.c.b16 %v3287, %v3285
    %v3364 = vpack.c.b16 %v3288, %v3286
    %v3365 = vpack.c.b16 %v3291, %v3289
    %v3366 = vpack.c.b16 %v3292, %v3290
    %v3367 = vpack.c.b16 %v3295, %v3293
    %v3368 = vpack.c.b16 %v3296, %v3294
    %v3369 = vpack.c.b16 %v3299, %v3297
    %v3370 = vpack.c.b16 %v3300, %v3298
    %v3371 = vpack.c.b16 %v3303, %v3301
    %v3372 = vpack.c.b16 %v3304, %v3302
    %3441 = vmatpush.bf16.msra.mxu0 %v3319
    %3442 = vmatpush.bf16.msra.mxu0 %v3317
    %3443 = vmatpush.bf16.msra.mxu0 %v3315
    %3444 = vmatpush.bf16.msra.mxu0 %v3313
    %3445 = vmatpush.bf16.msra.mxu0 %v3311
    %3446 = vmatpush.bf16.msra.mxu0 %v3309
    %3447 = vmatpush.bf16.msra.mxu0 %v3307
    %3448 = vmatpush.bf16.msra.mxu0 %v3305
    %3449 = vmatmul.bf16.gmra.mxu0 %v888
    %v3450 = vpop.f32.mrf.mxu0
    %v3451 = vadd.f32 %v2973, %v3450
    %v3452 = vpop.f32.mrf.mxu0
    %v3453 = vadd.f32 %v2975, %v3452
    %3454 = vmatmul.bf16.gmra.mxu0 %v965
    %v3455 = vpop.f32.mrf.mxu0
    %v3456 = vadd.f32 %v2978, %v3455
    %v3457 = vpop.f32.mrf.mxu0
    %v3458 = vadd.f32 %v2980, %v3457
    %3459 = vmatmul.bf16.gmra.mxu0 %v964
    %v3460 = vpop.f32.mrf.mxu0
    %v3461 = vadd.f32 %v2983, %v3460
    %v3462 = vpop.f32.mrf.mxu0
    %3463 = vdwg.mxu0
    %3464 = vmatpush.bf16.msra.mxu0 %v3335
    %3465 = vmatpush.bf16.msra.mxu0 %v3333
    %3466 = vmatpush.bf16.msra.mxu0 %v3331
    %3467 = vmatpush.bf16.msra.mxu0 %v3329
    %3468 = vmatpush.bf16.msra.mxu0 %v3327
    %3469 = vmatpush.bf16.msra.mxu0 %v3325
    %3470 = vmatpush.bf16.msra.mxu0 %v3323
    %3471 = vmatpush.bf16.msra.mxu0 %v3321
    %3472 = vmatmul.bf16.gmra.mxu0 %v905
    %v3473 = vpop.f32.mrf.mxu0
    %v3474 = vadd.f32 %v3451, %v3473
    %v3475 = vpop.f32.mrf.mxu0
    %v3476 = vadd.f32 %v3453, %v3475
    %3477 = vmatmul.bf16.gmra.mxu0 %v974
    %v3478 = vpop.f32.mrf.mxu0
    %v3479 = vadd.f32 %v3456, %v3478
    %v3480 = vpop.f32.mrf.mxu0
    %v3481 = vadd.f32 %v3458, %v3480
    %3482 = vmatmul.bf16.gmra.mxu0 %v973
    %v3483 = vpop.f32.mrf.mxu0
    %v3484 = vadd.f32 %v3461, %v3483
    %v3485 = vpop.f32.mrf.mxu0
    %3486 = vdwg.mxu0
    %3487 = vmatpush.bf16.msra.mxu0 %v3351
    %3488 = vmatpush.bf16.msra.mxu0 %v3349
    %3489 = vmatpush.bf16.msra.mxu0 %v3347
    %3490 = vmatpush.bf16.msra.mxu0 %v3345
    %3491 = vmatpush.bf16.msra.mxu0 %v3343
    %3492 = vmatpush.bf16.msra.mxu0 %v3341
    %3493 = vmatpush.bf16.msra.mxu0 %v3339
    %3494 = vmatpush.bf16.msra.mxu0 %v3337
    %3495 = vmatmul.bf16.gmra.mxu0 %v922
    %v3496 = vpop.f32.mrf.mxu0
    %v3497 = vadd.f32 %v3474, %v3496
    %v3498 = vpop.f32.mrf.mxu0
    %v3499 = vadd.f32 %v3476, %v3498
    %3500 = vmatmul.bf16.gmra.mxu0 %v983
    %v3501 = vpop.f32.mrf.mxu0
    %v3502 = vadd.f32 %v3479, %v3501
    %v3503 = vpop.f32.mrf.mxu0
    %v3504 = vadd.f32 %v3481, %v3503
    %3505 = vmatmul.bf16.gmra.mxu0 %v982
    %v3506 = vpop.f32.mrf.mxu0
    %v3507 = vadd.f32 %v3484, %v3506
    %v3508 = vpop.f32.mrf.mxu0
    %3509 = vdwg.mxu0
    %3510 = vmatpush.bf16.msra.mxu0 %v3367
    %3511 = vmatpush.bf16.msra.mxu0 %v3365
    %3512 = vmatpush.bf16.msra.mxu0 %v3363
    %3513 = vmatpush.bf16.msra.mxu0 %v3361
    %3514 = vmatpush.bf16.msra.mxu0 %v3359
    %3515 = vmatpush.bf16.msra.mxu0 %v3357
    %3516 = vmatpush.bf16.msra.mxu0 %v3355
    %3517 = vmatpush.bf16.msra.mxu0 %v3353
    %3518 = vmatmul.bf16.gmra.mxu0 %v939
    %v3519 = vpop.f32.mrf.mxu0
    %v3520 = vadd.f32 %v3497, %v3519
    %v3521 = vpop.f32.mrf.mxu0
    %v3522 = vadd.f32 %v3499, %v3521
    %3523 = vmatmul.bf16.gmra.mxu0 %v992
    %v3524 = vpop.f32.mrf.mxu0
    %v3525 = vadd.f32 %v3502, %v3524
    %v3526 = vpop.f32.mrf.mxu0
    %v3527 = vadd.f32 %v3504, %v3526
    %3528 = vmatmul.bf16.gmra.mxu0 %v991
    %v3529 = vpop.f32.mrf.mxu0
    %v3530 = vadd.f32 %v3507, %v3529
    %v3531 = vpop.f32.mrf.mxu0
    %3532 = vdwg.mxu0
    %3533 = vmatpush.bf16.msra.mxu0 0
    %3534 = vmatpush.bf16.msra.mxu0 0
    %3535 = vmatpush.bf16.msra.mxu0 0
    %3536 = vmatpush.bf16.msra.mxu0 0
    %3537 = vmatpush.bf16.msra.mxu0 0
    %3538 = vmatpush.bf16.msra.mxu0 0
    %3539 = vmatpush.bf16.msra.mxu0 %v3371
    %3540 = vmatpush.bf16.msra.mxu0 %v3369
    %3541 = vmatmul.bf16.gmra.mxu0 %v1355
    %v3542 = vpop.f32.mrf.mxu0
    %v3543 = vadd.f32 %v3520, %v3542
    %v3544 = vpop.f32.mrf.mxu0
    %v3545 = vadd.f32 %v3522, %v3544
    %3546 = vmatmul.bf16.gmra.mxu0 %v1358
    %v3547 = vpop.f32.mrf.mxu0
    %v3548 = vadd.f32 %v3525, %v3547
    %v3549 = vpop.f32.mrf.mxu0
    %v3550 = vadd.f32 %v3527, %v3549
    %3551 = vmatmul.bf16.gmra.mxu0 %v1361
    %v3552 = vpop.f32.mrf.mxu0
    %v3553 = vadd.f32 %v3530, %v3552
    %v3554 = vpop.f32.mrf.mxu0
    %3555 = vdwg.mxu0
    %3556 = vmatpush.bf16.msra.mxu0 %v3320
    %3557 = vmatpush.bf16.msra.mxu0 %v3318
    %3558 = vmatpush.bf16.msra.mxu0 %v3316
    %3559 = vmatpush.bf16.msra.mxu0 %v3314
    %3560 = vmatpush.bf16.msra.mxu0 %v3312
    %3561 = vmatpush.bf16.msra.mxu0 %v3310
    %3562 = vmatpush.bf16.msra.mxu0 %v3308
    %3563 = vmatpush.bf16.msra.mxu0 %v3306
    %3564 = vmatmul.bf16.gmra.mxu0 %v888
    %v3565 = vpop.f32.mrf.mxu0
    %v3566 = vadd.f32 %v3088, %v3565
    %v3567 = vpop.f32.mrf.mxu0
    %v3568 = vadd.f32 %v3090, %v3567
    %3569 = vmatmul.bf16.gmra.mxu0 %v965
    %v3570 = vpop.f32.mrf.mxu0
    %v3571 = vadd.f32 %v3093, %v3570
    %v3572 = vpop.f32.mrf.mxu0
    %v3573 = vadd.f32 %v3095, %v3572
    %3574 = vmatmul.bf16.gmra.mxu0 %v964
    %v3575 = vpop.f32.mrf.mxu0
    %v3576 = vadd.f32 %v3098, %v3575
    %v3577 = vpop.f32.mrf.mxu0
    %3578 = vdwg.mxu0
    %3579 = vmatpush.bf16.msra.mxu0 %v3336
    %3580 = vmatpush.bf16.msra.mxu0 %v3334
    %3581 = vmatpush.bf16.msra.mxu0 %v3332
    %3582 = vmatpush.bf16.msra.mxu0 %v3330
    %3583 = vmatpush.bf16.msra.mxu0 %v3328
    %3584 = vmatpush.bf16.msra.mxu0 %v3326
    %3585 = vmatpush.bf16.msra.mxu0 %v3324
    %3586 = vmatpush.bf16.msra.mxu0 %v3322
    %3587 = vmatmul.bf16.gmra.mxu0 %v905
    %v3588 = vpop.f32.mrf.mxu0
    %v3589 = vadd.f32 %v3566, %v3588
    %v3590 = vpop.f32.mrf.mxu0
    %v3591 = vadd.f32 %v3568, %v3590
    %3592 = vmatmul.bf16.gmra.mxu0 %v974
    %v3593 = vpop.f32.mrf.mxu0
    %v3594 = vadd.f32 %v3571, %v3593
    %v3595 = vpop.f32.mrf.mxu0
    %v3596 = vadd.f32 %v3573, %v3595
    %3597 = vmatmul.bf16.gmra.mxu0 %v973
    %v3598 = vpop.f32.mrf.mxu0
    %v3599 = vadd.f32 %v3576, %v3598
    %v3600 = vpop.f32.mrf.mxu0
    %3601 = vdwg.mxu0
    %3602 = vmatpush.bf16.msra.mxu0 %v3352
    %3603 = vmatpush.bf16.msra.mxu0 %v3350
    %3604 = vmatpush.bf16.msra.mxu0 %v3348
    %3605 = vmatpush.bf16.msra.mxu0 %v3346
    %3606 = vmatpush.bf16.msra.mxu0 %v3344
    %3607 = vmatpush.bf16.msra.mxu0 %v3342
    %3608 = vmatpush.bf16.msra.mxu0 %v3340
    %3609 = vmatpush.bf16.msra.mxu0 %v3338
    %3610 = vmatmul.bf16.gmra.mxu0 %v922
    %v3611 = vpop.f32.mrf.mxu0
    %v3612 = vadd.f32 %v3589, %v3611
    %v3613 = vpop.f32.mrf.mxu0
    %v3614 = vadd.f32 %v3591, %v3613
    %3615 = vmatmul.bf16.gmra.mxu0 %v983
    %v3616 = vpop.f32.mrf.mxu0
    %v3617 = vadd.f32 %v3594, %v3616
    %v3618 = vpop.f32.mrf.mxu0
    %v3619 = vadd.f32 %v3596, %v3618
    %3620 = vmatmul.bf16.gmra.mxu0 %v982
    %v3621 = vpop.f32.mrf.mxu0
    %v3622 = vadd.f32 %v3599, %v3621
    %v3623 = vpop.f32.mrf.mxu0
    %3624 = vdwg.mxu0
    %3625 = vmatpush.bf16.msra.mxu0 %v3368
    %3626 = vmatpush.bf16.msra.mxu0 %v3366
    %3627 = vmatpush.bf16.msra.mxu0 %v3364
    %3628 = vmatpush.bf16.msra.mxu0 %v3362
    %3629 = vmatpush.bf16.msra.mxu0 %v3360
    %3630 = vmatpush.bf16.msra.mxu0 %v3358
    %3631 = vmatpush.bf16.msra.mxu0 %v3356
    %3632 = vmatpush.bf16.msra.mxu0 %v3354
    %3633 = vmatmul.bf16.gmra.mxu0 %v939
    %v3634 = vpop.f32.mrf.mxu0
    %v3635 = vadd.f32 %v3612, %v3634
    %v3636 = vpop.f32.mrf.mxu0
    %v3637 = vadd.f32 %v3614, %v3636
    %3638 = vmatmul.bf16.gmra.mxu0 %v992
    %v3639 = vpop.f32.mrf.mxu0
    %v3640 = vadd.f32 %v3617, %v3639
    %v3641 = vpop.f32.mrf.mxu0
    %v3642 = vadd.f32 %v3619, %v3641
    %3643 = vmatmul.bf16.gmra.mxu0 %v991
    %v3644 = vpop.f32.mrf.mxu0
    %v3645 = vadd.f32 %v3622, %v3644
    %v3646 = vpop.f32.mrf.mxu0
    %3647 = vdwg.mxu0
    %3648 = vmatpush.bf16.msra.mxu0 0
    %3649 = vmatpush.bf16.msra.mxu0 0
    %3650 = vmatpush.bf16.msra.mxu0 0
    %3651 = vmatpush.bf16.msra.mxu0 0
    %3652 = vmatpush.bf16.msra.mxu0 0
    %3653 = vmatpush.bf16.msra.mxu0 0
    %3654 = vmatpush.bf16.msra.mxu0 %v3372
    %3655 = vmatpush.bf16.msra.mxu0 %v3370
    %3656 = vmatmul.bf16.gmra.mxu0 %v1355
    %v3657 = vpop.f32.mrf.mxu0
    %v3658 = vadd.f32 %v3635, %v3657
    %v3659 = vpop.f32.mrf.mxu0
    %v3660 = vadd.f32 %v3637, %v3659
    %3661 = vmatmul.bf16.gmra.mxu0 %v1358
    %v3662 = vpop.f32.mrf.mxu0
    %v3663 = vadd.f32 %v3640, %v3662
    %v3664 = vpop.f32.mrf.mxu0
    %v3665 = vadd.f32 %v3642, %v3664
    %3666 = vmatmul.bf16.gmra.mxu0 %v1361
    %v3667 = vpop.f32.mrf.mxu0
    %v3668 = vadd.f32 %v3645, %v3667
    %v3669 = vpop.f32.mrf.mxu0
    %3670 = vdwg.mxu0
    %s3671 = scalar_lea.vmem [#allocation2], 2720
    %v3672 = vld [vmem:[%s3671] sm:$0xff]
    %v3673 = vld [vmem:[%s3671 + $0x8] sm:$0xff]
    %v3674 = vld [vmem:[%s3671 + $0x10] sm:$0xff]
    %v3675 = vld [vmem:[%s3671 + $0x18] sm:$0xff]
    %v3676 = vld [vmem:[%s3671 + $0x20] sm:$0xff]
    %v3677 = vld [vmem:[%s3671 + $0x28] sm:$0xff]
    %v3678 = vld [vmem:[%s3671 + $0x30] sm:$0xff]
    %v3679 = vld [vmem:[%s3671 + $0x38] sm:$0xff]
    %v3680 = vld [vmem:[%s3671 + $0x40] sm:$0xff]
    %v3681 = vld [vmem:[%s3671 + $0x48] sm:$0xff]
    %v3682 = vld [vmem:[%s3671 + $0x50] sm:$0xff]
    %v3683 = vld [vmem:[%s3671 + $0x58] sm:$0xff]
    %v3684 = vld [vmem:[%s3671 + $0x60] sm:$0xff]
    %v3685 = vld [vmem:[%s3671 + $0x68] sm:$0xff]
    %v3686 = vld [vmem:[%s3671 + $0x70] sm:$0xff]
    %v3687 = vld [vmem:[%s3671 + $0x78] sm:$0xff]
    %v3688 = vld [vmem:[%s3671 + $0x80] sm:$0xff]
    %v3689 = vld [vmem:[%s3671 + $0x88] sm:$0xff]
    %v3690 = vld [vmem:[%s3671 + $0x90] sm:$0xff]
    %v3691 = vld [vmem:[%s3671 + $0x98] sm:$0xff]
    %v3692 = vld [vmem:[%s3671 + $0xa0] sm:$0xff]
    %v3693 = vld [vmem:[%s3671 + $0xa8] sm:$0xff]
    %v3694 = vld [vmem:[%s3671 + $0xb0] sm:$0xff]
    %v3695 = vld [vmem:[%s3671 + $0xb8] sm:$0xff]
    %v3696 = vld [vmem:[%s3671 + $0xc0] sm:$0xff]
    %v3697 = vld [vmem:[%s3671 + $0xc8] sm:$0xff]
    %v3698 = vld [vmem:[%s3671 + $0xd0] sm:$0xff]
    %v3699 = vld [vmem:[%s3671 + $0xd8] sm:$0xff]
    %v3700 = vld [vmem:[%s3671 + $0xe0] sm:$0xff]
    %v3701 = vld [vmem:[%s3671 + $0xe8] sm:$0xff]
    %v3702 = vld [vmem:[%s3671 + $0xf0] sm:$0xff]
    %v3703 = vld [vmem:[%s3671 + $0xf8] sm:$0xff]
    %v3704 = vld [vmem:[%s3671 + $0x100] sm:$0xff]
    %v3705 = vld [vmem:[%s3671 + $0x108] sm:$0xff]
    %v3706 = vld [vmem:[%s3671 + $0x110] sm:$0xff]
    %v3707 = vld [vmem:[%s3671 + $0x118] sm:$0xff]
    %v3708 = vld [vmem:[%s3671 + $0x120] sm:$0xff]
    %v3709 = vld [vmem:[%s3671 + $0x128] sm:$0xff]
    %v3710 = vld [vmem:[%s3671 + $0x130] sm:$0xff]
    %v3711 = vld [vmem:[%s3671 + $0x138] sm:$0xff]
    %v3712 = vld [vmem:[%s3671 + $0x140] sm:$0xff]
    %v3713 = vld [vmem:[%s3671 + $0x148] sm:$0xff]
    %v3714 = vld [vmem:[%s3671 + $0x150] sm:$0xff]
    %v3715 = vld [vmem:[%s3671 + $0x158] sm:$0xff]
    %v3716 = vld [vmem:[%s3671 + $0x160] sm:$0xff]
    %v3717 = vld [vmem:[%s3671 + $0x168] sm:$0xff]
    %v3718 = vld [vmem:[%s3671 + $0x170] sm:$0xff]
    %v3719 = vld [vmem:[%s3671 + $0x178] sm:$0xff]
    %v3720 = vld [vmem:[%s3671 + $0x180] sm:$0xff]
    %v3721 = vld [vmem:[%s3671 + $0x188] sm:$0xff]
    %v3722 = vld [vmem:[%s3671 + $0x190] sm:$0xff]
    %v3723 = vld [vmem:[%s3671 + $0x198] sm:$0xff]
    %v3724 = vld [vmem:[%s3671 + $0x1a0] sm:$0xff]
    %v3725 = vld [vmem:[%s3671 + $0x1a8] sm:$0xff]
    %v3726 = vld [vmem:[%s3671 + $0x1b0] sm:$0xff]
    %v3727 = vld [vmem:[%s3671 + $0x1b8] sm:$0xff]
    %v3728 = vld [vmem:[%s3671 + $0x1c0] sm:$0xff]
    %v3729 = vld [vmem:[%s3671 + $0x1c8] sm:$0xff]
    %v3730 = vld [vmem:[%s3671 + $0x1d0] sm:$0xff]
    %v3731 = vld [vmem:[%s3671 + $0x1d8] sm:$0xff]
    %v3732 = vld [vmem:[%s3671 + $0x1e0] sm:$0xff]
    %v3733 = vld [vmem:[%s3671 + $0x1e8] sm:$0xff]
    %v3734 = vld [vmem:[%s3671 + $0x1f0] sm:$0xff]
    %v3735 = vld [vmem:[%s3671 + $0x1f8] sm:$0xff]
    %v3736 = vld [vmem:[%s3671 + $0x200] sm:$0xff]
    %v3737 = vld [vmem:[%s3671 + $0x208] sm:$0xff]
    %v3738 = vld [vmem:[%s3671 + $0x210] sm:$0xff]
    %v3739 = vld [vmem:[%s3671 + $0x218] sm:$0xff]
    %v3808 = vunpack.c.l.b16 %v3672
    %v3809 = vunpack.c.h.b16 %v3672
    %v3810 = vunpack.c.l.b16 %v3673
    %v3811 = vunpack.c.h.b16 %v3673
    %v3812 = vunpack.c.l.b16 %v3674
    %v3813 = vunpack.c.h.b16 %v3674
    %v3814 = vunpack.c.l.b16 %v3675
    %v3815 = vunpack.c.h.b16 %v3675
    %v3816 = vunpack.c.l.b16 %v3676
    %v3817 = vunpack.c.h.b16 %v3676
    %v3818 = vunpack.c.l.b16 %v3677
    %v3819 = vunpack.c.h.b16 %v3677
    %v3820 = vunpack.c.l.b16 %v3678
    %v3821 = vunpack.c.h.b16 %v3678
    %v3822 = vunpack.c.l.b16 %v3679
    %v3823 = vunpack.c.h.b16 %v3679
    %v3824 = vunpack.c.l.b16 %v3680
    %v3825 = vunpack.c.h.b16 %v3680
    %v3826 = vunpack.c.l.b16 %v3681
    %v3827 = vunpack.c.h.b16 %v3681
    %v3828 = vunpack.c.l.b16 %v3682
    %v3829 = vunpack.c.h.b16 %v3682
    %v3830 = vunpack.c.l.b16 %v3683
    %v3831 = vunpack.c.h.b16 %v3683
    %v3832 = vunpack.c.l.b16 %v3684
    %v3833 = vunpack.c.h.b16 %v3684
    %v3834 = vunpack.c.l.b16 %v3685
    %v3835 = vunpack.c.h.b16 %v3685
    %v3836 = vunpack.c.l.b16 %v3686
    %v3837 = vunpack.c.h.b16 %v3686
    %v3838 = vunpack.c.l.b16 %v3687
    %v3839 = vunpack.c.h.b16 %v3687
    %v3840 = vunpack.c.l.b16 %v3688
    %v3841 = vunpack.c.h.b16 %v3688
    %v3842 = vunpack.c.l.b16 %v3689
    %v3843 = vunpack.c.h.b16 %v3689
    %v3844 = vunpack.c.l.b16 %v3690
    %v3845 = vunpack.c.h.b16 %v3690
    %v3846 = vunpack.c.l.b16 %v3691
    %v3847 = vunpack.c.h.b16 %v3691
    %v3848 = vunpack.c.l.b16 %v3692
    %v3849 = vunpack.c.h.b16 %v3692
    %v3850 = vunpack.c.l.b16 %v3693
    %v3851 = vunpack.c.h.b16 %v3693
    %v3852 = vunpack.c.l.b16 %v3694
    %v3853 = vunpack.c.h.b16 %v3694
    %v3854 = vunpack.c.l.b16 %v3695
    %v3855 = vunpack.c.h.b16 %v3695
    %v3856 = vunpack.c.l.b16 %v3696
    %v3857 = vunpack.c.h.b16 %v3696
    %v3858 = vunpack.c.l.b16 %v3697
    %v3859 = vunpack.c.h.b16 %v3697
    %v3860 = vunpack.c.l.b16 %v3698
    %v3861 = vunpack.c.h.b16 %v3698
    %v3862 = vunpack.c.l.b16 %v3699
    %v3863 = vunpack.c.h.b16 %v3699
    %v3864 = vunpack.c.l.b16 %v3700
    %v3865 = vunpack.c.h.b16 %v3700
    %v3866 = vunpack.c.l.b16 %v3701
    %v3867 = vunpack.c.h.b16 %v3701
    %v3868 = vunpack.c.l.b16 %v3702
    %v3869 = vunpack.c.h.b16 %v3702
    %v3870 = vunpack.c.l.b16 %v3703
    %v3871 = vunpack.c.h.b16 %v3703
    %v3872 = vunpack.c.l.b16 %v3704
    %v3873 = vunpack.c.h.b16 %v3704
    %v3874 = vunpack.c.l.b16 %v3705
    %v3875 = vunpack.c.h.b16 %v3705
    %v3876 = vunpack.c.l.b16 %v3706
    %v3877 = vunpack.c.h.b16 %v3706
    %v3878 = vunpack.c.l.b16 %v3707
    %v3879 = vunpack.c.h.b16 %v3707
    %v3880 = vunpack.c.l.b16 %v3708
    %v3881 = vunpack.c.h.b16 %v3708
    %v3882 = vunpack.c.l.b16 %v3709
    %v3883 = vunpack.c.h.b16 %v3709
    %v3884 = vunpack.c.l.b16 %v3710
    %v3885 = vunpack.c.h.b16 %v3710
    %v3886 = vunpack.c.l.b16 %v3711
    %v3887 = vunpack.c.h.b16 %v3711
    %v3888 = vunpack.c.l.b16 %v3712
    %v3889 = vunpack.c.h.b16 %v3712
    %v3890 = vunpack.c.l.b16 %v3713
    %v3891 = vunpack.c.h.b16 %v3713
    %v3892 = vunpack.c.l.b16 %v3714
    %v3893 = vunpack.c.h.b16 %v3714
    %v3894 = vunpack.c.l.b16 %v3715
    %v3895 = vunpack.c.h.b16 %v3715
    %v3896 = vunpack.c.l.b16 %v3716
    %v3897 = vunpack.c.h.b16 %v3716
    %v3898 = vunpack.c.l.b16 %v3717
    %v3899 = vunpack.c.h.b16 %v3717
    %v3900 = vunpack.c.l.b16 %v3718
    %v3901 = vunpack.c.h.b16 %v3718
    %v3902 = vunpack.c.l.b16 %v3719
    %v3903 = vunpack.c.h.b16 %v3719
    %v3904 = vunpack.c.l.b16 %v3720
    %v3905 = vunpack.c.h.b16 %v3720
    %v3906 = vunpack.c.l.b16 %v3721
    %v3907 = vunpack.c.h.b16 %v3721
    %v3908 = vunpack.c.l.b16 %v3722
    %v3909 = vunpack.c.h.b16 %v3722
    %v3910 = vunpack.c.l.b16 %v3723
    %v3911 = vunpack.c.h.b16 %v3723
    %v3912 = vunpack.c.l.b16 %v3724
    %v3913 = vunpack.c.h.b16 %v3724
    %v3914 = vunpack.c.l.b16 %v3725
    %v3915 = vunpack.c.h.b16 %v3725
    %v3916 = vunpack.c.l.b16 %v3726
    %v3917 = vunpack.c.h.b16 %v3726
    %v3918 = vunpack.c.l.b16 %v3727
    %v3919 = vunpack.c.h.b16 %v3727
    %v3920 = vunpack.c.l.b16 %v3728
    %v3921 = vunpack.c.h.b16 %v3728
    %v3922 = vunpack.c.l.b16 %v3729
    %v3923 = vunpack.c.h.b16 %v3729
    %v3924 = vunpack.c.l.b16 %v3730
    %v3925 = vunpack.c.h.b16 %v3730
    %v3926 = vunpack.c.l.b16 %v3731
    %v3927 = vunpack.c.h.b16 %v3731
    %v3928 = vunpack.c.l.b16 %v3732
    %v3929 = vunpack.c.h.b16 %v3732
    %v3930 = vunpack.c.l.b16 %v3733
    %v3931 = vunpack.c.h.b16 %v3733
    %v3932 = vunpack.c.l.b16 %v3734
    %v3933 = vunpack.c.h.b16 %v3734
    %v3934 = vunpack.c.l.b16 %v3735
    %v3935 = vunpack.c.h.b16 %v3735
    %v3936 = vunpack.c.l.b16 %v3736
    %v3937 = vunpack.c.h.b16 %v3736
    %v3938 = vunpack.c.l.b16 %v3737
    %v3939 = vunpack.c.h.b16 %v3737
    %v3940 = vunpack.c.l.b16 %v3738
    %v3941 = vunpack.c.h.b16 %v3738
    %v3942 = vunpack.c.l.b16 %v3739
    %v3943 = vunpack.c.h.b16 %v3739
    %v3944 = vpack.c.b16 %v3810, %v3808
    %v3945 = vpack.c.b16 %v3811, %v3809
    %v3946 = vpack.c.b16 %v3814, %v3812
    %v3947 = vpack.c.b16 %v3815, %v3813
    %v3948 = vpack.c.b16 %v3818, %v3816
    %v3949 = vpack.c.b16 %v3819, %v3817
    %v3950 = vpack.c.b16 %v3822, %v3820
    %v3951 = vpack.c.b16 %v3823, %v3821
    %v3952 = vpack.c.b16 %v3826, %v3824
    %v3953 = vpack.c.b16 %v3827, %v3825
    %v3954 = vpack.c.b16 %v3830, %v3828
    %v3955 = vpack.c.b16 %v3831, %v3829
    %v3956 = vpack.c.b16 %v3834, %v3832
    %v3957 = vpack.c.b16 %v3835, %v3833
    %v3958 = vpack.c.b16 %v3838, %v3836
    %v3959 = vpack.c.b16 %v3839, %v3837
    %v3960 = vpack.c.b16 %v3842, %v3840
    %v3961 = vpack.c.b16 %v3843, %v3841
    %v3962 = vpack.c.b16 %v3846, %v3844
    %v3963 = vpack.c.b16 %v3847, %v3845
    %v3964 = vpack.c.b16 %v3850, %v3848
    %v3965 = vpack.c.b16 %v3851, %v3849
    %v3966 = vpack.c.b16 %v3854, %v3852
    %v3967 = vpack.c.b16 %v3855, %v3853
    %v3968 = vpack.c.b16 %v3858, %v3856
    %v3969 = vpack.c.b16 %v3859, %v3857
    %v3970 = vpack.c.b16 %v3862, %v3860
    %v3971 = vpack.c.b16 %v3863, %v3861
    %v3972 = vpack.c.b16 %v3866, %v3864
    %v3973 = vpack.c.b16 %v3867, %v3865
    %v3974 = vpack.c.b16 %v3870, %v3868
    %v3975 = vpack.c.b16 %v3871, %v3869
    %v3976 = vpack.c.b16 %v3874, %v3872
    %v3977 = vpack.c.b16 %v3875, %v3873
    %v3978 = vpack.c.b16 %v3878, %v3876
    %v3979 = vpack.c.b16 %v3879, %v3877
    %v3980 = vpack.c.b16 %v3882, %v3880
    %v3981 = vpack.c.b16 %v3883, %v3881
    %v3982 = vpack.c.b16 %v3886, %v3884
    %v3983 = vpack.c.b16 %v3887, %v3885
    %v3984 = vpack.c.b16 %v3890, %v3888
    %v3985 = vpack.c.b16 %v3891, %v3889
    %v3986 = vpack.c.b16 %v3894, %v3892
    %v3987 = vpack.c.b16 %v3895, %v3893
    %v3988 = vpack.c.b16 %v3898, %v3896
    %v3989 = vpack.c.b16 %v3899, %v3897
    %v3990 = vpack.c.b16 %v3902, %v3900
    %v3991 = vpack.c.b16 %v3903, %v3901
    %v3992 = vpack.c.b16 %v3906, %v3904
    %v3993 = vpack.c.b16 %v3907, %v3905
    %v3994 = vpack.c.b16 %v3910, %v3908
    %v3995 = vpack.c.b16 %v3911, %v3909
    %v3996 = vpack.c.b16 %v3914, %v3912
    %v3997 = vpack.c.b16 %v3915, %v3913
    %v3998 = vpack.c.b16 %v3918, %v3916
    %v3999 = vpack.c.b16 %v3919, %v3917
    %v4000 = vpack.c.b16 %v3922, %v3920
    %v4001 = vpack.c.b16 %v3923, %v3921
    %v4002 = vpack.c.b16 %v3926, %v3924
    %v4003 = vpack.c.b16 %v3927, %v3925
    %v4004 = vpack.c.b16 %v3930, %v3928
    %v4005 = vpack.c.b16 %v3931, %v3929
    %v4006 = vpack.c.b16 %v3934, %v3932
    %v4007 = vpack.c.b16 %v3935, %v3933
    %v4008 = vpack.c.b16 %v3938, %v3936
    %v4009 = vpack.c.b16 %v3939, %v3937
    %v4010 = vpack.c.b16 %v3942, %v3940
    %v4011 = vpack.c.b16 %v3943, %v3941
    %4080 = vmatpush.bf16.msra.mxu0 %v3958
    %4081 = vmatpush.bf16.msra.mxu0 %v3956
    %4082 = vmatpush.bf16.msra.mxu0 %v3954
    %4083 = vmatpush.bf16.msra.mxu0 %v3952
    %4084 = vmatpush.bf16.msra.mxu0 %v3950
    %4085 = vmatpush.bf16.msra.mxu0 %v3948
    %4086 = vmatpush.bf16.msra.mxu0 %v3946
    %4087 = vmatpush.bf16.msra.mxu0 %v3944
    %4088 = vmatmul.bf16.gmra.mxu0 %v1690
    %v4089 = vpop.f32.mrf.mxu0
    %v4090 = vadd.f32 0.0, %v4089
    %v4091 = vpop.f32.mrf.mxu0
    %v4092 = vadd.f32 0.0, %v4091
    %4093 = vmatmul.bf16.gmra.mxu0 %v1744
    %v4094 = vpop.f32.mrf.mxu0
    %v4095 = vadd.f32 0.0, %v4094
    %v4096 = vpop.f32.mrf.mxu0
    %v4097 = vadd.f32 0.0, %v4096
    %4098 = vmatmul.bf16.gmra.mxu0 %v1779
    %v4099 = vpop.f32.mrf.mxu0
    %v4100 = vadd.f32 0.0, %v4099
    %v4101 = vpop.f32.mrf.mxu0
    %4102 = vdwg.mxu0
    %4103 = vmatpush.bf16.msra.mxu0 %v3974
    %4104 = vmatpush.bf16.msra.mxu0 %v3972
    %4105 = vmatpush.bf16.msra.mxu0 %v3970
    %4106 = vmatpush.bf16.msra.mxu0 %v3968
    %4107 = vmatpush.bf16.msra.mxu0 %v3966
    %4108 = vmatpush.bf16.msra.mxu0 %v3964
    %4109 = vmatpush.bf16.msra.mxu0 %v3962
    %4110 = vmatpush.bf16.msra.mxu0 %v3960
    %4111 = vmatmul.bf16.gmra.mxu0 %v1702
    %v4112 = vpop.f32.mrf.mxu0
    %v4113 = vadd.f32 %v4090, %v4112
    %v4114 = vpop.f32.mrf.mxu0
    %v4115 = vadd.f32 %v4092, %v4114
    %4116 = vmatmul.bf16.gmra.mxu0 %v1752
    %v4117 = vpop.f32.mrf.mxu0
    %v4118 = vadd.f32 %v4095, %v4117
    %v4119 = vpop.f32.mrf.mxu0
    %v4120 = vadd.f32 %v4097, %v4119
    %4121 = vmatmul.bf16.gmra.mxu0 %v1782
    %v4122 = vpop.f32.mrf.mxu0
    %v4123 = vadd.f32 %v4100, %v4122
    %v4124 = vpop.f32.mrf.mxu0
    %4125 = vdwg.mxu0
    %4126 = vmatpush.bf16.msra.mxu0 %v3990
    %4127 = vmatpush.bf16.msra.mxu0 %v3988
    %4128 = vmatpush.bf16.msra.mxu0 %v3986
    %4129 = vmatpush.bf16.msra.mxu0 %v3984
    %4130 = vmatpush.bf16.msra.mxu0 %v3982
    %4131 = vmatpush.bf16.msra.mxu0 %v3980
    %4132 = vmatpush.bf16.msra.mxu0 %v3978
    %4133 = vmatpush.bf16.msra.mxu0 %v3976
    %4134 = vmatmul.bf16.gmra.mxu0 %v1714
    %v4135 = vpop.f32.mrf.mxu0
    %v4136 = vadd.f32 %v4113, %v4135
    %v4137 = vpop.f32.mrf.mxu0
    %v4138 = vadd.f32 %v4115, %v4137
    %4139 = vmatmul.bf16.gmra.mxu0 %v1760
    %v4140 = vpop.f32.mrf.mxu0
    %v4141 = vadd.f32 %v4118, %v4140
    %v4142 = vpop.f32.mrf.mxu0
    %v4143 = vadd.f32 %v4120, %v4142
    %4144 = vmatmul.bf16.gmra.mxu0 %v1785
    %v4145 = vpop.f32.mrf.mxu0
    %v4146 = vadd.f32 %v4123, %v4145
    %v4147 = vpop.f32.mrf.mxu0
    %4148 = vdwg.mxu0
    %4149 = vmatpush.bf16.msra.mxu0 %v4006
    %4150 = vmatpush.bf16.msra.mxu0 %v4004
    %4151 = vmatpush.bf16.msra.mxu0 %v4002
    %4152 = vmatpush.bf16.msra.mxu0 %v4000
    %4153 = vmatpush.bf16.msra.mxu0 %v3998
    %4154 = vmatpush.bf16.msra.mxu0 %v3996
    %4155 = vmatpush.bf16.msra.mxu0 %v3994
    %4156 = vmatpush.bf16.msra.mxu0 %v3992
    %4157 = vmatmul.bf16.gmra.mxu0 %v1726
    %v4158 = vpop.f32.mrf.mxu0
    %v4159 = vadd.f32 %v4136, %v4158
    %v4160 = vpop.f32.mrf.mxu0
    %v4161 = vadd.f32 %v4138, %v4160
    %4162 = vmatmul.bf16.gmra.mxu0 %v1768
    %v4163 = vpop.f32.mrf.mxu0
    %v4164 = vadd.f32 %v4141, %v4163
    %v4165 = vpop.f32.mrf.mxu0
    %v4166 = vadd.f32 %v4143, %v4165
    %4167 = vmatmul.bf16.gmra.mxu0 %v1788
    %v4168 = vpop.f32.mrf.mxu0
    %v4169 = vadd.f32 %v4146, %v4168
    %v4170 = vpop.f32.mrf.mxu0
    %4171 = vdwg.mxu0
    %4172 = vmatpush.bf16.msra.mxu0 0
    %4173 = vmatpush.bf16.msra.mxu0 0
    %4174 = vmatpush.bf16.msra.mxu0 0
    %4175 = vmatpush.bf16.msra.mxu0 0
    %4176 = vmatpush.bf16.msra.mxu0 0
    %4177 = vmatpush.bf16.msra.mxu0 0
    %4178 = vmatpush.bf16.msra.mxu0 %v4010
    %4179 = vmatpush.bf16.msra.mxu0 %v4008
    %4180 = vmatmul.bf16.gmra.mxu0 %v2145
    %v4181 = vpop.f32.mrf.mxu0
    %v4182 = vadd.f32 %v4159, %v4181
    %v4183 = vpop.f32.mrf.mxu0
    %v4184 = vadd.f32 %v4161, %v4183
    %4185 = vmatmul.bf16.gmra.mxu0 %v2148
    %v4186 = vpop.f32.mrf.mxu0
    %v4187 = vadd.f32 %v4164, %v4186
    %v4188 = vpop.f32.mrf.mxu0
    %v4189 = vadd.f32 %v4166, %v4188
    %4190 = vmatmul.bf16.gmra.mxu0 %v2151
    %v4191 = vpop.f32.mrf.mxu0
    %v4192 = vadd.f32 %v4169, %v4191
    %v4193 = vpop.f32.mrf.mxu0
    %4194 = vdwg.mxu0
    %4195 = vmatpush.bf16.msra.mxu0 %v3959
    %4196 = vmatpush.bf16.msra.mxu0 %v3957
    %4197 = vmatpush.bf16.msra.mxu0 %v3955
    %4198 = vmatpush.bf16.msra.mxu0 %v3953
    %4199 = vmatpush.bf16.msra.mxu0 %v3951
    %4200 = vmatpush.bf16.msra.mxu0 %v3949
    %4201 = vmatpush.bf16.msra.mxu0 %v3947
    %4202 = vmatpush.bf16.msra.mxu0 %v3945
    %4203 = vmatmul.bf16.gmra.mxu0 %v1690
    %v4204 = vpop.f32.mrf.mxu0
    %v4205 = vadd.f32 0.0, %v4204
    %v4206 = vpop.f32.mrf.mxu0
    %v4207 = vadd.f32 0.0, %v4206
    %4208 = vmatmul.bf16.gmra.mxu0 %v1744
    %v4209 = vpop.f32.mrf.mxu0
    %v4210 = vadd.f32 0.0, %v4209
    %v4211 = vpop.f32.mrf.mxu0
    %v4212 = vadd.f32 0.0, %v4211
    %4213 = vmatmul.bf16.gmra.mxu0 %v1779
    %v4214 = vpop.f32.mrf.mxu0
    %v4215 = vadd.f32 0.0, %v4214
    %v4216 = vpop.f32.mrf.mxu0
    %4217 = vdwg.mxu0
    %4218 = vmatpush.bf16.msra.mxu0 %v3975
    %4219 = vmatpush.bf16.msra.mxu0 %v3973
    %4220 = vmatpush.bf16.msra.mxu0 %v3971
    %4221 = vmatpush.bf16.msra.mxu0 %v3969
    %4222 = vmatpush.bf16.msra.mxu0 %v3967
    %4223 = vmatpush.bf16.msra.mxu0 %v3965
    %4224 = vmatpush.bf16.msra.mxu0 %v3963
    %4225 = vmatpush.bf16.msra.mxu0 %v3961
    %4226 = vmatmul.bf16.gmra.mxu0 %v1702
    %v4227 = vpop.f32.mrf.mxu0
    %v4228 = vadd.f32 %v4205, %v4227
    %v4229 = vpop.f32.mrf.mxu0
    %v4230 = vadd.f32 %v4207, %v4229
    %4231 = vmatmul.bf16.gmra.mxu0 %v1752
    %v4232 = vpop.f32.mrf.mxu0
    %v4233 = vadd.f32 %v4210, %v4232
    %v4234 = vpop.f32.mrf.mxu0
    %v4235 = vadd.f32 %v4212, %v4234
    %4236 = vmatmul.bf16.gmra.mxu0 %v1782
    %v4237 = vpop.f32.mrf.mxu0
    %v4238 = vadd.f32 %v4215, %v4237
    %v4239 = vpop.f32.mrf.mxu0
    %4240 = vdwg.mxu0
    %4241 = vmatpush.bf16.msra.mxu0 %v3991
    %4242 = vmatpush.bf16.msra.mxu0 %v3989
    %4243 = vmatpush.bf16.msra.mxu0 %v3987
    %4244 = vmatpush.bf16.msra.mxu0 %v3985
    %4245 = vmatpush.bf16.msra.mxu0 %v3983
    %4246 = vmatpush.bf16.msra.mxu0 %v3981
    %4247 = vmatpush.bf16.msra.mxu0 %v3979
    %4248 = vmatpush.bf16.msra.mxu0 %v3977
    %4249 = vmatmul.bf16.gmra.mxu0 %v1714
    %v4250 = vpop.f32.mrf.mxu0
    %v4251 = vadd.f32 %v4228, %v4250
    %v4252 = vpop.f32.mrf.mxu0
    %v4253 = vadd.f32 %v4230, %v4252
    %4254 = vmatmul.bf16.gmra.mxu0 %v1760
    %v4255 = vpop.f32.mrf.mxu0
    %v4256 = vadd.f32 %v4233, %v4255
    %v4257 = vpop.f32.mrf.mxu0
    %v4258 = vadd.f32 %v4235, %v4257
    %4259 = vmatmul.bf16.gmra.mxu0 %v1785
    %v4260 = vpop.f32.mrf.mxu0
    %v4261 = vadd.f32 %v4238, %v4260
    %v4262 = vpop.f32.mrf.mxu0
    %4263 = vdwg.mxu0
    %4264 = vmatpush.bf16.msra.mxu0 %v4007
    %4265 = vmatpush.bf16.msra.mxu0 %v4005
    %4266 = vmatpush.bf16.msra.mxu0 %v4003
    %4267 = vmatpush.bf16.msra.mxu0 %v4001
    %4268 = vmatpush.bf16.msra.mxu0 %v3999
    %4269 = vmatpush.bf16.msra.mxu0 %v3997
    %4270 = vmatpush.bf16.msra.mxu0 %v3995
    %4271 = vmatpush.bf16.msra.mxu0 %v3993
    %4272 = vmatmul.bf16.gmra.mxu0 %v1726
    %v4273 = vpop.f32.mrf.mxu0
    %v4274 = vadd.f32 %v4251, %v4273
    %v4275 = vpop.f32.mrf.mxu0
    %v4276 = vadd.f32 %v4253, %v4275
    %4277 = vmatmul.bf16.gmra.mxu0 %v1768
    %v4278 = vpop.f32.mrf.mxu0
    %v4279 = vadd.f32 %v4256, %v4278
    %v4280 = vpop.f32.mrf.mxu0
    %v4281 = vadd.f32 %v4258, %v4280
    %4282 = vmatmul.bf16.gmra.mxu0 %v1788
    %v4283 = vpop.f32.mrf.mxu0
    %v4284 = vadd.f32 %v4261, %v4283
    %v4285 = vpop.f32.mrf.mxu0
    %4286 = vdwg.mxu0
    %4287 = vmatpush.bf16.msra.mxu0 0
    %4288 = vmatpush.bf16.msra.mxu0 0
    %4289 = vmatpush.bf16.msra.mxu0 0
    %4290 = vmatpush.bf16.msra.mxu0 0
    %4291 = vmatpush.bf16.msra.mxu0 0
    %4292 = vmatpush.bf16.msra.mxu0 0
    %4293 = vmatpush.bf16.msra.mxu0 %v4011
    %4294 = vmatpush.bf16.msra.mxu0 %v4009
    %4295 = vmatmul.bf16.gmra.mxu0 %v2145
    %v4296 = vpop.f32.mrf.mxu0
    %v4297 = vadd.f32 %v4274, %v4296
    %v4298 = vpop.f32.mrf.mxu0
    %v4299 = vadd.f32 %v4276, %v4298
    %4300 = vmatmul.bf16.gmra.mxu0 %v2148
    %v4301 = vpop.f32.mrf.mxu0
    %v4302 = vadd.f32 %v4279, %v4301
    %v4303 = vpop.f32.mrf.mxu0
    %v4304 = vadd.f32 %v4281, %v4303
    %4305 = vmatmul.bf16.gmra.mxu0 %v2151
    %v4306 = vpop.f32.mrf.mxu0
    %v4307 = vadd.f32 %v4284, %v4306
    %v4308 = vpop.f32.mrf.mxu0
    %4309 = vdwg.mxu0
    %v4310 = vadd.f32 %v3543, %v4182
    %v4311 = vadd.f32 %v3658, %v4297
    %v4312 = vadd.f32 %v3545, %v4184
    %v4313 = vadd.f32 %v3660, %v4299
    %v4314 = vadd.f32 %v3548, %v4187
    %v4315 = vadd.f32 %v3663, %v4302
    %v4316 = vadd.f32 %v3550, %v4189
    %v4317 = vadd.f32 %v3665, %v4304
    %v4318 = vadd.f32 %v3553, %v4192
    %v4319 = vadd.f32 %v3668, %v4307
    %v4320 = vmax.f32 %v2383, %v4310
    %v4321 = vmax.f32 %v2384, %v4311
    %v4322 = vmax.f32 %v2385, %v4312
    %v4323 = vmax.f32 %v2386, %v4313
    %v4324 = vmax.f32 %v2387, %v4314
    %v4325 = vmax.f32 %v2388, %v4315
    %v4326 = vmax.f32 %v2389, %v4316
    %v4327 = vmax.f32 %v2390, %v4317
    %v4328 = vmax.f32 %v2391, %v4318
    %v4329 = vmax.f32 %v2392, %v4319
    %v4331 = vperm.slane %v45, 0
    %v4332 = vperm.slane %v45, 1
    %v4335 = vadd.f32 %v4320, %v4331
    %v4336 = vadd.f32 %v4321, %v4332
    %v4337 = vadd.f32 %v4322, %v4331
    %v4338 = vadd.f32 %v4323, %v4332
    %v4339 = vadd.f32 %v4324, %v4331
    %v4340 = vadd.f32 %v4325, %v4332
    %v4341 = vadd.f32 %v4326, %v4331
    %v4342 = vadd.f32 %v4327, %v4332
    %v4343 = vadd.f32 %v4328, %v4331
    %v4344 = vadd.f32 %v4329, %v4332
    %v4345 = vmax.f32 %v4335, 0.0
    %v4346 = vmax.f32 %v4336, 0.0
    %v4347 = vmax.f32 %v4337, 0.0
    %v4348 = vmax.f32 %v4338, 0.0
    %v4349 = vmax.f32 %v4339, 0.0
    %v4350 = vmax.f32 %v4340, 0.0
    %v4351 = vmax.f32 %v4341, 0.0
    %v4352 = vmax.f32 %v4342, 0.0
    %v4353 = vmax.f32 %v4343, 0.0
    %v4354 = vmax.f32 %v4344, 0.0
    %v4355 = vpack.c.bf16 %v4346, %v4345
    %v4356 = vpack.c.bf16 %v4348, %v4347
    %v4357 = vpack.c.bf16 %v4350, %v4349
    %v4358 = vpack.c.bf16 %v4352, %v4351
    %v4359 = vpack.c.bf16 %v4354, %v4353
    %4365 = vrot.lane.b32.xlu0 %v4355, 16
    %v4366 = vpop.permute.xlu0 %4365
    %4367 = vrot.lane.b32.xlu0 %v4356, 16
    %v4368 = vpop.permute.xlu0 %4367
    %4369 = vrot.lane.b32.xlu0 %v4357, 16
    %v4370 = vpop.permute.xlu0 %4369
    %4371 = vrot.lane.b32.xlu0 %v4358, 16
    %v4372 = vpop.permute.xlu0 %4371
    %4373 = vrot.lane.b32.xlu0 %v4359, 16
    %v4374 = vpop.permute.xlu0 %4373
    %v4375 = vrot.slane %v4366, 4
    %v4376 = vrot.slane %v4368, 4
    %v4377 = vrot.slane %v4370, 4
    %v4378 = vrot.slane %v4372, 4
    %v4379 = vrot.slane %v4374, 4
    %vm4380 = vcmask 130048
    %v4381 = vsel %vm4380, %v4375, %v4366
    %v4382 = vsel %vm4380, %v4376, %v4368
    %v4383 = vsel %vm4380, %v4377, %v4370
    %v4384 = vsel %vm4380, %v4378, %v4372
    %v4385 = vsel %vm4380, %v4379, %v4374
    %vm4396 = vcmask 1043584
    %vm4397 = vcmask 1047556
    %vm4398 = vmor %vm4397, %vm4396
    %4399 = vst.msk [vmem:[%s3 + $0xc] sm:$0xff] %vm4398, %v4381
    %vm4400 = vcmask 125952
    %4401 = vst.msk [vmem:[%s3 + $0x14] sm:$0xf] %vm4400, %v4375
    %4402 = vst.msk [vmem:[%s3 + $0x18] sm:$0xff] %vm4398, %v4382
    %4403 = vst.msk [vmem:[%s3 + $0x20] sm:$0xf] %vm4400, %v4376
    %4404 = vst.msk [vmem:[%s3 + $0x24] sm:$0xff] %vm4398, %v4383
    %4405 = vst.msk [vmem:[%s3 + $0x2c] sm:$0xf] %vm4400, %v4377
    %4406 = vst.msk [vmem:[%s3 + $0x30] sm:$0xff] %vm4398, %v4384
    %4407 = vst.msk [vmem:[%s3 + $0x38] sm:$0xf] %vm4400, %v4378
    %vm4408 = vcmask 1040512
    %vm4409 = vcmask 1044484
    %vm4410 = vmor %vm4409, %vm4408
    %4411 = vst.msk [vmem:[%s3 + $0x3c] sm:$0x11] %vm4410, %v4385
    %vm4412 = vcmask 122880
    %4413 = vst.msk [vmem:[%s3 + $0x44] sm:$0x1] %vm4412, %v4379
    %4414 = vst [vmem:[%s3] sm:$0xff] 0
    %vm4415 = vcmask 257024
    %4416 = vst.msk [vmem:[%s3 + $0x8] sm:$0xf] %vm4415, 0
    %4417 = vst [vmem:[%s3 + $0x24] sm:$0x11] 0
    %vm4418 = vcmask 253952
    %4419 = vst.msk [vmem:[%s3 + $0x2c] sm:$0x1] %vm4418, 0
    %4420 = vst [vmem:[%s3 + $0x3c] sm:$0x22] 0
    %vm4421 = vcmask 254977
    %4422 = vst.msk [vmem:[%s3 + $0x44] sm:$0x2] %vm4421, 0
    %4423 = vst.msk [vmem:[%s3] sm:$0xf] %vm4400, 0
    %4424 = vst.msk [vmem:[%s3 + $0xc] sm:$0xf] %vm4400, 0
    %4425 = vst.msk [vmem:[%s3 + $0x18] sm:$0xf] %vm4400, 0
    %4426 = vst.msk [vmem:[%s3 + $0x24] sm:$0xf] %vm4400, 0
    %4427 = vst.msk [vmem:[%s3 + $0x30] sm:$0xf] %vm4400, 0
    %vm4428 = vcmask 123904
    %4429 = vst.msk [vmem:[%s3 + $0x3c] sm:$0x3] %vm4428, 0
    %vm4430 = vcmask 257152
    %4431 = vst.msk [vmem:[%s3 + $0x8] sm:$0xf] %vm4430, 0
    %4432 = vst.msk [vmem:[%s3 + $0x14] sm:$0xf] %vm4430, 0
    %4433 = vst.msk [vmem:[%s3 + $0x20] sm:$0xf] %vm4430, 0
    %4434 = vst.msk [vmem:[%s3 + $0x2c] sm:$0xf] %vm4430, 0
    %4435 = vst.msk [vmem:[%s3 + $0x38] sm:$0xf] %vm4430, 0
    %vm4436 = vcmask 255104
    %4437 = vst.msk [vmem:[%s3 + $0x44] sm:$0x3] %vm4436, 0
    // Predicated region
    $region22: #{_lambda_.5} parent=1 // pred_check
      _
    $region23: #{_lambda_.5} parent=1 // pred_check_branch
      %4439 = sbr.rel (0) target = $region25
    $region24: #{_lambda_.5} parent=1 // pred_region
      _
    $region25: #{_lambda_.5} parent=1 // pred_fallthru
      _
    // Predicated region
    $region26: #{_lambda_.5} parent=1 // pred_check
      _
    $region27: #{_lambda_.5} parent=1 // pred_check_branch
      %4441 = sbr.rel (0) target = $region29
    $region28: #{_lambda_.5} parent=1 // pred_region
      _
    $region29: #{_lambda_.5} parent=1 // pred_fallthru
      _
    %4442 = vsyncpa [#allocation3], 1
    %4443 = vsyncpa [#allocation5], 1

</llo_original>
